<compile_context>
chip_gen: v6e
topology: v6e:2x2x1
jax: 0.10.0
libtpu: 0.0.40
codegen_flags: <defaults>
</compile_context>

<pallas_src>
import jax
import jax.numpy as jnp
from jax.experimental import pallas as pl
from jax.experimental.pallas import tpu as pltpu

LANES = 128  # conv output channels are zero-padded to this many lanes


# ---------------------------------------------------------------------------
# Pallas kernels
# ---------------------------------------------------------------------------
def conv_relu_pool_kernel(pat_ref, w_ref, b_ref, o_ref):
    """conv-as-matmul + bias + ReLU + 2x2/stride-2 maxpool for the whole batch.

    pat_ref : (4*M, K) bf16  im2col patches; rows ordered (pool corner, n, ho, wo)
    w_ref   : (K, 128) bf16  flattened conv weights, Cout zero-padded to 128
    b_ref   : (1, 128) f32   bias (zero in padded lanes)
    o_ref   : (M, 128) bf16  pooled output, rows ordered (n, ho, wo)
    """
    y = jnp.dot(pat_ref[...], w_ref[...], preferred_element_type=jnp.float32)
    y = jnp.maximum(y + b_ref[...], 0.0)                      # bias + ReLU (f32, VPU)
    m = o_ref.shape[0]
    # 2x2 max-pool: the four pool-window corners are four contiguous row blocks.
    pooled = jnp.maximum(jnp.maximum(y[0 * m:1 * m], y[1 * m:2 * m]),
                         jnp.maximum(y[2 * m:3 * m], y[3 * m:4 * m]))
    o_ref[...] = pooled.astype(o_ref.dtype)


def mlp_head_kernel(x_ref, w1_ref, b1_ref, w2_ref, b2_ref, o_ref):
    """fc1 + ReLU + fc2 + log_softmax(dim=1) for the whole (small) batch."""
    h = jnp.dot(x_ref[...], w1_ref[...], preferred_element_type=jnp.float32)
    h = jnp.maximum(h + b1_ref[...], 0.0)
    logits = jnp.dot(h, w2_ref[...], preferred_element_type=jnp.float32) + b2_ref[...]
    m = jnp.max(logits, axis=1, keepdims=True)
    z = logits - m
    lse = jnp.log(jnp.sum(jnp.exp(z), axis=1, keepdims=True))
    o_ref[...] = z - lse


# ---------------------------------------------------------------------------
# Wrappers (pallas_call plumbing) — grid-less, fully VMEM resident
# ---------------------------------------------------------------------------
def conv_relu_pool(pat, w, b, m_out):
    return pl.pallas_call(
        conv_relu_pool_kernel,
        out_shape=jax.ShapeDtypeStruct((m_out, LANES), jnp.bfloat16),
        in_specs=[pl.BlockSpec(memory_space=pltpu.MemorySpace.VMEM)] * 3,
        out_specs=pl.BlockSpec(memory_space=pltpu.MemorySpace.VMEM),
    )(pat, w, b)


def mlp_head(x, w1, b1, w2, b2):
    n = x.shape[0]
    return pl.pallas_call(
        mlp_head_kernel,
        out_shape=jax.ShapeDtypeStruct((n, 10), jnp.float32),
        in_specs=[pl.BlockSpec(memory_space=pltpu.MemorySpace.VMEM)] * 5,
        out_specs=pl.BlockSpec(memory_space=pltpu.MemorySpace.VMEM),
    )(x, w1, b1, w2, b2)


# ---------------------------------------------------------------------------
# JAX glue: pool-ordered im2col, parameter layout prep, forward
# ---------------------------------------------------------------------------
def im2col_pool_ordered(a_nhwc, ksize=5, pad=2):
    """NHWC -> (4*N*Ho*Wo, ksize*ksize*C) bf16 patches.

    Feature order (kh, kw, cin); rows ordered (pool corner = dy*2+dx, n, ho, wo)
    so the in-kernel 2x2 max-pool is a max over four contiguous row blocks.
    """
    N, H, W, C = a_nhwc.shape
    Ho, Wo = H // 2, W // 2
    F = ksize * ksize * C
    ap = jnp.pad(a_nhwc, ((0, 0), (pad, pad), (pad, pad), (0, 0)))
    cols = [ap[:, kh:kh + H, kw:kw + W, :] for kh in range(ksize) for kw in range(ksize)]
    pat = jnp.concatenate(cols, axis=-1)                  # (N, H, W, 25*C)
    pat = pat.reshape(N, Ho, 2, Wo, 2, F)                 # h = 2*ho+dy, w = 2*wo+dx
    pat = pat.transpose(2, 4, 0, 1, 3, 5)                 # (dy, dx, n, ho, wo, F)
    return pat.reshape(4 * N * Ho * Wo, F).astype(jnp.bfloat16)


def init_params(key):
    ks = jax.random.split(key, 8)
    # PyTorch-layout parameters (Conv2d: (Cout, Cin, kH, kW); Linear: (out, in)).
    w_c1 = jax.random.normal(ks[0], (32, 1, 5, 5), jnp.float32) * 0.10
    b_c1 = jax.random.normal(ks[1], (32,), jnp.float32) * 0.01
    w_c2 = jax.random.normal(ks[2], (64, 32, 5, 5), jnp.float32) * 0.05
    b_c2 = jax.random.normal(ks[3], (64,), jnp.float32) * 0.01
    w_fc1 = jax.random.normal(ks[4], (128, 3136), jnp.float32) * 0.02
    b_fc1 = jax.random.normal(ks[5], (128,), jnp.float32) * 0.01
    w_fc2 = jax.random.normal(ks[6], (10, 128), jnp.float32) * 0.05
    b_fc2 = jax.random.normal(ks[7], (10,), jnp.float32) * 0.01

    # Conv weights: (Cout, Cin, kh, kw) -> (kh*kw*Cin, Cout) matching the im2col
    # feature order, Cout zero-padded to 128 lanes, cast to bf16 for the MXU.
    def conv_flat(w, b):
        cout, cin, kh, kw = w.shape
        wf = w.transpose(2, 3, 1, 0).reshape(kh * kw * cin, cout)
        wf = jnp.pad(wf, ((0, 0), (0, LANES - cout))).astype(jnp.bfloat16)
        bf = jnp.pad(b, (0, LANES - cout)).reshape(1, LANES)       # f32 bias
        return wf, bf

    w1f, b1p = conv_flat(w_c1, b_c1)
    w2f, b2p = conv_flat(w_c2, b_c2)

    # fc1 in torch consumes x.view(N,-1) on NCHW, i.e. feature = c*49 + ho*7 + wo.
    # Our layer-2 output is NHWC with channels padded to 128:
    #   feature = (ho*7+wo)*128 + c  -> permute + zero-pad the fc1 weight rows.
    w_fc1_in = w_fc1.T                                             # (3136, 128) input-major
    idx = jnp.arange(64)[None, :] * 49 + jnp.arange(49)[:, None]   # idx[p, c] = c*49 + p
    w_nhwc = w_fc1_in[idx.reshape(-1), :]                          # row p*64 + c
    w_nhwc = w_nhwc.reshape(49, 64, 128)
    wfc1 = jnp.pad(w_nhwc, ((0, 0), (0, LANES - 64), (0, 0))).reshape(49 * LANES, 128)
    wfc1 = wfc1.astype(jnp.bfloat16)

    return dict(
        w1f=w1f, b1=b1p, w2f=w2f, b2=b2p,
        wfc1=wfc1, bfc1=b_fc1.reshape(1, 128),
        wfc2=w_fc2.T, bfc2=b_fc2.reshape(1, 10),                   # f32 head tail
    )


@jax.jit
def simple_cnn_forward(x, params):
    """x: NCHW float32 [N, 1, 28, 28] -> log-probs [N, 10]."""
    N = x.shape[0]
    # layer 1: conv(1->32, 5x5, pad 2) + ReLU + maxpool 2x2    28x28 -> 14x14x32
    a1 = x.reshape(N, 28, 28, 1)                        # NCHW with C=1 == NHWC
    pat1 = im2col_pool_ordered(a1)                      # (4*N*196, 25) bf16
    y1 = conv_relu_pool(pat1, params["w1f"], params["b1"], N * 196)   # (N*196, 128) bf16
    # layer 2: conv(32->64, 5x5, pad 2) + ReLU + maxpool 2x2   14x14 -> 7x7x64
    a2 = y1.reshape(N, 14, 14, LANES)[..., :32]         # drop zero-padded channels
    pat2 = im2col_pool_ordered(a2)                      # (4*N*49, 800) bf16
    y2 = conv_relu_pool(pat2, params["w2f"], params["b2"], N * 49)    # (N*49, 128) bf16
    # head: fc1 + ReLU + fc2 + log_softmax (NCHW flatten folded into wfc1 rows)
    feats = y2.reshape(N, 49 * LANES)                   # (N, 6272) bf16
    return mlp_head(feats, params["wfc1"], params["bfc1"], params["wfc2"], params["bfc2"])


if __name__ == "__main__":
    key = jax.random.PRNGKey(0)
    k_param, k_x = jax.random.split(key)
    params = init_params(k_param)
    # module assumes 28x28 single-channel input (MNIST-sized); small batch = 2
    x = jax.random.normal(k_x, (2, 1, 28, 28), jnp.float32)
    out = simple_cnn_forward(x, params)
    out = jax.block_until_ready(out)
    assert out.shape == (2, 10)
    # log_softmax sanity: probabilities sum to 1 per row
    assert bool(jnp.all(jnp.abs(jnp.exp(out).sum(axis=1) - 1.0) < 1e-3))
    print("KERNEL_OK")
</pallas_src>

<mosaic_0001>
module attributes {stable_mosaic.version = 11 : i64} {
  func.func @conv_relu_pool_kernel(%arg0: memref<1568x25xbf16, #tpu.memory_space<vmem>>, %arg1: memref<25x128xbf16, #tpu.memory_space<vmem>>, %arg2: memref<1x128xf32, #tpu.memory_space<vmem>>, %arg3: memref<392x128xbf16, #tpu.memory_space<vmem>>) attributes {dimension_semantics = [], scalar_prefetch = 0 : i64, scratch_operands = 0 : i64, tpu.core_type = #tpu.core_type<tc>} {
    %c0 = arith.constant 0 : index
    %c0_0 = arith.constant 0 : index
    %0 = vector.load %arg0[%c0, %c0_0] : memref<1568x25xbf16, #tpu.memory_space<vmem>>, vector<1568x25xbf16>
    %c0_1 = arith.constant 0 : index
    %c0_2 = arith.constant 0 : index
    %1 = vector.load %arg1[%c0_1, %c0_2] : memref<25x128xbf16, #tpu.memory_space<vmem>>, vector<25x128xbf16>
    %cst = arith.constant dense<0.000000e+00> : vector<1568x128xf32>
    %2 = tpu.matmul %0, %1, %cst {dimension_numbers = #tpu.dot_dimension_numbers<[1], [0], [0], [1], [0, 0, 1, 1], [], []>} : vector<1568x25xbf16>, vector<25x128xbf16>, vector<1568x128xf32> -> vector<1568x128xf32>
    %c0_3 = arith.constant 0 : index
    %c0_4 = arith.constant 0 : index
    %3 = vector.load %arg2[%c0_3, %c0_4] : memref<1x128xf32, #tpu.memory_space<vmem>>, vector<1x128xf32>
    %4 = vector.broadcast %3 : vector<1x128xf32> to vector<1568x128xf32>
    %5 = arith.addf %2, %4 : vector<1568x128xf32>
    %cst_5 = arith.constant 0.000000e+00 : f32
    %6 = vector.broadcast %cst_5 : f32 to vector<1568x128xf32>
    %7 = arith.maximumf %5, %6 : vector<1568x128xf32>
    %8 = vector.extract_strided_slice %7 {offsets = [0, 0], sizes = [392, 128], strides = [1, 1]} : vector<1568x128xf32> to vector<392x128xf32>
    %9 = vector.extract_strided_slice %7 {offsets = [392, 0], sizes = [392, 128], strides = [1, 1]} : vector<1568x128xf32> to vector<392x128xf32>
    %10 = arith.maximumf %8, %9 : vector<392x128xf32>
    %11 = vector.extract_strided_slice %7 {offsets = [784, 0], sizes = [392, 128], strides = [1, 1]} : vector<1568x128xf32> to vector<392x128xf32>
    %12 = vector.extract_strided_slice %7 {offsets = [1176, 0], sizes = [392, 128], strides = [1, 1]} : vector<1568x128xf32> to vector<392x128xf32>
    %13 = arith.maximumf %11, %12 : vector<392x128xf32>
    %14 = arith.maximumf %10, %13 : vector<392x128xf32>
    %15 = arith.truncf %14 : vector<392x128xf32> to vector<392x128xbf16>
    %c0_6 = arith.constant 0 : index
    %c0_7 = arith.constant 0 : index
    %16 = vector.load %arg3[%c0_6, %c0_7] : memref<392x128xbf16, #tpu.memory_space<vmem>>, vector<392x128xbf16>
    tpu.vector_store %arg3[%c0_6, %c0_7], %15 {strides = array<i32>} : memref<392x128xbf16, #tpu.memory_space<vmem>>, vector<392x128xbf16>,
    return
  }
}

module attributes {stable_mosaic.version = 11 : i64} {
  func.func @conv_relu_pool_kernel(%arg0: memref<392x800xbf16, #tpu.memory_space<vmem>>, %arg1: memref<800x128xbf16, #tpu.memory_space<vmem>>, %arg2: memref<1x128xf32, #tpu.memory_space<vmem>>, %arg3: memref<98x128xbf16, #tpu.memory_space<vmem>>) attributes {dimension_semantics = [], scalar_prefetch = 0 : i64, scratch_operands = 0 : i64, tpu.core_type = #tpu.core_type<tc>} {
    %c0 = arith.constant 0 : index
    %c0_0 = arith.constant 0 : index
    %0 = vector.load %arg0[%c0, %c0_0] : memref<392x800xbf16, #tpu.memory_space<vmem>>, vector<392x800xbf16>
    %c0_1 = arith.constant 0 : index
    %c0_2 = arith.constant 0 : index
    %1 = vector.load %arg1[%c0_1, %c0_2] : memref<800x128xbf16, #tpu.memory_space<vmem>>, vector<800x128xbf16>
    %cst = arith.constant dense<0.000000e+00> : vector<392x128xf32>
    %2 = tpu.matmul %0, %1, %cst {dimension_numbers = #tpu.dot_dimension_numbers<[1], [0], [0], [1], [0, 0, 1, 1], [], []>} : vector<392x800xbf16>, vector<800x128xbf16>, vector<392x128xf32> -> vector<392x128xf32>
    %c0_3 = arith.constant 0 : index
    %c0_4 = arith.constant 0 : index
    %3 = vector.load %arg2[%c0_3, %c0_4] : memref<1x128xf32, #tpu.memory_space<vmem>>, vector<1x128xf32>
    %4 = vector.broadcast %3 : vector<1x128xf32> to vector<392x128xf32>
    %5 = arith.addf %2, %4 : vector<392x128xf32>
    %cst_5 = arith.constant 0.000000e+00 : f32
    %6 = vector.broadcast %cst_5 : f32 to vector<392x128xf32>
    %7 = arith.maximumf %5, %6 : vector<392x128xf32>
    %8 = vector.extract_strided_slice %7 {offsets = [0, 0], sizes = [98, 128], strides = [1, 1]} : vector<392x128xf32> to vector<98x128xf32>
    %9 = vector.extract_strided_slice %7 {offsets = [98, 0], sizes = [98, 128], strides = [1, 1]} : vector<392x128xf32> to vector<98x128xf32>
    %10 = arith.maximumf %8, %9 : vector<98x128xf32>
    %11 = vector.extract_strided_slice %7 {offsets = [196, 0], sizes = [98, 128], strides = [1, 1]} : vector<392x128xf32> to vector<98x128xf32>
    %12 = vector.extract_strided_slice %7 {offsets = [294, 0], sizes = [98, 128], strides = [1, 1]} : vector<392x128xf32> to vector<98x128xf32>
    %13 = arith.maximumf %11, %12 : vector<98x128xf32>
    %14 = arith.maximumf %10, %13 : vector<98x128xf32>
    %15 = arith.truncf %14 : vector<98x128xf32> to vector<98x128xbf16>
    %c0_6 = arith.constant 0 : index
    %c0_7 = arith.constant 0 : index
    %16 = vector.load %arg3[%c0_6, %c0_7] : memref<98x128xbf16, #tpu.memory_space<vmem>>, vector<98x128xbf16>
    tpu.vector_store %arg3[%c0_6, %c0_7], %15 {strides = array<i32>} : memref<98x128xbf16, #tpu.memory_space<vmem>>, vector<98x128xbf16>,
    return
  }
}

module attributes {stable_mosaic.version = 11 : i64} {
  func.func @mlp_head_kernel(%arg0: memref<2x6272xbf16, #tpu.memory_space<vmem>>, %arg1: memref<6272x128xbf16, #tpu.memory_space<vmem>>, %arg2: memref<1x128xf32, #tpu.memory_space<vmem>>, %arg3: memref<128x10xf32, #tpu.memory_space<vmem>>, %arg4: memref<1x10xf32, #tpu.memory_space<vmem>>, %arg5: memref<2x10xf32, #tpu.memory_space<vmem>>) attributes {dimension_semantics = [], scalar_prefetch = 0 : i64, scratch_operands = 0 : i64, tpu.core_type = #tpu.core_type<tc>} {
    %c0 = arith.constant 0 : index
    %c0_0 = arith.constant 0 : index
    %0 = vector.load %arg0[%c0, %c0_0] : memref<2x6272xbf16, #tpu.memory_space<vmem>>, vector<2x6272xbf16>
    %c0_1 = arith.constant 0 : index
    %c0_2 = arith.constant 0 : index
    %1 = vector.load %arg1[%c0_1, %c0_2] : memref<6272x128xbf16, #tpu.memory_space<vmem>>, vector<6272x128xbf16>
    %cst = arith.constant dense<0.000000e+00> : vector<2x128xf32>
    %2 = tpu.matmul %0, %1, %cst {dimension_numbers = #tpu.dot_dimension_numbers<[1], [0], [0], [1], [0, 0, 1, 1], [], []>} : vector<2x6272xbf16>, vector<6272x128xbf16>, vector<2x128xf32> -> vector<2x128xf32>
    %c0_3 = arith.constant 0 : index
    %c0_4 = arith.constant 0 : index
    %3 = vector.load %arg2[%c0_3, %c0_4] : memref<1x128xf32, #tpu.memory_space<vmem>>, vector<1x128xf32>
    %4 = vector.broadcast %3 : vector<1x128xf32> to vector<2x128xf32>
    %5 = arith.addf %2, %4 : vector<2x128xf32>
    %cst_5 = arith.constant 0.000000e+00 : f32
    %6 = vector.broadcast %cst_5 : f32 to vector<2x128xf32>
    %7 = arith.maximumf %5, %6 : vector<2x128xf32>
    %c0_6 = arith.constant 0 : index
    %c0_7 = arith.constant 0 : index
    %8 = vector.load %arg3[%c0_6, %c0_7] : memref<128x10xf32, #tpu.memory_space<vmem>>, vector<128x10xf32>
    %cst_8 = arith.constant dense<0.000000e+00> : vector<2x10xf32>
    %9 = tpu.matmul %7, %8, %cst_8 {dimension_numbers = #tpu.dot_dimension_numbers<[1], [0], [0], [1], [0, 0, 1, 1], [], []>} : vector<2x128xf32>, vector<128x10xf32>, vector<2x10xf32> -> vector<2x10xf32>
    %c0_9 = arith.constant 0 : index
    %c0_10 = arith.constant 0 : index
    %10 = vector.load %arg4[%c0_9, %c0_10] : memref<1x10xf32, #tpu.memory_space<vmem>>, vector<1x10xf32>
    %11 = vector.broadcast %10 : vector<1x10xf32> to vector<2x10xf32>
    %12 = arith.addf %9, %11 : vector<2x10xf32>
    %cst_11 = arith.constant dense<0xFF800000> : vector<2xf32>
    %13 = vector.multi_reduction <maximumf>, %12, %cst_11 [1] : vector<2x10xf32> to vector<2xf32>
    %14 = vector.shape_cast %13 : vector<2xf32> to vector<2x1xf32>
    %15 = vector.broadcast %14 : vector<2x1xf32> to vector<2x10xf32>
    %16 = arith.subf %12, %15 : vector<2x10xf32>
    %17 = math.exp %16 : vector<2x10xf32>
    %cst_12 = arith.constant dense<0.000000e+00> : vector<2xf32>
    %18 = vector.multi_reduction <add>, %17, %cst_12 [1] : vector<2x10xf32> to vector<2xf32>
    %19 = vector.shape_cast %18 : vector<2xf32> to vector<2x1xf32>
    %20 = math.log %19 : vector<2x1xf32>
    %21 = vector.broadcast %20 : vector<2x1xf32> to vector<2x10xf32>
    %22 = arith.subf %16, %21 : vector<2x10xf32>
    %c0_13 = arith.constant 0 : index
    %c0_14 = arith.constant 0 : index
    %23 = vector.load %arg5[%c0_13, %c0_14] : memref<2x10xf32, #tpu.memory_space<vmem>>, vector<2x10xf32>
    tpu.vector_store %arg5[%c0_13, %c0_14], %22 {strides = array<i32>} : memref<2x10xf32, #tpu.memory_space<vmem>>, vector<2x10xf32>,
    return
  }
}

</mosaic_0001>

<llo_original>
// kernel: simple_cnn_forward.3
$region0: #{simple_cnn_forward.3}
  #allocation0 [shape = 'u32[]', space=smem, size = 0x4, offset = 0x4, fixed_abs, tag = 'smem constant byte address 0x4 - core index']
  #allocation1 [shape = 'u32[144,128]{1,0:T(1,128)}', space=vmem, size = 0x12000, scoped, tag = 'internal scratch']
  %s0 = inlined_call_operand.vmem [shape: bf16[1568,25], index: 0, kind: input, shape index: {}]
  %s1 = inlined_call_operand.vmem [shape: bf16[25,128], index: 1, kind: input, shape index: {}]
  %s2 = inlined_call_operand.vmem [shape: f32[1,128], index: 2, kind: input, shape index: {}]
  %s3 = inlined_call_operand.vmem [shape: bf16[392,128], index: 3, kind: output, shape index: {}]
  %s4 = sld [smem:[#allocation0]]
  $region22: #{simple_cnn_forward.3} parent=0
    _
  %s6 = ssub.s32 1, %s4
  %s7 = scalar_select 0, %s6, %s4
  // Predicated region
  $region2: #{simple_cnn_forward.3} parent=0 // pred_check
    _
  $region3: #{simple_cnn_forward.3} parent=0 // pred_check_branch
    %9 = sbr.rel (0) target = $region5
  $region4: #{simple_cnn_forward.3} parent=0 // pred_region
    _
  $region5: #{simple_cnn_forward.3} parent=0 // pred_fallthru
    _
  // Predicated region
  $region6: #{simple_cnn_forward.3} parent=0 // pred_check
    _
  $region7: #{simple_cnn_forward.3} parent=0 // pred_check_branch
    %11 = sbr.rel (0) target = $region9
  $region8: #{simple_cnn_forward.3} parent=0 // pred_region
    _
  $region9: #{simple_cnn_forward.3} parent=0 // pred_fallthru
    _
  // Predicated region
  $region10: #{simple_cnn_forward.3} parent=0 // pred_check
    _
  $region11: #{simple_cnn_forward.3} parent=0 // pred_check_branch
    %13 = sbr.rel (0) target = $region13
  $region12: #{simple_cnn_forward.3} parent=0 // pred_region
    _
  $region13: #{simple_cnn_forward.3} parent=0 // pred_fallthru
    _
  %v15 = vld [vmem:[%s0] sm:$0xf]
  %v16 = vld [vmem:[%s0 + $0x4] sm:$0xf]
  %v17 = vld [vmem:[%s0 + $0x8] sm:$0xf]
  %v18 = vld [vmem:[%s0 + $0xc] sm:$0xf]
  %v19 = vld [vmem:[%s0 + $0x10] sm:$0xf]
  %v20 = vld [vmem:[%s0 + $0x14] sm:$0xf]
  %v21 = vld [vmem:[%s0 + $0x18] sm:$0xf]
  %v22 = vld [vmem:[%s0 + $0x1c] sm:$0xf]
  %v23 = vld [vmem:[%s0 + $0x20] sm:$0xf]
  %v24 = vld [vmem:[%s0 + $0x24] sm:$0xf]
  %v25 = vld [vmem:[%s0 + $0x28] sm:$0xf]
  %v26 = vld [vmem:[%s0 + $0x2c] sm:$0xf]
  %v27 = vld [vmem:[%s0 + $0x30] sm:$0xf]
  %v28 = vld [vmem:[%s0 + $0x34] sm:$0xf]
  %v29 = vld [vmem:[%s0 + $0x38] sm:$0xf]
  %v30 = vld [vmem:[%s0 + $0x3c] sm:$0xf]
  %v31 = vld [vmem:[%s0 + $0x40] sm:$0xf]
  %v32 = vld [vmem:[%s0 + $0x44] sm:$0xf]
  %v33 = vld [vmem:[%s0 + $0x48] sm:$0xf]
  %v34 = vld [vmem:[%s0 + $0x4c] sm:$0xf]
  %v35 = vld [vmem:[%s0 + $0x50] sm:$0xf]
  %v36 = vld [vmem:[%s0 + $0x54] sm:$0xf]
  %v37 = vld [vmem:[%s0 + $0x58] sm:$0xf]
  %v38 = vld [vmem:[%s0 + $0x5c] sm:$0xf]
  %v39 = vld [vmem:[%s0 + $0x60] sm:$0xf]
  %v40 = vld [vmem:[%s0 + $0x64] sm:$0xf]
  %v41 = vld [vmem:[%s0 + $0x68] sm:$0xf]
  %v42 = vld [vmem:[%s0 + $0x6c] sm:$0xf]
  %v43 = vld [vmem:[%s0 + $0x70] sm:$0xf]
  %v44 = vld [vmem:[%s0 + $0x74] sm:$0xf]
  %v45 = vld [vmem:[%s0 + $0x78] sm:$0xf]
  %v46 = vld [vmem:[%s0 + $0x7c] sm:$0xf]
  %v47 = vld [vmem:[%s0 + $0x80] sm:$0xf]
  %v48 = vld [vmem:[%s0 + $0x84] sm:$0xf]
  %v49 = vld [vmem:[%s0 + $0x88] sm:$0xf]
  %v50 = vld [vmem:[%s0 + $0x8c] sm:$0xf]
  %v51 = vld [vmem:[%s0 + $0x90] sm:$0xf]
  %v52 = vld [vmem:[%s0 + $0x94] sm:$0xf]
  %v53 = vld [vmem:[%s0 + $0x98] sm:$0xf]
  %v54 = vld [vmem:[%s0 + $0x9c] sm:$0xf]
  %v55 = vld [vmem:[%s0 + $0xa0] sm:$0xf]
  %v56 = vld [vmem:[%s0 + $0xa4] sm:$0xf]
  %v57 = vld [vmem:[%s0 + $0xa8] sm:$0xf]
  %v58 = vld [vmem:[%s0 + $0xac] sm:$0xf]
  %v59 = vld [vmem:[%s0 + $0xb0] sm:$0xf]
  %v60 = vld [vmem:[%s0 + $0xb4] sm:$0xf]
  %v61 = vld [vmem:[%s0 + $0xb8] sm:$0xf]
  %v62 = vld [vmem:[%s0 + $0xbc] sm:$0xf]
  %v63 = vld [vmem:[%s0 + $0xc0] sm:$0xf]
  %v64 = vld [vmem:[%s0 + $0xc4] sm:$0xf]
  %v65 = vld [vmem:[%s0 + $0xc8] sm:$0xf]
  %v66 = vld [vmem:[%s0 + $0xcc] sm:$0xf]
  %v67 = vld [vmem:[%s0 + $0xd0] sm:$0xf]
  %v68 = vld [vmem:[%s0 + $0xd4] sm:$0xf]
  %v69 = vld [vmem:[%s0 + $0xd8] sm:$0xf]
  %v70 = vld [vmem:[%s0 + $0xdc] sm:$0xf]
  %v71 = vld [vmem:[%s0 + $0xe0] sm:$0xf]
  %v72 = vld [vmem:[%s0 + $0xe4] sm:$0xf]
  %v73 = vld [vmem:[%s0 + $0xe8] sm:$0xf]
  %v74 = vld [vmem:[%s0 + $0xec] sm:$0xf]
  %v75 = vld [vmem:[%s0 + $0xf0] sm:$0xf]
  %v76 = vld [vmem:[%s0 + $0xf4] sm:$0xf]
  %v77 = vld [vmem:[%s0 + $0xf8] sm:$0xf]
  %v78 = vld [vmem:[%s0 + $0xfc] sm:$0xf]
  %v79 = vld [vmem:[%s0 + $0x100] sm:$0xf]
  %v80 = vld [vmem:[%s0 + $0x104] sm:$0xf]
  %v81 = vld [vmem:[%s0 + $0x108] sm:$0xf]
  %v82 = vld [vmem:[%s0 + $0x10c] sm:$0xf]
  %v83 = vld [vmem:[%s0 + $0x110] sm:$0xf]
  %v84 = vld [vmem:[%s0 + $0x114] sm:$0xf]
  %v85 = vld [vmem:[%s0 + $0x118] sm:$0xf]
  %v86 = vld [vmem:[%s0 + $0x11c] sm:$0xf]
  %v87 = vld [vmem:[%s0 + $0x120] sm:$0xf]
  %v88 = vld [vmem:[%s0 + $0x124] sm:$0xf]
  %v89 = vld [vmem:[%s0 + $0x128] sm:$0xf]
  %v90 = vld [vmem:[%s0 + $0x12c] sm:$0xf]
  %v91 = vld [vmem:[%s0 + $0x130] sm:$0xf]
  %v92 = vld [vmem:[%s0 + $0x134] sm:$0xf]
  %v93 = vld [vmem:[%s0 + $0x138] sm:$0xf]
  %v94 = vld [vmem:[%s0 + $0x13c] sm:$0xf]
  %v95 = vld [vmem:[%s0 + $0x140] sm:$0xf]
  %v96 = vld [vmem:[%s0 + $0x144] sm:$0xf]
  %v97 = vld [vmem:[%s0 + $0x148] sm:$0xf]
  %v98 = vld [vmem:[%s0 + $0x14c] sm:$0xf]
  %v99 = vld [vmem:[%s0 + $0x150] sm:$0xf]
  %v100 = vld [vmem:[%s0 + $0x154] sm:$0xf]
  %v101 = vld [vmem:[%s0 + $0x158] sm:$0xf]
  %v102 = vld [vmem:[%s0 + $0x15c] sm:$0xf]
  %v103 = vld [vmem:[%s0 + $0x160] sm:$0xf]
  %v104 = vld [vmem:[%s0 + $0x164] sm:$0xf]
  %v105 = vld [vmem:[%s0 + $0x168] sm:$0xf]
  %v106 = vld [vmem:[%s0 + $0x16c] sm:$0xf]
  %v107 = vld [vmem:[%s0 + $0x170] sm:$0xf]
  %v108 = vld [vmem:[%s0 + $0x174] sm:$0xf]
  %v109 = vld [vmem:[%s0 + $0x178] sm:$0xf]
  %v110 = vld [vmem:[%s0 + $0x17c] sm:$0xf]
  %v111 = vld [vmem:[%s0 + $0x180] sm:$0xf]
  %v112 = vld [vmem:[%s0 + $0x184] sm:$0xf]
  %v113 = vld [vmem:[%s0 + $0x188] sm:$0xf]
  %v114 = vld [vmem:[%s0 + $0x18c] sm:$0xf]
  %v115 = vld [vmem:[%s0 + $0x190] sm:$0xf]
  %v116 = vld [vmem:[%s0 + $0x194] sm:$0xf]
  %v117 = vld [vmem:[%s0 + $0x198] sm:$0xf]
  %v118 = vld [vmem:[%s0 + $0x19c] sm:$0xf]
  %v119 = vld [vmem:[%s0 + $0x1a0] sm:$0xf]
  %v120 = vld [vmem:[%s0 + $0x1a4] sm:$0xf]
  %v121 = vld [vmem:[%s0 + $0x1a8] sm:$0xf]
  %v122 = vld [vmem:[%s0 + $0x1ac] sm:$0xf]
  %v123 = vld [vmem:[%s0 + $0x1b0] sm:$0xf]
  %v124 = vld [vmem:[%s0 + $0x1b4] sm:$0xf]
  %v125 = vld [vmem:[%s0 + $0x1b8] sm:$0xf]
  %v126 = vld [vmem:[%s0 + $0x1bc] sm:$0xf]
  %v127 = vld [vmem:[%s0 + $0x1c0] sm:$0xf]
  %v128 = vld [vmem:[%s0 + $0x1c4] sm:$0xf]
  %v129 = vld [vmem:[%s0 + $0x1c8] sm:$0xf]
  %v130 = vld [vmem:[%s0 + $0x1cc] sm:$0xf]
  %v131 = vld [vmem:[%s0 + $0x1d0] sm:$0xf]
  %v132 = vld [vmem:[%s0 + $0x1d4] sm:$0xf]
  %v133 = vld [vmem:[%s0 + $0x1d8] sm:$0xf]
  %v134 = vld [vmem:[%s0 + $0x1dc] sm:$0xf]
  %v135 = vld [vmem:[%s0 + $0x1e0] sm:$0xf]
  %v136 = vld [vmem:[%s0 + $0x1e4] sm:$0xf]
  %v137 = vld [vmem:[%s0 + $0x1e8] sm:$0xf]
  %v138 = vld [vmem:[%s0 + $0x1ec] sm:$0xf]
  %v139 = vld [vmem:[%s0 + $0x1f0] sm:$0xf]
  %v140 = vld [vmem:[%s0 + $0x1f4] sm:$0xf]
  %v141 = vld [vmem:[%s0 + $0x1f8] sm:$0xf]
  %v142 = vld [vmem:[%s0 + $0x1fc] sm:$0xf]
  %v143 = vld [vmem:[%s0 + $0x200] sm:$0xf]
  %v144 = vld [vmem:[%s0 + $0x204] sm:$0xf]
  %v145 = vld [vmem:[%s0 + $0x208] sm:$0xf]
  %v146 = vld [vmem:[%s0 + $0x20c] sm:$0xf]
  %v147 = vld [vmem:[%s0 + $0x210] sm:$0xf]
  %v148 = vld [vmem:[%s0 + $0x214] sm:$0xf]
  %v149 = vld [vmem:[%s0 + $0x218] sm:$0xf]
  %v150 = vld [vmem:[%s0 + $0x21c] sm:$0xf]
  %v151 = vld [vmem:[%s0 + $0x220] sm:$0xf]
  %v152 = vld [vmem:[%s0 + $0x224] sm:$0xf]
  %v153 = vld [vmem:[%s0 + $0x228] sm:$0xf]
  %v154 = vld [vmem:[%s0 + $0x22c] sm:$0xf]
  %v155 = vld [vmem:[%s0 + $0x230] sm:$0xf]
  %v156 = vld [vmem:[%s0 + $0x234] sm:$0xf]
  %v157 = vld [vmem:[%s0 + $0x238] sm:$0xf]
  %v158 = vld [vmem:[%s0 + $0x23c] sm:$0xf]
  %v159 = vld [vmem:[%s0 + $0x240] sm:$0xf]
  %v160 = vld [vmem:[%s0 + $0x244] sm:$0xf]
  %v161 = vld [vmem:[%s0 + $0x248] sm:$0xf]
  %v162 = vld [vmem:[%s0 + $0x24c] sm:$0xf]
  %v163 = vld [vmem:[%s0 + $0x250] sm:$0xf]
  %v164 = vld [vmem:[%s0 + $0x254] sm:$0xf]
  %v165 = vld [vmem:[%s0 + $0x258] sm:$0xf]
  %v166 = vld [vmem:[%s0 + $0x25c] sm:$0xf]
  %v167 = vld [vmem:[%s0 + $0x260] sm:$0xf]
  %v168 = vld [vmem:[%s0 + $0x264] sm:$0xf]
  %v169 = vld [vmem:[%s0 + $0x268] sm:$0xf]
  %v170 = vld [vmem:[%s0 + $0x26c] sm:$0xf]
  %v171 = vld [vmem:[%s0 + $0x270] sm:$0xf]
  %v172 = vld [vmem:[%s0 + $0x274] sm:$0xf]
  %v173 = vld [vmem:[%s0 + $0x278] sm:$0xf]
  %v174 = vld [vmem:[%s0 + $0x27c] sm:$0xf]
  %v175 = vld [vmem:[%s0 + $0x280] sm:$0xf]
  %v176 = vld [vmem:[%s0 + $0x284] sm:$0xf]
  %v177 = vld [vmem:[%s0 + $0x288] sm:$0xf]
  %v178 = vld [vmem:[%s0 + $0x28c] sm:$0xf]
  %v179 = vld [vmem:[%s0 + $0x290] sm:$0xf]
  %v180 = vld [vmem:[%s0 + $0x294] sm:$0xf]
  %v181 = vld [vmem:[%s0 + $0x298] sm:$0xf]
  %v182 = vld [vmem:[%s0 + $0x29c] sm:$0xf]
  %v183 = vld [vmem:[%s0 + $0x2a0] sm:$0xf]
  %v184 = vld [vmem:[%s0 + $0x2a4] sm:$0xf]
  %v185 = vld [vmem:[%s0 + $0x2a8] sm:$0xf]
  %v186 = vld [vmem:[%s0 + $0x2ac] sm:$0xf]
  %v187 = vld [vmem:[%s0 + $0x2b0] sm:$0xf]
  %v188 = vld [vmem:[%s0 + $0x2b4] sm:$0xf]
  %v189 = vld [vmem:[%s0 + $0x2b8] sm:$0xf]
  %v190 = vld [vmem:[%s0 + $0x2bc] sm:$0xf]
  %v191 = vld [vmem:[%s0 + $0x2c0] sm:$0xf]
  %v192 = vld [vmem:[%s0 + $0x2c4] sm:$0xf]
  %v193 = vld [vmem:[%s0 + $0x2c8] sm:$0xf]
  %v194 = vld [vmem:[%s0 + $0x2cc] sm:$0xf]
  %v195 = vld [vmem:[%s0 + $0x2d0] sm:$0xf]
  %v196 = vld [vmem:[%s0 + $0x2d4] sm:$0xf]
  %v197 = vld [vmem:[%s0 + $0x2d8] sm:$0xf]
  %v198 = vld [vmem:[%s0 + $0x2dc] sm:$0xf]
  %v199 = vld [vmem:[%s0 + $0x2e0] sm:$0xf]
  %v200 = vld [vmem:[%s0 + $0x2e4] sm:$0xf]
  %v201 = vld [vmem:[%s0 + $0x2e8] sm:$0xf]
  %v202 = vld [vmem:[%s0 + $0x2ec] sm:$0xf]
  %v203 = vld [vmem:[%s0 + $0x2f0] sm:$0xf]
  %v204 = vld [vmem:[%s0 + $0x2f4] sm:$0xf]
  %v205 = vld [vmem:[%s0 + $0x2f8] sm:$0xf]
  %v206 = vld [vmem:[%s0 + $0x2fc] sm:$0xf]
  %v207 = vld [vmem:[%s0 + $0x300] sm:$0xf]
  %v208 = vld [vmem:[%s0 + $0x304] sm:$0xf]
  %v209 = vld [vmem:[%s0 + $0x308] sm:$0xf]
  %v210 = vld [vmem:[%s0 + $0x30c] sm:$0xf]
  %v211 = vld [vmem:[%s1] sm:$0xf]
  %v212 = vld [vmem:[%s1 + $0x4] sm:$0xf]
  %v213 = vld [vmem:[%s1 + $0x8] sm:$0xf]
  %v214 = vld [vmem:[%s1 + $0xc] sm:$0x1]
  %v215 = vld [vmem:[%s2] sm:$0x1]
  %v217 = vlaneseq
  %v218 = vshrl.u32 %v217, 7
  %v219 = vsub.s32 0, %v218
  %v220 = vrot.slane %v215, %v219
  %v418 = vunpack.c.l.b16 %v15
  %v419 = vunpack.c.l.b16 %v16
  %v420 = vunpack.c.l.b16 %v17
  %v421 = vunpack.c.l.b16 %v18
  %v422 = vunpack.c.l.b16 %v19
  %v423 = vunpack.c.l.b16 %v20
  %v424 = vunpack.c.l.b16 %v21
  %v425 = vunpack.c.l.b16 %v22
  %v426 = vunpack.c.l.b16 %v23
  %v427 = vunpack.c.l.b16 %v24
  %v428 = vunpack.c.l.b16 %v25
  %v429 = vunpack.c.l.b16 %v26
  %v430 = vunpack.c.l.b16 %v27
  %v431 = vunpack.c.l.b16 %v28
  %v432 = vunpack.c.l.b16 %v29
  %v433 = vunpack.c.l.b16 %v30
  %v434 = vunpack.c.l.b16 %v31
  %v435 = vunpack.c.l.b16 %v32
  %v436 = vunpack.c.l.b16 %v33
  %v437 = vunpack.c.l.b16 %v34
  %v438 = vunpack.c.l.b16 %v35
  %v439 = vunpack.c.l.b16 %v36
  %v440 = vunpack.c.l.b16 %v37
  %v441 = vunpack.c.l.b16 %v38
  %v442 = vunpack.c.l.b16 %v39
  %v443 = vunpack.c.l.b16 %v40
  %v444 = vunpack.c.l.b16 %v41
  %v445 = vunpack.c.l.b16 %v42
  %v446 = vunpack.c.l.b16 %v43
  %v447 = vunpack.c.l.b16 %v44
  %v448 = vunpack.c.l.b16 %v45
  %v449 = vunpack.c.l.b16 %v46
  %v450 = vunpack.c.l.b16 %v47
  %v451 = vunpack.c.l.b16 %v48
  %v452 = vunpack.c.l.b16 %v49
  %v453 = vunpack.c.l.b16 %v50
  %v454 = vunpack.c.l.b16 %v51
  %v455 = vunpack.c.l.b16 %v52
  %v456 = vunpack.c.l.b16 %v53
  %v457 = vunpack.c.l.b16 %v54
  %v458 = vunpack.c.l.b16 %v55
  %v459 = vunpack.c.l.b16 %v56
  %v460 = vunpack.c.l.b16 %v57
  %v461 = vunpack.c.l.b16 %v58
  %v462 = vunpack.c.l.b16 %v59
  %v463 = vunpack.c.l.b16 %v60
  %v464 = vunpack.c.l.b16 %v61
  %v465 = vunpack.c.l.b16 %v62
  %v466 = vunpack.c.l.b16 %v63
  %v467 = vunpack.c.l.b16 %v64
  %v468 = vunpack.c.l.b16 %v65
  %v469 = vunpack.c.l.b16 %v66
  %v470 = vunpack.c.l.b16 %v67
  %v471 = vunpack.c.l.b16 %v68
  %v472 = vunpack.c.l.b16 %v69
  %v473 = vunpack.c.l.b16 %v70
  %v474 = vunpack.c.l.b16 %v71
  %v475 = vunpack.c.l.b16 %v72
  %v476 = vunpack.c.l.b16 %v73
  %v477 = vunpack.c.l.b16 %v74
  %v478 = vunpack.c.l.b16 %v75
  %v479 = vunpack.c.l.b16 %v76
  %v480 = vunpack.c.l.b16 %v77
  %v481 = vunpack.c.l.b16 %v78
  %v482 = vunpack.c.l.b16 %v79
  %v483 = vunpack.c.l.b16 %v80
  %v484 = vunpack.c.l.b16 %v81
  %v485 = vunpack.c.l.b16 %v82
  %v486 = vunpack.c.l.b16 %v83
  %v487 = vunpack.c.l.b16 %v84
  %v488 = vunpack.c.l.b16 %v85
  %v489 = vunpack.c.l.b16 %v86
  %v490 = vunpack.c.l.b16 %v87
  %v491 = vunpack.c.l.b16 %v88
  %v492 = vunpack.c.l.b16 %v89
  %v493 = vunpack.c.l.b16 %v90
  %v494 = vunpack.c.l.b16 %v91
  %v495 = vunpack.c.l.b16 %v92
  %v496 = vunpack.c.l.b16 %v93
  %v497 = vunpack.c.l.b16 %v94
  %v498 = vunpack.c.l.b16 %v95
  %v499 = vunpack.c.l.b16 %v96
  %v500 = vunpack.c.l.b16 %v97
  %v501 = vunpack.c.l.b16 %v98
  %v502 = vunpack.c.l.b16 %v99
  %v503 = vunpack.c.l.b16 %v100
  %v504 = vunpack.c.l.b16 %v101
  %v505 = vunpack.c.l.b16 %v102
  %v506 = vunpack.c.l.b16 %v103
  %v507 = vunpack.c.l.b16 %v104
  %v508 = vunpack.c.l.b16 %v105
  %v509 = vunpack.c.l.b16 %v106
  %v510 = vunpack.c.l.b16 %v107
  %v511 = vunpack.c.l.b16 %v108
  %v512 = vunpack.c.l.b16 %v109
  %v513 = vunpack.c.l.b16 %v110
  %v514 = vunpack.c.l.b16 %v111
  %v515 = vunpack.c.l.b16 %v112
  %v516 = vunpack.c.l.b16 %v113
  %v517 = vunpack.c.l.b16 %v114
  %v518 = vunpack.c.l.b16 %v115
  %v519 = vunpack.c.l.b16 %v116
  %v520 = vunpack.c.l.b16 %v117
  %v521 = vunpack.c.l.b16 %v118
  %v522 = vunpack.c.l.b16 %v119
  %v523 = vunpack.c.l.b16 %v120
  %v524 = vunpack.c.l.b16 %v121
  %v525 = vunpack.c.l.b16 %v122
  %v526 = vunpack.c.l.b16 %v123
  %v527 = vunpack.c.l.b16 %v124
  %v528 = vunpack.c.l.b16 %v125
  %v529 = vunpack.c.l.b16 %v126
  %v530 = vunpack.c.l.b16 %v127
  %v531 = vunpack.c.l.b16 %v128
  %v532 = vunpack.c.l.b16 %v129
  %v533 = vunpack.c.l.b16 %v130
  %v534 = vunpack.c.l.b16 %v131
  %v535 = vunpack.c.l.b16 %v132
  %v536 = vunpack.c.l.b16 %v133
  %v537 = vunpack.c.l.b16 %v134
  %v538 = vunpack.c.l.b16 %v135
  %v539 = vunpack.c.l.b16 %v136
  %v540 = vunpack.c.l.b16 %v137
  %v541 = vunpack.c.l.b16 %v138
  %v542 = vunpack.c.l.b16 %v139
  %v543 = vunpack.c.l.b16 %v140
  %v544 = vunpack.c.l.b16 %v141
  %v545 = vunpack.c.l.b16 %v142
  %v546 = vunpack.c.l.b16 %v143
  %v547 = vunpack.c.l.b16 %v144
  %v548 = vunpack.c.l.b16 %v145
  %v549 = vunpack.c.l.b16 %v146
  %v550 = vunpack.c.l.b16 %v147
  %v551 = vunpack.c.l.b16 %v148
  %v552 = vunpack.c.l.b16 %v149
  %v553 = vunpack.c.l.b16 %v150
  %v554 = vunpack.c.l.b16 %v151
  %v555 = vunpack.c.l.b16 %v152
  %v556 = vunpack.c.l.b16 %v153
  %v557 = vunpack.c.l.b16 %v154
  %v558 = vunpack.c.l.b16 %v155
  %v559 = vunpack.c.l.b16 %v156
  %v560 = vunpack.c.l.b16 %v157
  %v561 = vunpack.c.l.b16 %v158
  %v562 = vunpack.c.l.b16 %v159
  %v563 = vunpack.c.l.b16 %v160
  %v564 = vunpack.c.l.b16 %v161
  %v565 = vunpack.c.l.b16 %v162
  %v566 = vunpack.c.l.b16 %v163
  %v567 = vunpack.c.l.b16 %v164
  %v568 = vunpack.c.l.b16 %v165
  %v569 = vunpack.c.l.b16 %v166
  %v570 = vunpack.c.l.b16 %v167
  %v571 = vunpack.c.l.b16 %v168
  %v572 = vunpack.c.l.b16 %v169
  %v573 = vunpack.c.l.b16 %v170
  %v574 = vunpack.c.l.b16 %v171
  %v575 = vunpack.c.l.b16 %v172
  %v576 = vunpack.c.l.b16 %v173
  %v577 = vunpack.c.l.b16 %v174
  %v578 = vunpack.c.l.b16 %v175
  %v579 = vunpack.c.l.b16 %v176
  %v580 = vunpack.c.l.b16 %v177
  %v581 = vunpack.c.l.b16 %v178
  %v582 = vunpack.c.l.b16 %v179
  %v583 = vunpack.c.l.b16 %v180
  %v584 = vunpack.c.l.b16 %v181
  %v585 = vunpack.c.l.b16 %v182
  %v586 = vunpack.c.l.b16 %v183
  %v587 = vunpack.c.l.b16 %v184
  %v588 = vunpack.c.l.b16 %v185
  %v589 = vunpack.c.l.b16 %v186
  %v590 = vunpack.c.l.b16 %v187
  %v591 = vunpack.c.l.b16 %v188
  %v592 = vunpack.c.l.b16 %v189
  %v593 = vunpack.c.l.b16 %v190
  %v594 = vunpack.c.l.b16 %v191
  %v595 = vunpack.c.l.b16 %v192
  %v596 = vunpack.c.l.b16 %v193
  %v597 = vunpack.c.l.b16 %v194
  %v598 = vunpack.c.l.b16 %v195
  %v599 = vunpack.c.l.b16 %v196
  %v600 = vunpack.c.l.b16 %v197
  %v601 = vunpack.c.l.b16 %v198
  %v602 = vunpack.c.l.b16 %v199
  %v603 = vunpack.c.l.b16 %v200
  %v604 = vunpack.c.l.b16 %v201
  %v605 = vunpack.c.l.b16 %v202
  %v606 = vunpack.c.l.b16 %v203
  %v607 = vunpack.c.l.b16 %v204
  %v608 = vunpack.c.l.b16 %v205
  %v609 = vunpack.c.l.b16 %v206
  %v610 = vunpack.c.l.b16 %v207
  %v611 = vunpack.c.l.b16 %v208
  %v612 = vunpack.c.l.b16 %v209
  %v613 = vunpack.c.l.b16 %v210
  %v614 = vpack.c.b16 %v419, %v418
  %v615 = vpack.c.b16 %v421, %v420
  %v616 = vpack.c.b16 %v423, %v422
  %v617 = vpack.c.b16 %v425, %v424
  %v618 = vpack.c.b16 %v427, %v426
  %v619 = vpack.c.b16 %v429, %v428
  %v620 = vpack.c.b16 %v431, %v430
  %v621 = vpack.c.b16 %v433, %v432
  %v622 = vpack.c.b16 %v435, %v434
  %v623 = vpack.c.b16 %v437, %v436
  %v624 = vpack.c.b16 %v439, %v438
  %v625 = vpack.c.b16 %v441, %v440
  %v626 = vpack.c.b16 %v443, %v442
  %v627 = vpack.c.b16 %v445, %v444
  %v628 = vpack.c.b16 %v447, %v446
  %v629 = vpack.c.b16 %v449, %v448
  %v630 = vpack.c.b16 %v451, %v450
  %v631 = vpack.c.b16 %v453, %v452
  %v632 = vpack.c.b16 %v455, %v454
  %v633 = vpack.c.b16 %v457, %v456
  %v634 = vpack.c.b16 %v459, %v458
  %v635 = vpack.c.b16 %v461, %v460
  %v636 = vpack.c.b16 %v463, %v462
  %v637 = vpack.c.b16 %v465, %v464
  %v638 = vpack.c.b16 %v467, %v466
  %v639 = vpack.c.b16 %v469, %v468
  %v640 = vpack.c.b16 %v471, %v470
  %v641 = vpack.c.b16 %v473, %v472
  %v642 = vpack.c.b16 %v475, %v474
  %v643 = vpack.c.b16 %v477, %v476
  %v644 = vpack.c.b16 %v479, %v478
  %v645 = vpack.c.b16 %v481, %v480
  %v646 = vpack.c.b16 %v483, %v482
  %v647 = vpack.c.b16 %v485, %v484
  %v648 = vpack.c.b16 %v487, %v486
  %v649 = vpack.c.b16 %v489, %v488
  %v650 = vpack.c.b16 %v491, %v490
  %v651 = vpack.c.b16 %v493, %v492
  %v652 = vpack.c.b16 %v495, %v494
  %v653 = vpack.c.b16 %v497, %v496
  %v654 = vpack.c.b16 %v499, %v498
  %v655 = vpack.c.b16 %v501, %v500
  %v656 = vpack.c.b16 %v503, %v502
  %v657 = vpack.c.b16 %v505, %v504
  %v658 = vpack.c.b16 %v507, %v506
  %v659 = vpack.c.b16 %v509, %v508
  %v660 = vpack.c.b16 %v511, %v510
  %v661 = vpack.c.b16 %v513, %v512
  %v662 = vpack.c.b16 %v515, %v514
  %v663 = vpack.c.b16 %v517, %v516
  %v664 = vpack.c.b16 %v519, %v518
  %v665 = vpack.c.b16 %v521, %v520
  %v666 = vpack.c.b16 %v523, %v522
  %v667 = vpack.c.b16 %v525, %v524
  %v668 = vpack.c.b16 %v527, %v526
  %v669 = vpack.c.b16 %v529, %v528
  %v670 = vpack.c.b16 %v531, %v530
  %v671 = vpack.c.b16 %v533, %v532
  %v672 = vpack.c.b16 %v535, %v534
  %v673 = vpack.c.b16 %v537, %v536
  %v674 = vpack.c.b16 %v539, %v538
  %v675 = vpack.c.b16 %v541, %v540
  %v676 = vpack.c.b16 %v543, %v542
  %v677 = vpack.c.b16 %v545, %v544
  %v678 = vpack.c.b16 %v547, %v546
  %v679 = vpack.c.b16 %v549, %v548
  %v680 = vpack.c.b16 %v551, %v550
  %v681 = vpack.c.b16 %v553, %v552
  %v682 = vpack.c.b16 %v555, %v554
  %v683 = vpack.c.b16 %v557, %v556
  %v684 = vpack.c.b16 %v559, %v558
  %v685 = vpack.c.b16 %v561, %v560
  %v686 = vpack.c.b16 %v563, %v562
  %v687 = vpack.c.b16 %v565, %v564
  %v688 = vpack.c.b16 %v567, %v566
  %v689 = vpack.c.b16 %v569, %v568
  %v690 = vpack.c.b16 %v571, %v570
  %v691 = vpack.c.b16 %v573, %v572
  %v692 = vpack.c.b16 %v575, %v574
  %v693 = vpack.c.b16 %v577, %v576
  %v694 = vpack.c.b16 %v579, %v578
  %v695 = vpack.c.b16 %v581, %v580
  %v696 = vpack.c.b16 %v583, %v582
  %v697 = vpack.c.b16 %v585, %v584
  %v698 = vpack.c.b16 %v587, %v586
  %v699 = vpack.c.b16 %v589, %v588
  %v700 = vpack.c.b16 %v591, %v590
  %v701 = vpack.c.b16 %v593, %v592
  %v702 = vpack.c.b16 %v595, %v594
  %v703 = vpack.c.b16 %v597, %v596
  %v704 = vpack.c.b16 %v599, %v598
  %v705 = vpack.c.b16 %v601, %v600
  %v706 = vpack.c.b16 %v603, %v602
  %v707 = vpack.c.b16 %v605, %v604
  %v708 = vpack.c.b16 %v607, %v606
  %v709 = vpack.c.b16 %v609, %v608
  %v710 = vpack.c.b16 %v611, %v610
  %v711 = vpack.c.b16 %v613, %v612
  %v716 = vunpack.c.l.b16 %v211
  %v717 = vunpack.c.l.b16 %v212
  %v718 = vunpack.c.l.b16 %v213
  %v719 = vunpack.c.l.b16 %v214
  %v720 = vpack.c.b16 %v717, %v716
  %v721 = vpack.c.b16 %v719, %v718
  %vm723 = vcmask 203776
  %v725 = vsel %vm723, %v614, 0
  %v728 = vsel %vm723, %v615, 0
  %v731 = vsel %vm723, %v616, 0
  %v734 = vsel %vm723, %v617, 0
  %v737 = vsel %vm723, %v618, 0
  %v740 = vsel %vm723, %v619, 0
  %v743 = vsel %vm723, %v620, 0
  %v746 = vsel %vm723, %v621, 0
  %v749 = vsel %vm723, %v622, 0
  %v752 = vsel %vm723, %v623, 0
  %v755 = vsel %vm723, %v624, 0
  %v758 = vsel %vm723, %v625, 0
  %v761 = vsel %vm723, %v626, 0
  %v764 = vsel %vm723, %v627, 0
  %v767 = vsel %vm723, %v628, 0
  %v770 = vsel %vm723, %v629, 0
  %v773 = vsel %vm723, %v630, 0
  %v776 = vsel %vm723, %v631, 0
  %v779 = vsel %vm723, %v632, 0
  %v782 = vsel %vm723, %v633, 0
  %v785 = vsel %vm723, %v634, 0
  %v788 = vsel %vm723, %v635, 0
  %v791 = vsel %vm723, %v636, 0
  %v794 = vsel %vm723, %v637, 0
  %v797 = vsel %vm723, %v638, 0
  %v800 = vsel %vm723, %v639, 0
  %v803 = vsel %vm723, %v640, 0
  %v806 = vsel %vm723, %v641, 0
  %v809 = vsel %vm723, %v642, 0
  %v812 = vsel %vm723, %v643, 0
  %v815 = vsel %vm723, %v644, 0
  %v818 = vsel %vm723, %v645, 0
  %v821 = vsel %vm723, %v646, 0
  %v824 = vsel %vm723, %v647, 0
  %v827 = vsel %vm723, %v648, 0
  %v830 = vsel %vm723, %v649, 0
  %v833 = vsel %vm723, %v650, 0
  %v836 = vsel %vm723, %v651, 0
  %v839 = vsel %vm723, %v652, 0
  %v842 = vsel %vm723, %v653, 0
  %v845 = vsel %vm723, %v654, 0
  %v848 = vsel %vm723, %v655, 0
  %v851 = vsel %vm723, %v656, 0
  %v854 = vsel %vm723, %v657, 0
  %v857 = vsel %vm723, %v658, 0
  %v860 = vsel %vm723, %v659, 0
  %v863 = vsel %vm723, %v660, 0
  %v866 = vsel %vm723, %v661, 0
  %v869 = vsel %vm723, %v662, 0
  %v872 = vsel %vm723, %v663, 0
  %v875 = vsel %vm723, %v664, 0
  %v878 = vsel %vm723, %v665, 0
  %v881 = vsel %vm723, %v666, 0
  %v884 = vsel %vm723, %v667, 0
  %v887 = vsel %vm723, %v668, 0
  %v890 = vsel %vm723, %v669, 0
  %v893 = vsel %vm723, %v670, 0
  %v896 = vsel %vm723, %v671, 0
  %v899 = vsel %vm723, %v672, 0
  %v902 = vsel %vm723, %v673, 0
  %v905 = vsel %vm723, %v674, 0
  %v908 = vsel %vm723, %v675, 0
  %v911 = vsel %vm723, %v676, 0
  %v914 = vsel %vm723, %v677, 0
  %v917 = vsel %vm723, %v678, 0
  %v920 = vsel %vm723, %v679, 0
  %v923 = vsel %vm723, %v680, 0
  %v926 = vsel %vm723, %v681, 0
  %v929 = vsel %vm723, %v682, 0
  %v932 = vsel %vm723, %v683, 0
  %v935 = vsel %vm723, %v684, 0
  %v938 = vsel %vm723, %v685, 0
  %v941 = vsel %vm723, %v686, 0
  %v944 = vsel %vm723, %v687, 0
  %v947 = vsel %vm723, %v688, 0
  %v950 = vsel %vm723, %v689, 0
  %v953 = vsel %vm723, %v690, 0
  %v956 = vsel %vm723, %v691, 0
  %v959 = vsel %vm723, %v692, 0
  %v962 = vsel %vm723, %v693, 0
  %v965 = vsel %vm723, %v694, 0
  %v968 = vsel %vm723, %v695, 0
  %v971 = vsel %vm723, %v696, 0
  %v974 = vsel %vm723, %v697, 0
  %v977 = vsel %vm723, %v698, 0
  %v980 = vsel %vm723, %v699, 0
  %v983 = vsel %vm723, %v700, 0
  %v986 = vsel %vm723, %v701, 0
  %v989 = vsel %vm723, %v702, 0
  %v992 = vsel %vm723, %v703, 0
  %v995 = vsel %vm723, %v704, 0
  %v998 = vsel %vm723, %v705, 0
  %v1001 = vsel %vm723, %v706, 0
  %v1004 = vsel %vm723, %v707, 0
  %v1007 = vsel %vm723, %v708, 0
  %v1010 = vsel %vm723, %v709, 0
  %v1013 = vsel %vm723, %v710, 0
  %v1016 = vsel %vm723, %v711, 0
  %vm1018 = vcmask 1043456
  %vm1019 = vcmask 1044480
  %v1020 = vsel %vm1018, 4294967295, 65535
  %v1021 = vsel %vm1019, %v1020, 0
  %v1023 = vand.u32 %v721, %v1021
  %1025 = vmatprep.subr.bf16.mxu0 0
  %1026 = vmatpush1.bf16.msra.mxu0 0
  %1027 = vmatprep.subr.bf16.mxu0 0
  %1028 = vmatpush1.bf16.msra.mxu0 0
  %1029 = vmatprep.subr.bf16.mxu0 0
  %1030 = vmatpush1.bf16.msra.mxu0 0
  %1031 = vmatprep.subr.bf16.mxu0 0
  %1032 = vmatpush1.bf16.msra.mxu0 0
  %1033 = vmatprep.subr.bf16.mxu0 0
  %1034 = vmatpush1.bf16.msra.mxu0 0
  %1035 = vmatprep.subr.bf16.mxu0 0
  %1036 = vmatpush1.bf16.msra.mxu0 0
  %1037 = vmatprep.subr.bf16.mxu0 0
  %1038 = vmatpush1.bf16.msra.mxu0 %v1023
  %1039 = vmatprep.subr.bf16.mxu0 0
  %1040 = vmatpush1.bf16.msra.mxu0 %v720
  %1041 = vmatprep.subr.bf16.mxu0 0
  %1042 = vmatpush2.bf16.msra.mxu0 0
  %1043 = vmatprep.subr.bf16.mxu0 0
  %1044 = vmatpush2.bf16.msra.mxu0 0
  %1045 = vmatprep.subr.bf16.mxu0 0
  %1046 = vmatpush2.bf16.msra.mxu0 0
  %1047 = vmatprep.subr.bf16.mxu0 0
  %1048 = vmatpush2.bf16.msra.mxu0 0
  %1049 = vmatprep.subr.bf16.mxu0 0
  %1050 = vmatpush2.bf16.msra.mxu0 0
  %1051 = vmatprep.subr.bf16.mxu0 0
  %1052 = vmatpush2.bf16.msra.mxu0 0
  %1053 = vmatprep.subr.bf16.mxu0 0
  %1054 = vmatpush2.bf16.msra.mxu0 0
  %1055 = vmatprep.subr.bf16.mxu0 0
  %1056 = vmatpush2.bf16.msra.mxu0 0
  %1057 = vmatprep.mubr.bf16.mxu0 0
  %1058 = vmatmul.mubr.bf16.gmra.mxu0 %v725
  %v1059 = vpop.f32.mrf.mxu0
  %v1060 = vadd.f32 %v220, %v1059
  %v1061 = vpop.f32.mrf.mxu0
  %v1062 = vpop.f32.mrf.mxu0
  %v1063 = vadd.f32 %v220, %v1062
  %v1064 = vpop.f32.mrf.mxu0
  %1065 = vmatprep.mubr.bf16.mxu0 0
  %1066 = vmatmul.mubr.bf16.gmra.mxu0 %v728
  %v1067 = vpop.f32.mrf.mxu0
  %v1068 = vadd.f32 %v220, %v1067
  %v1069 = vpop.f32.mrf.mxu0
  %v1070 = vpop.f32.mrf.mxu0
  %v1071 = vadd.f32 %v220, %v1070
  %v1072 = vpop.f32.mrf.mxu0
  %1073 = vmatprep.mubr.bf16.mxu0 0
  %1074 = vmatmul.mubr.bf16.gmra.mxu0 %v731
  %v1075 = vpop.f32.mrf.mxu0
  %v1076 = vadd.f32 %v220, %v1075
  %v1077 = vpop.f32.mrf.mxu0
  %v1078 = vpop.f32.mrf.mxu0
  %v1079 = vadd.f32 %v220, %v1078
  %v1080 = vpop.f32.mrf.mxu0
  %1081 = vmatprep.mubr.bf16.mxu0 0
  %1082 = vmatmul.mubr.bf16.gmra.mxu0 %v734
  %v1083 = vpop.f32.mrf.mxu0
  %v1084 = vadd.f32 %v220, %v1083
  %v1085 = vpop.f32.mrf.mxu0
  %v1086 = vpop.f32.mrf.mxu0
  %v1087 = vadd.f32 %v220, %v1086
  %v1088 = vpop.f32.mrf.mxu0
  %1089 = vmatprep.mubr.bf16.mxu0 0
  %1090 = vmatmul.mubr.bf16.gmra.mxu0 %v737
  %v1091 = vpop.f32.mrf.mxu0
  %v1092 = vadd.f32 %v220, %v1091
  %v1093 = vpop.f32.mrf.mxu0
  %v1094 = vpop.f32.mrf.mxu0
  %v1095 = vadd.f32 %v220, %v1094
  %v1096 = vpop.f32.mrf.mxu0
  %1097 = vmatprep.mubr.bf16.mxu0 0
  %1098 = vmatmul.mubr.bf16.gmra.mxu0 %v740
  %v1099 = vpop.f32.mrf.mxu0
  %v1100 = vadd.f32 %v220, %v1099
  %v1101 = vpop.f32.mrf.mxu0
  %v1102 = vpop.f32.mrf.mxu0
  %v1103 = vadd.f32 %v220, %v1102
  %v1104 = vpop.f32.mrf.mxu0
  %1105 = vmatprep.mubr.bf16.mxu0 0
  %1106 = vmatmul.mubr.bf16.gmra.mxu0 %v743
  %v1107 = vpop.f32.mrf.mxu0
  %v1108 = vadd.f32 %v220, %v1107
  %v1109 = vpop.f32.mrf.mxu0
  %v1110 = vpop.f32.mrf.mxu0
  %v1111 = vadd.f32 %v220, %v1110
  %v1112 = vpop.f32.mrf.mxu0
  %1113 = vmatprep.mubr.bf16.mxu0 0
  %1114 = vmatmul.mubr.bf16.gmra.mxu0 %v746
  %v1115 = vpop.f32.mrf.mxu0
  %v1116 = vadd.f32 %v220, %v1115
  %v1117 = vpop.f32.mrf.mxu0
  %v1118 = vpop.f32.mrf.mxu0
  %v1119 = vadd.f32 %v220, %v1118
  %v1120 = vpop.f32.mrf.mxu0
  %1121 = vmatprep.mubr.bf16.mxu0 0
  %1122 = vmatmul.mubr.bf16.gmra.mxu0 %v749
  %v1123 = vpop.f32.mrf.mxu0
  %v1124 = vadd.f32 %v220, %v1123
  %v1125 = vpop.f32.mrf.mxu0
  %v1126 = vpop.f32.mrf.mxu0
  %v1127 = vadd.f32 %v220, %v1126
  %v1128 = vpop.f32.mrf.mxu0
  %1129 = vmatprep.mubr.bf16.mxu0 0
  %1130 = vmatmul.mubr.bf16.gmra.mxu0 %v752
  %v1131 = vpop.f32.mrf.mxu0
  %v1132 = vadd.f32 %v220, %v1131
  %v1133 = vpop.f32.mrf.mxu0
  %v1134 = vpop.f32.mrf.mxu0
  %v1135 = vadd.f32 %v220, %v1134
  %v1136 = vpop.f32.mrf.mxu0
  %1137 = vmatprep.mubr.bf16.mxu0 0
  %1138 = vmatmul.mubr.bf16.gmra.mxu0 %v755
  %v1139 = vpop.f32.mrf.mxu0
  %v1140 = vadd.f32 %v220, %v1139
  %v1141 = vpop.f32.mrf.mxu0
  %v1142 = vpop.f32.mrf.mxu0
  %v1143 = vadd.f32 %v220, %v1142
  %v1144 = vpop.f32.mrf.mxu0
  %1145 = vmatprep.mubr.bf16.mxu0 0
  %1146 = vmatmul.mubr.bf16.gmra.mxu0 %v758
  %v1147 = vpop.f32.mrf.mxu0
  %v1148 = vadd.f32 %v220, %v1147
  %v1149 = vpop.f32.mrf.mxu0
  %v1150 = vpop.f32.mrf.mxu0
  %v1151 = vadd.f32 %v220, %v1150
  %v1152 = vpop.f32.mrf.mxu0
  %1153 = vmatprep.mubr.bf16.mxu0 0
  %1154 = vmatmul.mubr.bf16.gmra.mxu0 %v761
  %v1155 = vpop.f32.mrf.mxu0
  %v1156 = vadd.f32 %v220, %v1155
  %v1157 = vpop.f32.mrf.mxu0
  %v1158 = vpop.f32.mrf.mxu0
  %v1159 = vadd.f32 %v220, %v1158
  %v1160 = vpop.f32.mrf.mxu0
  %1161 = vmatprep.mubr.bf16.mxu0 0
  %1162 = vmatmul.mubr.bf16.gmra.mxu0 %v764
  %v1163 = vpop.f32.mrf.mxu0
  %v1164 = vadd.f32 %v220, %v1163
  %v1165 = vpop.f32.mrf.mxu0
  %v1166 = vpop.f32.mrf.mxu0
  %v1167 = vadd.f32 %v220, %v1166
  %v1168 = vpop.f32.mrf.mxu0
  %1169 = vmatprep.mubr.bf16.mxu0 0
  %1170 = vmatmul.mubr.bf16.gmra.mxu0 %v767
  %v1171 = vpop.f32.mrf.mxu0
  %v1172 = vadd.f32 %v220, %v1171
  %v1173 = vpop.f32.mrf.mxu0
  %v1174 = vpop.f32.mrf.mxu0
  %v1175 = vadd.f32 %v220, %v1174
  %v1176 = vpop.f32.mrf.mxu0
  %1177 = vmatprep.mubr.bf16.mxu0 0
  %1178 = vmatmul.mubr.bf16.gmra.mxu0 %v770
  %v1179 = vpop.f32.mrf.mxu0
  %v1180 = vadd.f32 %v220, %v1179
  %v1181 = vpop.f32.mrf.mxu0
  %v1182 = vpop.f32.mrf.mxu0
  %v1183 = vadd.f32 %v220, %v1182
  %v1184 = vpop.f32.mrf.mxu0
  %1185 = vmatprep.mubr.bf16.mxu0 0
  %1186 = vmatmul.mubr.bf16.gmra.mxu0 %v773
  %v1187 = vpop.f32.mrf.mxu0
  %v1188 = vadd.f32 %v220, %v1187
  %v1189 = vpop.f32.mrf.mxu0
  %v1190 = vpop.f32.mrf.mxu0
  %v1191 = vadd.f32 %v220, %v1190
  %v1192 = vpop.f32.mrf.mxu0
  %1193 = vmatprep.mubr.bf16.mxu0 0
  %1194 = vmatmul.mubr.bf16.gmra.mxu0 %v776
  %v1195 = vpop.f32.mrf.mxu0
  %v1196 = vadd.f32 %v220, %v1195
  %v1197 = vpop.f32.mrf.mxu0
  %v1198 = vpop.f32.mrf.mxu0
  %v1199 = vadd.f32 %v220, %v1198
  %v1200 = vpop.f32.mrf.mxu0
  %1201 = vmatprep.mubr.bf16.mxu0 0
  %1202 = vmatmul.mubr.bf16.gmra.mxu0 %v779
  %v1203 = vpop.f32.mrf.mxu0
  %v1204 = vadd.f32 %v220, %v1203
  %v1205 = vpop.f32.mrf.mxu0
  %v1206 = vpop.f32.mrf.mxu0
  %v1207 = vadd.f32 %v220, %v1206
  %v1208 = vpop.f32.mrf.mxu0
  %1209 = vmatprep.mubr.bf16.mxu0 0
  %1210 = vmatmul.mubr.bf16.gmra.mxu0 %v782
  %v1211 = vpop.f32.mrf.mxu0
  %v1212 = vadd.f32 %v220, %v1211
  %v1213 = vpop.f32.mrf.mxu0
  %v1214 = vpop.f32.mrf.mxu0
  %v1215 = vadd.f32 %v220, %v1214
  %v1216 = vpop.f32.mrf.mxu0
  %1217 = vmatprep.mubr.bf16.mxu0 0
  %1218 = vmatmul.mubr.bf16.gmra.mxu0 %v785
  %v1219 = vpop.f32.mrf.mxu0
  %v1220 = vadd.f32 %v220, %v1219
  %v1221 = vpop.f32.mrf.mxu0
  %v1222 = vpop.f32.mrf.mxu0
  %v1223 = vadd.f32 %v220, %v1222
  %v1224 = vpop.f32.mrf.mxu0
  %1225 = vmatprep.mubr.bf16.mxu0 0
  %1226 = vmatmul.mubr.bf16.gmra.mxu0 %v788
  %v1227 = vpop.f32.mrf.mxu0
  %v1228 = vadd.f32 %v220, %v1227
  %v1229 = vpop.f32.mrf.mxu0
  %v1230 = vpop.f32.mrf.mxu0
  %v1231 = vadd.f32 %v220, %v1230
  %v1232 = vpop.f32.mrf.mxu0
  %1233 = vmatprep.mubr.bf16.mxu0 0
  %1234 = vmatmul.mubr.bf16.gmra.mxu0 %v791
  %v1235 = vpop.f32.mrf.mxu0
  %v1236 = vadd.f32 %v220, %v1235
  %v1237 = vpop.f32.mrf.mxu0
  %v1238 = vpop.f32.mrf.mxu0
  %v1239 = vadd.f32 %v220, %v1238
  %v1240 = vpop.f32.mrf.mxu0
  %1241 = vmatprep.mubr.bf16.mxu0 0
  %1242 = vmatmul.mubr.bf16.gmra.mxu0 %v794
  %v1243 = vpop.f32.mrf.mxu0
  %v1244 = vadd.f32 %v220, %v1243
  %v1245 = vpop.f32.mrf.mxu0
  %v1246 = vpop.f32.mrf.mxu0
  %v1247 = vadd.f32 %v220, %v1246
  %v1248 = vpop.f32.mrf.mxu0
  %1249 = vmatprep.mubr.bf16.mxu0 0
  %1250 = vmatmul.mubr.bf16.gmra.mxu0 %v797
  %v1251 = vpop.f32.mrf.mxu0
  %v1252 = vadd.f32 %v220, %v1251
  %v1253 = vpop.f32.mrf.mxu0
  %v1254 = vpop.f32.mrf.mxu0
  %v1255 = vadd.f32 %v220, %v1254
  %v1256 = vpop.f32.mrf.mxu0
  %1257 = vmatprep.mubr.bf16.mxu0 0
  %1258 = vmatmul.mubr.bf16.gmra.mxu0 %v800
  %v1259 = vpop.f32.mrf.mxu0
  %v1260 = vadd.f32 %v220, %v1259
  %v1261 = vpop.f32.mrf.mxu0
  %v1262 = vpop.f32.mrf.mxu0
  %v1263 = vadd.f32 %v220, %v1262
  %v1264 = vpop.f32.mrf.mxu0
  %1265 = vmatprep.mubr.bf16.mxu0 0
  %1266 = vmatmul.mubr.bf16.gmra.mxu0 %v803
  %v1267 = vpop.f32.mrf.mxu0
  %v1268 = vadd.f32 %v220, %v1267
  %v1269 = vpop.f32.mrf.mxu0
  %v1270 = vpop.f32.mrf.mxu0
  %v1271 = vadd.f32 %v220, %v1270
  %v1272 = vpop.f32.mrf.mxu0
  %1273 = vmatprep.mubr.bf16.mxu0 0
  %1274 = vmatmul.mubr.bf16.gmra.mxu0 %v806
  %v1275 = vpop.f32.mrf.mxu0
  %v1276 = vadd.f32 %v220, %v1275
  %v1277 = vpop.f32.mrf.mxu0
  %v1278 = vpop.f32.mrf.mxu0
  %v1279 = vadd.f32 %v220, %v1278
  %v1280 = vpop.f32.mrf.mxu0
  %1281 = vmatprep.mubr.bf16.mxu0 0
  %1282 = vmatmul.mubr.bf16.gmra.mxu0 %v809
  %v1283 = vpop.f32.mrf.mxu0
  %v1284 = vadd.f32 %v220, %v1283
  %v1285 = vpop.f32.mrf.mxu0
  %v1286 = vpop.f32.mrf.mxu0
  %v1287 = vadd.f32 %v220, %v1286
  %v1288 = vpop.f32.mrf.mxu0
  %1289 = vmatprep.mubr.bf16.mxu0 0
  %1290 = vmatmul.mubr.bf16.gmra.mxu0 %v812
  %v1291 = vpop.f32.mrf.mxu0
  %v1292 = vadd.f32 %v220, %v1291
  %v1293 = vpop.f32.mrf.mxu0
  %v1294 = vpop.f32.mrf.mxu0
  %v1295 = vadd.f32 %v220, %v1294
  %v1296 = vpop.f32.mrf.mxu0
  %1297 = vmatprep.mubr.bf16.mxu0 0
  %1298 = vmatmul.mubr.bf16.gmra.mxu0 %v815
  %v1299 = vpop.f32.mrf.mxu0
  %v1300 = vadd.f32 %v220, %v1299
  %v1301 = vpop.f32.mrf.mxu0
  %v1302 = vpop.f32.mrf.mxu0
  %v1303 = vadd.f32 %v220, %v1302
  %v1304 = vpop.f32.mrf.mxu0
  %1305 = vmatprep.mubr.bf16.mxu0 0
  %1306 = vmatmul.mubr.bf16.gmra.mxu0 %v818
  %v1307 = vpop.f32.mrf.mxu0
  %v1308 = vadd.f32 %v220, %v1307
  %v1309 = vpop.f32.mrf.mxu0
  %v1310 = vpop.f32.mrf.mxu0
  %v1311 = vadd.f32 %v220, %v1310
  %v1312 = vpop.f32.mrf.mxu0
  %1313 = vmatprep.mubr.bf16.mxu0 0
  %1314 = vmatmul.mubr.bf16.gmra.mxu0 %v821
  %v1315 = vpop.f32.mrf.mxu0
  %v1316 = vadd.f32 %v220, %v1315
  %v1317 = vpop.f32.mrf.mxu0
  %v1318 = vpop.f32.mrf.mxu0
  %v1319 = vadd.f32 %v220, %v1318
  %v1320 = vpop.f32.mrf.mxu0
  %1321 = vmatprep.mubr.bf16.mxu0 0
  %1322 = vmatmul.mubr.bf16.gmra.mxu0 %v824
  %v1323 = vpop.f32.mrf.mxu0
  %v1324 = vadd.f32 %v220, %v1323
  %v1325 = vpop.f32.mrf.mxu0
  %v1326 = vpop.f32.mrf.mxu0
  %v1327 = vadd.f32 %v220, %v1326
  %v1328 = vpop.f32.mrf.mxu0
  %1329 = vmatprep.mubr.bf16.mxu0 0
  %1330 = vmatmul.mubr.bf16.gmra.mxu0 %v827
  %v1331 = vpop.f32.mrf.mxu0
  %v1332 = vadd.f32 %v220, %v1331
  %v1333 = vpop.f32.mrf.mxu0
  %v1334 = vpop.f32.mrf.mxu0
  %v1335 = vadd.f32 %v220, %v1334
  %v1336 = vpop.f32.mrf.mxu0
  %1337 = vmatprep.mubr.bf16.mxu0 0
  %1338 = vmatmul.mubr.bf16.gmra.mxu0 %v830
  %v1339 = vpop.f32.mrf.mxu0
  %v1340 = vadd.f32 %v220, %v1339
  %v1341 = vpop.f32.mrf.mxu0
  %v1342 = vpop.f32.mrf.mxu0
  %v1343 = vadd.f32 %v220, %v1342
  %v1344 = vpop.f32.mrf.mxu0
  %1345 = vmatprep.mubr.bf16.mxu0 0
  %1346 = vmatmul.mubr.bf16.gmra.mxu0 %v833
  %v1347 = vpop.f32.mrf.mxu0
  %v1348 = vadd.f32 %v220, %v1347
  %v1349 = vpop.f32.mrf.mxu0
  %v1350 = vpop.f32.mrf.mxu0
  %v1351 = vadd.f32 %v220, %v1350
  %v1352 = vpop.f32.mrf.mxu0
  %1353 = vmatprep.mubr.bf16.mxu0 0
  %1354 = vmatmul.mubr.bf16.gmra.mxu0 %v836
  %v1355 = vpop.f32.mrf.mxu0
  %v1356 = vadd.f32 %v220, %v1355
  %v1357 = vpop.f32.mrf.mxu0
  %v1358 = vpop.f32.mrf.mxu0
  %v1359 = vadd.f32 %v220, %v1358
  %v1360 = vpop.f32.mrf.mxu0
  %1361 = vmatprep.mubr.bf16.mxu0 0
  %1362 = vmatmul.mubr.bf16.gmra.mxu0 %v839
  %v1363 = vpop.f32.mrf.mxu0
  %v1364 = vadd.f32 %v220, %v1363
  %v1365 = vpop.f32.mrf.mxu0
  %v1366 = vpop.f32.mrf.mxu0
  %v1367 = vadd.f32 %v220, %v1366
  %v1368 = vpop.f32.mrf.mxu0
  %1369 = vmatprep.mubr.bf16.mxu0 0
  %1370 = vmatmul.mubr.bf16.gmra.mxu0 %v842
  %v1371 = vpop.f32.mrf.mxu0
  %v1372 = vadd.f32 %v220, %v1371
  %v1373 = vpop.f32.mrf.mxu0
  %v1374 = vpop.f32.mrf.mxu0
  %v1375 = vadd.f32 %v220, %v1374
  %v1376 = vpop.f32.mrf.mxu0
  %1377 = vmatprep.mubr.bf16.mxu0 0
  %1378 = vmatmul.mubr.bf16.gmra.mxu0 %v845
  %v1379 = vpop.f32.mrf.mxu0
  %v1380 = vadd.f32 %v220, %v1379
  %v1381 = vpop.f32.mrf.mxu0
  %v1382 = vpop.f32.mrf.mxu0
  %v1383 = vadd.f32 %v220, %v1382
  %v1384 = vpop.f32.mrf.mxu0
  %1385 = vmatprep.mubr.bf16.mxu0 0
  %1386 = vmatmul.mubr.bf16.gmra.mxu0 %v848
  %v1387 = vpop.f32.mrf.mxu0
  %v1388 = vadd.f32 %v220, %v1387
  %v1389 = vpop.f32.mrf.mxu0
  %v1390 = vpop.f32.mrf.mxu0
  %v1391 = vadd.f32 %v220, %v1390
  %v1392 = vpop.f32.mrf.mxu0
  %1393 = vmatprep.mubr.bf16.mxu0 0
  %1394 = vmatmul.mubr.bf16.gmra.mxu0 %v851
  %v1395 = vpop.f32.mrf.mxu0
  %v1396 = vadd.f32 %v220, %v1395
  %v1397 = vpop.f32.mrf.mxu0
  %v1398 = vpop.f32.mrf.mxu0
  %v1399 = vadd.f32 %v220, %v1398
  %v1400 = vpop.f32.mrf.mxu0
  %1401 = vmatprep.mubr.bf16.mxu0 0
  %1402 = vmatmul.mubr.bf16.gmra.mxu0 %v854
  %v1403 = vpop.f32.mrf.mxu0
  %v1404 = vadd.f32 %v220, %v1403
  %v1405 = vpop.f32.mrf.mxu0
  %v1406 = vpop.f32.mrf.mxu0
  %v1407 = vadd.f32 %v220, %v1406
  %v1408 = vpop.f32.mrf.mxu0
  %1409 = vmatprep.mubr.bf16.mxu0 0
  %1410 = vmatmul.mubr.bf16.gmra.mxu0 %v857
  %v1411 = vpop.f32.mrf.mxu0
  %v1412 = vadd.f32 %v220, %v1411
  %v1413 = vpop.f32.mrf.mxu0
  %v1414 = vpop.f32.mrf.mxu0
  %v1415 = vadd.f32 %v220, %v1414
  %v1416 = vpop.f32.mrf.mxu0
  %1417 = vmatprep.mubr.bf16.mxu0 0
  %1418 = vmatmul.mubr.bf16.gmra.mxu0 %v860
  %v1419 = vpop.f32.mrf.mxu0
  %v1420 = vadd.f32 %v220, %v1419
  %v1421 = vpop.f32.mrf.mxu0
  %v1422 = vpop.f32.mrf.mxu0
  %v1423 = vadd.f32 %v220, %v1422
  %v1424 = vpop.f32.mrf.mxu0
  %1425 = vmatprep.mubr.bf16.mxu0 0
  %1426 = vmatmul.mubr.bf16.gmra.mxu0 %v863
  %v1427 = vpop.f32.mrf.mxu0
  %v1428 = vadd.f32 %v220, %v1427
  %v1429 = vpop.f32.mrf.mxu0
  %v1430 = vpop.f32.mrf.mxu0
  %v1431 = vadd.f32 %v220, %v1430
  %v1432 = vpop.f32.mrf.mxu0
  %1433 = vmatprep.mubr.bf16.mxu0 0
  %1434 = vmatmul.mubr.bf16.gmra.mxu0 %v866
  %v1435 = vpop.f32.mrf.mxu0
  %v1436 = vadd.f32 %v220, %v1435
  %v1437 = vpop.f32.mrf.mxu0
  %v1438 = vpop.f32.mrf.mxu0
  %v1439 = vadd.f32 %v220, %v1438
  %v1440 = vpop.f32.mrf.mxu0
  %1441 = vmatprep.mubr.bf16.mxu0 0
  %1442 = vmatmul.mubr.bf16.gmra.mxu0 %v869
  %v1443 = vpop.f32.mrf.mxu0
  %v1444 = vadd.f32 %v220, %v1443
  %v1445 = vpop.f32.mrf.mxu0
  %v1446 = vpop.f32.mrf.mxu0
  %v1447 = vadd.f32 %v220, %v1446
  %v1448 = vpop.f32.mrf.mxu0
  %1449 = vmatprep.mubr.bf16.mxu0 0
  %1450 = vmatmul.mubr.bf16.gmra.mxu0 %v872
  %v1451 = vpop.f32.mrf.mxu0
  %v1452 = vadd.f32 %v220, %v1451
  %v1453 = vpop.f32.mrf.mxu0
  %v1454 = vpop.f32.mrf.mxu0
  %v1455 = vadd.f32 %v220, %v1454
  %v1456 = vpop.f32.mrf.mxu0
  %1457 = vmatprep.mubr.bf16.mxu0 0
  %1458 = vmatmul.mubr.bf16.gmra.mxu0 %v875
  %v1459 = vpop.f32.mrf.mxu0
  %v1460 = vadd.f32 %v220, %v1459
  %v1461 = vpop.f32.mrf.mxu0
  %v1462 = vpop.f32.mrf.mxu0
  %v1463 = vadd.f32 %v220, %v1462
  %v1464 = vpop.f32.mrf.mxu0
  %1465 = vmatprep.mubr.bf16.mxu0 0
  %1466 = vmatmul.mubr.bf16.gmra.mxu0 %v878
  %v1467 = vpop.f32.mrf.mxu0
  %v1468 = vadd.f32 %v220, %v1467
  %v1469 = vpop.f32.mrf.mxu0
  %v1470 = vpop.f32.mrf.mxu0
  %v1471 = vadd.f32 %v220, %v1470
  %v1472 = vpop.f32.mrf.mxu0
  %1473 = vmatprep.mubr.bf16.mxu0 0
  %1474 = vmatmul.mubr.bf16.gmra.mxu0 %v881
  %v1475 = vpop.f32.mrf.mxu0
  %v1476 = vadd.f32 %v220, %v1475
  %v1477 = vpop.f32.mrf.mxu0
  %v1478 = vpop.f32.mrf.mxu0
  %v1479 = vadd.f32 %v220, %v1478
  %v1480 = vpop.f32.mrf.mxu0
  %1481 = vmatprep.mubr.bf16.mxu0 0
  %1482 = vmatmul.mubr.bf16.gmra.mxu0 %v884
  %v1483 = vpop.f32.mrf.mxu0
  %v1484 = vadd.f32 %v220, %v1483
  %v1485 = vpop.f32.mrf.mxu0
  %v1486 = vpop.f32.mrf.mxu0
  %v1487 = vadd.f32 %v220, %v1486
  %v1488 = vpop.f32.mrf.mxu0
  %1489 = vmatprep.mubr.bf16.mxu0 0
  %1490 = vmatmul.mubr.bf16.gmra.mxu0 %v887
  %v1491 = vpop.f32.mrf.mxu0
  %v1492 = vadd.f32 %v220, %v1491
  %v1493 = vpop.f32.mrf.mxu0
  %v1494 = vpop.f32.mrf.mxu0
  %v1495 = vadd.f32 %v220, %v1494
  %v1496 = vpop.f32.mrf.mxu0
  %1497 = vmatprep.mubr.bf16.mxu0 0
  %1498 = vmatmul.mubr.bf16.gmra.mxu0 %v890
  %v1499 = vpop.f32.mrf.mxu0
  %v1500 = vadd.f32 %v220, %v1499
  %v1501 = vpop.f32.mrf.mxu0
  %v1502 = vpop.f32.mrf.mxu0
  %v1503 = vadd.f32 %v220, %v1502
  %v1504 = vpop.f32.mrf.mxu0
  %1505 = vmatprep.mubr.bf16.mxu0 0
  %1506 = vmatmul.mubr.bf16.gmra.mxu0 %v893
  %v1507 = vpop.f32.mrf.mxu0
  %v1508 = vadd.f32 %v220, %v1507
  %v1509 = vpop.f32.mrf.mxu0
  %v1510 = vpop.f32.mrf.mxu0
  %v1511 = vadd.f32 %v220, %v1510
  %v1512 = vpop.f32.mrf.mxu0
  %1513 = vmatprep.mubr.bf16.mxu0 0
  %1514 = vmatmul.mubr.bf16.gmra.mxu0 %v896
  %v1515 = vpop.f32.mrf.mxu0
  %v1516 = vadd.f32 %v220, %v1515
  %v1517 = vpop.f32.mrf.mxu0
  %v1518 = vpop.f32.mrf.mxu0
  %v1519 = vadd.f32 %v220, %v1518
  %v1520 = vpop.f32.mrf.mxu0
  %1521 = vmatprep.mubr.bf16.mxu0 0
  %1522 = vmatmul.mubr.bf16.gmra.mxu0 %v899
  %v1523 = vpop.f32.mrf.mxu0
  %v1524 = vadd.f32 %v220, %v1523
  %v1525 = vpop.f32.mrf.mxu0
  %v1526 = vpop.f32.mrf.mxu0
  %v1527 = vadd.f32 %v220, %v1526
  %v1528 = vpop.f32.mrf.mxu0
  %1529 = vmatprep.mubr.bf16.mxu0 0
  %1530 = vmatmul.mubr.bf16.gmra.mxu0 %v902
  %v1531 = vpop.f32.mrf.mxu0
  %v1532 = vadd.f32 %v220, %v1531
  %v1533 = vpop.f32.mrf.mxu0
  %v1534 = vpop.f32.mrf.mxu0
  %v1535 = vadd.f32 %v220, %v1534
  %v1536 = vpop.f32.mrf.mxu0
  %1537 = vmatprep.mubr.bf16.mxu0 0
  %1538 = vmatmul.mubr.bf16.gmra.mxu0 %v905
  %v1539 = vpop.f32.mrf.mxu0
  %v1540 = vadd.f32 %v220, %v1539
  %v1541 = vpop.f32.mrf.mxu0
  %v1542 = vpop.f32.mrf.mxu0
  %v1543 = vadd.f32 %v220, %v1542
  %v1544 = vpop.f32.mrf.mxu0
  %1545 = vmatprep.mubr.bf16.mxu0 0
  %1546 = vmatmul.mubr.bf16.gmra.mxu0 %v908
  %v1547 = vpop.f32.mrf.mxu0
  %v1548 = vadd.f32 %v220, %v1547
  %v1549 = vpop.f32.mrf.mxu0
  %v1550 = vpop.f32.mrf.mxu0
  %v1551 = vadd.f32 %v220, %v1550
  %v1552 = vpop.f32.mrf.mxu0
  %1553 = vmatprep.mubr.bf16.mxu0 0
  %1554 = vmatmul.mubr.bf16.gmra.mxu0 %v911
  %v1555 = vpop.f32.mrf.mxu0
  %v1556 = vadd.f32 %v220, %v1555
  %v1557 = vpop.f32.mrf.mxu0
  %v1558 = vpop.f32.mrf.mxu0
  %v1559 = vadd.f32 %v220, %v1558
  %v1560 = vpop.f32.mrf.mxu0
  %1561 = vmatprep.mubr.bf16.mxu0 0
  %1562 = vmatmul.mubr.bf16.gmra.mxu0 %v914
  %v1563 = vpop.f32.mrf.mxu0
  %v1564 = vadd.f32 %v220, %v1563
  %v1565 = vpop.f32.mrf.mxu0
  %v1566 = vpop.f32.mrf.mxu0
  %v1567 = vadd.f32 %v220, %v1566
  %v1568 = vpop.f32.mrf.mxu0
  %1569 = vmatprep.mubr.bf16.mxu0 0
  %1570 = vmatmul.mubr.bf16.gmra.mxu0 %v917
  %v1571 = vpop.f32.mrf.mxu0
  %v1572 = vadd.f32 %v220, %v1571
  %v1573 = vpop.f32.mrf.mxu0
  %v1574 = vpop.f32.mrf.mxu0
  %v1575 = vadd.f32 %v220, %v1574
  %v1576 = vpop.f32.mrf.mxu0
  %1577 = vmatprep.mubr.bf16.mxu0 0
  %1578 = vmatmul.mubr.bf16.gmra.mxu0 %v920
  %v1579 = vpop.f32.mrf.mxu0
  %v1580 = vadd.f32 %v220, %v1579
  %v1581 = vpop.f32.mrf.mxu0
  %v1582 = vpop.f32.mrf.mxu0
  %v1583 = vadd.f32 %v220, %v1582
  %v1584 = vpop.f32.mrf.mxu0
  %1585 = vmatprep.mubr.bf16.mxu0 0
  %1586 = vmatmul.mubr.bf16.gmra.mxu0 %v923
  %v1587 = vpop.f32.mrf.mxu0
  %v1588 = vadd.f32 %v220, %v1587
  %v1589 = vpop.f32.mrf.mxu0
  %v1590 = vpop.f32.mrf.mxu0
  %v1591 = vadd.f32 %v220, %v1590
  %v1592 = vpop.f32.mrf.mxu0
  %1593 = vmatprep.mubr.bf16.mxu0 0
  %1594 = vmatmul.mubr.bf16.gmra.mxu0 %v926
  %v1595 = vpop.f32.mrf.mxu0
  %v1596 = vadd.f32 %v220, %v1595
  %v1597 = vpop.f32.mrf.mxu0
  %v1598 = vpop.f32.mrf.mxu0
  %v1599 = vadd.f32 %v220, %v1598
  %v1600 = vpop.f32.mrf.mxu0
  %1601 = vmatprep.mubr.bf16.mxu0 0
  %1602 = vmatmul.mubr.bf16.gmra.mxu0 %v929
  %v1603 = vpop.f32.mrf.mxu0
  %v1604 = vadd.f32 %v220, %v1603
  %v1605 = vpop.f32.mrf.mxu0
  %v1606 = vpop.f32.mrf.mxu0
  %v1607 = vadd.f32 %v220, %v1606
  %v1608 = vpop.f32.mrf.mxu0
  %1609 = vmatprep.mubr.bf16.mxu0 0
  %1610 = vmatmul.mubr.bf16.gmra.mxu0 %v932
  %v1611 = vpop.f32.mrf.mxu0
  %v1612 = vadd.f32 %v220, %v1611
  %v1613 = vpop.f32.mrf.mxu0
  %v1614 = vpop.f32.mrf.mxu0
  %v1615 = vadd.f32 %v220, %v1614
  %v1616 = vpop.f32.mrf.mxu0
  %1617 = vmatprep.mubr.bf16.mxu0 0
  %1618 = vmatmul.mubr.bf16.gmra.mxu0 %v935
  %v1619 = vpop.f32.mrf.mxu0
  %v1620 = vadd.f32 %v220, %v1619
  %v1621 = vpop.f32.mrf.mxu0
  %v1622 = vpop.f32.mrf.mxu0
  %v1623 = vadd.f32 %v220, %v1622
  %v1624 = vpop.f32.mrf.mxu0
  %1625 = vmatprep.mubr.bf16.mxu0 0
  %1626 = vmatmul.mubr.bf16.gmra.mxu0 %v938
  %v1627 = vpop.f32.mrf.mxu0
  %v1628 = vadd.f32 %v220, %v1627
  %v1629 = vpop.f32.mrf.mxu0
  %v1630 = vpop.f32.mrf.mxu0
  %v1631 = vadd.f32 %v220, %v1630
  %v1632 = vpop.f32.mrf.mxu0
  %1633 = vmatprep.mubr.bf16.mxu0 0
  %1634 = vmatmul.mubr.bf16.gmra.mxu0 %v941
  %v1635 = vpop.f32.mrf.mxu0
  %v1636 = vadd.f32 %v220, %v1635
  %v1637 = vpop.f32.mrf.mxu0
  %v1638 = vpop.f32.mrf.mxu0
  %v1639 = vadd.f32 %v220, %v1638
  %v1640 = vpop.f32.mrf.mxu0
  %1641 = vmatprep.mubr.bf16.mxu0 0
  %1642 = vmatmul.mubr.bf16.gmra.mxu0 %v944
  %v1643 = vpop.f32.mrf.mxu0
  %v1644 = vadd.f32 %v220, %v1643
  %v1645 = vpop.f32.mrf.mxu0
  %v1646 = vpop.f32.mrf.mxu0
  %v1647 = vadd.f32 %v220, %v1646
  %v1648 = vpop.f32.mrf.mxu0
  %1649 = vmatprep.mubr.bf16.mxu0 0
  %1650 = vmatmul.mubr.bf16.gmra.mxu0 %v947
  %v1651 = vpop.f32.mrf.mxu0
  %v1652 = vadd.f32 %v220, %v1651
  %v1653 = vpop.f32.mrf.mxu0
  %v1654 = vpop.f32.mrf.mxu0
  %v1655 = vadd.f32 %v220, %v1654
  %v1656 = vpop.f32.mrf.mxu0
  %1657 = vmatprep.mubr.bf16.mxu0 0
  %1658 = vmatmul.mubr.bf16.gmra.mxu0 %v950
  %v1659 = vpop.f32.mrf.mxu0
  %v1660 = vadd.f32 %v220, %v1659
  %v1661 = vpop.f32.mrf.mxu0
  %v1662 = vpop.f32.mrf.mxu0
  %v1663 = vadd.f32 %v220, %v1662
  %v1664 = vpop.f32.mrf.mxu0
  %1665 = vmatprep.mubr.bf16.mxu0 0
  %1666 = vmatmul.mubr.bf16.gmra.mxu0 %v953
  %v1667 = vpop.f32.mrf.mxu0
  %v1668 = vadd.f32 %v220, %v1667
  %v1669 = vpop.f32.mrf.mxu0
  %v1670 = vpop.f32.mrf.mxu0
  %v1671 = vadd.f32 %v220, %v1670
  %v1672 = vpop.f32.mrf.mxu0
  %1673 = vmatprep.mubr.bf16.mxu0 0
  %1674 = vmatmul.mubr.bf16.gmra.mxu0 %v956
  %v1675 = vpop.f32.mrf.mxu0
  %v1676 = vadd.f32 %v220, %v1675
  %v1677 = vpop.f32.mrf.mxu0
  %v1678 = vpop.f32.mrf.mxu0
  %v1679 = vadd.f32 %v220, %v1678
  %v1680 = vpop.f32.mrf.mxu0
  %1681 = vmatprep.mubr.bf16.mxu0 0
  %1682 = vmatmul.mubr.bf16.gmra.mxu0 %v959
  %v1683 = vpop.f32.mrf.mxu0
  %v1684 = vadd.f32 %v220, %v1683
  %v1685 = vpop.f32.mrf.mxu0
  %v1686 = vpop.f32.mrf.mxu0
  %v1687 = vadd.f32 %v220, %v1686
  %v1688 = vpop.f32.mrf.mxu0
  %1689 = vmatprep.mubr.bf16.mxu0 0
  %1690 = vmatmul.mubr.bf16.gmra.mxu0 %v962
  %v1691 = vpop.f32.mrf.mxu0
  %v1692 = vadd.f32 %v220, %v1691
  %v1693 = vpop.f32.mrf.mxu0
  %v1694 = vpop.f32.mrf.mxu0
  %v1695 = vadd.f32 %v220, %v1694
  %v1696 = vpop.f32.mrf.mxu0
  %1697 = vmatprep.mubr.bf16.mxu0 0
  %1698 = vmatmul.mubr.bf16.gmra.mxu0 %v965
  %v1699 = vpop.f32.mrf.mxu0
  %v1700 = vadd.f32 %v220, %v1699
  %v1701 = vpop.f32.mrf.mxu0
  %v1702 = vpop.f32.mrf.mxu0
  %v1703 = vadd.f32 %v220, %v1702
  %v1704 = vpop.f32.mrf.mxu0
  %1705 = vmatprep.mubr.bf16.mxu0 0
  %1706 = vmatmul.mubr.bf16.gmra.mxu0 %v968
  %v1707 = vpop.f32.mrf.mxu0
  %v1708 = vadd.f32 %v220, %v1707
  %v1709 = vpop.f32.mrf.mxu0
  %v1710 = vpop.f32.mrf.mxu0
  %v1711 = vadd.f32 %v220, %v1710
  %v1712 = vpop.f32.mrf.mxu0
  %1713 = vmatprep.mubr.bf16.mxu0 0
  %1714 = vmatmul.mubr.bf16.gmra.mxu0 %v971
  %v1715 = vpop.f32.mrf.mxu0
  %v1716 = vadd.f32 %v220, %v1715
  %v1717 = vpop.f32.mrf.mxu0
  %v1718 = vpop.f32.mrf.mxu0
  %v1719 = vadd.f32 %v220, %v1718
  %v1720 = vpop.f32.mrf.mxu0
  %1721 = vmatprep.mubr.bf16.mxu0 0
  %1722 = vmatmul.mubr.bf16.gmra.mxu0 %v974
  %v1723 = vpop.f32.mrf.mxu0
  %v1724 = vadd.f32 %v220, %v1723
  %v1725 = vpop.f32.mrf.mxu0
  %v1726 = vpop.f32.mrf.mxu0
  %v1727 = vadd.f32 %v220, %v1726
  %v1728 = vpop.f32.mrf.mxu0
  %1729 = vmatprep.mubr.bf16.mxu0 0
  %1730 = vmatmul.mubr.bf16.gmra.mxu0 %v977
  %v1731 = vpop.f32.mrf.mxu0
  %v1732 = vadd.f32 %v220, %v1731
  %v1733 = vpop.f32.mrf.mxu0
  %v1734 = vpop.f32.mrf.mxu0
  %v1735 = vadd.f32 %v220, %v1734
  %v1736 = vpop.f32.mrf.mxu0
  %1737 = vmatprep.mubr.bf16.mxu0 0
  %1738 = vmatmul.mubr.bf16.gmra.mxu0 %v980
  %v1739 = vpop.f32.mrf.mxu0
  %v1740 = vadd.f32 %v220, %v1739
  %v1741 = vpop.f32.mrf.mxu0
  %v1742 = vpop.f32.mrf.mxu0
  %v1743 = vadd.f32 %v220, %v1742
  %v1744 = vpop.f32.mrf.mxu0
  %1745 = vmatprep.mubr.bf16.mxu0 0
  %1746 = vmatmul.mubr.bf16.gmra.mxu0 %v983
  %v1747 = vpop.f32.mrf.mxu0
  %v1748 = vadd.f32 %v220, %v1747
  %v1749 = vpop.f32.mrf.mxu0
  %v1750 = vpop.f32.mrf.mxu0
  %v1751 = vadd.f32 %v220, %v1750
  %v1752 = vpop.f32.mrf.mxu0
  %1753 = vmatprep.mubr.bf16.mxu0 0
  %1754 = vmatmul.mubr.bf16.gmra.mxu0 %v986
  %v1755 = vpop.f32.mrf.mxu0
  %v1756 = vadd.f32 %v220, %v1755
  %v1757 = vpop.f32.mrf.mxu0
  %v1758 = vpop.f32.mrf.mxu0
  %v1759 = vadd.f32 %v220, %v1758
  %v1760 = vpop.f32.mrf.mxu0
  %1761 = vmatprep.mubr.bf16.mxu0 0
  %1762 = vmatmul.mubr.bf16.gmra.mxu0 %v989
  %v1763 = vpop.f32.mrf.mxu0
  %v1764 = vadd.f32 %v220, %v1763
  %v1765 = vpop.f32.mrf.mxu0
  %v1766 = vpop.f32.mrf.mxu0
  %v1767 = vadd.f32 %v220, %v1766
  %v1768 = vpop.f32.mrf.mxu0
  %1769 = vmatprep.mubr.bf16.mxu0 0
  %1770 = vmatmul.mubr.bf16.gmra.mxu0 %v992
  %v1771 = vpop.f32.mrf.mxu0
  %v1772 = vadd.f32 %v220, %v1771
  %v1773 = vpop.f32.mrf.mxu0
  %v1774 = vpop.f32.mrf.mxu0
  %v1775 = vadd.f32 %v220, %v1774
  %v1776 = vpop.f32.mrf.mxu0
  %1777 = vmatprep.mubr.bf16.mxu0 0
  %1778 = vmatmul.mubr.bf16.gmra.mxu0 %v995
  %v1779 = vpop.f32.mrf.mxu0
  %v1780 = vadd.f32 %v220, %v1779
  %v1781 = vpop.f32.mrf.mxu0
  %v1782 = vpop.f32.mrf.mxu0
  %v1783 = vadd.f32 %v220, %v1782
  %v1784 = vpop.f32.mrf.mxu0
  %1785 = vmatprep.mubr.bf16.mxu0 0
  %1786 = vmatmul.mubr.bf16.gmra.mxu0 %v998
  %v1787 = vpop.f32.mrf.mxu0
  %v1788 = vadd.f32 %v220, %v1787
  %v1789 = vpop.f32.mrf.mxu0
  %v1790 = vpop.f32.mrf.mxu0
  %v1791 = vadd.f32 %v220, %v1790
  %v1792 = vpop.f32.mrf.mxu0
  %1793 = vmatprep.mubr.bf16.mxu0 0
  %1794 = vmatmul.mubr.bf16.gmra.mxu0 %v1001
  %v1795 = vpop.f32.mrf.mxu0
  %v1796 = vadd.f32 %v220, %v1795
  %v1797 = vpop.f32.mrf.mxu0
  %v1798 = vpop.f32.mrf.mxu0
  %v1799 = vadd.f32 %v220, %v1798
  %v1800 = vpop.f32.mrf.mxu0
  %1801 = vmatprep.mubr.bf16.mxu0 0
  %1802 = vmatmul.mubr.bf16.gmra.mxu0 %v1004
  %v1803 = vpop.f32.mrf.mxu0
  %v1804 = vadd.f32 %v220, %v1803
  %v1805 = vpop.f32.mrf.mxu0
  %v1806 = vpop.f32.mrf.mxu0
  %v1807 = vadd.f32 %v220, %v1806
  %v1808 = vpop.f32.mrf.mxu0
  %1809 = vmatprep.mubr.bf16.mxu0 0
  %1810 = vmatmul.mubr.bf16.gmra.mxu0 %v1007
  %v1811 = vpop.f32.mrf.mxu0
  %v1812 = vadd.f32 %v220, %v1811
  %v1813 = vpop.f32.mrf.mxu0
  %v1814 = vpop.f32.mrf.mxu0
  %v1815 = vadd.f32 %v220, %v1814
  %v1816 = vpop.f32.mrf.mxu0
  %1817 = vmatprep.mubr.bf16.mxu0 0
  %1818 = vmatmul.mubr.bf16.gmra.mxu0 %v1010
  %v1819 = vpop.f32.mrf.mxu0
  %v1820 = vadd.f32 %v220, %v1819
  %v1821 = vpop.f32.mrf.mxu0
  %v1822 = vpop.f32.mrf.mxu0
  %v1823 = vadd.f32 %v220, %v1822
  %v1824 = vpop.f32.mrf.mxu0
  %1825 = vmatprep.mubr.bf16.mxu0 0
  %1826 = vmatmul.mubr.bf16.gmra.mxu0 %v1013
  %v1827 = vpop.f32.mrf.mxu0
  %v1828 = vadd.f32 %v220, %v1827
  %v1829 = vpop.f32.mrf.mxu0
  %v1830 = vpop.f32.mrf.mxu0
  %v1831 = vadd.f32 %v220, %v1830
  %v1832 = vpop.f32.mrf.mxu0
  %1833 = vmatprep.mubr.bf16.mxu0 0
  %1834 = vmatmul.mubr.bf16.gmra.mxu0 %v1016
  %v1835 = vpop.f32.mrf.mxu0
  %v1836 = vadd.f32 %v220, %v1835
  %v1837 = vpop.f32.mrf.mxu0
  %v1838 = vpop.f32.mrf.mxu0
  %v1839 = vadd.f32 %v220, %v1838
  %v1840 = vpop.f32.mrf.mxu0
  %1841 = vdwg.mxu0
  %v1842 = vmax.f32 %v1060, 0.0
  %v1843 = vmax.f32 %v1063, 0.0
  %v1844 = vmax.f32 %v1068, 0.0
  %v1845 = vmax.f32 %v1071, 0.0
  %v1846 = vmax.f32 %v1076, 0.0
  %v1847 = vmax.f32 %v1079, 0.0
  %v1848 = vmax.f32 %v1084, 0.0
  %v1849 = vmax.f32 %v1087, 0.0
  %v1850 = vmax.f32 %v1092, 0.0
  %v1851 = vmax.f32 %v1095, 0.0
  %v1852 = vmax.f32 %v1100, 0.0
  %v1853 = vmax.f32 %v1103, 0.0
  %v1854 = vmax.f32 %v1108, 0.0
  %v1855 = vmax.f32 %v1111, 0.0
  %v1856 = vmax.f32 %v1116, 0.0
  %v1857 = vmax.f32 %v1119, 0.0
  %v1858 = vmax.f32 %v1124, 0.0
  %v1859 = vmax.f32 %v1127, 0.0
  %v1860 = vmax.f32 %v1132, 0.0
  %v1861 = vmax.f32 %v1135, 0.0
  %v1862 = vmax.f32 %v1140, 0.0
  %v1863 = vmax.f32 %v1143, 0.0
  %v1864 = vmax.f32 %v1148, 0.0
  %v1865 = vmax.f32 %v1151, 0.0
  %v1866 = vmax.f32 %v1156, 0.0
  %v1867 = vmax.f32 %v1159, 0.0
  %v1868 = vmax.f32 %v1164, 0.0
  %v1869 = vmax.f32 %v1167, 0.0
  %v1870 = vmax.f32 %v1172, 0.0
  %v1871 = vmax.f32 %v1175, 0.0
  %v1872 = vmax.f32 %v1180, 0.0
  %v1873 = vmax.f32 %v1183, 0.0
  %v1874 = vmax.f32 %v1188, 0.0
  %v1875 = vmax.f32 %v1191, 0.0
  %v1876 = vmax.f32 %v1196, 0.0
  %v1877 = vmax.f32 %v1199, 0.0
  %v1878 = vmax.f32 %v1204, 0.0
  %v1879 = vmax.f32 %v1207, 0.0
  %v1880 = vmax.f32 %v1212, 0.0
  %v1881 = vmax.f32 %v1215, 0.0
  %v1882 = vmax.f32 %v1220, 0.0
  %v1883 = vmax.f32 %v1223, 0.0
  %v1884 = vmax.f32 %v1228, 0.0
  %v1885 = vmax.f32 %v1231, 0.0
  %v1886 = vmax.f32 %v1236, 0.0
  %v1887 = vmax.f32 %v1239, 0.0
  %v1888 = vmax.f32 %v1244, 0.0
  %v1889 = vmax.f32 %v1247, 0.0
  %v1890 = vmax.f32 %v1252, 0.0
  %v1891 = vmax.f32 %v1255, 0.0
  %v1892 = vmax.f32 %v1260, 0.0
  %v1893 = vmax.f32 %v1263, 0.0
  %v1894 = vmax.f32 %v1268, 0.0
  %v1895 = vmax.f32 %v1271, 0.0
  %v1896 = vmax.f32 %v1276, 0.0
  %v1897 = vmax.f32 %v1279, 0.0
  %v1898 = vmax.f32 %v1284, 0.0
  %v1899 = vmax.f32 %v1287, 0.0
  %v1900 = vmax.f32 %v1292, 0.0
  %v1901 = vmax.f32 %v1295, 0.0
  %v1902 = vmax.f32 %v1300, 0.0
  %v1903 = vmax.f32 %v1303, 0.0
  %v1904 = vmax.f32 %v1308, 0.0
  %v1905 = vmax.f32 %v1311, 0.0
  %v1906 = vmax.f32 %v1316, 0.0
  %v1907 = vmax.f32 %v1319, 0.0
  %v1908 = vmax.f32 %v1324, 0.0
  %v1909 = vmax.f32 %v1327, 0.0
  %v1910 = vmax.f32 %v1332, 0.0
  %v1911 = vmax.f32 %v1335, 0.0
  %v1912 = vmax.f32 %v1340, 0.0
  %v1913 = vmax.f32 %v1343, 0.0
  %v1914 = vmax.f32 %v1348, 0.0
  %v1915 = vmax.f32 %v1351, 0.0
  %v1916 = vmax.f32 %v1356, 0.0
  %v1917 = vmax.f32 %v1359, 0.0
  %v1918 = vmax.f32 %v1364, 0.0
  %v1919 = vmax.f32 %v1367, 0.0
  %v1920 = vmax.f32 %v1372, 0.0
  %v1921 = vmax.f32 %v1375, 0.0
  %v1922 = vmax.f32 %v1380, 0.0
  %v1923 = vmax.f32 %v1383, 0.0
  %v1924 = vmax.f32 %v1388, 0.0
  %v1925 = vmax.f32 %v1391, 0.0
  %v1926 = vmax.f32 %v1396, 0.0
  %v1927 = vmax.f32 %v1399, 0.0
  %v1928 = vmax.f32 %v1404, 0.0
  %v1929 = vmax.f32 %v1407, 0.0
  %v1930 = vmax.f32 %v1412, 0.0
  %v1931 = vmax.f32 %v1415, 0.0
  %v1932 = vmax.f32 %v1420, 0.0
  %v1933 = vmax.f32 %v1423, 0.0
  %v1934 = vmax.f32 %v1428, 0.0
  %v1935 = vmax.f32 %v1431, 0.0
  %v1936 = vmax.f32 %v1436, 0.0
  %v1937 = vmax.f32 %v1439, 0.0
  %v1938 = vmax.f32 %v1444, 0.0
  %v1939 = vmax.f32 %v1447, 0.0
  %v1940 = vmax.f32 %v1452, 0.0
  %v1941 = vmax.f32 %v1455, 0.0
  %v1942 = vmax.f32 %v1460, 0.0
  %v1943 = vmax.f32 %v1463, 0.0
  %v1944 = vmax.f32 %v1468, 0.0
  %v1945 = vmax.f32 %v1471, 0.0
  %v1946 = vmax.f32 %v1476, 0.0
  %v1947 = vmax.f32 %v1479, 0.0
  %v1948 = vmax.f32 %v1484, 0.0
  %v1949 = vmax.f32 %v1487, 0.0
  %v1950 = vmax.f32 %v1492, 0.0
  %v1951 = vmax.f32 %v1495, 0.0
  %v1952 = vmax.f32 %v1500, 0.0
  %v1953 = vmax.f32 %v1503, 0.0
  %v1954 = vmax.f32 %v1508, 0.0
  %v1955 = vmax.f32 %v1511, 0.0
  %v1956 = vmax.f32 %v1516, 0.0
  %v1957 = vmax.f32 %v1519, 0.0
  %v1958 = vmax.f32 %v1524, 0.0
  %v1959 = vmax.f32 %v1527, 0.0
  %v1960 = vmax.f32 %v1532, 0.0
  %v1961 = vmax.f32 %v1535, 0.0
  %v1962 = vmax.f32 %v1540, 0.0
  %v1963 = vmax.f32 %v1543, 0.0
  %v1964 = vmax.f32 %v1548, 0.0
  %v1965 = vmax.f32 %v1551, 0.0
  %v1966 = vmax.f32 %v1556, 0.0
  %v1967 = vmax.f32 %v1559, 0.0
  %v1968 = vmax.f32 %v1564, 0.0
  %v1969 = vmax.f32 %v1567, 0.0
  %v1970 = vmax.f32 %v1572, 0.0
  %v1971 = vmax.f32 %v1575, 0.0
  %v1972 = vmax.f32 %v1580, 0.0
  %v1973 = vmax.f32 %v1583, 0.0
  %v1974 = vmax.f32 %v1588, 0.0
  %v1975 = vmax.f32 %v1591, 0.0
  %v1976 = vmax.f32 %v1596, 0.0
  %v1977 = vmax.f32 %v1599, 0.0
  %v1978 = vmax.f32 %v1604, 0.0
  %v1979 = vmax.f32 %v1607, 0.0
  %v1980 = vmax.f32 %v1612, 0.0
  %v1981 = vmax.f32 %v1615, 0.0
  %v1982 = vmax.f32 %v1620, 0.0
  %v1983 = vmax.f32 %v1623, 0.0
  %v1984 = vmax.f32 %v1628, 0.0
  %v1985 = vmax.f32 %v1631, 0.0
  %v1986 = vmax.f32 %v1636, 0.0
  %v1987 = vmax.f32 %v1639, 0.0
  %v1988 = vmax.f32 %v1644, 0.0
  %v1989 = vmax.f32 %v1647, 0.0
  %v1990 = vmax.f32 %v1652, 0.0
  %v1991 = vmax.f32 %v1655, 0.0
  %v1992 = vmax.f32 %v1660, 0.0
  %v1993 = vmax.f32 %v1663, 0.0
  %v1994 = vmax.f32 %v1668, 0.0
  %v1995 = vmax.f32 %v1671, 0.0
  %v1996 = vmax.f32 %v1676, 0.0
  %v1997 = vmax.f32 %v1679, 0.0
  %v1998 = vmax.f32 %v1684, 0.0
  %v1999 = vmax.f32 %v1687, 0.0
  %v2000 = vmax.f32 %v1692, 0.0
  %v2001 = vmax.f32 %v1695, 0.0
  %v2002 = vmax.f32 %v1700, 0.0
  %v2003 = vmax.f32 %v1703, 0.0
  %v2004 = vmax.f32 %v1708, 0.0
  %v2005 = vmax.f32 %v1711, 0.0
  %v2006 = vmax.f32 %v1716, 0.0
  %v2007 = vmax.f32 %v1719, 0.0
  %v2008 = vmax.f32 %v1724, 0.0
  %v2009 = vmax.f32 %v1727, 0.0
  %v2010 = vmax.f32 %v1732, 0.0
  %v2011 = vmax.f32 %v1735, 0.0
  %v2012 = vmax.f32 %v1740, 0.0
  %v2013 = vmax.f32 %v1743, 0.0
  %v2014 = vmax.f32 %v1748, 0.0
  %v2015 = vmax.f32 %v1751, 0.0
  %v2016 = vmax.f32 %v1756, 0.0
  %v2017 = vmax.f32 %v1759, 0.0
  %v2018 = vmax.f32 %v1764, 0.0
  %v2019 = vmax.f32 %v1767, 0.0
  %v2020 = vmax.f32 %v1772, 0.0
  %v2021 = vmax.f32 %v1775, 0.0
  %v2022 = vmax.f32 %v1780, 0.0
  %v2023 = vmax.f32 %v1783, 0.0
  %v2024 = vmax.f32 %v1788, 0.0
  %v2025 = vmax.f32 %v1791, 0.0
  %v2026 = vmax.f32 %v1796, 0.0
  %v2027 = vmax.f32 %v1799, 0.0
  %v2028 = vmax.f32 %v1804, 0.0
  %v2029 = vmax.f32 %v1807, 0.0
  %v2030 = vmax.f32 %v1812, 0.0
  %v2031 = vmax.f32 %v1815, 0.0
  %v2032 = vmax.f32 %v1820, 0.0
  %v2033 = vmax.f32 %v1823, 0.0
  %v2034 = vmax.f32 %v1828, 0.0
  %v2035 = vmax.f32 %v1831, 0.0
  %v2036 = vmax.f32 %v1836, 0.0
  %v2037 = vmax.f32 %v1839, 0.0
  %v2038 = vmax.f32 %v1842, %v1891
  %v2039 = vmax.f32 %v1843, %v1892
  %v2040 = vmax.f32 %v1844, %v1893
  %v2041 = vmax.f32 %v1845, %v1894
  %v2042 = vmax.f32 %v1846, %v1895
  %v2043 = vmax.f32 %v1847, %v1896
  %v2044 = vmax.f32 %v1848, %v1897
  %v2045 = vmax.f32 %v1849, %v1898
  %v2046 = vmax.f32 %v1850, %v1899
  %v2047 = vmax.f32 %v1851, %v1900
  %v2048 = vmax.f32 %v1852, %v1901
  %v2049 = vmax.f32 %v1853, %v1902
  %v2050 = vmax.f32 %v1854, %v1903
  %v2051 = vmax.f32 %v1855, %v1904
  %v2052 = vmax.f32 %v1856, %v1905
  %v2053 = vmax.f32 %v1857, %v1906
  %v2054 = vmax.f32 %v1858, %v1907
  %v2055 = vmax.f32 %v1859, %v1908
  %v2056 = vmax.f32 %v1860, %v1909
  %v2057 = vmax.f32 %v1861, %v1910
  %v2058 = vmax.f32 %v1862, %v1911
  %v2059 = vmax.f32 %v1863, %v1912
  %v2060 = vmax.f32 %v1864, %v1913
  %v2061 = vmax.f32 %v1865, %v1914
  %v2062 = vmax.f32 %v1866, %v1915
  %v2063 = vmax.f32 %v1867, %v1916
  %v2064 = vmax.f32 %v1868, %v1917
  %v2065 = vmax.f32 %v1869, %v1918
  %v2066 = vmax.f32 %v1870, %v1919
  %v2067 = vmax.f32 %v1871, %v1920
  %v2068 = vmax.f32 %v1872, %v1921
  %v2069 = vmax.f32 %v1873, %v1922
  %v2070 = vmax.f32 %v1874, %v1923
  %v2071 = vmax.f32 %v1875, %v1924
  %v2072 = vmax.f32 %v1876, %v1925
  %v2073 = vmax.f32 %v1877, %v1926
  %v2074 = vmax.f32 %v1878, %v1927
  %v2075 = vmax.f32 %v1879, %v1928
  %v2076 = vmax.f32 %v1880, %v1929
  %v2077 = vmax.f32 %v1881, %v1930
  %v2078 = vmax.f32 %v1882, %v1931
  %v2079 = vmax.f32 %v1883, %v1932
  %v2080 = vmax.f32 %v1884, %v1933
  %v2081 = vmax.f32 %v1885, %v1934
  %v2082 = vmax.f32 %v1886, %v1935
  %v2083 = vmax.f32 %v1887, %v1936
  %v2084 = vmax.f32 %v1888, %v1937
  %v2085 = vmax.f32 %v1889, %v1938
  %v2086 = vmax.f32 %v1890, %v1939
  %v2087 = vmax.f32 %v1940, %v1989
  %v2088 = vmax.f32 %v1941, %v1990
  %v2089 = vmax.f32 %v1942, %v1991
  %v2090 = vmax.f32 %v1943, %v1992
  %v2091 = vmax.f32 %v1944, %v1993
  %v2092 = vmax.f32 %v1945, %v1994
  %v2093 = vmax.f32 %v1946, %v1995
  %v2094 = vmax.f32 %v1947, %v1996
  %v2095 = vmax.f32 %v1948, %v1997
  %v2096 = vmax.f32 %v1949, %v1998
  %v2097 = vmax.f32 %v1950, %v1999
  %v2098 = vmax.f32 %v1951, %v2000
  %v2099 = vmax.f32 %v1952, %v2001
  %v2100 = vmax.f32 %v1953, %v2002
  %v2101 = vmax.f32 %v1954, %v2003
  %v2102 = vmax.f32 %v1955, %v2004
  %v2103 = vmax.f32 %v1956, %v2005
  %v2104 = vmax.f32 %v1957, %v2006
  %v2105 = vmax.f32 %v1958, %v2007
  %v2106 = vmax.f32 %v1959, %v2008
  %v2107 = vmax.f32 %v1960, %v2009
  %v2108 = vmax.f32 %v1961, %v2010
  %v2109 = vmax.f32 %v1962, %v2011
  %v2110 = vmax.f32 %v1963, %v2012
  %v2111 = vmax.f32 %v1964, %v2013
  %v2112 = vmax.f32 %v1965, %v2014
  %v2113 = vmax.f32 %v1966, %v2015
  %v2114 = vmax.f32 %v1967, %v2016
  %v2115 = vmax.f32 %v1968, %v2017
  %v2116 = vmax.f32 %v1969, %v2018
  %v2117 = vmax.f32 %v1970, %v2019
  %v2118 = vmax.f32 %v1971, %v2020
  %v2119 = vmax.f32 %v1972, %v2021
  %v2120 = vmax.f32 %v1973, %v2022
  %v2121 = vmax.f32 %v1974, %v2023
  %v2122 = vmax.f32 %v1975, %v2024
  %v2123 = vmax.f32 %v1976, %v2025
  %v2124 = vmax.f32 %v1977, %v2026
  %v2125 = vmax.f32 %v1978, %v2027
  %v2126 = vmax.f32 %v1979, %v2028
  %v2127 = vmax.f32 %v1980, %v2029
  %v2128 = vmax.f32 %v1981, %v2030
  %v2129 = vmax.f32 %v1982, %v2031
  %v2130 = vmax.f32 %v1983, %v2032
  %v2131 = vmax.f32 %v1984, %v2033
  %v2132 = vmax.f32 %v1985, %v2034
  %v2133 = vmax.f32 %v1986, %v2035
  %v2134 = vmax.f32 %v1987, %v2036
  %v2135 = vmax.f32 %v1988, %v2037
  %v2136 = vmax.f32 %v2038, %v2087
  %v2137 = vmax.f32 %v2039, %v2088
  %v2138 = vmax.f32 %v2040, %v2089
  %v2139 = vmax.f32 %v2041, %v2090
  %v2140 = vmax.f32 %v2042, %v2091
  %v2141 = vmax.f32 %v2043, %v2092
  %v2142 = vmax.f32 %v2044, %v2093
  %v2143 = vmax.f32 %v2045, %v2094
  %v2144 = vmax.f32 %v2046, %v2095
  %v2145 = vmax.f32 %v2047, %v2096
  %v2146 = vmax.f32 %v2048, %v2097
  %v2147 = vmax.f32 %v2049, %v2098
  %v2148 = vmax.f32 %v2050, %v2099
  %v2149 = vmax.f32 %v2051, %v2100
  %v2150 = vmax.f32 %v2052, %v2101
  %v2151 = vmax.f32 %v2053, %v2102
  %v2152 = vmax.f32 %v2054, %v2103
  %v2153 = vmax.f32 %v2055, %v2104
  %v2154 = vmax.f32 %v2056, %v2105
  %v2155 = vmax.f32 %v2057, %v2106
  %v2156 = vmax.f32 %v2058, %v2107
  %v2157 = vmax.f32 %v2059, %v2108
  %v2158 = vmax.f32 %v2060, %v2109
  %v2159 = vmax.f32 %v2061, %v2110
  %v2160 = vmax.f32 %v2062, %v2111
  %v2161 = vmax.f32 %v2063, %v2112
  %v2162 = vmax.f32 %v2064, %v2113
  %v2163 = vmax.f32 %v2065, %v2114
  %v2164 = vmax.f32 %v2066, %v2115
  %v2165 = vmax.f32 %v2067, %v2116
  %v2166 = vmax.f32 %v2068, %v2117
  %v2167 = vmax.f32 %v2069, %v2118
  %v2168 = vmax.f32 %v2070, %v2119
  %v2169 = vmax.f32 %v2071, %v2120
  %v2170 = vmax.f32 %v2072, %v2121
  %v2171 = vmax.f32 %v2073, %v2122
  %v2172 = vmax.f32 %v2074, %v2123
  %v2173 = vmax.f32 %v2075, %v2124
  %v2174 = vmax.f32 %v2076, %v2125
  %v2175 = vmax.f32 %v2077, %v2126
  %v2176 = vmax.f32 %v2078, %v2127
  %v2177 = vmax.f32 %v2079, %v2128
  %v2178 = vmax.f32 %v2080, %v2129
  %v2179 = vmax.f32 %v2081, %v2130
  %v2180 = vmax.f32 %v2082, %v2131
  %v2181 = vmax.f32 %v2083, %v2132
  %v2182 = vmax.f32 %v2084, %v2133
  %v2183 = vmax.f32 %v2085, %v2134
  %v2184 = vmax.f32 %v2086, %v2135
  %v2185 = vpack.c.bf16 %v2137, %v2136
  %v2186 = vpack.c.bf16 %v2139, %v2138
  %v2187 = vpack.c.bf16 %v2141, %v2140
  %v2188 = vpack.c.bf16 %v2143, %v2142
  %v2189 = vpack.c.bf16 %v2145, %v2144
  %v2190 = vpack.c.bf16 %v2147, %v2146
  %v2191 = vpack.c.bf16 %v2149, %v2148
  %v2192 = vpack.c.bf16 %v2151, %v2150
  %v2193 = vpack.c.bf16 %v2153, %v2152
  %v2194 = vpack.c.bf16 %v2155, %v2154
  %v2195 = vpack.c.bf16 %v2157, %v2156
  %v2196 = vpack.c.bf16 %v2159, %v2158
  %v2197 = vpack.c.bf16 %v2161, %v2160
  %v2198 = vpack.c.bf16 %v2163, %v2162
  %v2199 = vpack.c.bf16 %v2165, %v2164
  %v2200 = vpack.c.bf16 %v2167, %v2166
  %v2201 = vpack.c.bf16 %v2169, %v2168
  %v2202 = vpack.c.bf16 %v2171, %v2170
  %v2203 = vpack.c.bf16 %v2173, %v2172
  %v2204 = vpack.c.bf16 %v2175, %v2174
  %v2205 = vpack.c.bf16 %v2177, %v2176
  %v2206 = vpack.c.bf16 %v2179, %v2178
  %v2207 = vpack.c.bf16 %v2181, %v2180
  %v2208 = vpack.c.bf16 %v2183, %v2182
  %v2209 = vpack.c.bf16 %v2184, %v2184
  %v2235 = vunpack.c.l.b16 %v2185
  %v2236 = vunpack.c.h.b16 %v2185
  %v2237 = vunpack.c.l.b16 %v2186
  %v2238 = vunpack.c.h.b16 %v2186
  %v2239 = vunpack.c.l.b16 %v2187
  %v2240 = vunpack.c.h.b16 %v2187
  %v2241 = vunpack.c.l.b16 %v2188
  %v2242 = vunpack.c.h.b16 %v2188
  %v2243 = vunpack.c.l.b16 %v2189
  %v2244 = vunpack.c.h.b16 %v2189
  %v2245 = vunpack.c.l.b16 %v2190
  %v2246 = vunpack.c.h.b16 %v2190
  %v2247 = vunpack.c.l.b16 %v2191
  %v2248 = vunpack.c.h.b16 %v2191
  %v2249 = vunpack.c.l.b16 %v2192
  %v2250 = vunpack.c.h.b16 %v2192
  %v2251 = vunpack.c.l.b16 %v2193
  %v2252 = vunpack.c.h.b16 %v2193
  %v2253 = vunpack.c.l.b16 %v2194
  %v2254 = vunpack.c.h.b16 %v2194
  %v2255 = vunpack.c.l.b16 %v2195
  %v2256 = vunpack.c.h.b16 %v2195
  %v2257 = vunpack.c.l.b16 %v2196
  %v2258 = vunpack.c.h.b16 %v2196
  %v2259 = vunpack.c.l.b16 %v2197
  %v2260 = vunpack.c.h.b16 %v2197
  %v2261 = vunpack.c.l.b16 %v2198
  %v2262 = vunpack.c.h.b16 %v2198
  %v2263 = vunpack.c.l.b16 %v2199
  %v2264 = vunpack.c.h.b16 %v2199
  %v2265 = vunpack.c.l.b16 %v2200
  %v2266 = vunpack.c.h.b16 %v2200
  %v2267 = vunpack.c.l.b16 %v2201
  %v2268 = vunpack.c.h.b16 %v2201
  %v2269 = vunpack.c.l.b16 %v2202
  %v2270 = vunpack.c.h.b16 %v2202
  %v2271 = vunpack.c.l.b16 %v2203
  %v2272 = vunpack.c.h.b16 %v2203
  %v2273 = vunpack.c.l.b16 %v2204
  %v2274 = vunpack.c.h.b16 %v2204
  %v2275 = vunpack.c.l.b16 %v2205
  %v2276 = vunpack.c.h.b16 %v2205
  %v2277 = vunpack.c.l.b16 %v2206
  %v2278 = vunpack.c.h.b16 %v2206
  %v2279 = vunpack.c.l.b16 %v2207
  %v2280 = vunpack.c.h.b16 %v2207
  %v2281 = vunpack.c.l.b16 %v2208
  %v2282 = vunpack.c.h.b16 %v2208
  %v2283 = vunpack.c.l.b16 %v2209
  %v2284 = vpack.c.b16 %v2235, %v2235
  %v2285 = vpack.c.b16 %v2236, %v2236
  %v2286 = vpack.c.b16 %v2237, %v2237
  %v2287 = vpack.c.b16 %v2238, %v2238
  %v2288 = vpack.c.b16 %v2239, %v2239
  %v2289 = vpack.c.b16 %v2240, %v2240
  %v2290 = vpack.c.b16 %v2241, %v2241
  %v2291 = vpack.c.b16 %v2242, %v2242
  %v2292 = vpack.c.b16 %v2243, %v2243
  %v2293 = vpack.c.b16 %v2244, %v2244
  %v2294 = vpack.c.b16 %v2245, %v2245
  %v2295 = vpack.c.b16 %v2246, %v2246
  %v2296 = vpack.c.b16 %v2247, %v2247
  %v2297 = vpack.c.b16 %v2248, %v2248
  %v2298 = vpack.c.b16 %v2249, %v2249
  %v2299 = vpack.c.b16 %v2250, %v2250
  %v2300 = vpack.c.b16 %v2251, %v2251
  %v2301 = vpack.c.b16 %v2252, %v2252
  %v2302 = vpack.c.b16 %v2253, %v2253
  %v2303 = vpack.c.b16 %v2254, %v2254
  %v2304 = vpack.c.b16 %v2255, %v2255
  %v2305 = vpack.c.b16 %v2256, %v2256
  %v2306 = vpack.c.b16 %v2257, %v2257
  %v2307 = vpack.c.b16 %v2258, %v2258
  %v2308 = vpack.c.b16 %v2259, %v2259
  %v2309 = vpack.c.b16 %v2260, %v2260
  %v2310 = vpack.c.b16 %v2261, %v2261
  %v2311 = vpack.c.b16 %v2262, %v2262
  %v2312 = vpack.c.b16 %v2263, %v2263
  %v2313 = vpack.c.b16 %v2264, %v2264
  %v2314 = vpack.c.b16 %v2265, %v2265
  %v2315 = vpack.c.b16 %v2266, %v2266
  %v2316 = vpack.c.b16 %v2267, %v2267
  %v2317 = vpack.c.b16 %v2268, %v2268
  %v2318 = vpack.c.b16 %v2269, %v2269
  %v2319 = vpack.c.b16 %v2270, %v2270
  %v2320 = vpack.c.b16 %v2271, %v2271
  %v2321 = vpack.c.b16 %v2272, %v2272
  %v2322 = vpack.c.b16 %v2273, %v2273
  %v2323 = vpack.c.b16 %v2274, %v2274
  %v2324 = vpack.c.b16 %v2275, %v2275
  %v2325 = vpack.c.b16 %v2276, %v2276
  %v2326 = vpack.c.b16 %v2277, %v2277
  %v2327 = vpack.c.b16 %v2278, %v2278
  %v2328 = vpack.c.b16 %v2279, %v2279
  %v2329 = vpack.c.b16 %v2280, %v2280
  %v2330 = vpack.c.b16 %v2281, %v2281
  %v2331 = vpack.c.b16 %v2282, %v2282
  %v2332 = vpack.c.b16 %v2283, %v2283
  %2382 = vst [vmem:[%s3] sm:$0xf] %v2284
  %2383 = vst [vmem:[%s3 + $0x4] sm:$0xf] %v2285
  %2384 = vst [vmem:[%s3 + $0x8] sm:$0xf] %v2286
  %2385 = vst [vmem:[%s3 + $0xc] sm:$0xf] %v2287
  %2386 = vst [vmem:[%s3 + $0x10] sm:$0xf] %v2288
  %2387 = vst [vmem:[%s3 + $0x14] sm:$0xf] %v2289
  %2388 = vst [vmem:[%s3 + $0x18] sm:$0xf] %v2290
  %2389 = vst [vmem:[%s3 + $0x1c] sm:$0xf] %v2291
  %2390 = vst [vmem:[%s3 + $0x20] sm:$0xf] %v2292
  %2391 = vst [vmem:[%s3 + $0x24] sm:$0xf] %v2293
  %2392 = vst [vmem:[%s3 + $0x28] sm:$0xf] %v2294
  %2393 = vst [vmem:[%s3 + $0x2c] sm:$0xf] %v2295
  %2394 = vst [vmem:[%s3 + $0x30] sm:$0xf] %v2296
  %2395 = vst [vmem:[%s3 + $0x34] sm:$0xf] %v2297
  %2396 = vst [vmem:[%s3 + $0x38] sm:$0xf] %v2298
  %2397 = vst [vmem:[%s3 + $0x3c] sm:$0xf] %v2299
  %2398 = vst [vmem:[%s3 + $0x40] sm:$0xf] %v2300
  %2399 = vst [vmem:[%s3 + $0x44] sm:$0xf] %v2301
  %2400 = vst [vmem:[%s3 + $0x48] sm:$0xf] %v2302
  %2401 = vst [vmem:[%s3 + $0x4c] sm:$0xf] %v2303
  %2402 = vst [vmem:[%s3 + $0x50] sm:$0xf] %v2304
  %2403 = vst [vmem:[%s3 + $0x54] sm:$0xf] %v2305
  %2404 = vst [vmem:[%s3 + $0x58] sm:$0xf] %v2306
  %2405 = vst [vmem:[%s3 + $0x5c] sm:$0xf] %v2307
  %2406 = vst [vmem:[%s3 + $0x60] sm:$0xf] %v2308
  %2407 = vst [vmem:[%s3 + $0x64] sm:$0xf] %v2309
  %2408 = vst [vmem:[%s3 + $0x68] sm:$0xf] %v2310
  %2409 = vst [vmem:[%s3 + $0x6c] sm:$0xf] %v2311
  %2410 = vst [vmem:[%s3 + $0x70] sm:$0xf] %v2312
  %2411 = vst [vmem:[%s3 + $0x74] sm:$0xf] %v2313
  %2412 = vst [vmem:[%s3 + $0x78] sm:$0xf] %v2314
  %2413 = vst [vmem:[%s3 + $0x7c] sm:$0xf] %v2315
  %2414 = vst [vmem:[%s3 + $0x80] sm:$0xf] %v2316
  %2415 = vst [vmem:[%s3 + $0x84] sm:$0xf] %v2317
  %2416 = vst [vmem:[%s3 + $0x88] sm:$0xf] %v2318
  %2417 = vst [vmem:[%s3 + $0x8c] sm:$0xf] %v2319
  %2418 = vst [vmem:[%s3 + $0x90] sm:$0xf] %v2320
  %2419 = vst [vmem:[%s3 + $0x94] sm:$0xf] %v2321
  %2420 = vst [vmem:[%s3 + $0x98] sm:$0xf] %v2322
  %2421 = vst [vmem:[%s3 + $0x9c] sm:$0xf] %v2323
  %2422 = vst [vmem:[%s3 + $0xa0] sm:$0xf] %v2324
  %2423 = vst [vmem:[%s3 + $0xa4] sm:$0xf] %v2325
  %2424 = vst [vmem:[%s3 + $0xa8] sm:$0xf] %v2326
  %2425 = vst [vmem:[%s3 + $0xac] sm:$0xf] %v2327
  %2426 = vst [vmem:[%s3 + $0xb0] sm:$0xf] %v2328
  %2427 = vst [vmem:[%s3 + $0xb4] sm:$0xf] %v2329
  %2428 = vst [vmem:[%s3 + $0xb8] sm:$0xf] %v2330
  %2429 = vst [vmem:[%s3 + $0xbc] sm:$0xf] %v2331
  %2430 = vst [vmem:[%s3 + $0xc0] sm:$0xf] %v2332
  // Predicated region
  $region14: #{simple_cnn_forward.3} parent=0 // pred_check
    _
  $region15: #{simple_cnn_forward.3} parent=0 // pred_check_branch
    %2432 = sbr.rel (0) target = $region17
  $region16: #{simple_cnn_forward.3} parent=0 // pred_region
    _
  $region17: #{simple_cnn_forward.3} parent=0 // pred_fallthru
    _
  // Predicated region
  $region18: #{simple_cnn_forward.3} parent=0 // pred_check
    _
  $region19: #{simple_cnn_forward.3} parent=0 // pred_check_branch
    %2434 = sbr.rel (0) target = $region21
  $region20: #{simple_cnn_forward.3} parent=0 // pred_region
    _
  $region21: #{simple_cnn_forward.3} parent=0 // pred_fallthru
    _

// kernel: simple_cnn_forward.4
$region0: #{simple_cnn_forward.4}
  #allocation0 [shape = 'u32[]', space=smem, size = 0x4, offset = 0x4, fixed_abs, tag = 'smem constant byte address 0x4 - core index']
  #allocation1 [shape = 'u32[144,128]{1,0:T(1,128)}', space=vmem, size = 0x12000, scoped, tag = 'internal scratch']
  %s0 = inlined_call_operand.vmem [shape: bf16[392,800], index: 0, kind: input, shape index: {}]
  %s1 = inlined_call_operand.vmem [shape: bf16[800,128], index: 1, kind: input, shape index: {}]
  %s2 = inlined_call_operand.vmem [shape: f32[1,128], index: 2, kind: input, shape index: {}]
  %s3 = inlined_call_operand.vmem [shape: bf16[98,128], index: 3, kind: output, shape index: {}]
  %s4 = sld [smem:[#allocation0]]
  $region22: #{simple_cnn_forward.4} parent=0
    _
  %s6 = ssub.s32 1, %s4
  %s7 = scalar_select 0, %s6, %s4
  // Predicated region
  $region2: #{simple_cnn_forward.4} parent=0 // pred_check
    _
  $region3: #{simple_cnn_forward.4} parent=0 // pred_check_branch
    %9 = sbr.rel (0) target = $region5
  $region4: #{simple_cnn_forward.4} parent=0 // pred_region
    _
  $region5: #{simple_cnn_forward.4} parent=0 // pred_fallthru
    _
  // Predicated region
  $region6: #{simple_cnn_forward.4} parent=0 // pred_check
    _
  $region7: #{simple_cnn_forward.4} parent=0 // pred_check_branch
    %11 = sbr.rel (0) target = $region9
  $region8: #{simple_cnn_forward.4} parent=0 // pred_region
    _
  $region9: #{simple_cnn_forward.4} parent=0 // pred_fallthru
    _
  // Predicated region
  $region10: #{simple_cnn_forward.4} parent=0 // pred_check
    _
  $region11: #{simple_cnn_forward.4} parent=0 // pred_check_branch
    %13 = sbr.rel (0) target = $region13
  $region12: #{simple_cnn_forward.4} parent=0 // pred_region
    _
  $region13: #{simple_cnn_forward.4} parent=0 // pred_fallthru
    _
  %v15 = vld [vmem:[%s0] sm:$0xff]
  %v16 = vld [vmem:[%s0 + $0x8] sm:$0xff]
  %v17 = vld [vmem:[%s0 + $0x10] sm:$0xff]
  %v18 = vld [vmem:[%s0 + $0x18] sm:$0xf]
  %v19 = vld [vmem:[%s0 + $0x1c] sm:$0xff]
  %v20 = vld [vmem:[%s0 + $0x24] sm:$0xff]
  %v21 = vld [vmem:[%s0 + $0x2c] sm:$0xff]
  %v22 = vld [vmem:[%s0 + $0x34] sm:$0xf]
  %v23 = vld [vmem:[%s0 + $0x38] sm:$0xff]
  %v24 = vld [vmem:[%s0 + $0x40] sm:$0xff]
  %v25 = vld [vmem:[%s0 + $0x48] sm:$0xff]
  %v26 = vld [vmem:[%s0 + $0x50] sm:$0xf]
  %v27 = vld [vmem:[%s0 + $0x54] sm:$0xff]
  %v28 = vld [vmem:[%s0 + $0x5c] sm:$0xff]
  %v29 = vld [vmem:[%s0 + $0x64] sm:$0xff]
  %v30 = vld [vmem:[%s0 + $0x6c] sm:$0xf]
  %v31 = vld [vmem:[%s0 + $0x70] sm:$0xff]
  %v32 = vld [vmem:[%s0 + $0x78] sm:$0xff]
  %v33 = vld [vmem:[%s0 + $0x80] sm:$0xff]
  %v34 = vld [vmem:[%s0 + $0x88] sm:$0xf]
  %v35 = vld [vmem:[%s0 + $0x8c] sm:$0xff]
  %v36 = vld [vmem:[%s0 + $0x94] sm:$0xff]
  %v37 = vld [vmem:[%s0 + $0x9c] sm:$0xff]
  %v38 = vld [vmem:[%s0 + $0xa4] sm:$0xf]
  %v39 = vld [vmem:[%s0 + $0xa8] sm:$0xff]
  %v40 = vld [vmem:[%s0 + $0xb0] sm:$0xff]
  %v41 = vld [vmem:[%s0 + $0xb8] sm:$0xff]
  %v42 = vld [vmem:[%s0 + $0xc0] sm:$0xf]
  %v43 = vld [vmem:[%s0 + $0xc4] sm:$0xff]
  %v44 = vld [vmem:[%s0 + $0xcc] sm:$0xff]
  %v45 = vld [vmem:[%s0 + $0xd4] sm:$0xff]
  %v46 = vld [vmem:[%s0 + $0xdc] sm:$0xf]
  %v47 = vld [vmem:[%s0 + $0xe0] sm:$0xff]
  %v48 = vld [vmem:[%s0 + $0xe8] sm:$0xff]
  %v49 = vld [vmem:[%s0 + $0xf0] sm:$0xff]
  %v50 = vld [vmem:[%s0 + $0xf8] sm:$0xf]
  %v51 = vld [vmem:[%s0 + $0xfc] sm:$0xff]
  %v52 = vld [vmem:[%s0 + $0x104] sm:$0xff]
  %v53 = vld [vmem:[%s0 + $0x10c] sm:$0xff]
  %v54 = vld [vmem:[%s0 + $0x114] sm:$0xf]
  %v55 = vld [vmem:[%s0 + $0x118] sm:$0xff]
  %v56 = vld [vmem:[%s0 + $0x120] sm:$0xff]
  %v57 = vld [vmem:[%s0 + $0x128] sm:$0xff]
  %v58 = vld [vmem:[%s0 + $0x130] sm:$0xf]
  %v59 = vld [vmem:[%s0 + $0x134] sm:$0xff]
  %v60 = vld [vmem:[%s0 + $0x13c] sm:$0xff]
  %v61 = vld [vmem:[%s0 + $0x144] sm:$0xff]
  %v62 = vld [vmem:[%s0 + $0x14c] sm:$0xf]
  %v63 = vld [vmem:[%s0 + $0x150] sm:$0xff]
  %v64 = vld [vmem:[%s0 + $0x158] sm:$0xff]
  %v65 = vld [vmem:[%s0 + $0x160] sm:$0xff]
  %v66 = vld [vmem:[%s0 + $0x168] sm:$0xf]
  %v67 = vld [vmem:[%s0 + $0x16c] sm:$0xff]
  %v68 = vld [vmem:[%s0 + $0x174] sm:$0xff]
  %v69 = vld [vmem:[%s0 + $0x17c] sm:$0xff]
  %v70 = vld [vmem:[%s0 + $0x184] sm:$0xf]
  %v71 = vld [vmem:[%s0 + $0x188] sm:$0xff]
  %v72 = vld [vmem:[%s0 + $0x190] sm:$0xff]
  %v73 = vld [vmem:[%s0 + $0x198] sm:$0xff]
  %v74 = vld [vmem:[%s0 + $0x1a0] sm:$0xf]
  %v75 = vld [vmem:[%s0 + $0x1a4] sm:$0xff]
  %v76 = vld [vmem:[%s0 + $0x1ac] sm:$0xff]
  %v77 = vld [vmem:[%s0 + $0x1b4] sm:$0xff]
  %v78 = vld [vmem:[%s0 + $0x1bc] sm:$0xf]
  %v79 = vld [vmem:[%s0 + $0x1c0] sm:$0xff]
  %v80 = vld [vmem:[%s0 + $0x1c8] sm:$0xff]
  %v81 = vld [vmem:[%s0 + $0x1d0] sm:$0xff]
  %v82 = vld [vmem:[%s0 + $0x1d8] sm:$0xf]
  %v83 = vld [vmem:[%s0 + $0x1dc] sm:$0xff]
  %v84 = vld [vmem:[%s0 + $0x1e4] sm:$0xff]
  %v85 = vld [vmem:[%s0 + $0x1ec] sm:$0xff]
  %v86 = vld [vmem:[%s0 + $0x1f4] sm:$0xf]
  %v87 = vld [vmem:[%s0 + $0x1f8] sm:$0xff]
  %v88 = vld [vmem:[%s0 + $0x200] sm:$0xff]
  %v89 = vld [vmem:[%s0 + $0x208] sm:$0xff]
  %v90 = vld [vmem:[%s0 + $0x210] sm:$0xf]
  %v91 = vld [vmem:[%s0 + $0x214] sm:$0xff]
  %v92 = vld [vmem:[%s0 + $0x21c] sm:$0xff]
  %v93 = vld [vmem:[%s0 + $0x224] sm:$0xff]
  %v94 = vld [vmem:[%s0 + $0x22c] sm:$0xf]
  %v95 = vld [vmem:[%s0 + $0x230] sm:$0xff]
  %v96 = vld [vmem:[%s0 + $0x238] sm:$0xff]
  %v97 = vld [vmem:[%s0 + $0x240] sm:$0xff]
  %v98 = vld [vmem:[%s0 + $0x248] sm:$0xf]
  %v99 = vld [vmem:[%s0 + $0x24c] sm:$0xff]
  %v100 = vld [vmem:[%s0 + $0x254] sm:$0xff]
  %v101 = vld [vmem:[%s0 + $0x25c] sm:$0xff]
  %v102 = vld [vmem:[%s0 + $0x264] sm:$0xf]
  %v103 = vld [vmem:[%s0 + $0x268] sm:$0xff]
  %v104 = vld [vmem:[%s0 + $0x270] sm:$0xff]
  %v105 = vld [vmem:[%s0 + $0x278] sm:$0xff]
  %v106 = vld [vmem:[%s0 + $0x280] sm:$0xf]
  %v107 = vld [vmem:[%s0 + $0x284] sm:$0xff]
  %v108 = vld [vmem:[%s0 + $0x28c] sm:$0xff]
  %v109 = vld [vmem:[%s0 + $0x294] sm:$0xff]
  %v110 = vld [vmem:[%s0 + $0x29c] sm:$0xf]
  %v111 = vld [vmem:[%s0 + $0x2a0] sm:$0xff]
  %v112 = vld [vmem:[%s0 + $0x2a8] sm:$0xff]
  %v113 = vld [vmem:[%s0 + $0x2b0] sm:$0xff]
  %v114 = vld [vmem:[%s0 + $0x2b8] sm:$0xf]
  %v115 = vld [vmem:[%s0 + $0x2bc] sm:$0xff]
  %v116 = vld [vmem:[%s0 + $0x2c4] sm:$0xff]
  %v117 = vld [vmem:[%s0 + $0x2cc] sm:$0xff]
  %v118 = vld [vmem:[%s0 + $0x2d4] sm:$0xf]
  %v119 = vld [vmem:[%s0 + $0x2d8] sm:$0xff]
  %v120 = vld [vmem:[%s0 + $0x2e0] sm:$0xff]
  %v121 = vld [vmem:[%s0 + $0x2e8] sm:$0xff]
  %v122 = vld [vmem:[%s0 + $0x2f0] sm:$0xf]
  %v123 = vld [vmem:[%s0 + $0x2f4] sm:$0xff]
  %v124 = vld [vmem:[%s0 + $0x2fc] sm:$0xff]
  %v125 = vld [vmem:[%s0 + $0x304] sm:$0xff]
  %v126 = vld [vmem:[%s0 + $0x30c] sm:$0xf]
  %v127 = vld [vmem:[%s0 + $0x310] sm:$0xff]
  %v128 = vld [vmem:[%s0 + $0x318] sm:$0xff]
  %v129 = vld [vmem:[%s0 + $0x320] sm:$0xff]
  %v130 = vld [vmem:[%s0 + $0x328] sm:$0xf]
  %v131 = vld [vmem:[%s0 + $0x32c] sm:$0xff]
  %v132 = vld [vmem:[%s0 + $0x334] sm:$0xff]
  %v133 = vld [vmem:[%s0 + $0x33c] sm:$0xff]
  %v134 = vld [vmem:[%s0 + $0x344] sm:$0xf]
  %v135 = vld [vmem:[%s0 + $0x348] sm:$0xff]
  %v136 = vld [vmem:[%s0 + $0x350] sm:$0xff]
  %v137 = vld [vmem:[%s0 + $0x358] sm:$0xff]
  %v138 = vld [vmem:[%s0 + $0x360] sm:$0xf]
  %v139 = vld [vmem:[%s0 + $0x364] sm:$0xff]
  %v140 = vld [vmem:[%s0 + $0x36c] sm:$0xff]
  %v141 = vld [vmem:[%s0 + $0x374] sm:$0xff]
  %v142 = vld [vmem:[%s0 + $0x37c] sm:$0xf]
  %v143 = vld [vmem:[%s0 + $0x380] sm:$0xff]
  %v144 = vld [vmem:[%s0 + $0x388] sm:$0xff]
  %v145 = vld [vmem:[%s0 + $0x390] sm:$0xff]
  %v146 = vld [vmem:[%s0 + $0x398] sm:$0xf]
  %v147 = vld [vmem:[%s0 + $0x39c] sm:$0xff]
  %v148 = vld [vmem:[%s0 + $0x3a4] sm:$0xff]
  %v149 = vld [vmem:[%s0 + $0x3ac] sm:$0xff]
  %v150 = vld [vmem:[%s0 + $0x3b4] sm:$0xf]
  %v151 = vld [vmem:[%s0 + $0x3b8] sm:$0xff]
  %v152 = vld [vmem:[%s0 + $0x3c0] sm:$0xff]
  %v153 = vld [vmem:[%s0 + $0x3c8] sm:$0xff]
  %v154 = vld [vmem:[%s0 + $0x3d0] sm:$0xf]
  %v155 = vld [vmem:[%s0 + $0x3d4] sm:$0xff]
  %v156 = vld [vmem:[%s0 + $0x3dc] sm:$0xff]
  %v157 = vld [vmem:[%s0 + $0x3e4] sm:$0xff]
  %v158 = vld [vmem:[%s0 + $0x3ec] sm:$0xf]
  %v159 = vld [vmem:[%s0 + $0x3f0] sm:$0xff]
  %v160 = vld [vmem:[%s0 + $0x3f8] sm:$0xff]
  %v161 = vld [vmem:[%s0 + $0x400] sm:$0xff]
  %v162 = vld [vmem:[%s0 + $0x408] sm:$0xf]
  %v163 = vld [vmem:[%s0 + $0x40c] sm:$0xff]
  %v164 = vld [vmem:[%s0 + $0x414] sm:$0xff]
  %v165 = vld [vmem:[%s0 + $0x41c] sm:$0xff]
  %v166 = vld [vmem:[%s0 + $0x424] sm:$0xf]
  %v167 = vld [vmem:[%s0 + $0x428] sm:$0xff]
  %v168 = vld [vmem:[%s0 + $0x430] sm:$0xff]
  %v169 = vld [vmem:[%s0 + $0x438] sm:$0xff]
  %v170 = vld [vmem:[%s0 + $0x440] sm:$0xf]
  %v171 = vld [vmem:[%s0 + $0x444] sm:$0xff]
  %v172 = vld [vmem:[%s0 + $0x44c] sm:$0xff]
  %v173 = vld [vmem:[%s0 + $0x454] sm:$0xff]
  %v174 = vld [vmem:[%s0 + $0x45c] sm:$0xf]
  %v175 = vld [vmem:[%s0 + $0x460] sm:$0xff]
  %v176 = vld [vmem:[%s0 + $0x468] sm:$0xff]
  %v177 = vld [vmem:[%s0 + $0x470] sm:$0xff]
  %v178 = vld [vmem:[%s0 + $0x478] sm:$0xf]
  %v179 = vld [vmem:[%s0 + $0x47c] sm:$0xff]
  %v180 = vld [vmem:[%s0 + $0x484] sm:$0xff]
  %v181 = vld [vmem:[%s0 + $0x48c] sm:$0xff]
  %v182 = vld [vmem:[%s0 + $0x494] sm:$0xf]
  %v183 = vld [vmem:[%s0 + $0x498] sm:$0xff]
  %v184 = vld [vmem:[%s0 + $0x4a0] sm:$0xff]
  %v185 = vld [vmem:[%s0 + $0x4a8] sm:$0xff]
  %v186 = vld [vmem:[%s0 + $0x4b0] sm:$0xf]
  %v187 = vld [vmem:[%s0 + $0x4b4] sm:$0xff]
  %v188 = vld [vmem:[%s0 + $0x4bc] sm:$0xff]
  %v189 = vld [vmem:[%s0 + $0x4c4] sm:$0xff]
  %v190 = vld [vmem:[%s0 + $0x4cc] sm:$0xf]
  %v191 = vld [vmem:[%s0 + $0x4d0] sm:$0xff]
  %v192 = vld [vmem:[%s0 + $0x4d8] sm:$0xff]
  %v193 = vld [vmem:[%s0 + $0x4e0] sm:$0xff]
  %v194 = vld [vmem:[%s0 + $0x4e8] sm:$0xf]
  %v195 = vld [vmem:[%s0 + $0x4ec] sm:$0xff]
  %v196 = vld [vmem:[%s0 + $0x4f4] sm:$0xff]
  %v197 = vld [vmem:[%s0 + $0x4fc] sm:$0xff]
  %v198 = vld [vmem:[%s0 + $0x504] sm:$0xf]
  %v199 = vld [vmem:[%s0 + $0x508] sm:$0xff]
  %v200 = vld [vmem:[%s0 + $0x510] sm:$0xff]
  %v201 = vld [vmem:[%s0 + $0x518] sm:$0xff]
  %v202 = vld [vmem:[%s0 + $0x520] sm:$0xf]
  %v203 = vld [vmem:[%s0 + $0x524] sm:$0xff]
  %v204 = vld [vmem:[%s0 + $0x52c] sm:$0xff]
  %v205 = vld [vmem:[%s0 + $0x534] sm:$0xff]
  %v206 = vld [vmem:[%s0 + $0x53c] sm:$0xf]
  %v207 = vld [vmem:[%s0 + $0x540] sm:$0xff]
  %v208 = vld [vmem:[%s0 + $0x548] sm:$0xff]
  %v209 = vld [vmem:[%s0 + $0x550] sm:$0xff]
  %v210 = vld [vmem:[%s0 + $0x558] sm:$0xf]
  %v211 = vld [vmem:[%s1] sm:$0xf]
  %v212 = vld [vmem:[%s1 + $0x4] sm:$0xf]
  %v213 = vld [vmem:[%s1 + $0x8] sm:$0xf]
  %v214 = vld [vmem:[%s1 + $0xc] sm:$0xf]
  %v215 = vld [vmem:[%s1 + $0x10] sm:$0xf]
  %v216 = vld [vmem:[%s1 + $0x14] sm:$0xf]
  %v217 = vld [vmem:[%s1 + $0x18] sm:$0xf]
  %v218 = vld [vmem:[%s1 + $0x1c] sm:$0xf]
  %v219 = vld [vmem:[%s1 + $0x20] sm:$0xf]
  %v220 = vld [vmem:[%s1 + $0x24] sm:$0xf]
  %v221 = vld [vmem:[%s1 + $0x28] sm:$0xf]
  %v222 = vld [vmem:[%s1 + $0x2c] sm:$0xf]
  %v223 = vld [vmem:[%s1 + $0x30] sm:$0xf]
  %v224 = vld [vmem:[%s1 + $0x34] sm:$0xf]
  %v225 = vld [vmem:[%s1 + $0x38] sm:$0xf]
  %v226 = vld [vmem:[%s1 + $0x3c] sm:$0xf]
  %v227 = vld [vmem:[%s1 + $0x40] sm:$0xf]
  %v228 = vld [vmem:[%s1 + $0x44] sm:$0xf]
  %v229 = vld [vmem:[%s1 + $0x48] sm:$0xf]
  %v230 = vld [vmem:[%s1 + $0x4c] sm:$0xf]
  %v231 = vld [vmem:[%s1 + $0x50] sm:$0xf]
  %v232 = vld [vmem:[%s1 + $0x54] sm:$0xf]
  %v233 = vld [vmem:[%s1 + $0x58] sm:$0xf]
  %v234 = vld [vmem:[%s1 + $0x5c] sm:$0xf]
  %v235 = vld [vmem:[%s1 + $0x60] sm:$0xf]
  %v236 = vld [vmem:[%s1 + $0x64] sm:$0xf]
  %v237 = vld [vmem:[%s1 + $0x68] sm:$0xf]
  %v238 = vld [vmem:[%s1 + $0x6c] sm:$0xf]
  %v239 = vld [vmem:[%s1 + $0x70] sm:$0xf]
  %v240 = vld [vmem:[%s1 + $0x74] sm:$0xf]
  %v241 = vld [vmem:[%s1 + $0x78] sm:$0xf]
  %v242 = vld [vmem:[%s1 + $0x7c] sm:$0xf]
  %v243 = vld [vmem:[%s1 + $0x80] sm:$0xf]
  %v244 = vld [vmem:[%s1 + $0x84] sm:$0xf]
  %v245 = vld [vmem:[%s1 + $0x88] sm:$0xf]
  %v246 = vld [vmem:[%s1 + $0x8c] sm:$0xf]
  %v247 = vld [vmem:[%s1 + $0x90] sm:$0xf]
  %v248 = vld [vmem:[%s1 + $0x94] sm:$0xf]
  %v249 = vld [vmem:[%s1 + $0x98] sm:$0xf]
  %v250 = vld [vmem:[%s1 + $0x9c] sm:$0xf]
  %v251 = vld [vmem:[%s1 + $0xa0] sm:$0xf]
  %v252 = vld [vmem:[%s1 + $0xa4] sm:$0xf]
  %v253 = vld [vmem:[%s1 + $0xa8] sm:$0xf]
  %v254 = vld [vmem:[%s1 + $0xac] sm:$0xf]
  %v255 = vld [vmem:[%s1 + $0xb0] sm:$0xf]
  %v256 = vld [vmem:[%s1 + $0xb4] sm:$0xf]
  %v257 = vld [vmem:[%s1 + $0xb8] sm:$0xf]
  %v258 = vld [vmem:[%s1 + $0xbc] sm:$0xf]
  %v259 = vld [vmem:[%s1 + $0xc0] sm:$0xf]
  %v260 = vld [vmem:[%s1 + $0xc4] sm:$0xf]
  %v261 = vld [vmem:[%s1 + $0xc8] sm:$0xf]
  %v262 = vld [vmem:[%s1 + $0xcc] sm:$0xf]
  %v263 = vld [vmem:[%s1 + $0xd0] sm:$0xf]
  %v264 = vld [vmem:[%s1 + $0xd4] sm:$0xf]
  %v265 = vld [vmem:[%s1 + $0xd8] sm:$0xf]
  %v266 = vld [vmem:[%s1 + $0xdc] sm:$0xf]
  %v267 = vld [vmem:[%s1 + $0xe0] sm:$0xf]
  %v268 = vld [vmem:[%s1 + $0xe4] sm:$0xf]
  %v269 = vld [vmem:[%s1 + $0xe8] sm:$0xf]
  %v270 = vld [vmem:[%s1 + $0xec] sm:$0xf]
  %v271 = vld [vmem:[%s1 + $0xf0] sm:$0xf]
  %v272 = vld [vmem:[%s1 + $0xf4] sm:$0xf]
  %v273 = vld [vmem:[%s1 + $0xf8] sm:$0xf]
  %v274 = vld [vmem:[%s1 + $0xfc] sm:$0xf]
  %v275 = vld [vmem:[%s1 + $0x100] sm:$0xf]
  %v276 = vld [vmem:[%s1 + $0x104] sm:$0xf]
  %v277 = vld [vmem:[%s1 + $0x108] sm:$0xf]
  %v278 = vld [vmem:[%s1 + $0x10c] sm:$0xf]
  %v279 = vld [vmem:[%s1 + $0x110] sm:$0xf]
  %v280 = vld [vmem:[%s1 + $0x114] sm:$0xf]
  %v281 = vld [vmem:[%s1 + $0x118] sm:$0xf]
  %v282 = vld [vmem:[%s1 + $0x11c] sm:$0xf]
  %v283 = vld [vmem:[%s1 + $0x120] sm:$0xf]
  %v284 = vld [vmem:[%s1 + $0x124] sm:$0xf]
  %v285 = vld [vmem:[%s1 + $0x128] sm:$0xf]
  %v286 = vld [vmem:[%s1 + $0x12c] sm:$0xf]
  %v287 = vld [vmem:[%s1 + $0x130] sm:$0xf]
  %v288 = vld [vmem:[%s1 + $0x134] sm:$0xf]
  %v289 = vld [vmem:[%s1 + $0x138] sm:$0xf]
  %v290 = vld [vmem:[%s1 + $0x13c] sm:$0xf]
  %v291 = vld [vmem:[%s1 + $0x140] sm:$0xf]
  %v292 = vld [vmem:[%s1 + $0x144] sm:$0xf]
  %v293 = vld [vmem:[%s1 + $0x148] sm:$0xf]
  %v294 = vld [vmem:[%s1 + $0x14c] sm:$0xf]
  %v295 = vld [vmem:[%s1 + $0x150] sm:$0xf]
  %v296 = vld [vmem:[%s1 + $0x154] sm:$0xf]
  %v297 = vld [vmem:[%s1 + $0x158] sm:$0xf]
  %v298 = vld [vmem:[%s1 + $0x15c] sm:$0xf]
  %v299 = vld [vmem:[%s1 + $0x160] sm:$0xf]
  %v300 = vld [vmem:[%s1 + $0x164] sm:$0xf]
  %v301 = vld [vmem:[%s1 + $0x168] sm:$0xf]
  %v302 = vld [vmem:[%s1 + $0x16c] sm:$0xf]
  %v303 = vld [vmem:[%s1 + $0x170] sm:$0xf]
  %v304 = vld [vmem:[%s1 + $0x174] sm:$0xf]
  %v305 = vld [vmem:[%s1 + $0x178] sm:$0xf]
  %v306 = vld [vmem:[%s1 + $0x17c] sm:$0xf]
  %v307 = vld [vmem:[%s1 + $0x180] sm:$0xf]
  %v308 = vld [vmem:[%s1 + $0x184] sm:$0xf]
  %v309 = vld [vmem:[%s1 + $0x188] sm:$0xf]
  %v310 = vld [vmem:[%s1 + $0x18c] sm:$0xf]
  %v311 = vld [vmem:[%s2] sm:$0x1]
  %v313 = vlaneseq
  %v314 = vshrl.u32 %v313, 7
  %v315 = vsub.s32 0, %v314
  %v316 = vrot.slane %v311, %v315
  %v514 = vunpack.c.l.b16 %v15
  %v515 = vunpack.c.h.b16 %v15
  %v516 = vunpack.c.l.b16 %v16
  %v517 = vunpack.c.h.b16 %v16
  %v518 = vunpack.c.l.b16 %v17
  %v519 = vunpack.c.h.b16 %v17
  %v520 = vunpack.c.l.b16 %v18
  %v521 = vunpack.c.l.b16 %v19
  %v522 = vunpack.c.h.b16 %v19
  %v523 = vunpack.c.l.b16 %v20
  %v524 = vunpack.c.h.b16 %v20
  %v525 = vunpack.c.l.b16 %v21
  %v526 = vunpack.c.h.b16 %v21
  %v527 = vunpack.c.l.b16 %v22
  %v528 = vunpack.c.l.b16 %v23
  %v529 = vunpack.c.h.b16 %v23
  %v530 = vunpack.c.l.b16 %v24
  %v531 = vunpack.c.h.b16 %v24
  %v532 = vunpack.c.l.b16 %v25
  %v533 = vunpack.c.h.b16 %v25
  %v534 = vunpack.c.l.b16 %v26
  %v535 = vunpack.c.l.b16 %v27
  %v536 = vunpack.c.h.b16 %v27
  %v537 = vunpack.c.l.b16 %v28
  %v538 = vunpack.c.h.b16 %v28
  %v539 = vunpack.c.l.b16 %v29
  %v540 = vunpack.c.h.b16 %v29
  %v541 = vunpack.c.l.b16 %v30
  %v542 = vunpack.c.l.b16 %v31
  %v543 = vunpack.c.h.b16 %v31
  %v544 = vunpack.c.l.b16 %v32
  %v545 = vunpack.c.h.b16 %v32
  %v546 = vunpack.c.l.b16 %v33
  %v547 = vunpack.c.h.b16 %v33
  %v548 = vunpack.c.l.b16 %v34
  %v549 = vunpack.c.l.b16 %v35
  %v550 = vunpack.c.h.b16 %v35
  %v551 = vunpack.c.l.b16 %v36
  %v552 = vunpack.c.h.b16 %v36
  %v553 = vunpack.c.l.b16 %v37
  %v554 = vunpack.c.h.b16 %v37
  %v555 = vunpack.c.l.b16 %v38
  %v556 = vunpack.c.l.b16 %v39
  %v557 = vunpack.c.h.b16 %v39
  %v558 = vunpack.c.l.b16 %v40
  %v559 = vunpack.c.h.b16 %v40
  %v560 = vunpack.c.l.b16 %v41
  %v561 = vunpack.c.h.b16 %v41
  %v562 = vunpack.c.l.b16 %v42
  %v563 = vunpack.c.l.b16 %v43
  %v564 = vunpack.c.h.b16 %v43
  %v565 = vunpack.c.l.b16 %v44
  %v566 = vunpack.c.h.b16 %v44
  %v567 = vunpack.c.l.b16 %v45
  %v568 = vunpack.c.h.b16 %v45
  %v569 = vunpack.c.l.b16 %v46
  %v570 = vunpack.c.l.b16 %v47
  %v571 = vunpack.c.h.b16 %v47
  %v572 = vunpack.c.l.b16 %v48
  %v573 = vunpack.c.h.b16 %v48
  %v574 = vunpack.c.l.b16 %v49
  %v575 = vunpack.c.h.b16 %v49
  %v576 = vunpack.c.l.b16 %v50
  %v577 = vunpack.c.l.b16 %v51
  %v578 = vunpack.c.h.b16 %v51
  %v579 = vunpack.c.l.b16 %v52
  %v580 = vunpack.c.h.b16 %v52
  %v581 = vunpack.c.l.b16 %v53
  %v582 = vunpack.c.h.b16 %v53
  %v583 = vunpack.c.l.b16 %v54
  %v584 = vunpack.c.l.b16 %v55
  %v585 = vunpack.c.h.b16 %v55
  %v586 = vunpack.c.l.b16 %v56
  %v587 = vunpack.c.h.b16 %v56
  %v588 = vunpack.c.l.b16 %v57
  %v589 = vunpack.c.h.b16 %v57
  %v590 = vunpack.c.l.b16 %v58
  %v591 = vunpack.c.l.b16 %v59
  %v592 = vunpack.c.h.b16 %v59
  %v593 = vunpack.c.l.b16 %v60
  %v594 = vunpack.c.h.b16 %v60
  %v595 = vunpack.c.l.b16 %v61
  %v596 = vunpack.c.h.b16 %v61
  %v597 = vunpack.c.l.b16 %v62
  %v598 = vunpack.c.l.b16 %v63
  %v599 = vunpack.c.h.b16 %v63
  %v600 = vunpack.c.l.b16 %v64
  %v601 = vunpack.c.h.b16 %v64
  %v602 = vunpack.c.l.b16 %v65
  %v603 = vunpack.c.h.b16 %v65
  %v604 = vunpack.c.l.b16 %v66
  %v605 = vunpack.c.l.b16 %v67
  %v606 = vunpack.c.h.b16 %v67
  %v607 = vunpack.c.l.b16 %v68
  %v608 = vunpack.c.h.b16 %v68
  %v609 = vunpack.c.l.b16 %v69
  %v610 = vunpack.c.h.b16 %v69
  %v611 = vunpack.c.l.b16 %v70
  %v612 = vunpack.c.l.b16 %v71
  %v613 = vunpack.c.h.b16 %v71
  %v614 = vunpack.c.l.b16 %v72
  %v615 = vunpack.c.h.b16 %v72
  %v616 = vunpack.c.l.b16 %v73
  %v617 = vunpack.c.h.b16 %v73
  %v618 = vunpack.c.l.b16 %v74
  %v619 = vunpack.c.l.b16 %v75
  %v620 = vunpack.c.h.b16 %v75
  %v621 = vunpack.c.l.b16 %v76
  %v622 = vunpack.c.h.b16 %v76
  %v623 = vunpack.c.l.b16 %v77
  %v624 = vunpack.c.h.b16 %v77
  %v625 = vunpack.c.l.b16 %v78
  %v626 = vunpack.c.l.b16 %v79
  %v627 = vunpack.c.h.b16 %v79
  %v628 = vunpack.c.l.b16 %v80
  %v629 = vunpack.c.h.b16 %v80
  %v630 = vunpack.c.l.b16 %v81
  %v631 = vunpack.c.h.b16 %v81
  %v632 = vunpack.c.l.b16 %v82
  %v633 = vunpack.c.l.b16 %v83
  %v634 = vunpack.c.h.b16 %v83
  %v635 = vunpack.c.l.b16 %v84
  %v636 = vunpack.c.h.b16 %v84
  %v637 = vunpack.c.l.b16 %v85
  %v638 = vunpack.c.h.b16 %v85
  %v639 = vunpack.c.l.b16 %v86
  %v640 = vunpack.c.l.b16 %v87
  %v641 = vunpack.c.h.b16 %v87
  %v642 = vunpack.c.l.b16 %v88
  %v643 = vunpack.c.h.b16 %v88
  %v644 = vunpack.c.l.b16 %v89
  %v645 = vunpack.c.h.b16 %v89
  %v646 = vunpack.c.l.b16 %v90
  %v647 = vunpack.c.l.b16 %v91
  %v648 = vunpack.c.h.b16 %v91
  %v649 = vunpack.c.l.b16 %v92
  %v650 = vunpack.c.h.b16 %v92
  %v651 = vunpack.c.l.b16 %v93
  %v652 = vunpack.c.h.b16 %v93
  %v653 = vunpack.c.l.b16 %v94
  %v654 = vunpack.c.l.b16 %v95
  %v655 = vunpack.c.h.b16 %v95
  %v656 = vunpack.c.l.b16 %v96
  %v657 = vunpack.c.h.b16 %v96
  %v658 = vunpack.c.l.b16 %v97
  %v659 = vunpack.c.h.b16 %v97
  %v660 = vunpack.c.l.b16 %v98
  %v661 = vunpack.c.l.b16 %v99
  %v662 = vunpack.c.h.b16 %v99
  %v663 = vunpack.c.l.b16 %v100
  %v664 = vunpack.c.h.b16 %v100
  %v665 = vunpack.c.l.b16 %v101
  %v666 = vunpack.c.h.b16 %v101
  %v667 = vunpack.c.l.b16 %v102
  %v668 = vunpack.c.l.b16 %v103
  %v669 = vunpack.c.h.b16 %v103
  %v670 = vunpack.c.l.b16 %v104
  %v671 = vunpack.c.h.b16 %v104
  %v672 = vunpack.c.l.b16 %v105
  %v673 = vunpack.c.h.b16 %v105
  %v674 = vunpack.c.l.b16 %v106
  %v675 = vunpack.c.l.b16 %v107
  %v676 = vunpack.c.h.b16 %v107
  %v677 = vunpack.c.l.b16 %v108
  %v678 = vunpack.c.h.b16 %v108
  %v679 = vunpack.c.l.b16 %v109
  %v680 = vunpack.c.h.b16 %v109
  %v681 = vunpack.c.l.b16 %v110
  %v682 = vunpack.c.l.b16 %v111
  %v683 = vunpack.c.h.b16 %v111
  %v684 = vunpack.c.l.b16 %v112
  %v685 = vunpack.c.h.b16 %v112
  %v686 = vunpack.c.l.b16 %v113
  %v687 = vunpack.c.h.b16 %v113
  %v688 = vunpack.c.l.b16 %v114
  %v689 = vunpack.c.l.b16 %v115
  %v690 = vunpack.c.h.b16 %v115
  %v691 = vunpack.c.l.b16 %v116
  %v692 = vunpack.c.h.b16 %v116
  %v693 = vunpack.c.l.b16 %v117
  %v694 = vunpack.c.h.b16 %v117
  %v695 = vunpack.c.l.b16 %v118
  %v696 = vunpack.c.l.b16 %v119
  %v697 = vunpack.c.h.b16 %v119
  %v698 = vunpack.c.l.b16 %v120
  %v699 = vunpack.c.h.b16 %v120
  %v700 = vunpack.c.l.b16 %v121
  %v701 = vunpack.c.h.b16 %v121
  %v702 = vunpack.c.l.b16 %v122
  %v703 = vunpack.c.l.b16 %v123
  %v704 = vunpack.c.h.b16 %v123
  %v705 = vunpack.c.l.b16 %v124
  %v706 = vunpack.c.h.b16 %v124
  %v707 = vunpack.c.l.b16 %v125
  %v708 = vunpack.c.h.b16 %v125
  %v709 = vunpack.c.l.b16 %v126
  %v710 = vunpack.c.l.b16 %v127
  %v711 = vunpack.c.h.b16 %v127
  %v712 = vunpack.c.l.b16 %v128
  %v713 = vunpack.c.h.b16 %v128
  %v714 = vunpack.c.l.b16 %v129
  %v715 = vunpack.c.h.b16 %v129
  %v716 = vunpack.c.l.b16 %v130
  %v717 = vunpack.c.l.b16 %v131
  %v718 = vunpack.c.h.b16 %v131
  %v719 = vunpack.c.l.b16 %v132
  %v720 = vunpack.c.h.b16 %v132
  %v721 = vunpack.c.l.b16 %v133
  %v722 = vunpack.c.h.b16 %v133
  %v723 = vunpack.c.l.b16 %v134
  %v724 = vunpack.c.l.b16 %v135
  %v725 = vunpack.c.h.b16 %v135
  %v726 = vunpack.c.l.b16 %v136
  %v727 = vunpack.c.h.b16 %v136
  %v728 = vunpack.c.l.b16 %v137
  %v729 = vunpack.c.h.b16 %v137
  %v730 = vunpack.c.l.b16 %v138
  %v731 = vunpack.c.l.b16 %v139
  %v732 = vunpack.c.h.b16 %v139
  %v733 = vunpack.c.l.b16 %v140
  %v734 = vunpack.c.h.b16 %v140
  %v735 = vunpack.c.l.b16 %v141
  %v736 = vunpack.c.h.b16 %v141
  %v737 = vunpack.c.l.b16 %v142
  %v738 = vunpack.c.l.b16 %v143
  %v739 = vunpack.c.h.b16 %v143
  %v740 = vunpack.c.l.b16 %v144
  %v741 = vunpack.c.h.b16 %v144
  %v742 = vunpack.c.l.b16 %v145
  %v743 = vunpack.c.h.b16 %v145
  %v744 = vunpack.c.l.b16 %v146
  %v745 = vunpack.c.l.b16 %v147
  %v746 = vunpack.c.h.b16 %v147
  %v747 = vunpack.c.l.b16 %v148
  %v748 = vunpack.c.h.b16 %v148
  %v749 = vunpack.c.l.b16 %v149
  %v750 = vunpack.c.h.b16 %v149
  %v751 = vunpack.c.l.b16 %v150
  %v752 = vunpack.c.l.b16 %v151
  %v753 = vunpack.c.h.b16 %v151
  %v754 = vunpack.c.l.b16 %v152
  %v755 = vunpack.c.h.b16 %v152
  %v756 = vunpack.c.l.b16 %v153
  %v757 = vunpack.c.h.b16 %v153
  %v758 = vunpack.c.l.b16 %v154
  %v759 = vunpack.c.l.b16 %v155
  %v760 = vunpack.c.h.b16 %v155
  %v761 = vunpack.c.l.b16 %v156
  %v762 = vunpack.c.h.b16 %v156
  %v763 = vunpack.c.l.b16 %v157
  %v764 = vunpack.c.h.b16 %v157
  %v765 = vunpack.c.l.b16 %v158
  %v766 = vunpack.c.l.b16 %v159
  %v767 = vunpack.c.h.b16 %v159
  %v768 = vunpack.c.l.b16 %v160
  %v769 = vunpack.c.h.b16 %v160
  %v770 = vunpack.c.l.b16 %v161
  %v771 = vunpack.c.h.b16 %v161
  %v772 = vunpack.c.l.b16 %v162
  %v773 = vunpack.c.l.b16 %v163
  %v774 = vunpack.c.h.b16 %v163
  %v775 = vunpack.c.l.b16 %v164
  %v776 = vunpack.c.h.b16 %v164
  %v777 = vunpack.c.l.b16 %v165
  %v778 = vunpack.c.h.b16 %v165
  %v779 = vunpack.c.l.b16 %v166
  %v780 = vunpack.c.l.b16 %v167
  %v781 = vunpack.c.h.b16 %v167
  %v782 = vunpack.c.l.b16 %v168
  %v783 = vunpack.c.h.b16 %v168
  %v784 = vunpack.c.l.b16 %v169
  %v785 = vunpack.c.h.b16 %v169
  %v786 = vunpack.c.l.b16 %v170
  %v787 = vunpack.c.l.b16 %v171
  %v788 = vunpack.c.h.b16 %v171
  %v789 = vunpack.c.l.b16 %v172
  %v790 = vunpack.c.h.b16 %v172
  %v791 = vunpack.c.l.b16 %v173
  %v792 = vunpack.c.h.b16 %v173
  %v793 = vunpack.c.l.b16 %v174
  %v794 = vunpack.c.l.b16 %v175
  %v795 = vunpack.c.h.b16 %v175
  %v796 = vunpack.c.l.b16 %v176
  %v797 = vunpack.c.h.b16 %v176
  %v798 = vunpack.c.l.b16 %v177
  %v799 = vunpack.c.h.b16 %v177
  %v800 = vunpack.c.l.b16 %v178
  %v801 = vunpack.c.l.b16 %v179
  %v802 = vunpack.c.h.b16 %v179
  %v803 = vunpack.c.l.b16 %v180
  %v804 = vunpack.c.h.b16 %v180
  %v805 = vunpack.c.l.b16 %v181
  %v806 = vunpack.c.h.b16 %v181
  %v807 = vunpack.c.l.b16 %v182
  %v808 = vunpack.c.l.b16 %v183
  %v809 = vunpack.c.h.b16 %v183
  %v810 = vunpack.c.l.b16 %v184
  %v811 = vunpack.c.h.b16 %v184
  %v812 = vunpack.c.l.b16 %v185
  %v813 = vunpack.c.h.b16 %v185
  %v814 = vunpack.c.l.b16 %v186
  %v815 = vunpack.c.l.b16 %v187
  %v816 = vunpack.c.h.b16 %v187
  %v817 = vunpack.c.l.b16 %v188
  %v818 = vunpack.c.h.b16 %v188
  %v819 = vunpack.c.l.b16 %v189
  %v820 = vunpack.c.h.b16 %v189
  %v821 = vunpack.c.l.b16 %v190
  %v822 = vunpack.c.l.b16 %v191
  %v823 = vunpack.c.h.b16 %v191
  %v824 = vunpack.c.l.b16 %v192
  %v825 = vunpack.c.h.b16 %v192
  %v826 = vunpack.c.l.b16 %v193
  %v827 = vunpack.c.h.b16 %v193
  %v828 = vunpack.c.l.b16 %v194
  %v829 = vunpack.c.l.b16 %v195
  %v830 = vunpack.c.h.b16 %v195
  %v831 = vunpack.c.l.b16 %v196
  %v832 = vunpack.c.h.b16 %v196
  %v833 = vunpack.c.l.b16 %v197
  %v834 = vunpack.c.h.b16 %v197
  %v835 = vunpack.c.l.b16 %v198
  %v836 = vunpack.c.l.b16 %v199
  %v837 = vunpack.c.h.b16 %v199
  %v838 = vunpack.c.l.b16 %v200
  %v839 = vunpack.c.h.b16 %v200
  %v840 = vunpack.c.l.b16 %v201
  %v841 = vunpack.c.h.b16 %v201
  %v842 = vunpack.c.l.b16 %v202
  %v843 = vunpack.c.l.b16 %v203
  %v844 = vunpack.c.h.b16 %v203
  %v845 = vunpack.c.l.b16 %v204
  %v846 = vunpack.c.h.b16 %v204
  %v847 = vunpack.c.l.b16 %v205
  %v848 = vunpack.c.h.b16 %v205
  %v849 = vunpack.c.l.b16 %v206
  %v850 = vunpack.c.l.b16 %v207
  %v851 = vunpack.c.h.b16 %v207
  %v852 = vunpack.c.l.b16 %v208
  %v853 = vunpack.c.h.b16 %v208
  %v854 = vunpack.c.l.b16 %v209
  %v855 = vunpack.c.h.b16 %v209
  %v856 = vunpack.c.l.b16 %v210
  %v857 = vpack.c.b16 %v521, %v514
  %v858 = vpack.c.b16 %v522, %v515
  %v859 = vpack.c.b16 %v523, %v516
  %v860 = vpack.c.b16 %v524, %v517
  %v861 = vpack.c.b16 %v525, %v518
  %v862 = vpack.c.b16 %v526, %v519
  %v863 = vpack.c.b16 %v527, %v520
  %v864 = vpack.c.b16 %v535, %v528
  %v865 = vpack.c.b16 %v536, %v529
  %v866 = vpack.c.b16 %v537, %v530
  %v867 = vpack.c.b16 %v538, %v531
  %v868 = vpack.c.b16 %v539, %v532
  %v869 = vpack.c.b16 %v540, %v533
  %v870 = vpack.c.b16 %v541, %v534
  %v871 = vpack.c.b16 %v549, %v542
  %v872 = vpack.c.b16 %v550, %v543
  %v873 = vpack.c.b16 %v551, %v544
  %v874 = vpack.c.b16 %v552, %v545
  %v875 = vpack.c.b16 %v553, %v546
  %v876 = vpack.c.b16 %v554, %v547
  %v877 = vpack.c.b16 %v555, %v548
  %v878 = vpack.c.b16 %v563, %v556
  %v879 = vpack.c.b16 %v564, %v557
  %v880 = vpack.c.b16 %v565, %v558
  %v881 = vpack.c.b16 %v566, %v559
  %v882 = vpack.c.b16 %v567, %v560
  %v883 = vpack.c.b16 %v568, %v561
  %v884 = vpack.c.b16 %v569, %v562
  %v885 = vpack.c.b16 %v577, %v570
  %v886 = vpack.c.b16 %v578, %v571
  %v887 = vpack.c.b16 %v579, %v572
  %v888 = vpack.c.b16 %v580, %v573
  %v889 = vpack.c.b16 %v581, %v574
  %v890 = vpack.c.b16 %v582, %v575
  %v891 = vpack.c.b16 %v583, %v576
  %v892 = vpack.c.b16 %v591, %v584
  %v893 = vpack.c.b16 %v592, %v585
  %v894 = vpack.c.b16 %v593, %v586
  %v895 = vpack.c.b16 %v594, %v587
  %v896 = vpack.c.b16 %v595, %v588
  %v897 = vpack.c.b16 %v596, %v589
  %v898 = vpack.c.b16 %v597, %v590
  %v899 = vpack.c.b16 %v605, %v598
  %v900 = vpack.c.b16 %v606, %v599
  %v901 = vpack.c.b16 %v607, %v600
  %v902 = vpack.c.b16 %v608, %v601
  %v903 = vpack.c.b16 %v609, %v602
  %v904 = vpack.c.b16 %v610, %v603
  %v905 = vpack.c.b16 %v611, %v604
  %v906 = vpack.c.b16 %v619, %v612
  %v907 = vpack.c.b16 %v620, %v613
  %v908 = vpack.c.b16 %v621, %v614
  %v909 = vpack.c.b16 %v622, %v615
  %v910 = vpack.c.b16 %v623, %v616
  %v911 = vpack.c.b16 %v624, %v617
  %v912 = vpack.c.b16 %v625, %v618
  %v913 = vpack.c.b16 %v633, %v626
  %v914 = vpack.c.b16 %v634, %v627
  %v915 = vpack.c.b16 %v635, %v628
  %v916 = vpack.c.b16 %v636, %v629
  %v917 = vpack.c.b16 %v637, %v630
  %v918 = vpack.c.b16 %v638, %v631
  %v919 = vpack.c.b16 %v639, %v632
  %v920 = vpack.c.b16 %v647, %v640
  %v921 = vpack.c.b16 %v648, %v641
  %v922 = vpack.c.b16 %v649, %v642
  %v923 = vpack.c.b16 %v650, %v643
  %v924 = vpack.c.b16 %v651, %v644
  %v925 = vpack.c.b16 %v652, %v645
  %v926 = vpack.c.b16 %v653, %v646
  %v927 = vpack.c.b16 %v661, %v654
  %v928 = vpack.c.b16 %v662, %v655
  %v929 = vpack.c.b16 %v663, %v656
  %v930 = vpack.c.b16 %v664, %v657
  %v931 = vpack.c.b16 %v665, %v658
  %v932 = vpack.c.b16 %v666, %v659
  %v933 = vpack.c.b16 %v667, %v660
  %v934 = vpack.c.b16 %v675, %v668
  %v935 = vpack.c.b16 %v676, %v669
  %v936 = vpack.c.b16 %v677, %v670
  %v937 = vpack.c.b16 %v678, %v671
  %v938 = vpack.c.b16 %v679, %v672
  %v939 = vpack.c.b16 %v680, %v673
  %v940 = vpack.c.b16 %v681, %v674
  %v941 = vpack.c.b16 %v689, %v682
  %v942 = vpack.c.b16 %v690, %v683
  %v943 = vpack.c.b16 %v691, %v684
  %v944 = vpack.c.b16 %v692, %v685
  %v945 = vpack.c.b16 %v693, %v686
  %v946 = vpack.c.b16 %v694, %v687
  %v947 = vpack.c.b16 %v695, %v688
  %v948 = vpack.c.b16 %v703, %v696
  %v949 = vpack.c.b16 %v704, %v697
  %v950 = vpack.c.b16 %v705, %v698
  %v951 = vpack.c.b16 %v706, %v699
  %v952 = vpack.c.b16 %v707, %v700
  %v953 = vpack.c.b16 %v708, %v701
  %v954 = vpack.c.b16 %v709, %v702
  %v955 = vpack.c.b16 %v717, %v710
  %v956 = vpack.c.b16 %v718, %v711
  %v957 = vpack.c.b16 %v719, %v712
  %v958 = vpack.c.b16 %v720, %v713
  %v959 = vpack.c.b16 %v721, %v714
  %v960 = vpack.c.b16 %v722, %v715
  %v961 = vpack.c.b16 %v723, %v716
  %v962 = vpack.c.b16 %v731, %v724
  %v963 = vpack.c.b16 %v732, %v725
  %v964 = vpack.c.b16 %v733, %v726
  %v965 = vpack.c.b16 %v734, %v727
  %v966 = vpack.c.b16 %v735, %v728
  %v967 = vpack.c.b16 %v736, %v729
  %v968 = vpack.c.b16 %v737, %v730
  %v969 = vpack.c.b16 %v745, %v738
  %v970 = vpack.c.b16 %v746, %v739
  %v971 = vpack.c.b16 %v747, %v740
  %v972 = vpack.c.b16 %v748, %v741
  %v973 = vpack.c.b16 %v749, %v742
  %v974 = vpack.c.b16 %v750, %v743
  %v975 = vpack.c.b16 %v751, %v744
  %v976 = vpack.c.b16 %v759, %v752
  %v977 = vpack.c.b16 %v760, %v753
  %v978 = vpack.c.b16 %v761, %v754
  %v979 = vpack.c.b16 %v762, %v755
  %v980 = vpack.c.b16 %v763, %v756
  %v981 = vpack.c.b16 %v764, %v757
  %v982 = vpack.c.b16 %v765, %v758
  %v983 = vpack.c.b16 %v773, %v766
  %v984 = vpack.c.b16 %v774, %v767
  %v985 = vpack.c.b16 %v775, %v768
  %v986 = vpack.c.b16 %v776, %v769
  %v987 = vpack.c.b16 %v777, %v770
  %v988 = vpack.c.b16 %v778, %v771
  %v989 = vpack.c.b16 %v779, %v772
  %v990 = vpack.c.b16 %v787, %v780
  %v991 = vpack.c.b16 %v788, %v781
  %v992 = vpack.c.b16 %v789, %v782
  %v993 = vpack.c.b16 %v790, %v783
  %v994 = vpack.c.b16 %v791, %v784
  %v995 = vpack.c.b16 %v792, %v785
  %v996 = vpack.c.b16 %v793, %v786
  %v997 = vpack.c.b16 %v801, %v794
  %v998 = vpack.c.b16 %v802, %v795
  %v999 = vpack.c.b16 %v803, %v796
  %v1000 = vpack.c.b16 %v804, %v797
  %v1001 = vpack.c.b16 %v805, %v798
  %v1002 = vpack.c.b16 %v806, %v799
  %v1003 = vpack.c.b16 %v807, %v800
  %v1004 = vpack.c.b16 %v815, %v808
  %v1005 = vpack.c.b16 %v816, %v809
  %v1006 = vpack.c.b16 %v817, %v810
  %v1007 = vpack.c.b16 %v818, %v811
  %v1008 = vpack.c.b16 %v819, %v812
  %v1009 = vpack.c.b16 %v820, %v813
  %v1010 = vpack.c.b16 %v821, %v814
  %v1011 = vpack.c.b16 %v829, %v822
  %v1012 = vpack.c.b16 %v830, %v823
  %v1013 = vpack.c.b16 %v831, %v824
  %v1014 = vpack.c.b16 %v832, %v825
  %v1015 = vpack.c.b16 %v833, %v826
  %v1016 = vpack.c.b16 %v834, %v827
  %v1017 = vpack.c.b16 %v835, %v828
  %v1018 = vpack.c.b16 %v843, %v836
  %v1019 = vpack.c.b16 %v844, %v837
  %v1020 = vpack.c.b16 %v845, %v838
  %v1021 = vpack.c.b16 %v846, %v839
  %v1022 = vpack.c.b16 %v847, %v840
  %v1023 = vpack.c.b16 %v848, %v841
  %v1024 = vpack.c.b16 %v849, %v842
  %v1025 = vpack.c.b16 %v850, %v850
  %v1026 = vpack.c.b16 %v851, %v851
  %v1027 = vpack.c.b16 %v852, %v852
  %v1028 = vpack.c.b16 %v853, %v853
  %v1029 = vpack.c.b16 %v854, %v854
  %v1030 = vpack.c.b16 %v855, %v855
  %v1031 = vpack.c.b16 %v856, %v856
  %v1282 = vunpack.c.l.b16 %v211
  %v1283 = vunpack.c.l.b16 %v212
  %v1284 = vunpack.c.l.b16 %v213
  %v1285 = vunpack.c.l.b16 %v214
  %v1286 = vunpack.c.l.b16 %v215
  %v1287 = vunpack.c.l.b16 %v216
  %v1288 = vunpack.c.l.b16 %v217
  %v1289 = vunpack.c.l.b16 %v218
  %v1290 = vunpack.c.l.b16 %v219
  %v1291 = vunpack.c.l.b16 %v220
  %v1292 = vunpack.c.l.b16 %v221
  %v1293 = vunpack.c.l.b16 %v222
  %v1294 = vunpack.c.l.b16 %v223
  %v1295 = vunpack.c.l.b16 %v224
  %v1296 = vunpack.c.l.b16 %v225
  %v1297 = vunpack.c.l.b16 %v226
  %v1298 = vunpack.c.l.b16 %v227
  %v1299 = vunpack.c.l.b16 %v228
  %v1300 = vunpack.c.l.b16 %v229
  %v1301 = vunpack.c.l.b16 %v230
  %v1302 = vunpack.c.l.b16 %v231
  %v1303 = vunpack.c.l.b16 %v232
  %v1304 = vunpack.c.l.b16 %v233
  %v1305 = vunpack.c.l.b16 %v234
  %v1306 = vunpack.c.l.b16 %v235
  %v1307 = vunpack.c.l.b16 %v236
  %v1308 = vunpack.c.l.b16 %v237
  %v1309 = vunpack.c.l.b16 %v238
  %v1310 = vunpack.c.l.b16 %v239
  %v1311 = vunpack.c.l.b16 %v240
  %v1312 = vunpack.c.l.b16 %v241
  %v1313 = vunpack.c.l.b16 %v242
  %v1314 = vunpack.c.l.b16 %v243
  %v1315 = vunpack.c.l.b16 %v244
  %v1316 = vunpack.c.l.b16 %v245
  %v1317 = vunpack.c.l.b16 %v246
  %v1318 = vunpack.c.l.b16 %v247
  %v1319 = vunpack.c.l.b16 %v248
  %v1320 = vunpack.c.l.b16 %v249
  %v1321 = vunpack.c.l.b16 %v250
  %v1322 = vunpack.c.l.b16 %v251
  %v1323 = vunpack.c.l.b16 %v252
  %v1324 = vunpack.c.l.b16 %v253
  %v1325 = vunpack.c.l.b16 %v254
  %v1326 = vunpack.c.l.b16 %v255
  %v1327 = vunpack.c.l.b16 %v256
  %v1328 = vunpack.c.l.b16 %v257
  %v1329 = vunpack.c.l.b16 %v258
  %v1330 = vunpack.c.l.b16 %v259
  %v1331 = vunpack.c.l.b16 %v260
  %v1332 = vunpack.c.l.b16 %v261
  %v1333 = vunpack.c.l.b16 %v262
  %v1334 = vunpack.c.l.b16 %v263
  %v1335 = vunpack.c.l.b16 %v264
  %v1336 = vunpack.c.l.b16 %v265
  %v1337 = vunpack.c.l.b16 %v266
  %v1338 = vunpack.c.l.b16 %v267
  %v1339 = vunpack.c.l.b16 %v268
  %v1340 = vunpack.c.l.b16 %v269
  %v1341 = vunpack.c.l.b16 %v270
  %v1342 = vunpack.c.l.b16 %v271
  %v1343 = vunpack.c.l.b16 %v272
  %v1344 = vunpack.c.l.b16 %v273
  %v1345 = vunpack.c.l.b16 %v274
  %v1346 = vunpack.c.l.b16 %v275
  %v1347 = vunpack.c.l.b16 %v276
  %v1348 = vunpack.c.l.b16 %v277
  %v1349 = vunpack.c.l.b16 %v278
  %v1350 = vunpack.c.l.b16 %v279
  %v1351 = vunpack.c.l.b16 %v280
  %v1352 = vunpack.c.l.b16 %v281
  %v1353 = vunpack.c.l.b16 %v282
  %v1354 = vunpack.c.l.b16 %v283
  %v1355 = vunpack.c.l.b16 %v284
  %v1356 = vunpack.c.l.b16 %v285
  %v1357 = vunpack.c.l.b16 %v286
  %v1358 = vunpack.c.l.b16 %v287
  %v1359 = vunpack.c.l.b16 %v288
  %v1360 = vunpack.c.l.b16 %v289
  %v1361 = vunpack.c.l.b16 %v290
  %v1362 = vunpack.c.l.b16 %v291
  %v1363 = vunpack.c.l.b16 %v292
  %v1364 = vunpack.c.l.b16 %v293
  %v1365 = vunpack.c.l.b16 %v294
  %v1366 = vunpack.c.l.b16 %v295
  %v1367 = vunpack.c.l.b16 %v296
  %v1368 = vunpack.c.l.b16 %v297
  %v1369 = vunpack.c.l.b16 %v298
  %v1370 = vunpack.c.l.b16 %v299
  %v1371 = vunpack.c.l.b16 %v300
  %v1372 = vunpack.c.l.b16 %v301
  %v1373 = vunpack.c.l.b16 %v302
  %v1374 = vunpack.c.l.b16 %v303
  %v1375 = vunpack.c.l.b16 %v304
  %v1376 = vunpack.c.l.b16 %v305
  %v1377 = vunpack.c.l.b16 %v306
  %v1378 = vunpack.c.l.b16 %v307
  %v1379 = vunpack.c.l.b16 %v308
  %v1380 = vunpack.c.l.b16 %v309
  %v1381 = vunpack.c.l.b16 %v310
  %v1382 = vpack.c.b16 %v1283, %v1282
  %v1383 = vpack.c.b16 %v1285, %v1284
  %v1384 = vpack.c.b16 %v1287, %v1286
  %v1385 = vpack.c.b16 %v1289, %v1288
  %v1386 = vpack.c.b16 %v1291, %v1290
  %v1387 = vpack.c.b16 %v1293, %v1292
  %v1388 = vpack.c.b16 %v1295, %v1294
  %v1389 = vpack.c.b16 %v1297, %v1296
  %v1390 = vpack.c.b16 %v1299, %v1298
  %v1391 = vpack.c.b16 %v1301, %v1300
  %v1392 = vpack.c.b16 %v1303, %v1302
  %v1393 = vpack.c.b16 %v1305, %v1304
  %v1394 = vpack.c.b16 %v1307, %v1306
  %v1395 = vpack.c.b16 %v1309, %v1308
  %v1396 = vpack.c.b16 %v1311, %v1310
  %v1397 = vpack.c.b16 %v1313, %v1312
  %v1398 = vpack.c.b16 %v1315, %v1314
  %v1399 = vpack.c.b16 %v1317, %v1316
  %v1400 = vpack.c.b16 %v1319, %v1318
  %v1401 = vpack.c.b16 %v1321, %v1320
  %v1402 = vpack.c.b16 %v1323, %v1322
  %v1403 = vpack.c.b16 %v1325, %v1324
  %v1404 = vpack.c.b16 %v1327, %v1326
  %v1405 = vpack.c.b16 %v1329, %v1328
  %v1406 = vpack.c.b16 %v1331, %v1330
  %v1407 = vpack.c.b16 %v1333, %v1332
  %v1408 = vpack.c.b16 %v1335, %v1334
  %v1409 = vpack.c.b16 %v1337, %v1336
  %v1410 = vpack.c.b16 %v1339, %v1338
  %v1411 = vpack.c.b16 %v1341, %v1340
  %v1412 = vpack.c.b16 %v1343, %v1342
  %v1413 = vpack.c.b16 %v1345, %v1344
  %v1414 = vpack.c.b16 %v1347, %v1346
  %v1415 = vpack.c.b16 %v1349, %v1348
  %v1416 = vpack.c.b16 %v1351, %v1350
  %v1417 = vpack.c.b16 %v1353, %v1352
  %v1418 = vpack.c.b16 %v1355, %v1354
  %v1419 = vpack.c.b16 %v1357, %v1356
  %v1420 = vpack.c.b16 %v1359, %v1358
  %v1421 = vpack.c.b16 %v1361, %v1360
  %v1422 = vpack.c.b16 %v1363, %v1362
  %v1423 = vpack.c.b16 %v1365, %v1364
  %v1424 = vpack.c.b16 %v1367, %v1366
  %v1425 = vpack.c.b16 %v1369, %v1368
  %v1426 = vpack.c.b16 %v1371, %v1370
  %v1427 = vpack.c.b16 %v1373, %v1372
  %v1428 = vpack.c.b16 %v1375, %v1374
  %v1429 = vpack.c.b16 %v1377, %v1376
  %v1430 = vpack.c.b16 %v1379, %v1378
  %v1431 = vpack.c.b16 %v1381, %v1380
  %vm1482 = vcmask 261120
  %v1484 = vsel %vm1482, %v863, 0
  %v1487 = vsel %vm1482, %v870, 0
  %v1490 = vsel %vm1482, %v877, 0
  %v1493 = vsel %vm1482, %v884, 0
  %v1496 = vsel %vm1482, %v891, 0
  %v1499 = vsel %vm1482, %v898, 0
  %v1502 = vsel %vm1482, %v905, 0
  %v1505 = vsel %vm1482, %v912, 0
  %v1508 = vsel %vm1482, %v919, 0
  %v1511 = vsel %vm1482, %v926, 0
  %v1514 = vsel %vm1482, %v933, 0
  %v1517 = vsel %vm1482, %v940, 0
  %v1520 = vsel %vm1482, %v947, 0
  %v1523 = vsel %vm1482, %v954, 0
  %v1526 = vsel %vm1482, %v961, 0
  %v1529 = vsel %vm1482, %v968, 0
  %v1532 = vsel %vm1482, %v975, 0
  %v1535 = vsel %vm1482, %v982, 0
  %v1538 = vsel %vm1482, %v989, 0
  %v1541 = vsel %vm1482, %v996, 0
  %v1544 = vsel %vm1482, %v1003, 0
  %v1547 = vsel %vm1482, %v1010, 0
  %v1550 = vsel %vm1482, %v1017, 0
  %v1553 = vsel %vm1482, %v1024, 0
  %v1556 = vsel %vm1482, %v1031, 0
  %1558 = vmatprep.subr.bf16.mxu0 0
  %1559 = vmatpush1.bf16.msra.mxu0 %v1389
  %1560 = vmatprep.subr.bf16.mxu0 0
  %1561 = vmatpush1.bf16.msra.mxu0 %v1388
  %1562 = vmatprep.subr.bf16.mxu0 0
  %1563 = vmatpush1.bf16.msra.mxu0 %v1387
  %1564 = vmatprep.subr.bf16.mxu0 0
  %1565 = vmatpush1.bf16.msra.mxu0 %v1386
  %1566 = vmatprep.subr.bf16.mxu0 0
  %1567 = vmatpush1.bf16.msra.mxu0 %v1385
  %1568 = vmatprep.subr.bf16.mxu0 0
  %1569 = vmatpush1.bf16.msra.mxu0 %v1384
  %1570 = vmatprep.subr.bf16.mxu0 0
  %1571 = vmatpush1.bf16.msra.mxu0 %v1383
  %1572 = vmatprep.subr.bf16.mxu0 0
  %1573 = vmatpush1.bf16.msra.mxu0 %v1382
  %1574 = vmatprep.subr.bf16.mxu0 0
  %1575 = vmatpush2.bf16.msra.mxu0 %v1397
  %1576 = vmatprep.subr.bf16.mxu0 0
  %1577 = vmatpush2.bf16.msra.mxu0 %v1396
  %1578 = vmatprep.subr.bf16.mxu0 0
  %1579 = vmatpush2.bf16.msra.mxu0 %v1395
  %1580 = vmatprep.subr.bf16.mxu0 0
  %1581 = vmatpush2.bf16.msra.mxu0 %v1394
  %1582 = vmatprep.subr.bf16.mxu0 0
  %1583 = vmatpush2.bf16.msra.mxu0 %v1393
  %1584 = vmatprep.subr.bf16.mxu0 0
  %1585 = vmatpush2.bf16.msra.mxu0 %v1392
  %1586 = vmatprep.subr.bf16.mxu0 0
  %1587 = vmatpush2.bf16.msra.mxu0 %v1391
  %1588 = vmatprep.subr.bf16.mxu0 0
  %1589 = vmatpush2.bf16.msra.mxu0 %v1390
  %1590 = vmatprep.mubr.bf16.mxu0 %v858
  %1591 = vmatmul.mubr.bf16.gmra.mxu0 %v857
  %v1592 = vpop.f32.mrf.mxu0
  %v1593 = vadd.f32 %v316, %v1592
  %v1594 = vpop.f32.mrf.mxu0
  %v1595 = vpop.f32.mrf.mxu0
  %v1596 = vadd.f32 %v316, %v1595
  %v1597 = vpop.f32.mrf.mxu0
  %1598 = vmatprep.mubr.bf16.mxu0 %v865
  %1599 = vmatmul.mubr.bf16.gmra.mxu0 %v864
  %v1600 = vpop.f32.mrf.mxu0
  %v1601 = vadd.f32 %v316, %v1600
  %v1602 = vpop.f32.mrf.mxu0
  %v1603 = vpop.f32.mrf.mxu0
  %v1604 = vadd.f32 %v316, %v1603
  %v1605 = vpop.f32.mrf.mxu0
  %1606 = vmatprep.mubr.bf16.mxu0 %v872
  %1607 = vmatmul.mubr.bf16.gmra.mxu0 %v871
  %v1608 = vpop.f32.mrf.mxu0
  %v1609 = vadd.f32 %v316, %v1608
  %v1610 = vpop.f32.mrf.mxu0
  %v1611 = vpop.f32.mrf.mxu0
  %v1612 = vadd.f32 %v316, %v1611
  %v1613 = vpop.f32.mrf.mxu0
  %1614 = vmatprep.mubr.bf16.mxu0 %v879
  %1615 = vmatmul.mubr.bf16.gmra.mxu0 %v878
  %v1616 = vpop.f32.mrf.mxu0
  %v1617 = vadd.f32 %v316, %v1616
  %v1618 = vpop.f32.mrf.mxu0
  %v1619 = vpop.f32.mrf.mxu0
  %v1620 = vadd.f32 %v316, %v1619
  %v1621 = vpop.f32.mrf.mxu0
  %1622 = vmatprep.mubr.bf16.mxu0 %v886
  %1623 = vmatmul.mubr.bf16.gmra.mxu0 %v885
  %v1624 = vpop.f32.mrf.mxu0
  %v1625 = vadd.f32 %v316, %v1624
  %v1626 = vpop.f32.mrf.mxu0
  %v1627 = vpop.f32.mrf.mxu0
  %v1628 = vadd.f32 %v316, %v1627
  %v1629 = vpop.f32.mrf.mxu0
  %1630 = vmatprep.mubr.bf16.mxu0 %v893
  %1631 = vmatmul.mubr.bf16.gmra.mxu0 %v892
  %v1632 = vpop.f32.mrf.mxu0
  %v1633 = vadd.f32 %v316, %v1632
  %v1634 = vpop.f32.mrf.mxu0
  %v1635 = vpop.f32.mrf.mxu0
  %v1636 = vadd.f32 %v316, %v1635
  %v1637 = vpop.f32.mrf.mxu0
  %1638 = vmatprep.mubr.bf16.mxu0 %v900
  %1639 = vmatmul.mubr.bf16.gmra.mxu0 %v899
  %v1640 = vpop.f32.mrf.mxu0
  %v1641 = vadd.f32 %v316, %v1640
  %v1642 = vpop.f32.mrf.mxu0
  %v1643 = vpop.f32.mrf.mxu0
  %v1644 = vadd.f32 %v316, %v1643
  %v1645 = vpop.f32.mrf.mxu0
  %1646 = vmatprep.mubr.bf16.mxu0 %v907
  %1647 = vmatmul.mubr.bf16.gmra.mxu0 %v906
  %v1648 = vpop.f32.mrf.mxu0
  %v1649 = vadd.f32 %v316, %v1648
  %v1650 = vpop.f32.mrf.mxu0
  %v1651 = vpop.f32.mrf.mxu0
  %v1652 = vadd.f32 %v316, %v1651
  %v1653 = vpop.f32.mrf.mxu0
  %1654 = vmatprep.mubr.bf16.mxu0 %v914
  %1655 = vmatmul.mubr.bf16.gmra.mxu0 %v913
  %v1656 = vpop.f32.mrf.mxu0
  %v1657 = vadd.f32 %v316, %v1656
  %v1658 = vpop.f32.mrf.mxu0
  %v1659 = vpop.f32.mrf.mxu0
  %v1660 = vadd.f32 %v316, %v1659
  %v1661 = vpop.f32.mrf.mxu0
  %1662 = vmatprep.mubr.bf16.mxu0 %v921
  %1663 = vmatmul.mubr.bf16.gmra.mxu0 %v920
  %v1664 = vpop.f32.mrf.mxu0
  %v1665 = vadd.f32 %v316, %v1664
  %v1666 = vpop.f32.mrf.mxu0
  %v1667 = vpop.f32.mrf.mxu0
  %v1668 = vadd.f32 %v316, %v1667
  %v1669 = vpop.f32.mrf.mxu0
  %1670 = vmatprep.mubr.bf16.mxu0 %v928
  %1671 = vmatmul.mubr.bf16.gmra.mxu0 %v927
  %v1672 = vpop.f32.mrf.mxu0
  %v1673 = vadd.f32 %v316, %v1672
  %v1674 = vpop.f32.mrf.mxu0
  %v1675 = vpop.f32.mrf.mxu0
  %v1676 = vadd.f32 %v316, %v1675
  %v1677 = vpop.f32.mrf.mxu0
  %1678 = vmatprep.mubr.bf16.mxu0 %v935
  %1679 = vmatmul.mubr.bf16.gmra.mxu0 %v934
  %v1680 = vpop.f32.mrf.mxu0
  %v1681 = vadd.f32 %v316, %v1680
  %v1682 = vpop.f32.mrf.mxu0
  %v1683 = vpop.f32.mrf.mxu0
  %v1684 = vadd.f32 %v316, %v1683
  %v1685 = vpop.f32.mrf.mxu0
  %1686 = vmatprep.mubr.bf16.mxu0 %v942
  %1687 = vmatmul.mubr.bf16.gmra.mxu0 %v941
  %v1688 = vpop.f32.mrf.mxu0
  %v1689 = vadd.f32 %v316, %v1688
  %v1690 = vpop.f32.mrf.mxu0
  %v1691 = vpop.f32.mrf.mxu0
  %v1692 = vadd.f32 %v316, %v1691
  %v1693 = vpop.f32.mrf.mxu0
  %1694 = vmatprep.mubr.bf16.mxu0 %v949
  %1695 = vmatmul.mubr.bf16.gmra.mxu0 %v948
  %v1696 = vpop.f32.mrf.mxu0
  %v1697 = vadd.f32 %v316, %v1696
  %v1698 = vpop.f32.mrf.mxu0
  %v1699 = vpop.f32.mrf.mxu0
  %v1700 = vadd.f32 %v316, %v1699
  %v1701 = vpop.f32.mrf.mxu0
  %1702 = vmatprep.mubr.bf16.mxu0 %v956
  %1703 = vmatmul.mubr.bf16.gmra.mxu0 %v955
  %v1704 = vpop.f32.mrf.mxu0
  %v1705 = vadd.f32 %v316, %v1704
  %v1706 = vpop.f32.mrf.mxu0
  %v1707 = vpop.f32.mrf.mxu0
  %v1708 = vadd.f32 %v316, %v1707
  %v1709 = vpop.f32.mrf.mxu0
  %1710 = vmatprep.mubr.bf16.mxu0 %v963
  %1711 = vmatmul.mubr.bf16.gmra.mxu0 %v962
  %v1712 = vpop.f32.mrf.mxu0
  %v1713 = vadd.f32 %v316, %v1712
  %v1714 = vpop.f32.mrf.mxu0
  %v1715 = vpop.f32.mrf.mxu0
  %v1716 = vadd.f32 %v316, %v1715
  %v1717 = vpop.f32.mrf.mxu0
  %1718 = vmatprep.mubr.bf16.mxu0 %v970
  %1719 = vmatmul.mubr.bf16.gmra.mxu0 %v969
  %v1720 = vpop.f32.mrf.mxu0
  %v1721 = vadd.f32 %v316, %v1720
  %v1722 = vpop.f32.mrf.mxu0
  %v1723 = vpop.f32.mrf.mxu0
  %v1724 = vadd.f32 %v316, %v1723
  %v1725 = vpop.f32.mrf.mxu0
  %1726 = vmatprep.mubr.bf16.mxu0 %v977
  %1727 = vmatmul.mubr.bf16.gmra.mxu0 %v976
  %v1728 = vpop.f32.mrf.mxu0
  %v1729 = vadd.f32 %v316, %v1728
  %v1730 = vpop.f32.mrf.mxu0
  %v1731 = vpop.f32.mrf.mxu0
  %v1732 = vadd.f32 %v316, %v1731
  %v1733 = vpop.f32.mrf.mxu0
  %1734 = vmatprep.mubr.bf16.mxu0 %v984
  %1735 = vmatmul.mubr.bf16.gmra.mxu0 %v983
  %v1736 = vpop.f32.mrf.mxu0
  %v1737 = vadd.f32 %v316, %v1736
  %v1738 = vpop.f32.mrf.mxu0
  %v1739 = vpop.f32.mrf.mxu0
  %v1740 = vadd.f32 %v316, %v1739
  %v1741 = vpop.f32.mrf.mxu0
  %1742 = vmatprep.mubr.bf16.mxu0 %v991
  %1743 = vmatmul.mubr.bf16.gmra.mxu0 %v990
  %v1744 = vpop.f32.mrf.mxu0
  %v1745 = vadd.f32 %v316, %v1744
  %v1746 = vpop.f32.mrf.mxu0
  %v1747 = vpop.f32.mrf.mxu0
  %v1748 = vadd.f32 %v316, %v1747
  %v1749 = vpop.f32.mrf.mxu0
  %1750 = vmatprep.mubr.bf16.mxu0 %v998
  %1751 = vmatmul.mubr.bf16.gmra.mxu0 %v997
  %v1752 = vpop.f32.mrf.mxu0
  %v1753 = vadd.f32 %v316, %v1752
  %v1754 = vpop.f32.mrf.mxu0
  %v1755 = vpop.f32.mrf.mxu0
  %v1756 = vadd.f32 %v316, %v1755
  %v1757 = vpop.f32.mrf.mxu0
  %1758 = vmatprep.mubr.bf16.mxu0 %v1005
  %1759 = vmatmul.mubr.bf16.gmra.mxu0 %v1004
  %v1760 = vpop.f32.mrf.mxu0
  %v1761 = vadd.f32 %v316, %v1760
  %v1762 = vpop.f32.mrf.mxu0
  %v1763 = vpop.f32.mrf.mxu0
  %v1764 = vadd.f32 %v316, %v1763
  %v1765 = vpop.f32.mrf.mxu0
  %1766 = vmatprep.mubr.bf16.mxu0 %v1012
  %1767 = vmatmul.mubr.bf16.gmra.mxu0 %v1011
  %v1768 = vpop.f32.mrf.mxu0
  %v1769 = vadd.f32 %v316, %v1768
  %v1770 = vpop.f32.mrf.mxu0
  %v1771 = vpop.f32.mrf.mxu0
  %v1772 = vadd.f32 %v316, %v1771
  %v1773 = vpop.f32.mrf.mxu0
  %1774 = vmatprep.mubr.bf16.mxu0 %v1019
  %1775 = vmatmul.mubr.bf16.gmra.mxu0 %v1018
  %v1776 = vpop.f32.mrf.mxu0
  %v1777 = vadd.f32 %v316, %v1776
  %v1778 = vpop.f32.mrf.mxu0
  %v1779 = vpop.f32.mrf.mxu0
  %v1780 = vadd.f32 %v316, %v1779
  %v1781 = vpop.f32.mrf.mxu0
  %1782 = vmatprep.mubr.bf16.mxu0 %v1026
  %1783 = vmatmul.mubr.bf16.gmra.mxu0 %v1025
  %v1784 = vpop.f32.mrf.mxu0
  %v1785 = vadd.f32 %v316, %v1784
  %v1786 = vpop.f32.mrf.mxu0
  %v1787 = vpop.f32.mrf.mxu0
  %v1788 = vpop.f32.mrf.mxu0
  %1789 = vdwg.mxu0
  %1790 = vmatprep.subr.bf16.mxu0 0
  %1791 = vmatpush1.bf16.msra.mxu0 %v1405
  %1792 = vmatprep.subr.bf16.mxu0 0
  %1793 = vmatpush1.bf16.msra.mxu0 %v1404
  %1794 = vmatprep.subr.bf16.mxu0 0
  %1795 = vmatpush1.bf16.msra.mxu0 %v1403
  %1796 = vmatprep.subr.bf16.mxu0 0
  %1797 = vmatpush1.bf16.msra.mxu0 %v1402
  %1798 = vmatprep.subr.bf16.mxu0 0
  %1799 = vmatpush1.bf16.msra.mxu0 %v1401
  %1800 = vmatprep.subr.bf16.mxu0 0
  %1801 = vmatpush1.bf16.msra.mxu0 %v1400
  %1802 = vmatprep.subr.bf16.mxu0 0
  %1803 = vmatpush1.bf16.msra.mxu0 %v1399
  %1804 = vmatprep.subr.bf16.mxu0 0
  %1805 = vmatpush1.bf16.msra.mxu0 %v1398
  %1806 = vmatprep.subr.bf16.mxu0 0
  %1807 = vmatpush2.bf16.msra.mxu0 %v1413
  %1808 = vmatprep.subr.bf16.mxu0 0
  %1809 = vmatpush2.bf16.msra.mxu0 %v1412
  %1810 = vmatprep.subr.bf16.mxu0 0
  %1811 = vmatpush2.bf16.msra.mxu0 %v1411
  %1812 = vmatprep.subr.bf16.mxu0 0
  %1813 = vmatpush2.bf16.msra.mxu0 %v1410
  %1814 = vmatprep.subr.bf16.mxu0 0
  %1815 = vmatpush2.bf16.msra.mxu0 %v1409
  %1816 = vmatprep.subr.bf16.mxu0 0
  %1817 = vmatpush2.bf16.msra.mxu0 %v1408
  %1818 = vmatprep.subr.bf16.mxu0 0
  %1819 = vmatpush2.bf16.msra.mxu0 %v1407
  %1820 = vmatprep.subr.bf16.mxu0 0
  %1821 = vmatpush2.bf16.msra.mxu0 %v1406
  %1822 = vmatprep.mubr.bf16.mxu0 %v860
  %1823 = vmatmul.mubr.bf16.gmra.mxu0 %v859
  %v1824 = vpop.f32.mrf.mxu0
  %v1825 = vadd.f32 %v1593, %v1824
  %v1826 = vpop.f32.mrf.mxu0
  %v1827 = vpop.f32.mrf.mxu0
  %v1828 = vadd.f32 %v1596, %v1827
  %v1829 = vpop.f32.mrf.mxu0
  %1830 = vmatprep.mubr.bf16.mxu0 %v867
  %1831 = vmatmul.mubr.bf16.gmra.mxu0 %v866
  %v1832 = vpop.f32.mrf.mxu0
  %v1833 = vadd.f32 %v1601, %v1832
  %v1834 = vpop.f32.mrf.mxu0
  %v1835 = vpop.f32.mrf.mxu0
  %v1836 = vadd.f32 %v1604, %v1835
  %v1837 = vpop.f32.mrf.mxu0
  %1838 = vmatprep.mubr.bf16.mxu0 %v874
  %1839 = vmatmul.mubr.bf16.gmra.mxu0 %v873
  %v1840 = vpop.f32.mrf.mxu0
  %v1841 = vadd.f32 %v1609, %v1840
  %v1842 = vpop.f32.mrf.mxu0
  %v1843 = vpop.f32.mrf.mxu0
  %v1844 = vadd.f32 %v1612, %v1843
  %v1845 = vpop.f32.mrf.mxu0
  %1846 = vmatprep.mubr.bf16.mxu0 %v881
  %1847 = vmatmul.mubr.bf16.gmra.mxu0 %v880
  %v1848 = vpop.f32.mrf.mxu0
  %v1849 = vadd.f32 %v1617, %v1848
  %v1850 = vpop.f32.mrf.mxu0
  %v1851 = vpop.f32.mrf.mxu0
  %v1852 = vadd.f32 %v1620, %v1851
  %v1853 = vpop.f32.mrf.mxu0
  %1854 = vmatprep.mubr.bf16.mxu0 %v888
  %1855 = vmatmul.mubr.bf16.gmra.mxu0 %v887
  %v1856 = vpop.f32.mrf.mxu0
  %v1857 = vadd.f32 %v1625, %v1856
  %v1858 = vpop.f32.mrf.mxu0
  %v1859 = vpop.f32.mrf.mxu0
  %v1860 = vadd.f32 %v1628, %v1859
  %v1861 = vpop.f32.mrf.mxu0
  %1862 = vmatprep.mubr.bf16.mxu0 %v895
  %1863 = vmatmul.mubr.bf16.gmra.mxu0 %v894
  %v1864 = vpop.f32.mrf.mxu0
  %v1865 = vadd.f32 %v1633, %v1864
  %v1866 = vpop.f32.mrf.mxu0
  %v1867 = vpop.f32.mrf.mxu0
  %v1868 = vadd.f32 %v1636, %v1867
  %v1869 = vpop.f32.mrf.mxu0
  %1870 = vmatprep.mubr.bf16.mxu0 %v902
  %1871 = vmatmul.mubr.bf16.gmra.mxu0 %v901
  %v1872 = vpop.f32.mrf.mxu0
  %v1873 = vadd.f32 %v1641, %v1872
  %v1874 = vpop.f32.mrf.mxu0
  %v1875 = vpop.f32.mrf.mxu0
  %v1876 = vadd.f32 %v1644, %v1875
  %v1877 = vpop.f32.mrf.mxu0
  %1878 = vmatprep.mubr.bf16.mxu0 %v909
  %1879 = vmatmul.mubr.bf16.gmra.mxu0 %v908
  %v1880 = vpop.f32.mrf.mxu0
  %v1881 = vadd.f32 %v1649, %v1880
  %v1882 = vpop.f32.mrf.mxu0
  %v1883 = vpop.f32.mrf.mxu0
  %v1884 = vadd.f32 %v1652, %v1883
  %v1885 = vpop.f32.mrf.mxu0
  %1886 = vmatprep.mubr.bf16.mxu0 %v916
  %1887 = vmatmul.mubr.bf16.gmra.mxu0 %v915
  %v1888 = vpop.f32.mrf.mxu0
  %v1889 = vadd.f32 %v1657, %v1888
  %v1890 = vpop.f32.mrf.mxu0
  %v1891 = vpop.f32.mrf.mxu0
  %v1892 = vadd.f32 %v1660, %v1891
  %v1893 = vpop.f32.mrf.mxu0
  %1894 = vmatprep.mubr.bf16.mxu0 %v923
  %1895 = vmatmul.mubr.bf16.gmra.mxu0 %v922
  %v1896 = vpop.f32.mrf.mxu0
  %v1897 = vadd.f32 %v1665, %v1896
  %v1898 = vpop.f32.mrf.mxu0
  %v1899 = vpop.f32.mrf.mxu0
  %v1900 = vadd.f32 %v1668, %v1899
  %v1901 = vpop.f32.mrf.mxu0
  %1902 = vmatprep.mubr.bf16.mxu0 %v930
  %1903 = vmatmul.mubr.bf16.gmra.mxu0 %v929
  %v1904 = vpop.f32.mrf.mxu0
  %v1905 = vadd.f32 %v1673, %v1904
  %v1906 = vpop.f32.mrf.mxu0
  %v1907 = vpop.f32.mrf.mxu0
  %v1908 = vadd.f32 %v1676, %v1907
  %v1909 = vpop.f32.mrf.mxu0
  %1910 = vmatprep.mubr.bf16.mxu0 %v937
  %1911 = vmatmul.mubr.bf16.gmra.mxu0 %v936
  %v1912 = vpop.f32.mrf.mxu0
  %v1913 = vadd.f32 %v1681, %v1912
  %v1914 = vpop.f32.mrf.mxu0
  %v1915 = vpop.f32.mrf.mxu0
  %v1916 = vadd.f32 %v1684, %v1915
  %v1917 = vpop.f32.mrf.mxu0
  %1918 = vmatprep.mubr.bf16.mxu0 %v944
  %1919 = vmatmul.mubr.bf16.gmra.mxu0 %v943
  %v1920 = vpop.f32.mrf.mxu0
  %v1921 = vadd.f32 %v1689, %v1920
  %v1922 = vpop.f32.mrf.mxu0
  %v1923 = vpop.f32.mrf.mxu0
  %v1924 = vadd.f32 %v1692, %v1923
  %v1925 = vpop.f32.mrf.mxu0
  %1926 = vmatprep.mubr.bf16.mxu0 %v951
  %1927 = vmatmul.mubr.bf16.gmra.mxu0 %v950
  %v1928 = vpop.f32.mrf.mxu0
  %v1929 = vadd.f32 %v1697, %v1928
  %v1930 = vpop.f32.mrf.mxu0
  %v1931 = vpop.f32.mrf.mxu0
  %v1932 = vadd.f32 %v1700, %v1931
  %v1933 = vpop.f32.mrf.mxu0
  %1934 = vmatprep.mubr.bf16.mxu0 %v958
  %1935 = vmatmul.mubr.bf16.gmra.mxu0 %v957
  %v1936 = vpop.f32.mrf.mxu0
  %v1937 = vadd.f32 %v1705, %v1936
  %v1938 = vpop.f32.mrf.mxu0
  %v1939 = vpop.f32.mrf.mxu0
  %v1940 = vadd.f32 %v1708, %v1939
  %v1941 = vpop.f32.mrf.mxu0
  %1942 = vmatprep.mubr.bf16.mxu0 %v965
  %1943 = vmatmul.mubr.bf16.gmra.mxu0 %v964
  %v1944 = vpop.f32.mrf.mxu0
  %v1945 = vadd.f32 %v1713, %v1944
  %v1946 = vpop.f32.mrf.mxu0
  %v1947 = vpop.f32.mrf.mxu0
  %v1948 = vadd.f32 %v1716, %v1947
  %v1949 = vpop.f32.mrf.mxu0
  %1950 = vmatprep.mubr.bf16.mxu0 %v972
  %1951 = vmatmul.mubr.bf16.gmra.mxu0 %v971
  %v1952 = vpop.f32.mrf.mxu0
  %v1953 = vadd.f32 %v1721, %v1952
  %v1954 = vpop.f32.mrf.mxu0
  %v1955 = vpop.f32.mrf.mxu0
  %v1956 = vadd.f32 %v1724, %v1955
  %v1957 = vpop.f32.mrf.mxu0
  %1958 = vmatprep.mubr.bf16.mxu0 %v979
  %1959 = vmatmul.mubr.bf16.gmra.mxu0 %v978
  %v1960 = vpop.f32.mrf.mxu0
  %v1961 = vadd.f32 %v1729, %v1960
  %v1962 = vpop.f32.mrf.mxu0
  %v1963 = vpop.f32.mrf.mxu0
  %v1964 = vadd.f32 %v1732, %v1963
  %v1965 = vpop.f32.mrf.mxu0
  %1966 = vmatprep.mubr.bf16.mxu0 %v986
  %1967 = vmatmul.mubr.bf16.gmra.mxu0 %v985
  %v1968 = vpop.f32.mrf.mxu0
  %v1969 = vadd.f32 %v1737, %v1968
  %v1970 = vpop.f32.mrf.mxu0
  %v1971 = vpop.f32.mrf.mxu0
  %v1972 = vadd.f32 %v1740, %v1971
  %v1973 = vpop.f32.mrf.mxu0
  %1974 = vmatprep.mubr.bf16.mxu0 %v993
  %1975 = vmatmul.mubr.bf16.gmra.mxu0 %v992
  %v1976 = vpop.f32.mrf.mxu0
  %v1977 = vadd.f32 %v1745, %v1976
  %v1978 = vpop.f32.mrf.mxu0
  %v1979 = vpop.f32.mrf.mxu0
  %v1980 = vadd.f32 %v1748, %v1979
  %v1981 = vpop.f32.mrf.mxu0
  %1982 = vmatprep.mubr.bf16.mxu0 %v1000
  %1983 = vmatmul.mubr.bf16.gmra.mxu0 %v999
  %v1984 = vpop.f32.mrf.mxu0
  %v1985 = vadd.f32 %v1753, %v1984
  %v1986 = vpop.f32.mrf.mxu0
  %v1987 = vpop.f32.mrf.mxu0
  %v1988 = vadd.f32 %v1756, %v1987
  %v1989 = vpop.f32.mrf.mxu0
  %1990 = vmatprep.mubr.bf16.mxu0 %v1007
  %1991 = vmatmul.mubr.bf16.gmra.mxu0 %v1006
  %v1992 = vpop.f32.mrf.mxu0
  %v1993 = vadd.f32 %v1761, %v1992
  %v1994 = vpop.f32.mrf.mxu0
  %v1995 = vpop.f32.mrf.mxu0
  %v1996 = vadd.f32 %v1764, %v1995
  %v1997 = vpop.f32.mrf.mxu0
  %1998 = vmatprep.mubr.bf16.mxu0 %v1014
  %1999 = vmatmul.mubr.bf16.gmra.mxu0 %v1013
  %v2000 = vpop.f32.mrf.mxu0
  %v2001 = vadd.f32 %v1769, %v2000
  %v2002 = vpop.f32.mrf.mxu0
  %v2003 = vpop.f32.mrf.mxu0
  %v2004 = vadd.f32 %v1772, %v2003
  %v2005 = vpop.f32.mrf.mxu0
  %2006 = vmatprep.mubr.bf16.mxu0 %v1021
  %2007 = vmatmul.mubr.bf16.gmra.mxu0 %v1020
  %v2008 = vpop.f32.mrf.mxu0
  %v2009 = vadd.f32 %v1777, %v2008
  %v2010 = vpop.f32.mrf.mxu0
  %v2011 = vpop.f32.mrf.mxu0
  %v2012 = vadd.f32 %v1780, %v2011
  %v2013 = vpop.f32.mrf.mxu0
  %2014 = vmatprep.mubr.bf16.mxu0 %v1028
  %2015 = vmatmul.mubr.bf16.gmra.mxu0 %v1027
  %v2016 = vpop.f32.mrf.mxu0
  %v2017 = vadd.f32 %v1785, %v2016
  %v2018 = vpop.f32.mrf.mxu0
  %v2019 = vpop.f32.mrf.mxu0
  %v2020 = vpop.f32.mrf.mxu0
  %2021 = vdwg.mxu0
  %2022 = vmatprep.subr.bf16.mxu0 0
  %2023 = vmatpush1.bf16.msra.mxu0 %v1421
  %2024 = vmatprep.subr.bf16.mxu0 0
  %2025 = vmatpush1.bf16.msra.mxu0 %v1420
  %2026 = vmatprep.subr.bf16.mxu0 0
  %2027 = vmatpush1.bf16.msra.mxu0 %v1419
  %2028 = vmatprep.subr.bf16.mxu0 0
  %2029 = vmatpush1.bf16.msra.mxu0 %v1418
  %2030 = vmatprep.subr.bf16.mxu0 0
  %2031 = vmatpush1.bf16.msra.mxu0 %v1417
  %2032 = vmatprep.subr.bf16.mxu0 0
  %2033 = vmatpush1.bf16.msra.mxu0 %v1416
  %2034 = vmatprep.subr.bf16.mxu0 0
  %2035 = vmatpush1.bf16.msra.mxu0 %v1415
  %2036 = vmatprep.subr.bf16.mxu0 0
  %2037 = vmatpush1.bf16.msra.mxu0 %v1414
  %2038 = vmatprep.subr.bf16.mxu0 0
  %2039 = vmatpush2.bf16.msra.mxu0 %v1429
  %2040 = vmatprep.subr.bf16.mxu0 0
  %2041 = vmatpush2.bf16.msra.mxu0 %v1428
  %2042 = vmatprep.subr.bf16.mxu0 0
  %2043 = vmatpush2.bf16.msra.mxu0 %v1427
  %2044 = vmatprep.subr.bf16.mxu0 0
  %2045 = vmatpush2.bf16.msra.mxu0 %v1426
  %2046 = vmatprep.subr.bf16.mxu0 0
  %2047 = vmatpush2.bf16.msra.mxu0 %v1425
  %2048 = vmatprep.subr.bf16.mxu0 0
  %2049 = vmatpush2.bf16.msra.mxu0 %v1424
  %2050 = vmatprep.subr.bf16.mxu0 0
  %2051 = vmatpush2.bf16.msra.mxu0 %v1423
  %2052 = vmatprep.subr.bf16.mxu0 0
  %2053 = vmatpush2.bf16.msra.mxu0 %v1422
  %2054 = vmatprep.mubr.bf16.mxu0 %v862
  %2055 = vmatmul.mubr.bf16.gmra.mxu0 %v861
  %v2056 = vpop.f32.mrf.mxu0
  %v2057 = vadd.f32 %v1825, %v2056
  %v2058 = vpop.f32.mrf.mxu0
  %v2059 = vpop.f32.mrf.mxu0
  %v2060 = vadd.f32 %v1828, %v2059
  %v2061 = vpop.f32.mrf.mxu0
  %2062 = vmatprep.mubr.bf16.mxu0 %v869
  %2063 = vmatmul.mubr.bf16.gmra.mxu0 %v868
  %v2064 = vpop.f32.mrf.mxu0
  %v2065 = vadd.f32 %v1833, %v2064
  %v2066 = vpop.f32.mrf.mxu0
  %v2067 = vpop.f32.mrf.mxu0
  %v2068 = vadd.f32 %v1836, %v2067
  %v2069 = vpop.f32.mrf.mxu0
  %2070 = vmatprep.mubr.bf16.mxu0 %v876
  %2071 = vmatmul.mubr.bf16.gmra.mxu0 %v875
  %v2072 = vpop.f32.mrf.mxu0
  %v2073 = vadd.f32 %v1841, %v2072
  %v2074 = vpop.f32.mrf.mxu0
  %v2075 = vpop.f32.mrf.mxu0
  %v2076 = vadd.f32 %v1844, %v2075
  %v2077 = vpop.f32.mrf.mxu0
  %2078 = vmatprep.mubr.bf16.mxu0 %v883
  %2079 = vmatmul.mubr.bf16.gmra.mxu0 %v882
  %v2080 = vpop.f32.mrf.mxu0
  %v2081 = vadd.f32 %v1849, %v2080
  %v2082 = vpop.f32.mrf.mxu0
  %v2083 = vpop.f32.mrf.mxu0
  %v2084 = vadd.f32 %v1852, %v2083
  %v2085 = vpop.f32.mrf.mxu0
  %2086 = vmatprep.mubr.bf16.mxu0 %v890
  %2087 = vmatmul.mubr.bf16.gmra.mxu0 %v889
  %v2088 = vpop.f32.mrf.mxu0
  %v2089 = vadd.f32 %v1857, %v2088
  %v2090 = vpop.f32.mrf.mxu0
  %v2091 = vpop.f32.mrf.mxu0
  %v2092 = vadd.f32 %v1860, %v2091
  %v2093 = vpop.f32.mrf.mxu0
  %2094 = vmatprep.mubr.bf16.mxu0 %v897
  %2095 = vmatmul.mubr.bf16.gmra.mxu0 %v896
  %v2096 = vpop.f32.mrf.mxu0
  %v2097 = vadd.f32 %v1865, %v2096
  %v2098 = vpop.f32.mrf.mxu0
  %v2099 = vpop.f32.mrf.mxu0
  %v2100 = vadd.f32 %v1868, %v2099
  %v2101 = vpop.f32.mrf.mxu0
  %2102 = vmatprep.mubr.bf16.mxu0 %v904
  %2103 = vmatmul.mubr.bf16.gmra.mxu0 %v903
  %v2104 = vpop.f32.mrf.mxu0
  %v2105 = vadd.f32 %v1873, %v2104
  %v2106 = vpop.f32.mrf.mxu0
  %v2107 = vpop.f32.mrf.mxu0
  %v2108 = vadd.f32 %v1876, %v2107
  %v2109 = vpop.f32.mrf.mxu0
  %2110 = vmatprep.mubr.bf16.mxu0 %v911
  %2111 = vmatmul.mubr.bf16.gmra.mxu0 %v910
  %v2112 = vpop.f32.mrf.mxu0
  %v2113 = vadd.f32 %v1881, %v2112
  %v2114 = vpop.f32.mrf.mxu0
  %v2115 = vpop.f32.mrf.mxu0
  %v2116 = vadd.f32 %v1884, %v2115
  %v2117 = vpop.f32.mrf.mxu0
  %2118 = vmatprep.mubr.bf16.mxu0 %v918
  %2119 = vmatmul.mubr.bf16.gmra.mxu0 %v917
  %v2120 = vpop.f32.mrf.mxu0
  %v2121 = vadd.f32 %v1889, %v2120
  %v2122 = vpop.f32.mrf.mxu0
  %v2123 = vpop.f32.mrf.mxu0
  %v2124 = vadd.f32 %v1892, %v2123
  %v2125 = vpop.f32.mrf.mxu0
  %2126 = vmatprep.mubr.bf16.mxu0 %v925
  %2127 = vmatmul.mubr.bf16.gmra.mxu0 %v924
  %v2128 = vpop.f32.mrf.mxu0
  %v2129 = vadd.f32 %v1897, %v2128
  %v2130 = vpop.f32.mrf.mxu0
  %v2131 = vpop.f32.mrf.mxu0
  %v2132 = vadd.f32 %v1900, %v2131
  %v2133 = vpop.f32.mrf.mxu0
  %2134 = vmatprep.mubr.bf16.mxu0 %v932
  %2135 = vmatmul.mubr.bf16.gmra.mxu0 %v931
  %v2136 = vpop.f32.mrf.mxu0
  %v2137 = vadd.f32 %v1905, %v2136
  %v2138 = vpop.f32.mrf.mxu0
  %v2139 = vpop.f32.mrf.mxu0
  %v2140 = vadd.f32 %v1908, %v2139
  %v2141 = vpop.f32.mrf.mxu0
  %2142 = vmatprep.mubr.bf16.mxu0 %v939
  %2143 = vmatmul.mubr.bf16.gmra.mxu0 %v938
  %v2144 = vpop.f32.mrf.mxu0
  %v2145 = vadd.f32 %v1913, %v2144
  %v2146 = vpop.f32.mrf.mxu0
  %v2147 = vpop.f32.mrf.mxu0
  %v2148 = vadd.f32 %v1916, %v2147
  %v2149 = vpop.f32.mrf.mxu0
  %2150 = vmatprep.mubr.bf16.mxu0 %v946
  %2151 = vmatmul.mubr.bf16.gmra.mxu0 %v945
  %v2152 = vpop.f32.mrf.mxu0
  %v2153 = vadd.f32 %v1921, %v2152
  %v2154 = vpop.f32.mrf.mxu0
  %v2155 = vpop.f32.mrf.mxu0
  %v2156 = vadd.f32 %v1924, %v2155
  %v2157 = vpop.f32.mrf.mxu0
  %2158 = vmatprep.mubr.bf16.mxu0 %v953
  %2159 = vmatmul.mubr.bf16.gmra.mxu0 %v952
  %v2160 = vpop.f32.mrf.mxu0
  %v2161 = vadd.f32 %v1929, %v2160
  %v2162 = vpop.f32.mrf.mxu0
  %v2163 = vpop.f32.mrf.mxu0
  %v2164 = vadd.f32 %v1932, %v2163
  %v2165 = vpop.f32.mrf.mxu0
  %2166 = vmatprep.mubr.bf16.mxu0 %v960
  %2167 = vmatmul.mubr.bf16.gmra.mxu0 %v959
  %v2168 = vpop.f32.mrf.mxu0
  %v2169 = vadd.f32 %v1937, %v2168
  %v2170 = vpop.f32.mrf.mxu0
  %v2171 = vpop.f32.mrf.mxu0
  %v2172 = vadd.f32 %v1940, %v2171
  %v2173 = vpop.f32.mrf.mxu0
  %2174 = vmatprep.mubr.bf16.mxu0 %v967
  %2175 = vmatmul.mubr.bf16.gmra.mxu0 %v966
  %v2176 = vpop.f32.mrf.mxu0
  %v2177 = vadd.f32 %v1945, %v2176
  %v2178 = vpop.f32.mrf.mxu0
  %v2179 = vpop.f32.mrf.mxu0
  %v2180 = vadd.f32 %v1948, %v2179
  %v2181 = vpop.f32.mrf.mxu0
  %2182 = vmatprep.mubr.bf16.mxu0 %v974
  %2183 = vmatmul.mubr.bf16.gmra.mxu0 %v973
  %v2184 = vpop.f32.mrf.mxu0
  %v2185 = vadd.f32 %v1953, %v2184
  %v2186 = vpop.f32.mrf.mxu0
  %v2187 = vpop.f32.mrf.mxu0
  %v2188 = vadd.f32 %v1956, %v2187
  %v2189 = vpop.f32.mrf.mxu0
  %2190 = vmatprep.mubr.bf16.mxu0 %v981
  %2191 = vmatmul.mubr.bf16.gmra.mxu0 %v980
  %v2192 = vpop.f32.mrf.mxu0
  %v2193 = vadd.f32 %v1961, %v2192
  %v2194 = vpop.f32.mrf.mxu0
  %v2195 = vpop.f32.mrf.mxu0
  %v2196 = vadd.f32 %v1964, %v2195
  %v2197 = vpop.f32.mrf.mxu0
  %2198 = vmatprep.mubr.bf16.mxu0 %v988
  %2199 = vmatmul.mubr.bf16.gmra.mxu0 %v987
  %v2200 = vpop.f32.mrf.mxu0
  %v2201 = vadd.f32 %v1969, %v2200
  %v2202 = vpop.f32.mrf.mxu0
  %v2203 = vpop.f32.mrf.mxu0
  %v2204 = vadd.f32 %v1972, %v2203
  %v2205 = vpop.f32.mrf.mxu0
  %2206 = vmatprep.mubr.bf16.mxu0 %v995
  %2207 = vmatmul.mubr.bf16.gmra.mxu0 %v994
  %v2208 = vpop.f32.mrf.mxu0
  %v2209 = vadd.f32 %v1977, %v2208
  %v2210 = vpop.f32.mrf.mxu0
  %v2211 = vpop.f32.mrf.mxu0
  %v2212 = vadd.f32 %v1980, %v2211
  %v2213 = vpop.f32.mrf.mxu0
  %2214 = vmatprep.mubr.bf16.mxu0 %v1002
  %2215 = vmatmul.mubr.bf16.gmra.mxu0 %v1001
  %v2216 = vpop.f32.mrf.mxu0
  %v2217 = vadd.f32 %v1985, %v2216
  %v2218 = vpop.f32.mrf.mxu0
  %v2219 = vpop.f32.mrf.mxu0
  %v2220 = vadd.f32 %v1988, %v2219
  %v2221 = vpop.f32.mrf.mxu0
  %2222 = vmatprep.mubr.bf16.mxu0 %v1009
  %2223 = vmatmul.mubr.bf16.gmra.mxu0 %v1008
  %v2224 = vpop.f32.mrf.mxu0
  %v2225 = vadd.f32 %v1993, %v2224
  %v2226 = vpop.f32.mrf.mxu0
  %v2227 = vpop.f32.mrf.mxu0
  %v2228 = vadd.f32 %v1996, %v2227
  %v2229 = vpop.f32.mrf.mxu0
  %2230 = vmatprep.mubr.bf16.mxu0 %v1016
  %2231 = vmatmul.mubr.bf16.gmra.mxu0 %v1015
  %v2232 = vpop.f32.mrf.mxu0
  %v2233 = vadd.f32 %v2001, %v2232
  %v2234 = vpop.f32.mrf.mxu0
  %v2235 = vpop.f32.mrf.mxu0
  %v2236 = vadd.f32 %v2004, %v2235
  %v2237 = vpop.f32.mrf.mxu0
  %2238 = vmatprep.mubr.bf16.mxu0 %v1023
  %2239 = vmatmul.mubr.bf16.gmra.mxu0 %v1022
  %v2240 = vpop.f32.mrf.mxu0
  %v2241 = vadd.f32 %v2009, %v2240
  %v2242 = vpop.f32.mrf.mxu0
  %v2243 = vpop.f32.mrf.mxu0
  %v2244 = vadd.f32 %v2012, %v2243
  %v2245 = vpop.f32.mrf.mxu0
  %2246 = vmatprep.mubr.bf16.mxu0 %v1030
  %2247 = vmatmul.mubr.bf16.gmra.mxu0 %v1029
  %v2248 = vpop.f32.mrf.mxu0
  %v2249 = vadd.f32 %v2017, %v2248
  %v2250 = vpop.f32.mrf.mxu0
  %v2251 = vpop.f32.mrf.mxu0
  %v2252 = vpop.f32.mrf.mxu0
  %2253 = vdwg.mxu0
  %2254 = vmatprep.subr.bf16.mxu0 0
  %2255 = vmatpush1.bf16.msra.mxu0 0
  %2256 = vmatprep.subr.bf16.mxu0 0
  %2257 = vmatpush1.bf16.msra.mxu0 0
  %2258 = vmatprep.subr.bf16.mxu0 0
  %2259 = vmatpush1.bf16.msra.mxu0 0
  %2260 = vmatprep.subr.bf16.mxu0 0
  %2261 = vmatpush1.bf16.msra.mxu0 0
  %2262 = vmatprep.subr.bf16.mxu0 0
  %2263 = vmatpush1.bf16.msra.mxu0 0
  %2264 = vmatprep.subr.bf16.mxu0 0
  %2265 = vmatpush1.bf16.msra.mxu0 0
  %2266 = vmatprep.subr.bf16.mxu0 0
  %2267 = vmatpush1.bf16.msra.mxu0 %v1431
  %2268 = vmatprep.subr.bf16.mxu0 0
  %2269 = vmatpush1.bf16.msra.mxu0 %v1430
  %2270 = vmatprep.subr.bf16.mxu0 0
  %2271 = vmatpush2.bf16.msra.mxu0 0
  %2272 = vmatprep.subr.bf16.mxu0 0
  %2273 = vmatpush2.bf16.msra.mxu0 0
  %2274 = vmatprep.subr.bf16.mxu0 0
  %2275 = vmatpush2.bf16.msra.mxu0 0
  %2276 = vmatprep.subr.bf16.mxu0 0
  %2277 = vmatpush2.bf16.msra.mxu0 0
  %2278 = vmatprep.subr.bf16.mxu0 0
  %2279 = vmatpush2.bf16.msra.mxu0 0
  %2280 = vmatprep.subr.bf16.mxu0 0
  %2281 = vmatpush2.bf16.msra.mxu0 0
  %2282 = vmatprep.subr.bf16.mxu0 0
  %2283 = vmatpush2.bf16.msra.mxu0 0
  %2284 = vmatprep.subr.bf16.mxu0 0
  %2285 = vmatpush2.bf16.msra.mxu0 0
  %2286 = vmatprep.mubr.bf16.mxu0 0
  %2287 = vmatmul.mubr.bf16.gmra.mxu0 %v1484
  %v2288 = vpop.f32.mrf.mxu0
  %v2289 = vadd.f32 %v2057, %v2288
  %v2290 = vpop.f32.mrf.mxu0
  %v2291 = vpop.f32.mrf.mxu0
  %v2292 = vadd.f32 %v2060, %v2291
  %v2293 = vpop.f32.mrf.mxu0
  %2294 = vmatprep.mubr.bf16.mxu0 0
  %2295 = vmatmul.mubr.bf16.gmra.mxu0 %v1487
  %v2296 = vpop.f32.mrf.mxu0
  %v2297 = vadd.f32 %v2065, %v2296
  %v2298 = vpop.f32.mrf.mxu0
  %v2299 = vpop.f32.mrf.mxu0
  %v2300 = vadd.f32 %v2068, %v2299
  %v2301 = vpop.f32.mrf.mxu0
  %2302 = vmatprep.mubr.bf16.mxu0 0
  %2303 = vmatmul.mubr.bf16.gmra.mxu0 %v1490
  %v2304 = vpop.f32.mrf.mxu0
  %v2305 = vadd.f32 %v2073, %v2304
  %v2306 = vpop.f32.mrf.mxu0
  %v2307 = vpop.f32.mrf.mxu0
  %v2308 = vadd.f32 %v2076, %v2307
  %v2309 = vpop.f32.mrf.mxu0
  %2310 = vmatprep.mubr.bf16.mxu0 0
  %2311 = vmatmul.mubr.bf16.gmra.mxu0 %v1493
  %v2312 = vpop.f32.mrf.mxu0
  %v2313 = vadd.f32 %v2081, %v2312
  %v2314 = vpop.f32.mrf.mxu0
  %v2315 = vpop.f32.mrf.mxu0
  %v2316 = vadd.f32 %v2084, %v2315
  %v2317 = vpop.f32.mrf.mxu0
  %2318 = vmatprep.mubr.bf16.mxu0 0
  %2319 = vmatmul.mubr.bf16.gmra.mxu0 %v1496
  %v2320 = vpop.f32.mrf.mxu0
  %v2321 = vadd.f32 %v2089, %v2320
  %v2322 = vpop.f32.mrf.mxu0
  %v2323 = vpop.f32.mrf.mxu0
  %v2324 = vadd.f32 %v2092, %v2323
  %v2325 = vpop.f32.mrf.mxu0
  %2326 = vmatprep.mubr.bf16.mxu0 0
  %2327 = vmatmul.mubr.bf16.gmra.mxu0 %v1499
  %v2328 = vpop.f32.mrf.mxu0
  %v2329 = vadd.f32 %v2097, %v2328
  %v2330 = vpop.f32.mrf.mxu0
  %v2331 = vpop.f32.mrf.mxu0
  %v2332 = vadd.f32 %v2100, %v2331
  %v2333 = vpop.f32.mrf.mxu0
  %2334 = vmatprep.mubr.bf16.mxu0 0
  %2335 = vmatmul.mubr.bf16.gmra.mxu0 %v1502
  %v2336 = vpop.f32.mrf.mxu0
  %v2337 = vadd.f32 %v2105, %v2336
  %v2338 = vpop.f32.mrf.mxu0
  %v2339 = vpop.f32.mrf.mxu0
  %v2340 = vadd.f32 %v2108, %v2339
  %v2341 = vpop.f32.mrf.mxu0
  %2342 = vmatprep.mubr.bf16.mxu0 0
  %2343 = vmatmul.mubr.bf16.gmra.mxu0 %v1505
  %v2344 = vpop.f32.mrf.mxu0
  %v2345 = vadd.f32 %v2113, %v2344
  %v2346 = vpop.f32.mrf.mxu0
  %v2347 = vpop.f32.mrf.mxu0
  %v2348 = vadd.f32 %v2116, %v2347
  %v2349 = vpop.f32.mrf.mxu0
  %2350 = vmatprep.mubr.bf16.mxu0 0
  %2351 = vmatmul.mubr.bf16.gmra.mxu0 %v1508
  %v2352 = vpop.f32.mrf.mxu0
  %v2353 = vadd.f32 %v2121, %v2352
  %v2354 = vpop.f32.mrf.mxu0
  %v2355 = vpop.f32.mrf.mxu0
  %v2356 = vadd.f32 %v2124, %v2355
  %v2357 = vpop.f32.mrf.mxu0
  %2358 = vmatprep.mubr.bf16.mxu0 0
  %2359 = vmatmul.mubr.bf16.gmra.mxu0 %v1511
  %v2360 = vpop.f32.mrf.mxu0
  %v2361 = vadd.f32 %v2129, %v2360
  %v2362 = vpop.f32.mrf.mxu0
  %v2363 = vpop.f32.mrf.mxu0
  %v2364 = vadd.f32 %v2132, %v2363
  %v2365 = vpop.f32.mrf.mxu0
  %2366 = vmatprep.mubr.bf16.mxu0 0
  %2367 = vmatmul.mubr.bf16.gmra.mxu0 %v1514
  %v2368 = vpop.f32.mrf.mxu0
  %v2369 = vadd.f32 %v2137, %v2368
  %v2370 = vpop.f32.mrf.mxu0
  %v2371 = vpop.f32.mrf.mxu0
  %v2372 = vadd.f32 %v2140, %v2371
  %v2373 = vpop.f32.mrf.mxu0
  %2374 = vmatprep.mubr.bf16.mxu0 0
  %2375 = vmatmul.mubr.bf16.gmra.mxu0 %v1517
  %v2376 = vpop.f32.mrf.mxu0
  %v2377 = vadd.f32 %v2145, %v2376
  %v2378 = vpop.f32.mrf.mxu0
  %v2379 = vpop.f32.mrf.mxu0
  %v2380 = vadd.f32 %v2148, %v2379
  %v2381 = vpop.f32.mrf.mxu0
  %2382 = vmatprep.mubr.bf16.mxu0 0
  %2383 = vmatmul.mubr.bf16.gmra.mxu0 %v1520
  %v2384 = vpop.f32.mrf.mxu0
  %v2385 = vadd.f32 %v2153, %v2384
  %v2386 = vpop.f32.mrf.mxu0
  %v2387 = vpop.f32.mrf.mxu0
  %v2388 = vadd.f32 %v2156, %v2387
  %v2389 = vpop.f32.mrf.mxu0
  %2390 = vmatprep.mubr.bf16.mxu0 0
  %2391 = vmatmul.mubr.bf16.gmra.mxu0 %v1523
  %v2392 = vpop.f32.mrf.mxu0
  %v2393 = vadd.f32 %v2161, %v2392
  %v2394 = vpop.f32.mrf.mxu0
  %v2395 = vpop.f32.mrf.mxu0
  %v2396 = vadd.f32 %v2164, %v2395
  %v2397 = vpop.f32.mrf.mxu0
  %2398 = vmatprep.mubr.bf16.mxu0 0
  %2399 = vmatmul.mubr.bf16.gmra.mxu0 %v1526
  %v2400 = vpop.f32.mrf.mxu0
  %v2401 = vadd.f32 %v2169, %v2400
  %v2402 = vpop.f32.mrf.mxu0
  %v2403 = vpop.f32.mrf.mxu0
  %v2404 = vadd.f32 %v2172, %v2403
  %v2405 = vpop.f32.mrf.mxu0
  %2406 = vmatprep.mubr.bf16.mxu0 0
  %2407 = vmatmul.mubr.bf16.gmra.mxu0 %v1529
  %v2408 = vpop.f32.mrf.mxu0
  %v2409 = vadd.f32 %v2177, %v2408
  %v2410 = vpop.f32.mrf.mxu0
  %v2411 = vpop.f32.mrf.mxu0
  %v2412 = vadd.f32 %v2180, %v2411
  %v2413 = vpop.f32.mrf.mxu0
  %2414 = vmatprep.mubr.bf16.mxu0 0
  %2415 = vmatmul.mubr.bf16.gmra.mxu0 %v1532
  %v2416 = vpop.f32.mrf.mxu0
  %v2417 = vadd.f32 %v2185, %v2416
  %v2418 = vpop.f32.mrf.mxu0
  %v2419 = vpop.f32.mrf.mxu0
  %v2420 = vadd.f32 %v2188, %v2419
  %v2421 = vpop.f32.mrf.mxu0
  %2422 = vmatprep.mubr.bf16.mxu0 0
  %2423 = vmatmul.mubr.bf16.gmra.mxu0 %v1535
  %v2424 = vpop.f32.mrf.mxu0
  %v2425 = vadd.f32 %v2193, %v2424
  %v2426 = vpop.f32.mrf.mxu0
  %v2427 = vpop.f32.mrf.mxu0
  %v2428 = vadd.f32 %v2196, %v2427
  %v2429 = vpop.f32.mrf.mxu0
  %2430 = vmatprep.mubr.bf16.mxu0 0
  %2431 = vmatmul.mubr.bf16.gmra.mxu0 %v1538
  %v2432 = vpop.f32.mrf.mxu0
  %v2433 = vadd.f32 %v2201, %v2432
  %v2434 = vpop.f32.mrf.mxu0
  %v2435 = vpop.f32.mrf.mxu0
  %v2436 = vadd.f32 %v2204, %v2435
  %v2437 = vpop.f32.mrf.mxu0
  %2438 = vmatprep.mubr.bf16.mxu0 0
  %2439 = vmatmul.mubr.bf16.gmra.mxu0 %v1541
  %v2440 = vpop.f32.mrf.mxu0
  %v2441 = vadd.f32 %v2209, %v2440
  %v2442 = vpop.f32.mrf.mxu0
  %v2443 = vpop.f32.mrf.mxu0
  %v2444 = vadd.f32 %v2212, %v2443
  %v2445 = vpop.f32.mrf.mxu0
  %2446 = vmatprep.mubr.bf16.mxu0 0
  %2447 = vmatmul.mubr.bf16.gmra.mxu0 %v1544
  %v2448 = vpop.f32.mrf.mxu0
  %v2449 = vadd.f32 %v2217, %v2448
  %v2450 = vpop.f32.mrf.mxu0
  %v2451 = vpop.f32.mrf.mxu0
  %v2452 = vadd.f32 %v2220, %v2451
  %v2453 = vpop.f32.mrf.mxu0
  %2454 = vmatprep.mubr.bf16.mxu0 0
  %2455 = vmatmul.mubr.bf16.gmra.mxu0 %v1547
  %v2456 = vpop.f32.mrf.mxu0
  %v2457 = vadd.f32 %v2225, %v2456
  %v2458 = vpop.f32.mrf.mxu0
  %v2459 = vpop.f32.mrf.mxu0
  %v2460 = vadd.f32 %v2228, %v2459
  %v2461 = vpop.f32.mrf.mxu0
  %2462 = vmatprep.mubr.bf16.mxu0 0
  %2463 = vmatmul.mubr.bf16.gmra.mxu0 %v1550
  %v2464 = vpop.f32.mrf.mxu0
  %v2465 = vadd.f32 %v2233, %v2464
  %v2466 = vpop.f32.mrf.mxu0
  %v2467 = vpop.f32.mrf.mxu0
  %v2468 = vadd.f32 %v2236, %v2467
  %v2469 = vpop.f32.mrf.mxu0
  %2470 = vmatprep.mubr.bf16.mxu0 0
  %2471 = vmatmul.mubr.bf16.gmra.mxu0 %v1553
  %v2472 = vpop.f32.mrf.mxu0
  %v2473 = vadd.f32 %v2241, %v2472
  %v2474 = vpop.f32.mrf.mxu0
  %v2475 = vpop.f32.mrf.mxu0
  %v2476 = vadd.f32 %v2244, %v2475
  %v2477 = vpop.f32.mrf.mxu0
  %2478 = vmatprep.mubr.bf16.mxu0 0
  %2479 = vmatmul.mubr.bf16.gmra.mxu0 %v1556
  %v2480 = vpop.f32.mrf.mxu0
  %v2481 = vadd.f32 %v2249, %v2480
  %v2482 = vpop.f32.mrf.mxu0
  %v2483 = vpop.f32.mrf.mxu0
  %v2484 = vpop.f32.mrf.mxu0
  %2485 = vdwg.mxu0
  %v2486 = vmax.f32 %v2289, 0.0
  %v2487 = vmax.f32 %v2292, 0.0
  %v2488 = vmax.f32 %v2297, 0.0
  %v2489 = vmax.f32 %v2300, 0.0
  %v2490 = vmax.f32 %v2305, 0.0
  %v2491 = vmax.f32 %v2308, 0.0
  %v2492 = vmax.f32 %v2313, 0.0
  %v2493 = vmax.f32 %v2316, 0.0
  %v2494 = vmax.f32 %v2321, 0.0
  %v2495 = vmax.f32 %v2324, 0.0
  %v2496 = vmax.f32 %v2329, 0.0
  %v2497 = vmax.f32 %v2332, 0.0
  %v2498 = vmax.f32 %v2337, 0.0
  %v2499 = vmax.f32 %v2340, 0.0
  %v2500 = vmax.f32 %v2345, 0.0
  %v2501 = vmax.f32 %v2348, 0.0
  %v2502 = vmax.f32 %v2353, 0.0
  %v2503 = vmax.f32 %v2356, 0.0
  %v2504 = vmax.f32 %v2361, 0.0
  %v2505 = vmax.f32 %v2364, 0.0
  %v2506 = vmax.f32 %v2369, 0.0
  %v2507 = vmax.f32 %v2372, 0.0
  %v2508 = vmax.f32 %v2377, 0.0
  %v2509 = vmax.f32 %v2380, 0.0
  %v2510 = vmax.f32 %v2385, 0.0
  %v2511 = vmax.f32 %v2388, 0.0
  %v2512 = vmax.f32 %v2393, 0.0
  %v2513 = vmax.f32 %v2396, 0.0
  %v2514 = vmax.f32 %v2401, 0.0
  %v2515 = vmax.f32 %v2404, 0.0
  %v2516 = vmax.f32 %v2409, 0.0
  %v2517 = vmax.f32 %v2412, 0.0
  %v2518 = vmax.f32 %v2417, 0.0
  %v2519 = vmax.f32 %v2420, 0.0
  %v2520 = vmax.f32 %v2425, 0.0
  %v2521 = vmax.f32 %v2428, 0.0
  %v2522 = vmax.f32 %v2433, 0.0
  %v2523 = vmax.f32 %v2436, 0.0
  %v2524 = vmax.f32 %v2441, 0.0
  %v2525 = vmax.f32 %v2444, 0.0
  %v2526 = vmax.f32 %v2449, 0.0
  %v2527 = vmax.f32 %v2452, 0.0
  %v2528 = vmax.f32 %v2457, 0.0
  %v2529 = vmax.f32 %v2460, 0.0
  %v2530 = vmax.f32 %v2465, 0.0
  %v2531 = vmax.f32 %v2468, 0.0
  %v2532 = vmax.f32 %v2473, 0.0
  %v2533 = vmax.f32 %v2476, 0.0
  %v2534 = vmax.f32 %v2481, 0.0
  %vm2548 = vcmask 1045504
  %v2549 = vrot.slane %v2498, 2
  %v2550 = vrot.slane %v2499, 2
  %v2551 = vsel %vm2548, %v2549, %v2550
  %v2552 = vrot.slane %v2500, 2
  %v2553 = vsel %vm2548, %v2550, %v2552
  %v2554 = vrot.slane %v2501, 2
  %v2555 = vsel %vm2548, %v2552, %v2554
  %v2556 = vrot.slane %v2502, 2
  %v2557 = vsel %vm2548, %v2554, %v2556
  %v2558 = vrot.slane %v2503, 2
  %v2559 = vsel %vm2548, %v2556, %v2558
  %v2560 = vrot.slane %v2504, 2
  %v2561 = vsel %vm2548, %v2558, %v2560
  %v2562 = vrot.slane %v2505, 2
  %v2563 = vsel %vm2548, %v2560, %v2562
  %v2564 = vrot.slane %v2506, 2
  %v2565 = vsel %vm2548, %v2562, %v2564
  %v2566 = vrot.slane %v2507, 2
  %v2567 = vsel %vm2548, %v2564, %v2566
  %v2568 = vrot.slane %v2508, 2
  %v2569 = vsel %vm2548, %v2566, %v2568
  %v2570 = vrot.slane %v2509, 2
  %v2571 = vsel %vm2548, %v2568, %v2570
  %v2572 = vrot.slane %v2510, 2
  %v2573 = vsel %vm2548, %v2570, %v2572
  %v2587 = vmax.f32 %v2486, %v2551
  %v2588 = vmax.f32 %v2487, %v2553
  %v2589 = vmax.f32 %v2488, %v2555
  %v2590 = vmax.f32 %v2489, %v2557
  %v2591 = vmax.f32 %v2490, %v2559
  %v2592 = vmax.f32 %v2491, %v2561
  %v2593 = vmax.f32 %v2492, %v2563
  %v2594 = vmax.f32 %v2493, %v2565
  %v2595 = vmax.f32 %v2494, %v2567
  %v2596 = vmax.f32 %v2495, %v2569
  %v2597 = vmax.f32 %v2496, %v2571
  %v2598 = vmax.f32 %v2497, %v2573
  %v2599 = vmax.f32 %v2498, %v2572
  %v2613 = vrot.slane %v2522, 2
  %v2614 = vrot.slane %v2523, 2
  %v2615 = vsel %vm2548, %v2613, %v2614
  %v2616 = vrot.slane %v2524, 2
  %v2617 = vsel %vm2548, %v2614, %v2616
  %v2618 = vrot.slane %v2525, 2
  %v2619 = vsel %vm2548, %v2616, %v2618
  %v2620 = vrot.slane %v2526, 2
  %v2621 = vsel %vm2548, %v2618, %v2620
  %v2622 = vrot.slane %v2527, 2
  %v2623 = vsel %vm2548, %v2620, %v2622
  %v2624 = vrot.slane %v2528, 2
  %v2625 = vsel %vm2548, %v2622, %v2624
  %v2626 = vrot.slane %v2529, 2
  %v2627 = vsel %vm2548, %v2624, %v2626
  %v2628 = vrot.slane %v2530, 2
  %v2629 = vsel %vm2548, %v2626, %v2628
  %v2630 = vrot.slane %v2531, 2
  %v2631 = vsel %vm2548, %v2628, %v2630
  %v2632 = vrot.slane %v2532, 2
  %v2633 = vsel %vm2548, %v2630, %v2632
  %v2634 = vrot.slane %v2533, 2
  %v2635 = vsel %vm2548, %v2632, %v2634
  %v2636 = vrot.slane %v2534, 2
  %v2637 = vsel %vm2548, %v2634, %v2636
  %v2651 = vmax.f32 %v2510, %v2615
  %v2652 = vmax.f32 %v2511, %v2617
  %v2653 = vmax.f32 %v2512, %v2619
  %v2654 = vmax.f32 %v2513, %v2621
  %v2655 = vmax.f32 %v2514, %v2623
  %v2656 = vmax.f32 %v2515, %v2625
  %v2657 = vmax.f32 %v2516, %v2627
  %v2658 = vmax.f32 %v2517, %v2629
  %v2659 = vmax.f32 %v2518, %v2631
  %v2660 = vmax.f32 %v2519, %v2633
  %v2661 = vmax.f32 %v2520, %v2635
  %v2662 = vmax.f32 %v2521, %v2637
  %v2663 = vmax.f32 %v2522, %v2636
  %vm2677 = vcmask 1043456
  %v2678 = vrot.slane %v2651, 4
  %v2679 = vrot.slane %v2652, 4
  %v2680 = vsel %vm2677, %v2678, %v2679
  %v2681 = vrot.slane %v2653, 4
  %v2682 = vsel %vm2677, %v2679, %v2681
  %v2683 = vrot.slane %v2654, 4
  %v2684 = vsel %vm2677, %v2681, %v2683
  %v2685 = vrot.slane %v2655, 4
  %v2686 = vsel %vm2677, %v2683, %v2685
  %v2687 = vrot.slane %v2656, 4
  %v2688 = vsel %vm2677, %v2685, %v2687
  %v2689 = vrot.slane %v2657, 4
  %v2690 = vsel %vm2677, %v2687, %v2689
  %v2691 = vrot.slane %v2658, 4
  %v2692 = vsel %vm2677, %v2689, %v2691
  %v2693 = vrot.slane %v2659, 4
  %v2694 = vsel %vm2677, %v2691, %v2693
  %v2695 = vrot.slane %v2660, 4
  %v2696 = vsel %vm2677, %v2693, %v2695
  %v2697 = vrot.slane %v2661, 4
  %v2698 = vsel %vm2677, %v2695, %v2697
  %v2699 = vrot.slane %v2662, 4
  %v2700 = vsel %vm2677, %v2697, %v2699
  %v2701 = vrot.slane %v2663, 4
  %v2702 = vsel %vm2677, %v2699, %v2701
  %v2716 = vmax.f32 %v2587, %v2680
  %v2717 = vmax.f32 %v2588, %v2682
  %v2718 = vmax.f32 %v2589, %v2684
  %v2719 = vmax.f32 %v2590, %v2686
  %v2720 = vmax.f32 %v2591, %v2688
  %v2721 = vmax.f32 %v2592, %v2690
  %v2722 = vmax.f32 %v2593, %v2692
  %v2723 = vmax.f32 %v2594, %v2694
  %v2724 = vmax.f32 %v2595, %v2696
  %v2725 = vmax.f32 %v2596, %v2698
  %v2726 = vmax.f32 %v2597, %v2700
  %v2727 = vmax.f32 %v2598, %v2702
  %v2728 = vmax.f32 %v2599, %v2701
  %v2729 = vpack.c.bf16 %v2717, %v2716
  %v2730 = vpack.c.bf16 %v2719, %v2718
  %v2731 = vpack.c.bf16 %v2721, %v2720
  %v2732 = vpack.c.bf16 %v2723, %v2722
  %v2733 = vpack.c.bf16 %v2725, %v2724
  %v2734 = vpack.c.bf16 %v2727, %v2726
  %v2735 = vpack.c.bf16 %v2728, %v2728
  %v2743 = vunpack.c.l.b16 %v2729
  %v2744 = vunpack.c.h.b16 %v2729
  %v2745 = vunpack.c.l.b16 %v2730
  %v2746 = vunpack.c.h.b16 %v2730
  %v2747 = vunpack.c.l.b16 %v2731
  %v2748 = vunpack.c.h.b16 %v2731
  %v2749 = vunpack.c.l.b16 %v2732
  %v2750 = vunpack.c.h.b16 %v2732
  %v2751 = vunpack.c.l.b16 %v2733
  %v2752 = vunpack.c.h.b16 %v2733
  %v2753 = vunpack.c.l.b16 %v2734
  %v2754 = vunpack.c.h.b16 %v2734
  %v2755 = vunpack.c.l.b16 %v2735
  %v2756 = vpack.c.b16 %v2743, %v2743
  %v2757 = vpack.c.b16 %v2744, %v2744
  %v2758 = vpack.c.b16 %v2745, %v2745
  %v2759 = vpack.c.b16 %v2746, %v2746
  %v2760 = vpack.c.b16 %v2747, %v2747
  %v2761 = vpack.c.b16 %v2748, %v2748
  %v2762 = vpack.c.b16 %v2749, %v2749
  %v2763 = vpack.c.b16 %v2750, %v2750
  %v2764 = vpack.c.b16 %v2751, %v2751
  %v2765 = vpack.c.b16 %v2752, %v2752
  %v2766 = vpack.c.b16 %v2753, %v2753
  %v2767 = vpack.c.b16 %v2754, %v2754
  %v2768 = vpack.c.b16 %v2755, %v2755
  %2782 = vst [vmem:[%s3] sm:$0xf] %v2756
  %2783 = vst [vmem:[%s3 + $0x4] sm:$0xf] %v2757
  %2784 = vst [vmem:[%s3 + $0x8] sm:$0xf] %v2758
  %2785 = vst [vmem:[%s3 + $0xc] sm:$0xf] %v2759
  %2786 = vst [vmem:[%s3 + $0x10] sm:$0xf] %v2760
  %2787 = vst [vmem:[%s3 + $0x14] sm:$0xf] %v2761
  %2788 = vst [vmem:[%s3 + $0x18] sm:$0xf] %v2762
  %2789 = vst [vmem:[%s3 + $0x1c] sm:$0xf] %v2763
  %2790 = vst [vmem:[%s3 + $0x20] sm:$0xf] %v2764
  %2791 = vst [vmem:[%s3 + $0x24] sm:$0xf] %v2765
  %2792 = vst [vmem:[%s3 + $0x28] sm:$0xf] %v2766
  %2793 = vst [vmem:[%s3 + $0x2c] sm:$0xf] %v2767
  %2794 = vst [vmem:[%s3 + $0x30] sm:$0x1] %v2768
  // Predicated region
  $region14: #{simple_cnn_forward.4} parent=0 // pred_check
    _
  $region15: #{simple_cnn_forward.4} parent=0 // pred_check_branch
    %2796 = sbr.rel (0) target = $region17
  $region16: #{simple_cnn_forward.4} parent=0 // pred_region
    _
  $region17: #{simple_cnn_forward.4} parent=0 // pred_fallthru
    _
  // Predicated region
  $region18: #{simple_cnn_forward.4} parent=0 // pred_check
    _
  $region19: #{simple_cnn_forward.4} parent=0 // pred_check_branch
    %2798 = sbr.rel (0) target = $region21
  $region20: #{simple_cnn_forward.4} parent=0 // pred_region
    _
  $region21: #{simple_cnn_forward.4} parent=0 // pred_fallthru
    _

// kernel: simple_cnn_forward.5
$region0: #{simple_cnn_forward.5}
  #allocation0 [shape = 'u32[]', space=smem, size = 0x4, offset = 0x4, fixed_abs, tag = 'smem constant byte address 0x4 - core index']
  #allocation1 [shape = 'u32[144,128]{1,0:T(1,128)}', space=vmem, size = 0x12000, scoped, tag = 'internal scratch']
  %s0 = inlined_call_operand.vmem [shape: bf16[2,6272], index: 0, kind: input, shape index: {}]
  %s1 = inlined_call_operand.vmem [shape: bf16[6272,128], index: 1, kind: input, shape index: {}]
  %s2 = inlined_call_operand.vmem [shape: f32[1,128], index: 2, kind: input, shape index: {}]
  %s3 = inlined_call_operand.vmem [shape: f32[128,10], index: 3, kind: input, shape index: {}]
  %s4 = inlined_call_operand.vmem [shape: f32[1,10], index: 4, kind: input, shape index: {}]
  %s5 = inlined_call_operand.hbm [shape: f32[2,10], index: 5, kind: output, shape index: {}]
  %s6 = sld [smem:[#allocation0]]
  $region30: #{simple_cnn_forward.5} parent=0
    _
  %s8 = ssub.s32 1, %s6
  %s9 = scalar_select 0, %s8, %s6
  $region1: #{simple_cnn_forward.5} parent=0
    #allocation2 [shape = 'u8[1024]{0}', space=vmem, size = 0x400, scoped, tag = 'output window, operand 0, single buffered']
    #allocation3 [shape = 's32[1]{0}', space=sflag, size = 0x4, scoped, tag = 'scoped memory for simple_cnn_forward.5']
    %10 = vsyncpa [#allocation3], 0
    // Predicated region
    $region2: #{simple_cnn_forward.5} parent=1 // pred_check
      _
    $region3: #{simple_cnn_forward.5} parent=1 // pred_check_branch
      %12 = sbr.rel (0) target = $region5
    $region4: #{simple_cnn_forward.5} parent=1 // pred_region
      _
    $region5: #{simple_cnn_forward.5} parent=1 // pred_fallthru
      _
    // Predicated region
    $region6: #{simple_cnn_forward.5} parent=1 // pred_check
      _
    $region7: #{simple_cnn_forward.5} parent=1 // pred_check_branch
      %14 = sbr.rel (0) target = $region9
    $region8: #{simple_cnn_forward.5} parent=1 // pred_region
      _
    $region9: #{simple_cnn_forward.5} parent=1 // pred_fallthru
      _
    // Predicated region
    $region10: #{simple_cnn_forward.5} parent=1 // pred_check
      _
    $region11: #{simple_cnn_forward.5} parent=1 // pred_check_branch
      %16 = sbr.rel (0) target = $region13
    $region12: #{simple_cnn_forward.5} parent=1 // pred_region
      _
    $region13: #{simple_cnn_forward.5} parent=1 // pred_fallthru
      _
    // Predicated region
    $region14: #{simple_cnn_forward.5} parent=1 // pred_check
      _
    $region15: #{simple_cnn_forward.5} parent=1 // pred_check_branch
      %18 = sbr.rel (0) target = $region17
    $region16: #{simple_cnn_forward.5} parent=1 // pred_region
      _
    $region17: #{simple_cnn_forward.5} parent=1 // pred_fallthru
      _
    // Predicated region
    $region18: #{simple_cnn_forward.5} parent=1 // pred_check
      _
    $region19: #{simple_cnn_forward.5} parent=1 // pred_check_branch
      %20 = sbr.rel (0) target = $region21
    $region20: #{simple_cnn_forward.5} parent=1 // pred_region
      _
    $region21: #{simple_cnn_forward.5} parent=1 // pred_fallthru
      _
    %v22 = vld [vmem:[%s0] sm:$0xff]
    %v23 = vld [vmem:[%s0 + $0x8] sm:$0xff]
    %v24 = vld [vmem:[%s0 + $0x10] sm:$0xff]
    %v25 = vld [vmem:[%s0 + $0x18] sm:$0xff]
    %v26 = vld [vmem:[%s0 + $0x20] sm:$0xff]
    %v27 = vld [vmem:[%s0 + $0x28] sm:$0xff]
    %v28 = vld [vmem:[%s0 + $0x30] sm:$0x1]
    %v29 = vld [vmem:[%s1] sm:$0xf]
    %v30 = vld [vmem:[%s1 + $0x4] sm:$0xf]
    %v31 = vld [vmem:[%s1 + $0x8] sm:$0xf]
    %v32 = vld [vmem:[%s1 + $0xc] sm:$0xf]
    %v33 = vld [vmem:[%s1 + $0x10] sm:$0xf]
    %v34 = vld [vmem:[%s1 + $0x14] sm:$0xf]
    %v35 = vld [vmem:[%s1 + $0x18] sm:$0xf]
    %v36 = vld [vmem:[%s1 + $0x1c] sm:$0xf]
    %v37 = vld [vmem:[%s1 + $0x20] sm:$0xf]
    %v38 = vld [vmem:[%s1 + $0x24] sm:$0xf]
    %v39 = vld [vmem:[%s1 + $0x28] sm:$0xf]
    %v40 = vld [vmem:[%s1 + $0x2c] sm:$0xf]
    %v41 = vld [vmem:[%s1 + $0x30] sm:$0xf]
    %v42 = vld [vmem:[%s1 + $0x34] sm:$0xf]
    %v43 = vld [vmem:[%s1 + $0x38] sm:$0xf]
    %v44 = vld [vmem:[%s1 + $0x3c] sm:$0xf]
    %v45 = vld [vmem:[%s1 + $0x40] sm:$0xf]
    %v46 = vld [vmem:[%s1 + $0x44] sm:$0xf]
    %v47 = vld [vmem:[%s1 + $0x48] sm:$0xf]
    %v48 = vld [vmem:[%s1 + $0x4c] sm:$0xf]
    %v49 = vld [vmem:[%s1 + $0x50] sm:$0xf]
    %v50 = vld [vmem:[%s1 + $0x54] sm:$0xf]
    %v51 = vld [vmem:[%s1 + $0x58] sm:$0xf]
    %v52 = vld [vmem:[%s1 + $0x5c] sm:$0xf]
    %v53 = vld [vmem:[%s1 + $0x60] sm:$0xf]
    %v54 = vld [vmem:[%s1 + $0x64] sm:$0xf]
    %v55 = vld [vmem:[%s1 + $0x68] sm:$0xf]
    %v56 = vld [vmem:[%s1 + $0x6c] sm:$0xf]
    %v57 = vld [vmem:[%s1 + $0x70] sm:$0xf]
    %v58 = vld [vmem:[%s1 + $0x74] sm:$0xf]
    %v59 = vld [vmem:[%s1 + $0x78] sm:$0xf]
    %v60 = vld [vmem:[%s1 + $0x7c] sm:$0xf]
    %v61 = vld [vmem:[%s1 + $0x80] sm:$0xf]
    %v62 = vld [vmem:[%s1 + $0x84] sm:$0xf]
    %v63 = vld [vmem:[%s1 + $0x88] sm:$0xf]
    %v64 = vld [vmem:[%s1 + $0x8c] sm:$0xf]
    %v65 = vld [vmem:[%s1 + $0x90] sm:$0xf]
    %v66 = vld [vmem:[%s1 + $0x94] sm:$0xf]
    %v67 = vld [vmem:[%s1 + $0x98] sm:$0xf]
    %v68 = vld [vmem:[%s1 + $0x9c] sm:$0xf]
    %v69 = vld [vmem:[%s1 + $0xa0] sm:$0xf]
    %v70 = vld [vmem:[%s1 + $0xa4] sm:$0xf]
    %v71 = vld [vmem:[%s1 + $0xa8] sm:$0xf]
    %v72 = vld [vmem:[%s1 + $0xac] sm:$0xf]
    %v73 = vld [vmem:[%s1 + $0xb0] sm:$0xf]
    %v74 = vld [vmem:[%s1 + $0xb4] sm:$0xf]
    %v75 = vld [vmem:[%s1 + $0xb8] sm:$0xf]
    %v76 = vld [vmem:[%s1 + $0xbc] sm:$0xf]
    %v77 = vld [vmem:[%s1 + $0xc0] sm:$0xf]
    %v78 = vld [vmem:[%s1 + $0xc4] sm:$0xf]
    %v79 = vld [vmem:[%s1 + $0xc8] sm:$0xf]
    %v80 = vld [vmem:[%s1 + $0xcc] sm:$0xf]
    %v81 = vld [vmem:[%s1 + $0xd0] sm:$0xf]
    %v82 = vld [vmem:[%s1 + $0xd4] sm:$0xf]
    %v83 = vld [vmem:[%s1 + $0xd8] sm:$0xf]
    %v84 = vld [vmem:[%s1 + $0xdc] sm:$0xf]
    %v85 = vld [vmem:[%s1 + $0xe0] sm:$0xf]
    %v86 = vld [vmem:[%s1 + $0xe4] sm:$0xf]
    %v87 = vld [vmem:[%s1 + $0xe8] sm:$0xf]
    %v88 = vld [vmem:[%s1 + $0xec] sm:$0xf]
    %v89 = vld [vmem:[%s1 + $0xf0] sm:$0xf]
    %v90 = vld [vmem:[%s1 + $0xf4] sm:$0xf]
    %v91 = vld [vmem:[%s1 + $0xf8] sm:$0xf]
    %v92 = vld [vmem:[%s1 + $0xfc] sm:$0xf]
    %v93 = vld [vmem:[%s1 + $0x100] sm:$0xf]
    %v94 = vld [vmem:[%s1 + $0x104] sm:$0xf]
    %v95 = vld [vmem:[%s1 + $0x108] sm:$0xf]
    %v96 = vld [vmem:[%s1 + $0x10c] sm:$0xf]
    %v97 = vld [vmem:[%s1 + $0x110] sm:$0xf]
    %v98 = vld [vmem:[%s1 + $0x114] sm:$0xf]
    %v99 = vld [vmem:[%s1 + $0x118] sm:$0xf]
    %v100 = vld [vmem:[%s1 + $0x11c] sm:$0xf]
    %v101 = vld [vmem:[%s1 + $0x120] sm:$0xf]
    %v102 = vld [vmem:[%s1 + $0x124] sm:$0xf]
    %v103 = vld [vmem:[%s1 + $0x128] sm:$0xf]
    %v104 = vld [vmem:[%s1 + $0x12c] sm:$0xf]
    %v105 = vld [vmem:[%s1 + $0x130] sm:$0xf]
    %v106 = vld [vmem:[%s1 + $0x134] sm:$0xf]
    %v107 = vld [vmem:[%s1 + $0x138] sm:$0xf]
    %v108 = vld [vmem:[%s1 + $0x13c] sm:$0xf]
    %v109 = vld [vmem:[%s1 + $0x140] sm:$0xf]
    %v110 = vld [vmem:[%s1 + $0x144] sm:$0xf]
    %v111 = vld [vmem:[%s1 + $0x148] sm:$0xf]
    %v112 = vld [vmem:[%s1 + $0x14c] sm:$0xf]
    %v113 = vld [vmem:[%s1 + $0x150] sm:$0xf]
    %v114 = vld [vmem:[%s1 + $0x154] sm:$0xf]
    %v115 = vld [vmem:[%s1 + $0x158] sm:$0xf]
    %v116 = vld [vmem:[%s1 + $0x15c] sm:$0xf]
    %v117 = vld [vmem:[%s1 + $0x160] sm:$0xf]
    %v118 = vld [vmem:[%s1 + $0x164] sm:$0xf]
    %v119 = vld [vmem:[%s1 + $0x168] sm:$0xf]
    %v120 = vld [vmem:[%s1 + $0x16c] sm:$0xf]
    %v121 = vld [vmem:[%s1 + $0x170] sm:$0xf]
    %v122 = vld [vmem:[%s1 + $0x174] sm:$0xf]
    %v123 = vld [vmem:[%s1 + $0x178] sm:$0xf]
    %v124 = vld [vmem:[%s1 + $0x17c] sm:$0xf]
    %v125 = vld [vmem:[%s1 + $0x180] sm:$0xf]
    %v126 = vld [vmem:[%s1 + $0x184] sm:$0xf]
    %v127 = vld [vmem:[%s1 + $0x188] sm:$0xf]
    %v128 = vld [vmem:[%s1 + $0x18c] sm:$0xf]
    %v129 = vld [vmem:[%s1 + $0x190] sm:$0xf]
    %v130 = vld [vmem:[%s1 + $0x194] sm:$0xf]
    %v131 = vld [vmem:[%s1 + $0x198] sm:$0xf]
    %v132 = vld [vmem:[%s1 + $0x19c] sm:$0xf]
    %v133 = vld [vmem:[%s1 + $0x1a0] sm:$0xf]
    %v134 = vld [vmem:[%s1 + $0x1a4] sm:$0xf]
    %v135 = vld [vmem:[%s1 + $0x1a8] sm:$0xf]
    %v136 = vld [vmem:[%s1 + $0x1ac] sm:$0xf]
    %v137 = vld [vmem:[%s1 + $0x1b0] sm:$0xf]
    %v138 = vld [vmem:[%s1 + $0x1b4] sm:$0xf]
    %v139 = vld [vmem:[%s1 + $0x1b8] sm:$0xf]
    %v140 = vld [vmem:[%s1 + $0x1bc] sm:$0xf]
    %v141 = vld [vmem:[%s1 + $0x1c0] sm:$0xf]
    %v142 = vld [vmem:[%s1 + $0x1c4] sm:$0xf]
    %v143 = vld [vmem:[%s1 + $0x1c8] sm:$0xf]
    %v144 = vld [vmem:[%s1 + $0x1cc] sm:$0xf]
    %v145 = vld [vmem:[%s1 + $0x1d0] sm:$0xf]
    %v146 = vld [vmem:[%s1 + $0x1d4] sm:$0xf]
    %v147 = vld [vmem:[%s1 + $0x1d8] sm:$0xf]
    %v148 = vld [vmem:[%s1 + $0x1dc] sm:$0xf]
    %v149 = vld [vmem:[%s1 + $0x1e0] sm:$0xf]
    %v150 = vld [vmem:[%s1 + $0x1e4] sm:$0xf]
    %v151 = vld [vmem:[%s1 + $0x1e8] sm:$0xf]
    %v152 = vld [vmem:[%s1 + $0x1ec] sm:$0xf]
    %v153 = vld [vmem:[%s1 + $0x1f0] sm:$0xf]
    %v154 = vld [vmem:[%s1 + $0x1f4] sm:$0xf]
    %v155 = vld [vmem:[%s1 + $0x1f8] sm:$0xf]
    %v156 = vld [vmem:[%s1 + $0x1fc] sm:$0xf]
    %v157 = vld [vmem:[%s1 + $0x200] sm:$0xf]
    %v158 = vld [vmem:[%s1 + $0x204] sm:$0xf]
    %v159 = vld [vmem:[%s1 + $0x208] sm:$0xf]
    %v160 = vld [vmem:[%s1 + $0x20c] sm:$0xf]
    %v161 = vld [vmem:[%s1 + $0x210] sm:$0xf]
    %v162 = vld [vmem:[%s1 + $0x214] sm:$0xf]
    %v163 = vld [vmem:[%s1 + $0x218] sm:$0xf]
    %v164 = vld [vmem:[%s1 + $0x21c] sm:$0xf]
    %v165 = vld [vmem:[%s1 + $0x220] sm:$0xf]
    %v166 = vld [vmem:[%s1 + $0x224] sm:$0xf]
    %v167 = vld [vmem:[%s1 + $0x228] sm:$0xf]
    %v168 = vld [vmem:[%s1 + $0x22c] sm:$0xf]
    %v169 = vld [vmem:[%s1 + $0x230] sm:$0xf]
    %v170 = vld [vmem:[%s1 + $0x234] sm:$0xf]
    %v171 = vld [vmem:[%s1 + $0x238] sm:$0xf]
    %v172 = vld [vmem:[%s1 + $0x23c] sm:$0xf]
    %v173 = vld [vmem:[%s1 + $0x240] sm:$0xf]
    %v174 = vld [vmem:[%s1 + $0x244] sm:$0xf]
    %v175 = vld [vmem:[%s1 + $0x248] sm:$0xf]
    %v176 = vld [vmem:[%s1 + $0x24c] sm:$0xf]
    %v177 = vld [vmem:[%s1 + $0x250] sm:$0xf]
    %v178 = vld [vmem:[%s1 + $0x254] sm:$0xf]
    %v179 = vld [vmem:[%s1 + $0x258] sm:$0xf]
    %v180 = vld [vmem:[%s1 + $0x25c] sm:$0xf]
    %v181 = vld [vmem:[%s1 + $0x260] sm:$0xf]
    %v182 = vld [vmem:[%s1 + $0x264] sm:$0xf]
    %v183 = vld [vmem:[%s1 + $0x268] sm:$0xf]
    %v184 = vld [vmem:[%s1 + $0x26c] sm:$0xf]
    %v185 = vld [vmem:[%s1 + $0x270] sm:$0xf]
    %v186 = vld [vmem:[%s1 + $0x274] sm:$0xf]
    %v187 = vld [vmem:[%s1 + $0x278] sm:$0xf]
    %v188 = vld [vmem:[%s1 + $0x27c] sm:$0xf]
    %v189 = vld [vmem:[%s1 + $0x280] sm:$0xf]
    %v190 = vld [vmem:[%s1 + $0x284] sm:$0xf]
    %v191 = vld [vmem:[%s1 + $0x288] sm:$0xf]
    %v192 = vld [vmem:[%s1 + $0x28c] sm:$0xf]
    %v193 = vld [vmem:[%s1 + $0x290] sm:$0xf]
    %v194 = vld [vmem:[%s1 + $0x294] sm:$0xf]
    %v195 = vld [vmem:[%s1 + $0x298] sm:$0xf]
    %v196 = vld [vmem:[%s1 + $0x29c] sm:$0xf]
    %v197 = vld [vmem:[%s1 + $0x2a0] sm:$0xf]
    %v198 = vld [vmem:[%s1 + $0x2a4] sm:$0xf]
    %v199 = vld [vmem:[%s1 + $0x2a8] sm:$0xf]
    %v200 = vld [vmem:[%s1 + $0x2ac] sm:$0xf]
    %v201 = vld [vmem:[%s1 + $0x2b0] sm:$0xf]
    %v202 = vld [vmem:[%s1 + $0x2b4] sm:$0xf]
    %v203 = vld [vmem:[%s1 + $0x2b8] sm:$0xf]
    %v204 = vld [vmem:[%s1 + $0x2bc] sm:$0xf]
    %v205 = vld [vmem:[%s1 + $0x2c0] sm:$0xf]
    %v206 = vld [vmem:[%s1 + $0x2c4] sm:$0xf]
    %v207 = vld [vmem:[%s1 + $0x2c8] sm:$0xf]
    %v208 = vld [vmem:[%s1 + $0x2cc] sm:$0xf]
    %v209 = vld [vmem:[%s1 + $0x2d0] sm:$0xf]
    %v210 = vld [vmem:[%s1 + $0x2d4] sm:$0xf]
    %v211 = vld [vmem:[%s1 + $0x2d8] sm:$0xf]
    %v212 = vld [vmem:[%s1 + $0x2dc] sm:$0xf]
    %v213 = vld [vmem:[%s1 + $0x2e0] sm:$0xf]
    %v214 = vld [vmem:[%s1 + $0x2e4] sm:$0xf]
    %v215 = vld [vmem:[%s1 + $0x2e8] sm:$0xf]
    %v216 = vld [vmem:[%s1 + $0x2ec] sm:$0xf]
    %v217 = vld [vmem:[%s1 + $0x2f0] sm:$0xf]
    %v218 = vld [vmem:[%s1 + $0x2f4] sm:$0xf]
    %v219 = vld [vmem:[%s1 + $0x2f8] sm:$0xf]
    %v220 = vld [vmem:[%s1 + $0x2fc] sm:$0xf]
    %v221 = vld [vmem:[%s1 + $0x300] sm:$0xf]
    %v222 = vld [vmem:[%s1 + $0x304] sm:$0xf]
    %v223 = vld [vmem:[%s1 + $0x308] sm:$0xf]
    %v224 = vld [vmem:[%s1 + $0x30c] sm:$0xf]
    %v225 = vld [vmem:[%s1 + $0x310] sm:$0xf]
    %v226 = vld [vmem:[%s1 + $0x314] sm:$0xf]
    %v227 = vld [vmem:[%s1 + $0x318] sm:$0xf]
    %v228 = vld [vmem:[%s1 + $0x31c] sm:$0xf]
    %v229 = vld [vmem:[%s1 + $0x320] sm:$0xf]
    %v230 = vld [vmem:[%s1 + $0x324] sm:$0xf]
    %v231 = vld [vmem:[%s1 + $0x328] sm:$0xf]
    %v232 = vld [vmem:[%s1 + $0x32c] sm:$0xf]
    %v233 = vld [vmem:[%s1 + $0x330] sm:$0xf]
    %v234 = vld [vmem:[%s1 + $0x334] sm:$0xf]
    %v235 = vld [vmem:[%s1 + $0x338] sm:$0xf]
    %v236 = vld [vmem:[%s1 + $0x33c] sm:$0xf]
    %v237 = vld [vmem:[%s1 + $0x340] sm:$0xf]
    %v238 = vld [vmem:[%s1 + $0x344] sm:$0xf]
    %v239 = vld [vmem:[%s1 + $0x348] sm:$0xf]
    %v240 = vld [vmem:[%s1 + $0x34c] sm:$0xf]
    %v241 = vld [vmem:[%s1 + $0x350] sm:$0xf]
    %v242 = vld [vmem:[%s1 + $0x354] sm:$0xf]
    %v243 = vld [vmem:[%s1 + $0x358] sm:$0xf]
    %v244 = vld [vmem:[%s1 + $0x35c] sm:$0xf]
    %v245 = vld [vmem:[%s1 + $0x360] sm:$0xf]
    %v246 = vld [vmem:[%s1 + $0x364] sm:$0xf]
    %v247 = vld [vmem:[%s1 + $0x368] sm:$0xf]
    %v248 = vld [vmem:[%s1 + $0x36c] sm:$0xf]
    %v249 = vld [vmem:[%s1 + $0x370] sm:$0xf]
    %v250 = vld [vmem:[%s1 + $0x374] sm:$0xf]
    %v251 = vld [vmem:[%s1 + $0x378] sm:$0xf]
    %v252 = vld [vmem:[%s1 + $0x37c] sm:$0xf]
    %v253 = vld [vmem:[%s1 + $0x380] sm:$0xf]
    %v254 = vld [vmem:[%s1 + $0x384] sm:$0xf]
    %v255 = vld [vmem:[%s1 + $0x388] sm:$0xf]
    %v256 = vld [vmem:[%s1 + $0x38c] sm:$0xf]
    %v257 = vld [vmem:[%s1 + $0x390] sm:$0xf]
    %v258 = vld [vmem:[%s1 + $0x394] sm:$0xf]
    %v259 = vld [vmem:[%s1 + $0x398] sm:$0xf]
    %v260 = vld [vmem:[%s1 + $0x39c] sm:$0xf]
    %v261 = vld [vmem:[%s1 + $0x3a0] sm:$0xf]
    %v262 = vld [vmem:[%s1 + $0x3a4] sm:$0xf]
    %v263 = vld [vmem:[%s1 + $0x3a8] sm:$0xf]
    %v264 = vld [vmem:[%s1 + $0x3ac] sm:$0xf]
    %v265 = vld [vmem:[%s1 + $0x3b0] sm:$0xf]
    %v266 = vld [vmem:[%s1 + $0x3b4] sm:$0xf]
    %v267 = vld [vmem:[%s1 + $0x3b8] sm:$0xf]
    %v268 = vld [vmem:[%s1 + $0x3bc] sm:$0xf]
    %v269 = vld [vmem:[%s1 + $0x3c0] sm:$0xf]
    %v270 = vld [vmem:[%s1 + $0x3c4] sm:$0xf]
    %v271 = vld [vmem:[%s1 + $0x3c8] sm:$0xf]
    %v272 = vld [vmem:[%s1 + $0x3cc] sm:$0xf]
    %v273 = vld [vmem:[%s1 + $0x3d0] sm:$0xf]
    %v274 = vld [vmem:[%s1 + $0x3d4] sm:$0xf]
    %v275 = vld [vmem:[%s1 + $0x3d8] sm:$0xf]
    %v276 = vld [vmem:[%s1 + $0x3dc] sm:$0xf]
    %v277 = vld [vmem:[%s1 + $0x3e0] sm:$0xf]
    %v278 = vld [vmem:[%s1 + $0x3e4] sm:$0xf]
    %v279 = vld [vmem:[%s1 + $0x3e8] sm:$0xf]
    %v280 = vld [vmem:[%s1 + $0x3ec] sm:$0xf]
    %v281 = vld [vmem:[%s1 + $0x3f0] sm:$0xf]
    %v282 = vld [vmem:[%s1 + $0x3f4] sm:$0xf]
    %v283 = vld [vmem:[%s1 + $0x3f8] sm:$0xf]
    %v284 = vld [vmem:[%s1 + $0x3fc] sm:$0xf]
    %v285 = vld [vmem:[%s1 + $0x400] sm:$0xf]
    %v286 = vld [vmem:[%s1 + $0x404] sm:$0xf]
    %v287 = vld [vmem:[%s1 + $0x408] sm:$0xf]
    %v288 = vld [vmem:[%s1 + $0x40c] sm:$0xf]
    %v289 = vld [vmem:[%s1 + $0x410] sm:$0xf]
    %v290 = vld [vmem:[%s1 + $0x414] sm:$0xf]
    %v291 = vld [vmem:[%s1 + $0x418] sm:$0xf]
    %v292 = vld [vmem:[%s1 + $0x41c] sm:$0xf]
    %v293 = vld [vmem:[%s1 + $0x420] sm:$0xf]
    %v294 = vld [vmem:[%s1 + $0x424] sm:$0xf]
    %v295 = vld [vmem:[%s1 + $0x428] sm:$0xf]
    %v296 = vld [vmem:[%s1 + $0x42c] sm:$0xf]
    %v297 = vld [vmem:[%s1 + $0x430] sm:$0xf]
    %v298 = vld [vmem:[%s1 + $0x434] sm:$0xf]
    %v299 = vld [vmem:[%s1 + $0x438] sm:$0xf]
    %v300 = vld [vmem:[%s1 + $0x43c] sm:$0xf]
    %v301 = vld [vmem:[%s1 + $0x440] sm:$0xf]
    %v302 = vld [vmem:[%s1 + $0x444] sm:$0xf]
    %v303 = vld [vmem:[%s1 + $0x448] sm:$0xf]
    %v304 = vld [vmem:[%s1 + $0x44c] sm:$0xf]
    %v305 = vld [vmem:[%s1 + $0x450] sm:$0xf]
    %v306 = vld [vmem:[%s1 + $0x454] sm:$0xf]
    %v307 = vld [vmem:[%s1 + $0x458] sm:$0xf]
    %v308 = vld [vmem:[%s1 + $0x45c] sm:$0xf]
    %v309 = vld [vmem:[%s1 + $0x460] sm:$0xf]
    %v310 = vld [vmem:[%s1 + $0x464] sm:$0xf]
    %v311 = vld [vmem:[%s1 + $0x468] sm:$0xf]
    %v312 = vld [vmem:[%s1 + $0x46c] sm:$0xf]
    %v313 = vld [vmem:[%s1 + $0x470] sm:$0xf]
    %v314 = vld [vmem:[%s1 + $0x474] sm:$0xf]
    %v315 = vld [vmem:[%s1 + $0x478] sm:$0xf]
    %v316 = vld [vmem:[%s1 + $0x47c] sm:$0xf]
    %v317 = vld [vmem:[%s1 + $0x480] sm:$0xf]
    %v318 = vld [vmem:[%s1 + $0x484] sm:$0xf]
    %v319 = vld [vmem:[%s1 + $0x488] sm:$0xf]
    %v320 = vld [vmem:[%s1 + $0x48c] sm:$0xf]
    %v321 = vld [vmem:[%s1 + $0x490] sm:$0xf]
    %v322 = vld [vmem:[%s1 + $0x494] sm:$0xf]
    %v323 = vld [vmem:[%s1 + $0x498] sm:$0xf]
    %v324 = vld [vmem:[%s1 + $0x49c] sm:$0xf]
    %v325 = vld [vmem:[%s1 + $0x4a0] sm:$0xf]
    %v326 = vld [vmem:[%s1 + $0x4a4] sm:$0xf]
    %v327 = vld [vmem:[%s1 + $0x4a8] sm:$0xf]
    %v328 = vld [vmem:[%s1 + $0x4ac] sm:$0xf]
    %v329 = vld [vmem:[%s1 + $0x4b0] sm:$0xf]
    %v330 = vld [vmem:[%s1 + $0x4b4] sm:$0xf]
    %v331 = vld [vmem:[%s1 + $0x4b8] sm:$0xf]
    %v332 = vld [vmem:[%s1 + $0x4bc] sm:$0xf]
    %v333 = vld [vmem:[%s1 + $0x4c0] sm:$0xf]
    %v334 = vld [vmem:[%s1 + $0x4c4] sm:$0xf]
    %v335 = vld [vmem:[%s1 + $0x4c8] sm:$0xf]
    %v336 = vld [vmem:[%s1 + $0x4cc] sm:$0xf]
    %v337 = vld [vmem:[%s1 + $0x4d0] sm:$0xf]
    %v338 = vld [vmem:[%s1 + $0x4d4] sm:$0xf]
    %v339 = vld [vmem:[%s1 + $0x4d8] sm:$0xf]
    %v340 = vld [vmem:[%s1 + $0x4dc] sm:$0xf]
    %v341 = vld [vmem:[%s1 + $0x4e0] sm:$0xf]
    %v342 = vld [vmem:[%s1 + $0x4e4] sm:$0xf]
    %v343 = vld [vmem:[%s1 + $0x4e8] sm:$0xf]
    %v344 = vld [vmem:[%s1 + $0x4ec] sm:$0xf]
    %v345 = vld [vmem:[%s1 + $0x4f0] sm:$0xf]
    %v346 = vld [vmem:[%s1 + $0x4f4] sm:$0xf]
    %v347 = vld [vmem:[%s1 + $0x4f8] sm:$0xf]
    %v348 = vld [vmem:[%s1 + $0x4fc] sm:$0xf]
    %v349 = vld [vmem:[%s1 + $0x500] sm:$0xf]
    %v350 = vld [vmem:[%s1 + $0x504] sm:$0xf]
    %v351 = vld [vmem:[%s1 + $0x508] sm:$0xf]
    %v352 = vld [vmem:[%s1 + $0x50c] sm:$0xf]
    %v353 = vld [vmem:[%s1 + $0x510] sm:$0xf]
    %v354 = vld [vmem:[%s1 + $0x514] sm:$0xf]
    %v355 = vld [vmem:[%s1 + $0x518] sm:$0xf]
    %v356 = vld [vmem:[%s1 + $0x51c] sm:$0xf]
    %v357 = vld [vmem:[%s1 + $0x520] sm:$0xf]
    %v358 = vld [vmem:[%s1 + $0x524] sm:$0xf]
    %v359 = vld [vmem:[%s1 + $0x528] sm:$0xf]
    %v360 = vld [vmem:[%s1 + $0x52c] sm:$0xf]
    %v361 = vld [vmem:[%s1 + $0x530] sm:$0xf]
    %v362 = vld [vmem:[%s1 + $0x534] sm:$0xf]
    %v363 = vld [vmem:[%s1 + $0x538] sm:$0xf]
    %v364 = vld [vmem:[%s1 + $0x53c] sm:$0xf]
    %v365 = vld [vmem:[%s1 + $0x540] sm:$0xf]
    %v366 = vld [vmem:[%s1 + $0x544] sm:$0xf]
    %v367 = vld [vmem:[%s1 + $0x548] sm:$0xf]
    %v368 = vld [vmem:[%s1 + $0x54c] sm:$0xf]
    %v369 = vld [vmem:[%s1 + $0x550] sm:$0xf]
    %v370 = vld [vmem:[%s1 + $0x554] sm:$0xf]
    %v371 = vld [vmem:[%s1 + $0x558] sm:$0xf]
    %v372 = vld [vmem:[%s1 + $0x55c] sm:$0xf]
    %v373 = vld [vmem:[%s1 + $0x560] sm:$0xf]
    %v374 = vld [vmem:[%s1 + $0x564] sm:$0xf]
    %v375 = vld [vmem:[%s1 + $0x568] sm:$0xf]
    %v376 = vld [vmem:[%s1 + $0x56c] sm:$0xf]
    %v377 = vld [vmem:[%s1 + $0x570] sm:$0xf]
    %v378 = vld [vmem:[%s1 + $0x574] sm:$0xf]
    %v379 = vld [vmem:[%s1 + $0x578] sm:$0xf]
    %v380 = vld [vmem:[%s1 + $0x57c] sm:$0xf]
    %v381 = vld [vmem:[%s1 + $0x580] sm:$0xf]
    %v382 = vld [vmem:[%s1 + $0x584] sm:$0xf]
    %v383 = vld [vmem:[%s1 + $0x588] sm:$0xf]
    %v384 = vld [vmem:[%s1 + $0x58c] sm:$0xf]
    %v385 = vld [vmem:[%s1 + $0x590] sm:$0xf]
    %v386 = vld [vmem:[%s1 + $0x594] sm:$0xf]
    %v387 = vld [vmem:[%s1 + $0x598] sm:$0xf]
    %v388 = vld [vmem:[%s1 + $0x59c] sm:$0xf]
    %v389 = vld [vmem:[%s1 + $0x5a0] sm:$0xf]
    %v390 = vld [vmem:[%s1 + $0x5a4] sm:$0xf]
    %v391 = vld [vmem:[%s1 + $0x5a8] sm:$0xf]
    %v392 = vld [vmem:[%s1 + $0x5ac] sm:$0xf]
    %v393 = vld [vmem:[%s1 + $0x5b0] sm:$0xf]
    %v394 = vld [vmem:[%s1 + $0x5b4] sm:$0xf]
    %v395 = vld [vmem:[%s1 + $0x5b8] sm:$0xf]
    %v396 = vld [vmem:[%s1 + $0x5bc] sm:$0xf]
    %v397 = vld [vmem:[%s1 + $0x5c0] sm:$0xf]
    %v398 = vld [vmem:[%s1 + $0x5c4] sm:$0xf]
    %v399 = vld [vmem:[%s1 + $0x5c8] sm:$0xf]
    %v400 = vld [vmem:[%s1 + $0x5cc] sm:$0xf]
    %v401 = vld [vmem:[%s1 + $0x5d0] sm:$0xf]
    %v402 = vld [vmem:[%s1 + $0x5d4] sm:$0xf]
    %v403 = vld [vmem:[%s1 + $0x5d8] sm:$0xf]
    %v404 = vld [vmem:[%s1 + $0x5dc] sm:$0xf]
    %v405 = vld [vmem:[%s1 + $0x5e0] sm:$0xf]
    %v406 = vld [vmem:[%s1 + $0x5e4] sm:$0xf]
    %v407 = vld [vmem:[%s1 + $0x5e8] sm:$0xf]
    %v408 = vld [vmem:[%s1 + $0x5ec] sm:$0xf]
    %v409 = vld [vmem:[%s1 + $0x5f0] sm:$0xf]
    %v410 = vld [vmem:[%s1 + $0x5f4] sm:$0xf]
    %v411 = vld [vmem:[%s1 + $0x5f8] sm:$0xf]
    %v412 = vld [vmem:[%s1 + $0x5fc] sm:$0xf]
    %v413 = vld [vmem:[%s1 + $0x600] sm:$0xf]
    %v414 = vld [vmem:[%s1 + $0x604] sm:$0xf]
    %v415 = vld [vmem:[%s1 + $0x608] sm:$0xf]
    %v416 = vld [vmem:[%s1 + $0x60c] sm:$0xf]
    %v417 = vld [vmem:[%s1 + $0x610] sm:$0xf]
    %v418 = vld [vmem:[%s1 + $0x614] sm:$0xf]
    %v419 = vld [vmem:[%s1 + $0x618] sm:$0xf]
    %v420 = vld [vmem:[%s1 + $0x61c] sm:$0xf]
    %v421 = vld [vmem:[%s1 + $0x620] sm:$0xf]
    %v422 = vld [vmem:[%s1 + $0x624] sm:$0xf]
    %v423 = vld [vmem:[%s1 + $0x628] sm:$0xf]
    %v424 = vld [vmem:[%s1 + $0x62c] sm:$0xf]
    %v425 = vld [vmem:[%s1 + $0x630] sm:$0xf]
    %v426 = vld [vmem:[%s1 + $0x634] sm:$0xf]
    %v427 = vld [vmem:[%s1 + $0x638] sm:$0xf]
    %v428 = vld [vmem:[%s1 + $0x63c] sm:$0xf]
    %v429 = vld [vmem:[%s1 + $0x640] sm:$0xf]
    %v430 = vld [vmem:[%s1 + $0x644] sm:$0xf]
    %v431 = vld [vmem:[%s1 + $0x648] sm:$0xf]
    %v432 = vld [vmem:[%s1 + $0x64c] sm:$0xf]
    %v433 = vld [vmem:[%s1 + $0x650] sm:$0xf]
    %v434 = vld [vmem:[%s1 + $0x654] sm:$0xf]
    %v435 = vld [vmem:[%s1 + $0x658] sm:$0xf]
    %v436 = vld [vmem:[%s1 + $0x65c] sm:$0xf]
    %v437 = vld [vmem:[%s1 + $0x660] sm:$0xf]
    %v438 = vld [vmem:[%s1 + $0x664] sm:$0xf]
    %v439 = vld [vmem:[%s1 + $0x668] sm:$0xf]
    %v440 = vld [vmem:[%s1 + $0x66c] sm:$0xf]
    %v441 = vld [vmem:[%s1 + $0x670] sm:$0xf]
    %v442 = vld [vmem:[%s1 + $0x674] sm:$0xf]
    %v443 = vld [vmem:[%s1 + $0x678] sm:$0xf]
    %v444 = vld [vmem:[%s1 + $0x67c] sm:$0xf]
    %v445 = vld [vmem:[%s1 + $0x680] sm:$0xf]
    %v446 = vld [vmem:[%s1 + $0x684] sm:$0xf]
    %v447 = vld [vmem:[%s1 + $0x688] sm:$0xf]
    %v448 = vld [vmem:[%s1 + $0x68c] sm:$0xf]
    %v449 = vld [vmem:[%s1 + $0x690] sm:$0xf]
    %v450 = vld [vmem:[%s1 + $0x694] sm:$0xf]
    %v451 = vld [vmem:[%s1 + $0x698] sm:$0xf]
    %v452 = vld [vmem:[%s1 + $0x69c] sm:$0xf]
    %v453 = vld [vmem:[%s1 + $0x6a0] sm:$0xf]
    %v454 = vld [vmem:[%s1 + $0x6a4] sm:$0xf]
    %v455 = vld [vmem:[%s1 + $0x6a8] sm:$0xf]
    %v456 = vld [vmem:[%s1 + $0x6ac] sm:$0xf]
    %v457 = vld [vmem:[%s1 + $0x6b0] sm:$0xf]
    %v458 = vld [vmem:[%s1 + $0x6b4] sm:$0xf]
    %v459 = vld [vmem:[%s1 + $0x6b8] sm:$0xf]
    %v460 = vld [vmem:[%s1 + $0x6bc] sm:$0xf]
    %v461 = vld [vmem:[%s1 + $0x6c0] sm:$0xf]
    %v462 = vld [vmem:[%s1 + $0x6c4] sm:$0xf]
    %v463 = vld [vmem:[%s1 + $0x6c8] sm:$0xf]
    %v464 = vld [vmem:[%s1 + $0x6cc] sm:$0xf]
    %v465 = vld [vmem:[%s1 + $0x6d0] sm:$0xf]
    %v466 = vld [vmem:[%s1 + $0x6d4] sm:$0xf]
    %v467 = vld [vmem:[%s1 + $0x6d8] sm:$0xf]
    %v468 = vld [vmem:[%s1 + $0x6dc] sm:$0xf]
    %v469 = vld [vmem:[%s1 + $0x6e0] sm:$0xf]
    %v470 = vld [vmem:[%s1 + $0x6e4] sm:$0xf]
    %v471 = vld [vmem:[%s1 + $0x6e8] sm:$0xf]
    %v472 = vld [vmem:[%s1 + $0x6ec] sm:$0xf]
    %v473 = vld [vmem:[%s1 + $0x6f0] sm:$0xf]
    %v474 = vld [vmem:[%s1 + $0x6f4] sm:$0xf]
    %v475 = vld [vmem:[%s1 + $0x6f8] sm:$0xf]
    %v476 = vld [vmem:[%s1 + $0x6fc] sm:$0xf]
    %v477 = vld [vmem:[%s1 + $0x700] sm:$0xf]
    %v478 = vld [vmem:[%s1 + $0x704] sm:$0xf]
    %v479 = vld [vmem:[%s1 + $0x708] sm:$0xf]
    %v480 = vld [vmem:[%s1 + $0x70c] sm:$0xf]
    %v481 = vld [vmem:[%s1 + $0x710] sm:$0xf]
    %v482 = vld [vmem:[%s1 + $0x714] sm:$0xf]
    %v483 = vld [vmem:[%s1 + $0x718] sm:$0xf]
    %v484 = vld [vmem:[%s1 + $0x71c] sm:$0xf]
    %v485 = vld [vmem:[%s1 + $0x720] sm:$0xf]
    %v486 = vld [vmem:[%s1 + $0x724] sm:$0xf]
    %v487 = vld [vmem:[%s1 + $0x728] sm:$0xf]
    %v488 = vld [vmem:[%s1 + $0x72c] sm:$0xf]
    %v489 = vld [vmem:[%s1 + $0x730] sm:$0xf]
    %v490 = vld [vmem:[%s1 + $0x734] sm:$0xf]
    %v491 = vld [vmem:[%s1 + $0x738] sm:$0xf]
    %v492 = vld [vmem:[%s1 + $0x73c] sm:$0xf]
    %v493 = vld [vmem:[%s1 + $0x740] sm:$0xf]
    %v494 = vld [vmem:[%s1 + $0x744] sm:$0xf]
    %v495 = vld [vmem:[%s1 + $0x748] sm:$0xf]
    %v496 = vld [vmem:[%s1 + $0x74c] sm:$0xf]
    %v497 = vld [vmem:[%s1 + $0x750] sm:$0xf]
    %v498 = vld [vmem:[%s1 + $0x754] sm:$0xf]
    %v499 = vld [vmem:[%s1 + $0x758] sm:$0xf]
    %v500 = vld [vmem:[%s1 + $0x75c] sm:$0xf]
    %v501 = vld [vmem:[%s1 + $0x760] sm:$0xf]
    %v502 = vld [vmem:[%s1 + $0x764] sm:$0xf]
    %v503 = vld [vmem:[%s1 + $0x768] sm:$0xf]
    %v504 = vld [vmem:[%s1 + $0x76c] sm:$0xf]
    %v505 = vld [vmem:[%s1 + $0x770] sm:$0xf]
    %v506 = vld [vmem:[%s1 + $0x774] sm:$0xf]
    %v507 = vld [vmem:[%s1 + $0x778] sm:$0xf]
    %v508 = vld [vmem:[%s1 + $0x77c] sm:$0xf]
    %v509 = vld [vmem:[%s1 + $0x780] sm:$0xf]
    %v510 = vld [vmem:[%s1 + $0x784] sm:$0xf]
    %v511 = vld [vmem:[%s1 + $0x788] sm:$0xf]
    %v512 = vld [vmem:[%s1 + $0x78c] sm:$0xf]
    %v513 = vld [vmem:[%s1 + $0x790] sm:$0xf]
    %v514 = vld [vmem:[%s1 + $0x794] sm:$0xf]
    %v515 = vld [vmem:[%s1 + $0x798] sm:$0xf]
    %v516 = vld [vmem:[%s1 + $0x79c] sm:$0xf]
    %v517 = vld [vmem:[%s1 + $0x7a0] sm:$0xf]
    %v518 = vld [vmem:[%s1 + $0x7a4] sm:$0xf]
    %v519 = vld [vmem:[%s1 + $0x7a8] sm:$0xf]
    %v520 = vld [vmem:[%s1 + $0x7ac] sm:$0xf]
    %v521 = vld [vmem:[%s1 + $0x7b0] sm:$0xf]
    %v522 = vld [vmem:[%s1 + $0x7b4] sm:$0xf]
    %v523 = vld [vmem:[%s1 + $0x7b8] sm:$0xf]
    %v524 = vld [vmem:[%s1 + $0x7bc] sm:$0xf]
    %v525 = vld [vmem:[%s1 + $0x7c0] sm:$0xf]
    %v526 = vld [vmem:[%s1 + $0x7c4] sm:$0xf]
    %v527 = vld [vmem:[%s1 + $0x7c8] sm:$0xf]
    %v528 = vld [vmem:[%s1 + $0x7cc] sm:$0xf]
    %v529 = vld [vmem:[%s1 + $0x7d0] sm:$0xf]
    %v530 = vld [vmem:[%s1 + $0x7d4] sm:$0xf]
    %v531 = vld [vmem:[%s1 + $0x7d8] sm:$0xf]
    %v532 = vld [vmem:[%s1 + $0x7dc] sm:$0xf]
    %v533 = vld [vmem:[%s1 + $0x7e0] sm:$0xf]
    %v534 = vld [vmem:[%s1 + $0x7e4] sm:$0xf]
    %v535 = vld [vmem:[%s1 + $0x7e8] sm:$0xf]
    %v536 = vld [vmem:[%s1 + $0x7ec] sm:$0xf]
    %v537 = vld [vmem:[%s1 + $0x7f0] sm:$0xf]
    %v538 = vld [vmem:[%s1 + $0x7f4] sm:$0xf]
    %v539 = vld [vmem:[%s1 + $0x7f8] sm:$0xf]
    %v540 = vld [vmem:[%s1 + $0x7fc] sm:$0xf]
    %v541 = vld [vmem:[%s1 + $0x800] sm:$0xf]
    %v542 = vld [vmem:[%s1 + $0x804] sm:$0xf]
    %v543 = vld [vmem:[%s1 + $0x808] sm:$0xf]
    %v544 = vld [vmem:[%s1 + $0x80c] sm:$0xf]
    %v545 = vld [vmem:[%s1 + $0x810] sm:$0xf]
    %v546 = vld [vmem:[%s1 + $0x814] sm:$0xf]
    %v547 = vld [vmem:[%s1 + $0x818] sm:$0xf]
    %v548 = vld [vmem:[%s1 + $0x81c] sm:$0xf]
    %v549 = vld [vmem:[%s1 + $0x820] sm:$0xf]
    %v550 = vld [vmem:[%s1 + $0x824] sm:$0xf]
    %v551 = vld [vmem:[%s1 + $0x828] sm:$0xf]
    %v552 = vld [vmem:[%s1 + $0x82c] sm:$0xf]
    %v553 = vld [vmem:[%s1 + $0x830] sm:$0xf]
    %v554 = vld [vmem:[%s1 + $0x834] sm:$0xf]
    %v555 = vld [vmem:[%s1 + $0x838] sm:$0xf]
    %v556 = vld [vmem:[%s1 + $0x83c] sm:$0xf]
    %v557 = vld [vmem:[%s1 + $0x840] sm:$0xf]
    %v558 = vld [vmem:[%s1 + $0x844] sm:$0xf]
    %v559 = vld [vmem:[%s1 + $0x848] sm:$0xf]
    %v560 = vld [vmem:[%s1 + $0x84c] sm:$0xf]
    %v561 = vld [vmem:[%s1 + $0x850] sm:$0xf]
    %v562 = vld [vmem:[%s1 + $0x854] sm:$0xf]
    %v563 = vld [vmem:[%s1 + $0x858] sm:$0xf]
    %v564 = vld [vmem:[%s1 + $0x85c] sm:$0xf]
    %v565 = vld [vmem:[%s1 + $0x860] sm:$0xf]
    %v566 = vld [vmem:[%s1 + $0x864] sm:$0xf]
    %v567 = vld [vmem:[%s1 + $0x868] sm:$0xf]
    %v568 = vld [vmem:[%s1 + $0x86c] sm:$0xf]
    %v569 = vld [vmem:[%s1 + $0x870] sm:$0xf]
    %v570 = vld [vmem:[%s1 + $0x874] sm:$0xf]
    %v571 = vld [vmem:[%s1 + $0x878] sm:$0xf]
    %v572 = vld [vmem:[%s1 + $0x87c] sm:$0xf]
    %v573 = vld [vmem:[%s1 + $0x880] sm:$0xf]
    %v574 = vld [vmem:[%s1 + $0x884] sm:$0xf]
    %v575 = vld [vmem:[%s1 + $0x888] sm:$0xf]
    %v576 = vld [vmem:[%s1 + $0x88c] sm:$0xf]
    %v577 = vld [vmem:[%s1 + $0x890] sm:$0xf]
    %v578 = vld [vmem:[%s1 + $0x894] sm:$0xf]
    %v579 = vld [vmem:[%s1 + $0x898] sm:$0xf]
    %v580 = vld [vmem:[%s1 + $0x89c] sm:$0xf]
    %v581 = vld [vmem:[%s1 + $0x8a0] sm:$0xf]
    %v582 = vld [vmem:[%s1 + $0x8a4] sm:$0xf]
    %v583 = vld [vmem:[%s1 + $0x8a8] sm:$0xf]
    %v584 = vld [vmem:[%s1 + $0x8ac] sm:$0xf]
    %v585 = vld [vmem:[%s1 + $0x8b0] sm:$0xf]
    %v586 = vld [vmem:[%s1 + $0x8b4] sm:$0xf]
    %v587 = vld [vmem:[%s1 + $0x8b8] sm:$0xf]
    %v588 = vld [vmem:[%s1 + $0x8bc] sm:$0xf]
    %v589 = vld [vmem:[%s1 + $0x8c0] sm:$0xf]
    %v590 = vld [vmem:[%s1 + $0x8c4] sm:$0xf]
    %v591 = vld [vmem:[%s1 + $0x8c8] sm:$0xf]
    %v592 = vld [vmem:[%s1 + $0x8cc] sm:$0xf]
    %v593 = vld [vmem:[%s1 + $0x8d0] sm:$0xf]
    %v594 = vld [vmem:[%s1 + $0x8d4] sm:$0xf]
    %v595 = vld [vmem:[%s1 + $0x8d8] sm:$0xf]
    %v596 = vld [vmem:[%s1 + $0x8dc] sm:$0xf]
    %v597 = vld [vmem:[%s1 + $0x8e0] sm:$0xf]
    %v598 = vld [vmem:[%s1 + $0x8e4] sm:$0xf]
    %v599 = vld [vmem:[%s1 + $0x8e8] sm:$0xf]
    %v600 = vld [vmem:[%s1 + $0x8ec] sm:$0xf]
    %v601 = vld [vmem:[%s1 + $0x8f0] sm:$0xf]
    %v602 = vld [vmem:[%s1 + $0x8f4] sm:$0xf]
    %v603 = vld [vmem:[%s1 + $0x8f8] sm:$0xf]
    %v604 = vld [vmem:[%s1 + $0x8fc] sm:$0xf]
    %v605 = vld [vmem:[%s1 + $0x900] sm:$0xf]
    %v606 = vld [vmem:[%s1 + $0x904] sm:$0xf]
    %v607 = vld [vmem:[%s1 + $0x908] sm:$0xf]
    %v608 = vld [vmem:[%s1 + $0x90c] sm:$0xf]
    %v609 = vld [vmem:[%s1 + $0x910] sm:$0xf]
    %v610 = vld [vmem:[%s1 + $0x914] sm:$0xf]
    %v611 = vld [vmem:[%s1 + $0x918] sm:$0xf]
    %v612 = vld [vmem:[%s1 + $0x91c] sm:$0xf]
    %v613 = vld [vmem:[%s1 + $0x920] sm:$0xf]
    %v614 = vld [vmem:[%s1 + $0x924] sm:$0xf]
    %v615 = vld [vmem:[%s1 + $0x928] sm:$0xf]
    %v616 = vld [vmem:[%s1 + $0x92c] sm:$0xf]
    %v617 = vld [vmem:[%s1 + $0x930] sm:$0xf]
    %v618 = vld [vmem:[%s1 + $0x934] sm:$0xf]
    %v619 = vld [vmem:[%s1 + $0x938] sm:$0xf]
    %v620 = vld [vmem:[%s1 + $0x93c] sm:$0xf]
    %v621 = vld [vmem:[%s1 + $0x940] sm:$0xf]
    %v622 = vld [vmem:[%s1 + $0x944] sm:$0xf]
    %v623 = vld [vmem:[%s1 + $0x948] sm:$0xf]
    %v624 = vld [vmem:[%s1 + $0x94c] sm:$0xf]
    %v625 = vld [vmem:[%s1 + $0x950] sm:$0xf]
    %v626 = vld [vmem:[%s1 + $0x954] sm:$0xf]
    %v627 = vld [vmem:[%s1 + $0x958] sm:$0xf]
    %v628 = vld [vmem:[%s1 + $0x95c] sm:$0xf]
    %v629 = vld [vmem:[%s1 + $0x960] sm:$0xf]
    %v630 = vld [vmem:[%s1 + $0x964] sm:$0xf]
    %v631 = vld [vmem:[%s1 + $0x968] sm:$0xf]
    %v632 = vld [vmem:[%s1 + $0x96c] sm:$0xf]
    %v633 = vld [vmem:[%s1 + $0x970] sm:$0xf]
    %v634 = vld [vmem:[%s1 + $0x974] sm:$0xf]
    %v635 = vld [vmem:[%s1 + $0x978] sm:$0xf]
    %v636 = vld [vmem:[%s1 + $0x97c] sm:$0xf]
    %v637 = vld [vmem:[%s1 + $0x980] sm:$0xf]
    %v638 = vld [vmem:[%s1 + $0x984] sm:$0xf]
    %v639 = vld [vmem:[%s1 + $0x988] sm:$0xf]
    %v640 = vld [vmem:[%s1 + $0x98c] sm:$0xf]
    %v641 = vld [vmem:[%s1 + $0x990] sm:$0xf]
    %v642 = vld [vmem:[%s1 + $0x994] sm:$0xf]
    %v643 = vld [vmem:[%s1 + $0x998] sm:$0xf]
    %v644 = vld [vmem:[%s1 + $0x99c] sm:$0xf]
    %v645 = vld [vmem:[%s1 + $0x9a0] sm:$0xf]
    %v646 = vld [vmem:[%s1 + $0x9a4] sm:$0xf]
    %v647 = vld [vmem:[%s1 + $0x9a8] sm:$0xf]
    %v648 = vld [vmem:[%s1 + $0x9ac] sm:$0xf]
    %v649 = vld [vmem:[%s1 + $0x9b0] sm:$0xf]
    %v650 = vld [vmem:[%s1 + $0x9b4] sm:$0xf]
    %v651 = vld [vmem:[%s1 + $0x9b8] sm:$0xf]
    %v652 = vld [vmem:[%s1 + $0x9bc] sm:$0xf]
    %v653 = vld [vmem:[%s1 + $0x9c0] sm:$0xf]
    %v654 = vld [vmem:[%s1 + $0x9c4] sm:$0xf]
    %v655 = vld [vmem:[%s1 + $0x9c8] sm:$0xf]
    %v656 = vld [vmem:[%s1 + $0x9cc] sm:$0xf]
    %v657 = vld [vmem:[%s1 + $0x9d0] sm:$0xf]
    %v658 = vld [vmem:[%s1 + $0x9d4] sm:$0xf]
    %v659 = vld [vmem:[%s1 + $0x9d8] sm:$0xf]
    %v660 = vld [vmem:[%s1 + $0x9dc] sm:$0xf]
    %v661 = vld [vmem:[%s1 + $0x9e0] sm:$0xf]
    %v662 = vld [vmem:[%s1 + $0x9e4] sm:$0xf]
    %v663 = vld [vmem:[%s1 + $0x9e8] sm:$0xf]
    %v664 = vld [vmem:[%s1 + $0x9ec] sm:$0xf]
    %v665 = vld [vmem:[%s1 + $0x9f0] sm:$0xf]
    %v666 = vld [vmem:[%s1 + $0x9f4] sm:$0xf]
    %v667 = vld [vmem:[%s1 + $0x9f8] sm:$0xf]
    %v668 = vld [vmem:[%s1 + $0x9fc] sm:$0xf]
    %v669 = vld [vmem:[%s1 + $0xa00] sm:$0xf]
    %v670 = vld [vmem:[%s1 + $0xa04] sm:$0xf]
    %v671 = vld [vmem:[%s1 + $0xa08] sm:$0xf]
    %v672 = vld [vmem:[%s1 + $0xa0c] sm:$0xf]
    %v673 = vld [vmem:[%s1 + $0xa10] sm:$0xf]
    %v674 = vld [vmem:[%s1 + $0xa14] sm:$0xf]
    %v675 = vld [vmem:[%s1 + $0xa18] sm:$0xf]
    %v676 = vld [vmem:[%s1 + $0xa1c] sm:$0xf]
    %v677 = vld [vmem:[%s1 + $0xa20] sm:$0xf]
    %v678 = vld [vmem:[%s1 + $0xa24] sm:$0xf]
    %v679 = vld [vmem:[%s1 + $0xa28] sm:$0xf]
    %v680 = vld [vmem:[%s1 + $0xa2c] sm:$0xf]
    %v681 = vld [vmem:[%s1 + $0xa30] sm:$0xf]
    %v682 = vld [vmem:[%s1 + $0xa34] sm:$0xf]
    %v683 = vld [vmem:[%s1 + $0xa38] sm:$0xf]
    %v684 = vld [vmem:[%s1 + $0xa3c] sm:$0xf]
    %v685 = vld [vmem:[%s1 + $0xa40] sm:$0xf]
    %v686 = vld [vmem:[%s1 + $0xa44] sm:$0xf]
    %v687 = vld [vmem:[%s1 + $0xa48] sm:$0xf]
    %v688 = vld [vmem:[%s1 + $0xa4c] sm:$0xf]
    %v689 = vld [vmem:[%s1 + $0xa50] sm:$0xf]
    %v690 = vld [vmem:[%s1 + $0xa54] sm:$0xf]
    %v691 = vld [vmem:[%s1 + $0xa58] sm:$0xf]
    %v692 = vld [vmem:[%s1 + $0xa5c] sm:$0xf]
    %v693 = vld [vmem:[%s1 + $0xa60] sm:$0xf]
    %v694 = vld [vmem:[%s1 + $0xa64] sm:$0xf]
    %v695 = vld [vmem:[%s1 + $0xa68] sm:$0xf]
    %v696 = vld [vmem:[%s1 + $0xa6c] sm:$0xf]
    %v697 = vld [vmem:[%s1 + $0xa70] sm:$0xf]
    %v698 = vld [vmem:[%s1 + $0xa74] sm:$0xf]
    %v699 = vld [vmem:[%s1 + $0xa78] sm:$0xf]
    %v700 = vld [vmem:[%s1 + $0xa7c] sm:$0xf]
    %v701 = vld [vmem:[%s1 + $0xa80] sm:$0xf]
    %v702 = vld [vmem:[%s1 + $0xa84] sm:$0xf]
    %v703 = vld [vmem:[%s1 + $0xa88] sm:$0xf]
    %v704 = vld [vmem:[%s1 + $0xa8c] sm:$0xf]
    %v705 = vld [vmem:[%s1 + $0xa90] sm:$0xf]
    %v706 = vld [vmem:[%s1 + $0xa94] sm:$0xf]
    %v707 = vld [vmem:[%s1 + $0xa98] sm:$0xf]
    %v708 = vld [vmem:[%s1 + $0xa9c] sm:$0xf]
    %v709 = vld [vmem:[%s1 + $0xaa0] sm:$0xf]
    %v710 = vld [vmem:[%s1 + $0xaa4] sm:$0xf]
    %v711 = vld [vmem:[%s1 + $0xaa8] sm:$0xf]
    %v712 = vld [vmem:[%s1 + $0xaac] sm:$0xf]
    %v713 = vld [vmem:[%s1 + $0xab0] sm:$0xf]
    %v714 = vld [vmem:[%s1 + $0xab4] sm:$0xf]
    %v715 = vld [vmem:[%s1 + $0xab8] sm:$0xf]
    %v716 = vld [vmem:[%s1 + $0xabc] sm:$0xf]
    %v717 = vld [vmem:[%s1 + $0xac0] sm:$0xf]
    %v718 = vld [vmem:[%s1 + $0xac4] sm:$0xf]
    %v719 = vld [vmem:[%s1 + $0xac8] sm:$0xf]
    %v720 = vld [vmem:[%s1 + $0xacc] sm:$0xf]
    %v721 = vld [vmem:[%s1 + $0xad0] sm:$0xf]
    %v722 = vld [vmem:[%s1 + $0xad4] sm:$0xf]
    %v723 = vld [vmem:[%s1 + $0xad8] sm:$0xf]
    %v724 = vld [vmem:[%s1 + $0xadc] sm:$0xf]
    %v725 = vld [vmem:[%s1 + $0xae0] sm:$0xf]
    %v726 = vld [vmem:[%s1 + $0xae4] sm:$0xf]
    %v727 = vld [vmem:[%s1 + $0xae8] sm:$0xf]
    %v728 = vld [vmem:[%s1 + $0xaec] sm:$0xf]
    %v729 = vld [vmem:[%s1 + $0xaf0] sm:$0xf]
    %v730 = vld [vmem:[%s1 + $0xaf4] sm:$0xf]
    %v731 = vld [vmem:[%s1 + $0xaf8] sm:$0xf]
    %v732 = vld [vmem:[%s1 + $0xafc] sm:$0xf]
    %v733 = vld [vmem:[%s1 + $0xb00] sm:$0xf]
    %v734 = vld [vmem:[%s1 + $0xb04] sm:$0xf]
    %v735 = vld [vmem:[%s1 + $0xb08] sm:$0xf]
    %v736 = vld [vmem:[%s1 + $0xb0c] sm:$0xf]
    %v737 = vld [vmem:[%s1 + $0xb10] sm:$0xf]
    %v738 = vld [vmem:[%s1 + $0xb14] sm:$0xf]
    %v739 = vld [vmem:[%s1 + $0xb18] sm:$0xf]
    %v740 = vld [vmem:[%s1 + $0xb1c] sm:$0xf]
    %v741 = vld [vmem:[%s1 + $0xb20] sm:$0xf]
    %v742 = vld [vmem:[%s1 + $0xb24] sm:$0xf]
    %v743 = vld [vmem:[%s1 + $0xb28] sm:$0xf]
    %v744 = vld [vmem:[%s1 + $0xb2c] sm:$0xf]
    %v745 = vld [vmem:[%s1 + $0xb30] sm:$0xf]
    %v746 = vld [vmem:[%s1 + $0xb34] sm:$0xf]
    %v747 = vld [vmem:[%s1 + $0xb38] sm:$0xf]
    %v748 = vld [vmem:[%s1 + $0xb3c] sm:$0xf]
    %v749 = vld [vmem:[%s1 + $0xb40] sm:$0xf]
    %v750 = vld [vmem:[%s1 + $0xb44] sm:$0xf]
    %v751 = vld [vmem:[%s1 + $0xb48] sm:$0xf]
    %v752 = vld [vmem:[%s1 + $0xb4c] sm:$0xf]
    %v753 = vld [vmem:[%s1 + $0xb50] sm:$0xf]
    %v754 = vld [vmem:[%s1 + $0xb54] sm:$0xf]
    %v755 = vld [vmem:[%s1 + $0xb58] sm:$0xf]
    %v756 = vld [vmem:[%s1 + $0xb5c] sm:$0xf]
    %v757 = vld [vmem:[%s1 + $0xb60] sm:$0xf]
    %v758 = vld [vmem:[%s1 + $0xb64] sm:$0xf]
    %v759 = vld [vmem:[%s1 + $0xb68] sm:$0xf]
    %v760 = vld [vmem:[%s1 + $0xb6c] sm:$0xf]
    %v761 = vld [vmem:[%s1 + $0xb70] sm:$0xf]
    %v762 = vld [vmem:[%s1 + $0xb74] sm:$0xf]
    %v763 = vld [vmem:[%s1 + $0xb78] sm:$0xf]
    %v764 = vld [vmem:[%s1 + $0xb7c] sm:$0xf]
    %v765 = vld [vmem:[%s1 + $0xb80] sm:$0xf]
    %v766 = vld [vmem:[%s1 + $0xb84] sm:$0xf]
    %v767 = vld [vmem:[%s1 + $0xb88] sm:$0xf]
    %v768 = vld [vmem:[%s1 + $0xb8c] sm:$0xf]
    %v769 = vld [vmem:[%s1 + $0xb90] sm:$0xf]
    %v770 = vld [vmem:[%s1 + $0xb94] sm:$0xf]
    %v771 = vld [vmem:[%s1 + $0xb98] sm:$0xf]
    %v772 = vld [vmem:[%s1 + $0xb9c] sm:$0xf]
    %v773 = vld [vmem:[%s1 + $0xba0] sm:$0xf]
    %v774 = vld [vmem:[%s1 + $0xba4] sm:$0xf]
    %v775 = vld [vmem:[%s1 + $0xba8] sm:$0xf]
    %v776 = vld [vmem:[%s1 + $0xbac] sm:$0xf]
    %v777 = vld [vmem:[%s1 + $0xbb0] sm:$0xf]
    %v778 = vld [vmem:[%s1 + $0xbb4] sm:$0xf]
    %v779 = vld [vmem:[%s1 + $0xbb8] sm:$0xf]
    %v780 = vld [vmem:[%s1 + $0xbbc] sm:$0xf]
    %v781 = vld [vmem:[%s1 + $0xbc0] sm:$0xf]
    %v782 = vld [vmem:[%s1 + $0xbc4] sm:$0xf]
    %v783 = vld [vmem:[%s1 + $0xbc8] sm:$0xf]
    %v784 = vld [vmem:[%s1 + $0xbcc] sm:$0xf]
    %v785 = vld [vmem:[%s1 + $0xbd0] sm:$0xf]
    %v786 = vld [vmem:[%s1 + $0xbd4] sm:$0xf]
    %v787 = vld [vmem:[%s1 + $0xbd8] sm:$0xf]
    %v788 = vld [vmem:[%s1 + $0xbdc] sm:$0xf]
    %v789 = vld [vmem:[%s1 + $0xbe0] sm:$0xf]
    %v790 = vld [vmem:[%s1 + $0xbe4] sm:$0xf]
    %v791 = vld [vmem:[%s1 + $0xbe8] sm:$0xf]
    %v792 = vld [vmem:[%s1 + $0xbec] sm:$0xf]
    %v793 = vld [vmem:[%s1 + $0xbf0] sm:$0xf]
    %v794 = vld [vmem:[%s1 + $0xbf4] sm:$0xf]
    %v795 = vld [vmem:[%s1 + $0xbf8] sm:$0xf]
    %v796 = vld [vmem:[%s1 + $0xbfc] sm:$0xf]
    %v797 = vld [vmem:[%s1 + $0xc00] sm:$0xf]
    %v798 = vld [vmem:[%s1 + $0xc04] sm:$0xf]
    %v799 = vld [vmem:[%s1 + $0xc08] sm:$0xf]
    %v800 = vld [vmem:[%s1 + $0xc0c] sm:$0xf]
    %v801 = vld [vmem:[%s1 + $0xc10] sm:$0xf]
    %v802 = vld [vmem:[%s1 + $0xc14] sm:$0xf]
    %v803 = vld [vmem:[%s1 + $0xc18] sm:$0xf]
    %v804 = vld [vmem:[%s1 + $0xc1c] sm:$0xf]
    %v805 = vld [vmem:[%s1 + $0xc20] sm:$0xf]
    %v806 = vld [vmem:[%s1 + $0xc24] sm:$0xf]
    %v807 = vld [vmem:[%s1 + $0xc28] sm:$0xf]
    %v808 = vld [vmem:[%s1 + $0xc2c] sm:$0xf]
    %v809 = vld [vmem:[%s1 + $0xc30] sm:$0xf]
    %v810 = vld [vmem:[%s1 + $0xc34] sm:$0xf]
    %v811 = vld [vmem:[%s1 + $0xc38] sm:$0xf]
    %v812 = vld [vmem:[%s1 + $0xc3c] sm:$0xf]
    %v813 = vld [vmem:[%s2] sm:$0x1]
    %v815 = vlaneseq
    %v816 = vshrl.u32 %v815, 7
    %v817 = vsub.s32 0, %v816
    %v818 = vrot.slane %v813, %v817
    %v827 = vcombine.high %v22, %v22
    %v829 = vunpack.c.l.s4 1966171168
    %v830 = vunpack.c.0.s8 %v829
    %v831 = vlaneseq
    %v832 = vshrl.u32 %v831, 7
    %v833 = vsub.s32 %v830, %v832
    %v834 = vrot.slane %v22, %v833
    %v836 = vunpack.c.l.s4 1966171168
    %v837 = vunpack.c.0.s8 %v836
    %v838 = vlaneseq
    %v839 = vshrl.u32 %v838, 7
    %v840 = vsub.s32 %v837, %v839
    %v841 = vrot.slane %v827, %v840
    %v842 = vcombine.high %v834, %v834
    %v843 = vcombine.high %v841, %v841
    %v845 = vunpack.c.l.s4 1966171168
    %v846 = vunpack.c.0.s8 %v845
    %v847 = vlaneseq
    %v848 = vshrl.u32 %v847, 7
    %v849 = vsub.s32 %v846, %v848
    %v850 = vrot.slane %v834, %v849
    %v852 = vunpack.c.l.s4 1966171168
    %v853 = vunpack.c.0.s8 %v852
    %v854 = vlaneseq
    %v855 = vshrl.u32 %v854, 7
    %v856 = vsub.s32 %v853, %v855
    %v857 = vrot.slane %v841, %v856
    %v859 = vunpack.c.l.s4 1966171168
    %v860 = vunpack.c.0.s8 %v859
    %v861 = vlaneseq
    %v862 = vshrl.u32 %v861, 7
    %v863 = vsub.s32 %v860, %v862
    %v864 = vrot.slane %v842, %v863
    %v866 = vunpack.c.l.s4 1966171168
    %v867 = vunpack.c.0.s8 %v866
    %v868 = vlaneseq
    %v869 = vshrl.u32 %v868, 7
    %v870 = vsub.s32 %v867, %v869
    %v871 = vrot.slane %v843, %v870
    %v872 = vcombine.high %v850, %v850
    %v873 = vcombine.high %v857, %v857
    %v874 = vcombine.high %v864, %v864
    %v875 = vcombine.high %v871, %v871
    %v876 = vcombine.high %v23, %v23
    %v878 = vunpack.c.l.s4 1966171168
    %v879 = vunpack.c.0.s8 %v878
    %v880 = vlaneseq
    %v881 = vshrl.u32 %v880, 7
    %v882 = vsub.s32 %v879, %v881
    %v883 = vrot.slane %v23, %v882
    %v885 = vunpack.c.l.s4 1966171168
    %v886 = vunpack.c.0.s8 %v885
    %v887 = vlaneseq
    %v888 = vshrl.u32 %v887, 7
    %v889 = vsub.s32 %v886, %v888
    %v890 = vrot.slane %v876, %v889
    %v891 = vcombine.high %v883, %v883
    %v892 = vcombine.high %v890, %v890
    %v894 = vunpack.c.l.s4 1966171168
    %v895 = vunpack.c.0.s8 %v894
    %v896 = vlaneseq
    %v897 = vshrl.u32 %v896, 7
    %v898 = vsub.s32 %v895, %v897
    %v899 = vrot.slane %v883, %v898
    %v901 = vunpack.c.l.s4 1966171168
    %v902 = vunpack.c.0.s8 %v901
    %v903 = vlaneseq
    %v904 = vshrl.u32 %v903, 7
    %v905 = vsub.s32 %v902, %v904
    %v906 = vrot.slane %v890, %v905
    %v908 = vunpack.c.l.s4 1966171168
    %v909 = vunpack.c.0.s8 %v908
    %v910 = vlaneseq
    %v911 = vshrl.u32 %v910, 7
    %v912 = vsub.s32 %v909, %v911
    %v913 = vrot.slane %v891, %v912
    %v915 = vunpack.c.l.s4 1966171168
    %v916 = vunpack.c.0.s8 %v915
    %v917 = vlaneseq
    %v918 = vshrl.u32 %v917, 7
    %v919 = vsub.s32 %v916, %v918
    %v920 = vrot.slane %v892, %v919
    %v921 = vcombine.high %v899, %v899
    %v922 = vcombine.high %v906, %v906
    %v923 = vcombine.high %v913, %v913
    %v924 = vcombine.high %v920, %v920
    %v925 = vcombine.high %v24, %v24
    %v927 = vunpack.c.l.s4 1966171168
    %v928 = vunpack.c.0.s8 %v927
    %v929 = vlaneseq
    %v930 = vshrl.u32 %v929, 7
    %v931 = vsub.s32 %v928, %v930
    %v932 = vrot.slane %v24, %v931
    %v934 = vunpack.c.l.s4 1966171168
    %v935 = vunpack.c.0.s8 %v934
    %v936 = vlaneseq
    %v937 = vshrl.u32 %v936, 7
    %v938 = vsub.s32 %v935, %v937
    %v939 = vrot.slane %v925, %v938
    %v940 = vcombine.high %v932, %v932
    %v941 = vcombine.high %v939, %v939
    %v943 = vunpack.c.l.s4 1966171168
    %v944 = vunpack.c.0.s8 %v943
    %v945 = vlaneseq
    %v946 = vshrl.u32 %v945, 7
    %v947 = vsub.s32 %v944, %v946
    %v948 = vrot.slane %v932, %v947
    %v950 = vunpack.c.l.s4 1966171168
    %v951 = vunpack.c.0.s8 %v950
    %v952 = vlaneseq
    %v953 = vshrl.u32 %v952, 7
    %v954 = vsub.s32 %v951, %v953
    %v955 = vrot.slane %v939, %v954
    %v957 = vunpack.c.l.s4 1966171168
    %v958 = vunpack.c.0.s8 %v957
    %v959 = vlaneseq
    %v960 = vshrl.u32 %v959, 7
    %v961 = vsub.s32 %v958, %v960
    %v962 = vrot.slane %v940, %v961
    %v964 = vunpack.c.l.s4 1966171168
    %v965 = vunpack.c.0.s8 %v964
    %v966 = vlaneseq
    %v967 = vshrl.u32 %v966, 7
    %v968 = vsub.s32 %v965, %v967
    %v969 = vrot.slane %v941, %v968
    %v970 = vcombine.high %v948, %v948
    %v971 = vcombine.high %v955, %v955
    %v972 = vcombine.high %v962, %v962
    %v973 = vcombine.high %v969, %v969
    %v974 = vcombine.high %v25, %v25
    %v976 = vunpack.c.l.s4 1966171168
    %v977 = vunpack.c.0.s8 %v976
    %v978 = vlaneseq
    %v979 = vshrl.u32 %v978, 7
    %v980 = vsub.s32 %v977, %v979
    %v981 = vrot.slane %v25, %v980
    %v983 = vunpack.c.l.s4 1966171168
    %v984 = vunpack.c.0.s8 %v983
    %v985 = vlaneseq
    %v986 = vshrl.u32 %v985, 7
    %v987 = vsub.s32 %v984, %v986
    %v988 = vrot.slane %v974, %v987
    %v989 = vcombine.high %v981, %v981
    %v990 = vcombine.high %v988, %v988
    %v992 = vunpack.c.l.s4 1966171168
    %v993 = vunpack.c.0.s8 %v992
    %v994 = vlaneseq
    %v995 = vshrl.u32 %v994, 7
    %v996 = vsub.s32 %v993, %v995
    %v997 = vrot.slane %v981, %v996
    %v999 = vunpack.c.l.s4 1966171168
    %v1000 = vunpack.c.0.s8 %v999
    %v1001 = vlaneseq
    %v1002 = vshrl.u32 %v1001, 7
    %v1003 = vsub.s32 %v1000, %v1002
    %v1004 = vrot.slane %v988, %v1003
    %v1006 = vunpack.c.l.s4 1966171168
    %v1007 = vunpack.c.0.s8 %v1006
    %v1008 = vlaneseq
    %v1009 = vshrl.u32 %v1008, 7
    %v1010 = vsub.s32 %v1007, %v1009
    %v1011 = vrot.slane %v989, %v1010
    %v1013 = vunpack.c.l.s4 1966171168
    %v1014 = vunpack.c.0.s8 %v1013
    %v1015 = vlaneseq
    %v1016 = vshrl.u32 %v1015, 7
    %v1017 = vsub.s32 %v1014, %v1016
    %v1018 = vrot.slane %v990, %v1017
    %v1019 = vcombine.high %v997, %v997
    %v1020 = vcombine.high %v1004, %v1004
    %v1021 = vcombine.high %v1011, %v1011
    %v1022 = vcombine.high %v1018, %v1018
    %v1023 = vcombine.high %v26, %v26
    %v1025 = vunpack.c.l.s4 1966171168
    %v1026 = vunpack.c.0.s8 %v1025
    %v1027 = vlaneseq
    %v1028 = vshrl.u32 %v1027, 7
    %v1029 = vsub.s32 %v1026, %v1028
    %v1030 = vrot.slane %v26, %v1029
    %v1032 = vunpack.c.l.s4 1966171168
    %v1033 = vunpack.c.0.s8 %v1032
    %v1034 = vlaneseq
    %v1035 = vshrl.u32 %v1034, 7
    %v1036 = vsub.s32 %v1033, %v1035
    %v1037 = vrot.slane %v1023, %v1036
    %v1038 = vcombine.high %v1030, %v1030
    %v1039 = vcombine.high %v1037, %v1037
    %v1041 = vunpack.c.l.s4 1966171168
    %v1042 = vunpack.c.0.s8 %v1041
    %v1043 = vlaneseq
    %v1044 = vshrl.u32 %v1043, 7
    %v1045 = vsub.s32 %v1042, %v1044
    %v1046 = vrot.slane %v1030, %v1045
    %v1048 = vunpack.c.l.s4 1966171168
    %v1049 = vunpack.c.0.s8 %v1048
    %v1050 = vlaneseq
    %v1051 = vshrl.u32 %v1050, 7
    %v1052 = vsub.s32 %v1049, %v1051
    %v1053 = vrot.slane %v1037, %v1052
    %v1055 = vunpack.c.l.s4 1966171168
    %v1056 = vunpack.c.0.s8 %v1055
    %v1057 = vlaneseq
    %v1058 = vshrl.u32 %v1057, 7
    %v1059 = vsub.s32 %v1056, %v1058
    %v1060 = vrot.slane %v1038, %v1059
    %v1062 = vunpack.c.l.s4 1966171168
    %v1063 = vunpack.c.0.s8 %v1062
    %v1064 = vlaneseq
    %v1065 = vshrl.u32 %v1064, 7
    %v1066 = vsub.s32 %v1063, %v1065
    %v1067 = vrot.slane %v1039, %v1066
    %v1068 = vcombine.high %v1046, %v1046
    %v1069 = vcombine.high %v1053, %v1053
    %v1070 = vcombine.high %v1060, %v1060
    %v1071 = vcombine.high %v1067, %v1067
    %v1072 = vcombine.high %v27, %v27
    %v1074 = vunpack.c.l.s4 1966171168
    %v1075 = vunpack.c.0.s8 %v1074
    %v1076 = vlaneseq
    %v1077 = vshrl.u32 %v1076, 7
    %v1078 = vsub.s32 %v1075, %v1077
    %v1079 = vrot.slane %v27, %v1078
    %v1081 = vunpack.c.l.s4 1966171168
    %v1082 = vunpack.c.0.s8 %v1081
    %v1083 = vlaneseq
    %v1084 = vshrl.u32 %v1083, 7
    %v1085 = vsub.s32 %v1082, %v1084
    %v1086 = vrot.slane %v1072, %v1085
    %v1087 = vcombine.high %v1079, %v1079
    %v1088 = vcombine.high %v1086, %v1086
    %v1090 = vunpack.c.l.s4 1966171168
    %v1091 = vunpack.c.0.s8 %v1090
    %v1092 = vlaneseq
    %v1093 = vshrl.u32 %v1092, 7
    %v1094 = vsub.s32 %v1091, %v1093
    %v1095 = vrot.slane %v1079, %v1094
    %v1097 = vunpack.c.l.s4 1966171168
    %v1098 = vunpack.c.0.s8 %v1097
    %v1099 = vlaneseq
    %v1100 = vshrl.u32 %v1099, 7
    %v1101 = vsub.s32 %v1098, %v1100
    %v1102 = vrot.slane %v1086, %v1101
    %v1104 = vunpack.c.l.s4 1966171168
    %v1105 = vunpack.c.0.s8 %v1104
    %v1106 = vlaneseq
    %v1107 = vshrl.u32 %v1106, 7
    %v1108 = vsub.s32 %v1105, %v1107
    %v1109 = vrot.slane %v1087, %v1108
    %v1111 = vunpack.c.l.s4 1966171168
    %v1112 = vunpack.c.0.s8 %v1111
    %v1113 = vlaneseq
    %v1114 = vshrl.u32 %v1113, 7
    %v1115 = vsub.s32 %v1112, %v1114
    %v1116 = vrot.slane %v1088, %v1115
    %v1117 = vcombine.high %v1095, %v1095
    %v1118 = vcombine.high %v1102, %v1102
    %v1119 = vcombine.high %v1109, %v1109
    %v1120 = vcombine.high %v1116, %v1116
    %v1122 = vunpack.c.l.s4 1966171168
    %v1123 = vunpack.c.0.s8 %v1122
    %v1124 = vlaneseq
    %v1125 = vshrl.u32 %v1124, 7
    %v1126 = vsub.s32 %v1123, %v1125
    %v1127 = vrot.slane %v28, %v1126
    %v1129 = vunpack.c.l.s4 1966171168
    %v1130 = vunpack.c.0.s8 %v1129
    %v1131 = vlaneseq
    %v1132 = vshrl.u32 %v1131, 7
    %v1133 = vsub.s32 %v1130, %v1132
    %v1134 = vrot.slane %v1127, %v1133
    %v1968 = vunpack.c.l.b16 %v29
    %v1969 = vunpack.c.l.b16 %v30
    %v1970 = vunpack.c.l.b16 %v31
    %v1971 = vunpack.c.l.b16 %v32
    %v1972 = vunpack.c.l.b16 %v33
    %v1973 = vunpack.c.l.b16 %v34
    %v1974 = vunpack.c.l.b16 %v35
    %v1975 = vunpack.c.l.b16 %v36
    %v1976 = vunpack.c.l.b16 %v37
    %v1977 = vunpack.c.l.b16 %v38
    %v1978 = vunpack.c.l.b16 %v39
    %v1979 = vunpack.c.l.b16 %v40
    %v1980 = vunpack.c.l.b16 %v41
    %v1981 = vunpack.c.l.b16 %v42
    %v1982 = vunpack.c.l.b16 %v43
    %v1983 = vunpack.c.l.b16 %v44
    %v1984 = vunpack.c.l.b16 %v45
    %v1985 = vunpack.c.l.b16 %v46
    %v1986 = vunpack.c.l.b16 %v47
    %v1987 = vunpack.c.l.b16 %v48
    %v1988 = vunpack.c.l.b16 %v49
    %v1989 = vunpack.c.l.b16 %v50
    %v1990 = vunpack.c.l.b16 %v51
    %v1991 = vunpack.c.l.b16 %v52
    %v1992 = vunpack.c.l.b16 %v53
    %v1993 = vunpack.c.l.b16 %v54
    %v1994 = vunpack.c.l.b16 %v55
    %v1995 = vunpack.c.l.b16 %v56
    %v1996 = vunpack.c.l.b16 %v57
    %v1997 = vunpack.c.l.b16 %v58
    %v1998 = vunpack.c.l.b16 %v59
    %v1999 = vunpack.c.l.b16 %v60
    %v2000 = vunpack.c.l.b16 %v61
    %v2001 = vunpack.c.l.b16 %v62
    %v2002 = vunpack.c.l.b16 %v63
    %v2003 = vunpack.c.l.b16 %v64
    %v2004 = vunpack.c.l.b16 %v65
    %v2005 = vunpack.c.l.b16 %v66
    %v2006 = vunpack.c.l.b16 %v67
    %v2007 = vunpack.c.l.b16 %v68
    %v2008 = vunpack.c.l.b16 %v69
    %v2009 = vunpack.c.l.b16 %v70
    %v2010 = vunpack.c.l.b16 %v71
    %v2011 = vunpack.c.l.b16 %v72
    %v2012 = vunpack.c.l.b16 %v73
    %v2013 = vunpack.c.l.b16 %v74
    %v2014 = vunpack.c.l.b16 %v75
    %v2015 = vunpack.c.l.b16 %v76
    %v2016 = vunpack.c.l.b16 %v77
    %v2017 = vunpack.c.l.b16 %v78
    %v2018 = vunpack.c.l.b16 %v79
    %v2019 = vunpack.c.l.b16 %v80
    %v2020 = vunpack.c.l.b16 %v81
    %v2021 = vunpack.c.l.b16 %v82
    %v2022 = vunpack.c.l.b16 %v83
    %v2023 = vunpack.c.l.b16 %v84
    %v2024 = vunpack.c.l.b16 %v85
    %v2025 = vunpack.c.l.b16 %v86
    %v2026 = vunpack.c.l.b16 %v87
    %v2027 = vunpack.c.l.b16 %v88
    %v2028 = vunpack.c.l.b16 %v89
    %v2029 = vunpack.c.l.b16 %v90
    %v2030 = vunpack.c.l.b16 %v91
    %v2031 = vunpack.c.l.b16 %v92
    %v2032 = vunpack.c.l.b16 %v93
    %v2033 = vunpack.c.l.b16 %v94
    %v2034 = vunpack.c.l.b16 %v95
    %v2035 = vunpack.c.l.b16 %v96
    %v2036 = vunpack.c.l.b16 %v97
    %v2037 = vunpack.c.l.b16 %v98
    %v2038 = vunpack.c.l.b16 %v99
    %v2039 = vunpack.c.l.b16 %v100
    %v2040 = vunpack.c.l.b16 %v101
    %v2041 = vunpack.c.l.b16 %v102
    %v2042 = vunpack.c.l.b16 %v103
    %v2043 = vunpack.c.l.b16 %v104
    %v2044 = vunpack.c.l.b16 %v105
    %v2045 = vunpack.c.l.b16 %v106
    %v2046 = vunpack.c.l.b16 %v107
    %v2047 = vunpack.c.l.b16 %v108
    %v2048 = vunpack.c.l.b16 %v109
    %v2049 = vunpack.c.l.b16 %v110
    %v2050 = vunpack.c.l.b16 %v111
    %v2051 = vunpack.c.l.b16 %v112
    %v2052 = vunpack.c.l.b16 %v113
    %v2053 = vunpack.c.l.b16 %v114
    %v2054 = vunpack.c.l.b16 %v115
    %v2055 = vunpack.c.l.b16 %v116
    %v2056 = vunpack.c.l.b16 %v117
    %v2057 = vunpack.c.l.b16 %v118
    %v2058 = vunpack.c.l.b16 %v119
    %v2059 = vunpack.c.l.b16 %v120
    %v2060 = vunpack.c.l.b16 %v121
    %v2061 = vunpack.c.l.b16 %v122
    %v2062 = vunpack.c.l.b16 %v123
    %v2063 = vunpack.c.l.b16 %v124
    %v2064 = vunpack.c.l.b16 %v125
    %v2065 = vunpack.c.l.b16 %v126
    %v2066 = vunpack.c.l.b16 %v127
    %v2067 = vunpack.c.l.b16 %v128
    %v2068 = vunpack.c.l.b16 %v129
    %v2069 = vunpack.c.l.b16 %v130
    %v2070 = vunpack.c.l.b16 %v131
    %v2071 = vunpack.c.l.b16 %v132
    %v2072 = vunpack.c.l.b16 %v133
    %v2073 = vunpack.c.l.b16 %v134
    %v2074 = vunpack.c.l.b16 %v135
    %v2075 = vunpack.c.l.b16 %v136
    %v2076 = vunpack.c.l.b16 %v137
    %v2077 = vunpack.c.l.b16 %v138
    %v2078 = vunpack.c.l.b16 %v139
    %v2079 = vunpack.c.l.b16 %v140
    %v2080 = vunpack.c.l.b16 %v141
    %v2081 = vunpack.c.l.b16 %v142
    %v2082 = vunpack.c.l.b16 %v143
    %v2083 = vunpack.c.l.b16 %v144
    %v2084 = vunpack.c.l.b16 %v145
    %v2085 = vunpack.c.l.b16 %v146
    %v2086 = vunpack.c.l.b16 %v147
    %v2087 = vunpack.c.l.b16 %v148
    %v2088 = vunpack.c.l.b16 %v149
    %v2089 = vunpack.c.l.b16 %v150
    %v2090 = vunpack.c.l.b16 %v151
    %v2091 = vunpack.c.l.b16 %v152
    %v2092 = vunpack.c.l.b16 %v153
    %v2093 = vunpack.c.l.b16 %v154
    %v2094 = vunpack.c.l.b16 %v155
    %v2095 = vunpack.c.l.b16 %v156
    %v2096 = vunpack.c.l.b16 %v157
    %v2097 = vunpack.c.l.b16 %v158
    %v2098 = vunpack.c.l.b16 %v159
    %v2099 = vunpack.c.l.b16 %v160
    %v2100 = vunpack.c.l.b16 %v161
    %v2101 = vunpack.c.l.b16 %v162
    %v2102 = vunpack.c.l.b16 %v163
    %v2103 = vunpack.c.l.b16 %v164
    %v2104 = vunpack.c.l.b16 %v165
    %v2105 = vunpack.c.l.b16 %v166
    %v2106 = vunpack.c.l.b16 %v167
    %v2107 = vunpack.c.l.b16 %v168
    %v2108 = vunpack.c.l.b16 %v169
    %v2109 = vunpack.c.l.b16 %v170
    %v2110 = vunpack.c.l.b16 %v171
    %v2111 = vunpack.c.l.b16 %v172
    %v2112 = vunpack.c.l.b16 %v173
    %v2113 = vunpack.c.l.b16 %v174
    %v2114 = vunpack.c.l.b16 %v175
    %v2115 = vunpack.c.l.b16 %v176
    %v2116 = vunpack.c.l.b16 %v177
    %v2117 = vunpack.c.l.b16 %v178
    %v2118 = vunpack.c.l.b16 %v179
    %v2119 = vunpack.c.l.b16 %v180
    %v2120 = vunpack.c.l.b16 %v181
    %v2121 = vunpack.c.l.b16 %v182
    %v2122 = vunpack.c.l.b16 %v183
    %v2123 = vunpack.c.l.b16 %v184
    %v2124 = vunpack.c.l.b16 %v185
    %v2125 = vunpack.c.l.b16 %v186
    %v2126 = vunpack.c.l.b16 %v187
    %v2127 = vunpack.c.l.b16 %v188
    %v2128 = vunpack.c.l.b16 %v189
    %v2129 = vunpack.c.l.b16 %v190
    %v2130 = vunpack.c.l.b16 %v191
    %v2131 = vunpack.c.l.b16 %v192
    %v2132 = vunpack.c.l.b16 %v193
    %v2133 = vunpack.c.l.b16 %v194
    %v2134 = vunpack.c.l.b16 %v195
    %v2135 = vunpack.c.l.b16 %v196
    %v2136 = vunpack.c.l.b16 %v197
    %v2137 = vunpack.c.l.b16 %v198
    %v2138 = vunpack.c.l.b16 %v199
    %v2139 = vunpack.c.l.b16 %v200
    %v2140 = vunpack.c.l.b16 %v201
    %v2141 = vunpack.c.l.b16 %v202
    %v2142 = vunpack.c.l.b16 %v203
    %v2143 = vunpack.c.l.b16 %v204
    %v2144 = vunpack.c.l.b16 %v205
    %v2145 = vunpack.c.l.b16 %v206
    %v2146 = vunpack.c.l.b16 %v207
    %v2147 = vunpack.c.l.b16 %v208
    %v2148 = vunpack.c.l.b16 %v209
    %v2149 = vunpack.c.l.b16 %v210
    %v2150 = vunpack.c.l.b16 %v211
    %v2151 = vunpack.c.l.b16 %v212
    %v2152 = vunpack.c.l.b16 %v213
    %v2153 = vunpack.c.l.b16 %v214
    %v2154 = vunpack.c.l.b16 %v215
    %v2155 = vunpack.c.l.b16 %v216
    %v2156 = vunpack.c.l.b16 %v217
    %v2157 = vunpack.c.l.b16 %v218
    %v2158 = vunpack.c.l.b16 %v219
    %v2159 = vunpack.c.l.b16 %v220
    %v2160 = vunpack.c.l.b16 %v221
    %v2161 = vunpack.c.l.b16 %v222
    %v2162 = vunpack.c.l.b16 %v223
    %v2163 = vunpack.c.l.b16 %v224
    %v2164 = vunpack.c.l.b16 %v225
    %v2165 = vunpack.c.l.b16 %v226
    %v2166 = vunpack.c.l.b16 %v227
    %v2167 = vunpack.c.l.b16 %v228
    %v2168 = vunpack.c.l.b16 %v229
    %v2169 = vunpack.c.l.b16 %v230
    %v2170 = vunpack.c.l.b16 %v231
    %v2171 = vunpack.c.l.b16 %v232
    %v2172 = vunpack.c.l.b16 %v233
    %v2173 = vunpack.c.l.b16 %v234
    %v2174 = vunpack.c.l.b16 %v235
    %v2175 = vunpack.c.l.b16 %v236
    %v2176 = vunpack.c.l.b16 %v237
    %v2177 = vunpack.c.l.b16 %v238
    %v2178 = vunpack.c.l.b16 %v239
    %v2179 = vunpack.c.l.b16 %v240
    %v2180 = vunpack.c.l.b16 %v241
    %v2181 = vunpack.c.l.b16 %v242
    %v2182 = vunpack.c.l.b16 %v243
    %v2183 = vunpack.c.l.b16 %v244
    %v2184 = vunpack.c.l.b16 %v245
    %v2185 = vunpack.c.l.b16 %v246
    %v2186 = vunpack.c.l.b16 %v247
    %v2187 = vunpack.c.l.b16 %v248
    %v2188 = vunpack.c.l.b16 %v249
    %v2189 = vunpack.c.l.b16 %v250
    %v2190 = vunpack.c.l.b16 %v251
    %v2191 = vunpack.c.l.b16 %v252
    %v2192 = vunpack.c.l.b16 %v253
    %v2193 = vunpack.c.l.b16 %v254
    %v2194 = vunpack.c.l.b16 %v255
    %v2195 = vunpack.c.l.b16 %v256
    %v2196 = vunpack.c.l.b16 %v257
    %v2197 = vunpack.c.l.b16 %v258
    %v2198 = vunpack.c.l.b16 %v259
    %v2199 = vunpack.c.l.b16 %v260
    %v2200 = vunpack.c.l.b16 %v261
    %v2201 = vunpack.c.l.b16 %v262
    %v2202 = vunpack.c.l.b16 %v263
    %v2203 = vunpack.c.l.b16 %v264
    %v2204 = vunpack.c.l.b16 %v265
    %v2205 = vunpack.c.l.b16 %v266
    %v2206 = vunpack.c.l.b16 %v267
    %v2207 = vunpack.c.l.b16 %v268
    %v2208 = vunpack.c.l.b16 %v269
    %v2209 = vunpack.c.l.b16 %v270
    %v2210 = vunpack.c.l.b16 %v271
    %v2211 = vunpack.c.l.b16 %v272
    %v2212 = vunpack.c.l.b16 %v273
    %v2213 = vunpack.c.l.b16 %v274
    %v2214 = vunpack.c.l.b16 %v275
    %v2215 = vunpack.c.l.b16 %v276
    %v2216 = vunpack.c.l.b16 %v277
    %v2217 = vunpack.c.l.b16 %v278
    %v2218 = vunpack.c.l.b16 %v279
    %v2219 = vunpack.c.l.b16 %v280
    %v2220 = vunpack.c.l.b16 %v281
    %v2221 = vunpack.c.l.b16 %v282
    %v2222 = vunpack.c.l.b16 %v283
    %v2223 = vunpack.c.l.b16 %v284
    %v2224 = vunpack.c.l.b16 %v285
    %v2225 = vunpack.c.l.b16 %v286
    %v2226 = vunpack.c.l.b16 %v287
    %v2227 = vunpack.c.l.b16 %v288
    %v2228 = vunpack.c.l.b16 %v289
    %v2229 = vunpack.c.l.b16 %v290
    %v2230 = vunpack.c.l.b16 %v291
    %v2231 = vunpack.c.l.b16 %v292
    %v2232 = vunpack.c.l.b16 %v293
    %v2233 = vunpack.c.l.b16 %v294
    %v2234 = vunpack.c.l.b16 %v295
    %v2235 = vunpack.c.l.b16 %v296
    %v2236 = vunpack.c.l.b16 %v297
    %v2237 = vunpack.c.l.b16 %v298
    %v2238 = vunpack.c.l.b16 %v299
    %v2239 = vunpack.c.l.b16 %v300
    %v2240 = vunpack.c.l.b16 %v301
    %v2241 = vunpack.c.l.b16 %v302
    %v2242 = vunpack.c.l.b16 %v303
    %v2243 = vunpack.c.l.b16 %v304
    %v2244 = vunpack.c.l.b16 %v305
    %v2245 = vunpack.c.l.b16 %v306
    %v2246 = vunpack.c.l.b16 %v307
    %v2247 = vunpack.c.l.b16 %v308
    %v2248 = vunpack.c.l.b16 %v309
    %v2249 = vunpack.c.l.b16 %v310
    %v2250 = vunpack.c.l.b16 %v311
    %v2251 = vunpack.c.l.b16 %v312
    %v2252 = vunpack.c.l.b16 %v313
    %v2253 = vunpack.c.l.b16 %v314
    %v2254 = vunpack.c.l.b16 %v315
    %v2255 = vunpack.c.l.b16 %v316
    %v2256 = vunpack.c.l.b16 %v317
    %v2257 = vunpack.c.l.b16 %v318
    %v2258 = vunpack.c.l.b16 %v319
    %v2259 = vunpack.c.l.b16 %v320
    %v2260 = vunpack.c.l.b16 %v321
    %v2261 = vunpack.c.l.b16 %v322
    %v2262 = vunpack.c.l.b16 %v323
    %v2263 = vunpack.c.l.b16 %v324
    %v2264 = vunpack.c.l.b16 %v325
    %v2265 = vunpack.c.l.b16 %v326
    %v2266 = vunpack.c.l.b16 %v327
    %v2267 = vunpack.c.l.b16 %v328
    %v2268 = vunpack.c.l.b16 %v329
    %v2269 = vunpack.c.l.b16 %v330
    %v2270 = vunpack.c.l.b16 %v331
    %v2271 = vunpack.c.l.b16 %v332
    %v2272 = vunpack.c.l.b16 %v333
    %v2273 = vunpack.c.l.b16 %v334
    %v2274 = vunpack.c.l.b16 %v335
    %v2275 = vunpack.c.l.b16 %v336
    %v2276 = vunpack.c.l.b16 %v337
    %v2277 = vunpack.c.l.b16 %v338
    %v2278 = vunpack.c.l.b16 %v339
    %v2279 = vunpack.c.l.b16 %v340
    %v2280 = vunpack.c.l.b16 %v341
    %v2281 = vunpack.c.l.b16 %v342
    %v2282 = vunpack.c.l.b16 %v343
    %v2283 = vunpack.c.l.b16 %v344
    %v2284 = vunpack.c.l.b16 %v345
    %v2285 = vunpack.c.l.b16 %v346
    %v2286 = vunpack.c.l.b16 %v347
    %v2287 = vunpack.c.l.b16 %v348
    %v2288 = vunpack.c.l.b16 %v349
    %v2289 = vunpack.c.l.b16 %v350
    %v2290 = vunpack.c.l.b16 %v351
    %v2291 = vunpack.c.l.b16 %v352
    %v2292 = vunpack.c.l.b16 %v353
    %v2293 = vunpack.c.l.b16 %v354
    %v2294 = vunpack.c.l.b16 %v355
    %v2295 = vunpack.c.l.b16 %v356
    %v2296 = vunpack.c.l.b16 %v357
    %v2297 = vunpack.c.l.b16 %v358
    %v2298 = vunpack.c.l.b16 %v359
    %v2299 = vunpack.c.l.b16 %v360
    %v2300 = vunpack.c.l.b16 %v361
    %v2301 = vunpack.c.l.b16 %v362
    %v2302 = vunpack.c.l.b16 %v363
    %v2303 = vunpack.c.l.b16 %v364
    %v2304 = vunpack.c.l.b16 %v365
    %v2305 = vunpack.c.l.b16 %v366
    %v2306 = vunpack.c.l.b16 %v367
    %v2307 = vunpack.c.l.b16 %v368
    %v2308 = vunpack.c.l.b16 %v369
    %v2309 = vunpack.c.l.b16 %v370
    %v2310 = vunpack.c.l.b16 %v371
    %v2311 = vunpack.c.l.b16 %v372
    %v2312 = vunpack.c.l.b16 %v373
    %v2313 = vunpack.c.l.b16 %v374
    %v2314 = vunpack.c.l.b16 %v375
    %v2315 = vunpack.c.l.b16 %v376
    %v2316 = vunpack.c.l.b16 %v377
    %v2317 = vunpack.c.l.b16 %v378
    %v2318 = vunpack.c.l.b16 %v379
    %v2319 = vunpack.c.l.b16 %v380
    %v2320 = vunpack.c.l.b16 %v381
    %v2321 = vunpack.c.l.b16 %v382
    %v2322 = vunpack.c.l.b16 %v383
    %v2323 = vunpack.c.l.b16 %v384
    %v2324 = vunpack.c.l.b16 %v385
    %v2325 = vunpack.c.l.b16 %v386
    %v2326 = vunpack.c.l.b16 %v387
    %v2327 = vunpack.c.l.b16 %v388
    %v2328 = vunpack.c.l.b16 %v389
    %v2329 = vunpack.c.l.b16 %v390
    %v2330 = vunpack.c.l.b16 %v391
    %v2331 = vunpack.c.l.b16 %v392
    %v2332 = vunpack.c.l.b16 %v393
    %v2333 = vunpack.c.l.b16 %v394
    %v2334 = vunpack.c.l.b16 %v395
    %v2335 = vunpack.c.l.b16 %v396
    %v2336 = vunpack.c.l.b16 %v397
    %v2337 = vunpack.c.l.b16 %v398
    %v2338 = vunpack.c.l.b16 %v399
    %v2339 = vunpack.c.l.b16 %v400
    %v2340 = vunpack.c.l.b16 %v401
    %v2341 = vunpack.c.l.b16 %v402
    %v2342 = vunpack.c.l.b16 %v403
    %v2343 = vunpack.c.l.b16 %v404
    %v2344 = vunpack.c.l.b16 %v405
    %v2345 = vunpack.c.l.b16 %v406
    %v2346 = vunpack.c.l.b16 %v407
    %v2347 = vunpack.c.l.b16 %v408
    %v2348 = vunpack.c.l.b16 %v409
    %v2349 = vunpack.c.l.b16 %v410
    %v2350 = vunpack.c.l.b16 %v411
    %v2351 = vunpack.c.l.b16 %v412
    %v2352 = vunpack.c.l.b16 %v413
    %v2353 = vunpack.c.l.b16 %v414
    %v2354 = vunpack.c.l.b16 %v415
    %v2355 = vunpack.c.l.b16 %v416
    %v2356 = vunpack.c.l.b16 %v417
    %v2357 = vunpack.c.l.b16 %v418
    %v2358 = vunpack.c.l.b16 %v419
    %v2359 = vunpack.c.l.b16 %v420
    %v2360 = vunpack.c.l.b16 %v421
    %v2361 = vunpack.c.l.b16 %v422
    %v2362 = vunpack.c.l.b16 %v423
    %v2363 = vunpack.c.l.b16 %v424
    %v2364 = vunpack.c.l.b16 %v425
    %v2365 = vunpack.c.l.b16 %v426
    %v2366 = vunpack.c.l.b16 %v427
    %v2367 = vunpack.c.l.b16 %v428
    %v2368 = vunpack.c.l.b16 %v429
    %v2369 = vunpack.c.l.b16 %v430
    %v2370 = vunpack.c.l.b16 %v431
    %v2371 = vunpack.c.l.b16 %v432
    %v2372 = vunpack.c.l.b16 %v433
    %v2373 = vunpack.c.l.b16 %v434
    %v2374 = vunpack.c.l.b16 %v435
    %v2375 = vunpack.c.l.b16 %v436
    %v2376 = vunpack.c.l.b16 %v437
    %v2377 = vunpack.c.l.b16 %v438
    %v2378 = vunpack.c.l.b16 %v439
    %v2379 = vunpack.c.l.b16 %v440
    %v2380 = vunpack.c.l.b16 %v441
    %v2381 = vunpack.c.l.b16 %v442
    %v2382 = vunpack.c.l.b16 %v443
    %v2383 = vunpack.c.l.b16 %v444
    %v2384 = vunpack.c.l.b16 %v445
    %v2385 = vunpack.c.l.b16 %v446
    %v2386 = vunpack.c.l.b16 %v447
    %v2387 = vunpack.c.l.b16 %v448
    %v2388 = vunpack.c.l.b16 %v449
    %v2389 = vunpack.c.l.b16 %v450
    %v2390 = vunpack.c.l.b16 %v451
    %v2391 = vunpack.c.l.b16 %v452
    %v2392 = vunpack.c.l.b16 %v453
    %v2393 = vunpack.c.l.b16 %v454
    %v2394 = vunpack.c.l.b16 %v455
    %v2395 = vunpack.c.l.b16 %v456
    %v2396 = vunpack.c.l.b16 %v457
    %v2397 = vunpack.c.l.b16 %v458
    %v2398 = vunpack.c.l.b16 %v459
    %v2399 = vunpack.c.l.b16 %v460
    %v2400 = vunpack.c.l.b16 %v461
    %v2401 = vunpack.c.l.b16 %v462
    %v2402 = vunpack.c.l.b16 %v463
    %v2403 = vunpack.c.l.b16 %v464
    %v2404 = vunpack.c.l.b16 %v465
    %v2405 = vunpack.c.l.b16 %v466
    %v2406 = vunpack.c.l.b16 %v467
    %v2407 = vunpack.c.l.b16 %v468
    %v2408 = vunpack.c.l.b16 %v469
    %v2409 = vunpack.c.l.b16 %v470
    %v2410 = vunpack.c.l.b16 %v471
    %v2411 = vunpack.c.l.b16 %v472
    %v2412 = vunpack.c.l.b16 %v473
    %v2413 = vunpack.c.l.b16 %v474
    %v2414 = vunpack.c.l.b16 %v475
    %v2415 = vunpack.c.l.b16 %v476
    %v2416 = vunpack.c.l.b16 %v477
    %v2417 = vunpack.c.l.b16 %v478
    %v2418 = vunpack.c.l.b16 %v479
    %v2419 = vunpack.c.l.b16 %v480
    %v2420 = vunpack.c.l.b16 %v481
    %v2421 = vunpack.c.l.b16 %v482
    %v2422 = vunpack.c.l.b16 %v483
    %v2423 = vunpack.c.l.b16 %v484
    %v2424 = vunpack.c.l.b16 %v485
    %v2425 = vunpack.c.l.b16 %v486
    %v2426 = vunpack.c.l.b16 %v487
    %v2427 = vunpack.c.l.b16 %v488
    %v2428 = vunpack.c.l.b16 %v489
    %v2429 = vunpack.c.l.b16 %v490
    %v2430 = vunpack.c.l.b16 %v491
    %v2431 = vunpack.c.l.b16 %v492
    %v2432 = vunpack.c.l.b16 %v493
    %v2433 = vunpack.c.l.b16 %v494
    %v2434 = vunpack.c.l.b16 %v495
    %v2435 = vunpack.c.l.b16 %v496
    %v2436 = vunpack.c.l.b16 %v497
    %v2437 = vunpack.c.l.b16 %v498
    %v2438 = vunpack.c.l.b16 %v499
    %v2439 = vunpack.c.l.b16 %v500
    %v2440 = vunpack.c.l.b16 %v501
    %v2441 = vunpack.c.l.b16 %v502
    %v2442 = vunpack.c.l.b16 %v503
    %v2443 = vunpack.c.l.b16 %v504
    %v2444 = vunpack.c.l.b16 %v505
    %v2445 = vunpack.c.l.b16 %v506
    %v2446 = vunpack.c.l.b16 %v507
    %v2447 = vunpack.c.l.b16 %v508
    %v2448 = vunpack.c.l.b16 %v509
    %v2449 = vunpack.c.l.b16 %v510
    %v2450 = vunpack.c.l.b16 %v511
    %v2451 = vunpack.c.l.b16 %v512
    %v2452 = vunpack.c.l.b16 %v513
    %v2453 = vunpack.c.l.b16 %v514
    %v2454 = vunpack.c.l.b16 %v515
    %v2455 = vunpack.c.l.b16 %v516
    %v2456 = vunpack.c.l.b16 %v517
    %v2457 = vunpack.c.l.b16 %v518
    %v2458 = vunpack.c.l.b16 %v519
    %v2459 = vunpack.c.l.b16 %v520
    %v2460 = vunpack.c.l.b16 %v521
    %v2461 = vunpack.c.l.b16 %v522
    %v2462 = vunpack.c.l.b16 %v523
    %v2463 = vunpack.c.l.b16 %v524
    %v2464 = vunpack.c.l.b16 %v525
    %v2465 = vunpack.c.l.b16 %v526
    %v2466 = vunpack.c.l.b16 %v527
    %v2467 = vunpack.c.l.b16 %v528
    %v2468 = vunpack.c.l.b16 %v529
    %v2469 = vunpack.c.l.b16 %v530
    %v2470 = vunpack.c.l.b16 %v531
    %v2471 = vunpack.c.l.b16 %v532
    %v2472 = vunpack.c.l.b16 %v533
    %v2473 = vunpack.c.l.b16 %v534
    %v2474 = vunpack.c.l.b16 %v535
    %v2475 = vunpack.c.l.b16 %v536
    %v2476 = vunpack.c.l.b16 %v537
    %v2477 = vunpack.c.l.b16 %v538
    %v2478 = vunpack.c.l.b16 %v539
    %v2479 = vunpack.c.l.b16 %v540
    %v2480 = vunpack.c.l.b16 %v541
    %v2481 = vunpack.c.l.b16 %v542
    %v2482 = vunpack.c.l.b16 %v543
    %v2483 = vunpack.c.l.b16 %v544
    %v2484 = vunpack.c.l.b16 %v545
    %v2485 = vunpack.c.l.b16 %v546
    %v2486 = vunpack.c.l.b16 %v547
    %v2487 = vunpack.c.l.b16 %v548
    %v2488 = vunpack.c.l.b16 %v549
    %v2489 = vunpack.c.l.b16 %v550
    %v2490 = vunpack.c.l.b16 %v551
    %v2491 = vunpack.c.l.b16 %v552
    %v2492 = vunpack.c.l.b16 %v553
    %v2493 = vunpack.c.l.b16 %v554
    %v2494 = vunpack.c.l.b16 %v555
    %v2495 = vunpack.c.l.b16 %v556
    %v2496 = vunpack.c.l.b16 %v557
    %v2497 = vunpack.c.l.b16 %v558
    %v2498 = vunpack.c.l.b16 %v559
    %v2499 = vunpack.c.l.b16 %v560
    %v2500 = vunpack.c.l.b16 %v561
    %v2501 = vunpack.c.l.b16 %v562
    %v2502 = vunpack.c.l.b16 %v563
    %v2503 = vunpack.c.l.b16 %v564
    %v2504 = vunpack.c.l.b16 %v565
    %v2505 = vunpack.c.l.b16 %v566
    %v2506 = vunpack.c.l.b16 %v567
    %v2507 = vunpack.c.l.b16 %v568
    %v2508 = vunpack.c.l.b16 %v569
    %v2509 = vunpack.c.l.b16 %v570
    %v2510 = vunpack.c.l.b16 %v571
    %v2511 = vunpack.c.l.b16 %v572
    %v2512 = vunpack.c.l.b16 %v573
    %v2513 = vunpack.c.l.b16 %v574
    %v2514 = vunpack.c.l.b16 %v575
    %v2515 = vunpack.c.l.b16 %v576
    %v2516 = vunpack.c.l.b16 %v577
    %v2517 = vunpack.c.l.b16 %v578
    %v2518 = vunpack.c.l.b16 %v579
    %v2519 = vunpack.c.l.b16 %v580
    %v2520 = vunpack.c.l.b16 %v581
    %v2521 = vunpack.c.l.b16 %v582
    %v2522 = vunpack.c.l.b16 %v583
    %v2523 = vunpack.c.l.b16 %v584
    %v2524 = vunpack.c.l.b16 %v585
    %v2525 = vunpack.c.l.b16 %v586
    %v2526 = vunpack.c.l.b16 %v587
    %v2527 = vunpack.c.l.b16 %v588
    %v2528 = vunpack.c.l.b16 %v589
    %v2529 = vunpack.c.l.b16 %v590
    %v2530 = vunpack.c.l.b16 %v591
    %v2531 = vunpack.c.l.b16 %v592
    %v2532 = vunpack.c.l.b16 %v593
    %v2533 = vunpack.c.l.b16 %v594
    %v2534 = vunpack.c.l.b16 %v595
    %v2535 = vunpack.c.l.b16 %v596
    %v2536 = vunpack.c.l.b16 %v597
    %v2537 = vunpack.c.l.b16 %v598
    %v2538 = vunpack.c.l.b16 %v599
    %v2539 = vunpack.c.l.b16 %v600
    %v2540 = vunpack.c.l.b16 %v601
    %v2541 = vunpack.c.l.b16 %v602
    %v2542 = vunpack.c.l.b16 %v603
    %v2543 = vunpack.c.l.b16 %v604
    %v2544 = vunpack.c.l.b16 %v605
    %v2545 = vunpack.c.l.b16 %v606
    %v2546 = vunpack.c.l.b16 %v607
    %v2547 = vunpack.c.l.b16 %v608
    %v2548 = vunpack.c.l.b16 %v609
    %v2549 = vunpack.c.l.b16 %v610
    %v2550 = vunpack.c.l.b16 %v611
    %v2551 = vunpack.c.l.b16 %v612
    %v2552 = vunpack.c.l.b16 %v613
    %v2553 = vunpack.c.l.b16 %v614
    %v2554 = vunpack.c.l.b16 %v615
    %v2555 = vunpack.c.l.b16 %v616
    %v2556 = vunpack.c.l.b16 %v617
    %v2557 = vunpack.c.l.b16 %v618
    %v2558 = vunpack.c.l.b16 %v619
    %v2559 = vunpack.c.l.b16 %v620
    %v2560 = vunpack.c.l.b16 %v621
    %v2561 = vunpack.c.l.b16 %v622
    %v2562 = vunpack.c.l.b16 %v623
    %v2563 = vunpack.c.l.b16 %v624
    %v2564 = vunpack.c.l.b16 %v625
    %v2565 = vunpack.c.l.b16 %v626
    %v2566 = vunpack.c.l.b16 %v627
    %v2567 = vunpack.c.l.b16 %v628
    %v2568 = vunpack.c.l.b16 %v629
    %v2569 = vunpack.c.l.b16 %v630
    %v2570 = vunpack.c.l.b16 %v631
    %v2571 = vunpack.c.l.b16 %v632
    %v2572 = vunpack.c.l.b16 %v633
    %v2573 = vunpack.c.l.b16 %v634
    %v2574 = vunpack.c.l.b16 %v635
    %v2575 = vunpack.c.l.b16 %v636
    %v2576 = vunpack.c.l.b16 %v637
    %v2577 = vunpack.c.l.b16 %v638
    %v2578 = vunpack.c.l.b16 %v639
    %v2579 = vunpack.c.l.b16 %v640
    %v2580 = vunpack.c.l.b16 %v641
    %v2581 = vunpack.c.l.b16 %v642
    %v2582 = vunpack.c.l.b16 %v643
    %v2583 = vunpack.c.l.b16 %v644
    %v2584 = vunpack.c.l.b16 %v645
    %v2585 = vunpack.c.l.b16 %v646
    %v2586 = vunpack.c.l.b16 %v647
    %v2587 = vunpack.c.l.b16 %v648
    %v2588 = vunpack.c.l.b16 %v649
    %v2589 = vunpack.c.l.b16 %v650
    %v2590 = vunpack.c.l.b16 %v651
    %v2591 = vunpack.c.l.b16 %v652
    %v2592 = vunpack.c.l.b16 %v653
    %v2593 = vunpack.c.l.b16 %v654
    %v2594 = vunpack.c.l.b16 %v655
    %v2595 = vunpack.c.l.b16 %v656
    %v2596 = vunpack.c.l.b16 %v657
    %v2597 = vunpack.c.l.b16 %v658
    %v2598 = vunpack.c.l.b16 %v659
    %v2599 = vunpack.c.l.b16 %v660
    %v2600 = vunpack.c.l.b16 %v661
    %v2601 = vunpack.c.l.b16 %v662
    %v2602 = vunpack.c.l.b16 %v663
    %v2603 = vunpack.c.l.b16 %v664
    %v2604 = vunpack.c.l.b16 %v665
    %v2605 = vunpack.c.l.b16 %v666
    %v2606 = vunpack.c.l.b16 %v667
    %v2607 = vunpack.c.l.b16 %v668
    %v2608 = vunpack.c.l.b16 %v669
    %v2609 = vunpack.c.l.b16 %v670
    %v2610 = vunpack.c.l.b16 %v671
    %v2611 = vunpack.c.l.b16 %v672
    %v2612 = vunpack.c.l.b16 %v673
    %v2613 = vunpack.c.l.b16 %v674
    %v2614 = vunpack.c.l.b16 %v675
    %v2615 = vunpack.c.l.b16 %v676
    %v2616 = vunpack.c.l.b16 %v677
    %v2617 = vunpack.c.l.b16 %v678
    %v2618 = vunpack.c.l.b16 %v679
    %v2619 = vunpack.c.l.b16 %v680
    %v2620 = vunpack.c.l.b16 %v681
    %v2621 = vunpack.c.l.b16 %v682
    %v2622 = vunpack.c.l.b16 %v683
    %v2623 = vunpack.c.l.b16 %v684
    %v2624 = vunpack.c.l.b16 %v685
    %v2625 = vunpack.c.l.b16 %v686
    %v2626 = vunpack.c.l.b16 %v687
    %v2627 = vunpack.c.l.b16 %v688
    %v2628 = vunpack.c.l.b16 %v689
    %v2629 = vunpack.c.l.b16 %v690
    %v2630 = vunpack.c.l.b16 %v691
    %v2631 = vunpack.c.l.b16 %v692
    %v2632 = vunpack.c.l.b16 %v693
    %v2633 = vunpack.c.l.b16 %v694
    %v2634 = vunpack.c.l.b16 %v695
    %v2635 = vunpack.c.l.b16 %v696
    %v2636 = vunpack.c.l.b16 %v697
    %v2637 = vunpack.c.l.b16 %v698
    %v2638 = vunpack.c.l.b16 %v699
    %v2639 = vunpack.c.l.b16 %v700
    %v2640 = vunpack.c.l.b16 %v701
    %v2641 = vunpack.c.l.b16 %v702
    %v2642 = vunpack.c.l.b16 %v703
    %v2643 = vunpack.c.l.b16 %v704
    %v2644 = vunpack.c.l.b16 %v705
    %v2645 = vunpack.c.l.b16 %v706
    %v2646 = vunpack.c.l.b16 %v707
    %v2647 = vunpack.c.l.b16 %v708
    %v2648 = vunpack.c.l.b16 %v709
    %v2649 = vunpack.c.l.b16 %v710
    %v2650 = vunpack.c.l.b16 %v711
    %v2651 = vunpack.c.l.b16 %v712
    %v2652 = vunpack.c.l.b16 %v713
    %v2653 = vunpack.c.l.b16 %v714
    %v2654 = vunpack.c.l.b16 %v715
    %v2655 = vunpack.c.l.b16 %v716
    %v2656 = vunpack.c.l.b16 %v717
    %v2657 = vunpack.c.l.b16 %v718
    %v2658 = vunpack.c.l.b16 %v719
    %v2659 = vunpack.c.l.b16 %v720
    %v2660 = vunpack.c.l.b16 %v721
    %v2661 = vunpack.c.l.b16 %v722
    %v2662 = vunpack.c.l.b16 %v723
    %v2663 = vunpack.c.l.b16 %v724
    %v2664 = vunpack.c.l.b16 %v725
    %v2665 = vunpack.c.l.b16 %v726
    %v2666 = vunpack.c.l.b16 %v727
    %v2667 = vunpack.c.l.b16 %v728
    %v2668 = vunpack.c.l.b16 %v729
    %v2669 = vunpack.c.l.b16 %v730
    %v2670 = vunpack.c.l.b16 %v731
    %v2671 = vunpack.c.l.b16 %v732
    %v2672 = vunpack.c.l.b16 %v733
    %v2673 = vunpack.c.l.b16 %v734
    %v2674 = vunpack.c.l.b16 %v735
    %v2675 = vunpack.c.l.b16 %v736
    %v2676 = vunpack.c.l.b16 %v737
    %v2677 = vunpack.c.l.b16 %v738
    %v2678 = vunpack.c.l.b16 %v739
    %v2679 = vunpack.c.l.b16 %v740
    %v2680 = vunpack.c.l.b16 %v741
    %v2681 = vunpack.c.l.b16 %v742
    %v2682 = vunpack.c.l.b16 %v743
    %v2683 = vunpack.c.l.b16 %v744
    %v2684 = vunpack.c.l.b16 %v745
    %v2685 = vunpack.c.l.b16 %v746
    %v2686 = vunpack.c.l.b16 %v747
    %v2687 = vunpack.c.l.b16 %v748
    %v2688 = vunpack.c.l.b16 %v749
    %v2689 = vunpack.c.l.b16 %v750
    %v2690 = vunpack.c.l.b16 %v751
    %v2691 = vunpack.c.l.b16 %v752
    %v2692 = vunpack.c.l.b16 %v753
    %v2693 = vunpack.c.l.b16 %v754
    %v2694 = vunpack.c.l.b16 %v755
    %v2695 = vunpack.c.l.b16 %v756
    %v2696 = vunpack.c.l.b16 %v757
    %v2697 = vunpack.c.l.b16 %v758
    %v2698 = vunpack.c.l.b16 %v759
    %v2699 = vunpack.c.l.b16 %v760
    %v2700 = vunpack.c.l.b16 %v761
    %v2701 = vunpack.c.l.b16 %v762
    %v2702 = vunpack.c.l.b16 %v763
    %v2703 = vunpack.c.l.b16 %v764
    %v2704 = vunpack.c.l.b16 %v765
    %v2705 = vunpack.c.l.b16 %v766
    %v2706 = vunpack.c.l.b16 %v767
    %v2707 = vunpack.c.l.b16 %v768
    %v2708 = vunpack.c.l.b16 %v769
    %v2709 = vunpack.c.l.b16 %v770
    %v2710 = vunpack.c.l.b16 %v771
    %v2711 = vunpack.c.l.b16 %v772
    %v2712 = vunpack.c.l.b16 %v773
    %v2713 = vunpack.c.l.b16 %v774
    %v2714 = vunpack.c.l.b16 %v775
    %v2715 = vunpack.c.l.b16 %v776
    %v2716 = vunpack.c.l.b16 %v777
    %v2717 = vunpack.c.l.b16 %v778
    %v2718 = vunpack.c.l.b16 %v779
    %v2719 = vunpack.c.l.b16 %v780
    %v2720 = vunpack.c.l.b16 %v781
    %v2721 = vunpack.c.l.b16 %v782
    %v2722 = vunpack.c.l.b16 %v783
    %v2723 = vunpack.c.l.b16 %v784
    %v2724 = vunpack.c.l.b16 %v785
    %v2725 = vunpack.c.l.b16 %v786
    %v2726 = vunpack.c.l.b16 %v787
    %v2727 = vunpack.c.l.b16 %v788
    %v2728 = vunpack.c.l.b16 %v789
    %v2729 = vunpack.c.l.b16 %v790
    %v2730 = vunpack.c.l.b16 %v791
    %v2731 = vunpack.c.l.b16 %v792
    %v2732 = vunpack.c.l.b16 %v793
    %v2733 = vunpack.c.l.b16 %v794
    %v2734 = vunpack.c.l.b16 %v795
    %v2735 = vunpack.c.l.b16 %v796
    %v2736 = vunpack.c.l.b16 %v797
    %v2737 = vunpack.c.l.b16 %v798
    %v2738 = vunpack.c.l.b16 %v799
    %v2739 = vunpack.c.l.b16 %v800
    %v2740 = vunpack.c.l.b16 %v801
    %v2741 = vunpack.c.l.b16 %v802
    %v2742 = vunpack.c.l.b16 %v803
    %v2743 = vunpack.c.l.b16 %v804
    %v2744 = vunpack.c.l.b16 %v805
    %v2745 = vunpack.c.l.b16 %v806
    %v2746 = vunpack.c.l.b16 %v807
    %v2747 = vunpack.c.l.b16 %v808
    %v2748 = vunpack.c.l.b16 %v809
    %v2749 = vunpack.c.l.b16 %v810
    %v2750 = vunpack.c.l.b16 %v811
    %v2751 = vunpack.c.l.b16 %v812
    %v2752 = vpack.c.b16 %v1969, %v1968
    %v2753 = vpack.c.b16 %v1971, %v1970
    %v2754 = vpack.c.b16 %v1973, %v1972
    %v2755 = vpack.c.b16 %v1975, %v1974
    %v2756 = vpack.c.b16 %v1977, %v1976
    %v2757 = vpack.c.b16 %v1979, %v1978
    %v2758 = vpack.c.b16 %v1981, %v1980
    %v2759 = vpack.c.b16 %v1983, %v1982
    %v2760 = vpack.c.b16 %v1985, %v1984
    %v2761 = vpack.c.b16 %v1987, %v1986
    %v2762 = vpack.c.b16 %v1989, %v1988
    %v2763 = vpack.c.b16 %v1991, %v1990
    %v2764 = vpack.c.b16 %v1993, %v1992
    %v2765 = vpack.c.b16 %v1995, %v1994
    %v2766 = vpack.c.b16 %v1997, %v1996
    %v2767 = vpack.c.b16 %v1999, %v1998
    %v2768 = vpack.c.b16 %v2001, %v2000
    %v2769 = vpack.c.b16 %v2003, %v2002
    %v2770 = vpack.c.b16 %v2005, %v2004
    %v2771 = vpack.c.b16 %v2007, %v2006
    %v2772 = vpack.c.b16 %v2009, %v2008
    %v2773 = vpack.c.b16 %v2011, %v2010
    %v2774 = vpack.c.b16 %v2013, %v2012
    %v2775 = vpack.c.b16 %v2015, %v2014
    %v2776 = vpack.c.b16 %v2017, %v2016
    %v2777 = vpack.c.b16 %v2019, %v2018
    %v2778 = vpack.c.b16 %v2021, %v2020
    %v2779 = vpack.c.b16 %v2023, %v2022
    %v2780 = vpack.c.b16 %v2025, %v2024
    %v2781 = vpack.c.b16 %v2027, %v2026
    %v2782 = vpack.c.b16 %v2029, %v2028
    %v2783 = vpack.c.b16 %v2031, %v2030
    %v2784 = vpack.c.b16 %v2033, %v2032
    %v2785 = vpack.c.b16 %v2035, %v2034
    %v2786 = vpack.c.b16 %v2037, %v2036
    %v2787 = vpack.c.b16 %v2039, %v2038
    %v2788 = vpack.c.b16 %v2041, %v2040
    %v2789 = vpack.c.b16 %v2043, %v2042
    %v2790 = vpack.c.b16 %v2045, %v2044
    %v2791 = vpack.c.b16 %v2047, %v2046
    %v2792 = vpack.c.b16 %v2049, %v2048
    %v2793 = vpack.c.b16 %v2051, %v2050
    %v2794 = vpack.c.b16 %v2053, %v2052
    %v2795 = vpack.c.b16 %v2055, %v2054
    %v2796 = vpack.c.b16 %v2057, %v2056
    %v2797 = vpack.c.b16 %v2059, %v2058
    %v2798 = vpack.c.b16 %v2061, %v2060
    %v2799 = vpack.c.b16 %v2063, %v2062
    %v2800 = vpack.c.b16 %v2065, %v2064
    %v2801 = vpack.c.b16 %v2067, %v2066
    %v2802 = vpack.c.b16 %v2069, %v2068
    %v2803 = vpack.c.b16 %v2071, %v2070
    %v2804 = vpack.c.b16 %v2073, %v2072
    %v2805 = vpack.c.b16 %v2075, %v2074
    %v2806 = vpack.c.b16 %v2077, %v2076
    %v2807 = vpack.c.b16 %v2079, %v2078
    %v2808 = vpack.c.b16 %v2081, %v2080
    %v2809 = vpack.c.b16 %v2083, %v2082
    %v2810 = vpack.c.b16 %v2085, %v2084
    %v2811 = vpack.c.b16 %v2087, %v2086
    %v2812 = vpack.c.b16 %v2089, %v2088
    %v2813 = vpack.c.b16 %v2091, %v2090
    %v2814 = vpack.c.b16 %v2093, %v2092
    %v2815 = vpack.c.b16 %v2095, %v2094
    %v2816 = vpack.c.b16 %v2097, %v2096
    %v2817 = vpack.c.b16 %v2099, %v2098
    %v2818 = vpack.c.b16 %v2101, %v2100
    %v2819 = vpack.c.b16 %v2103, %v2102
    %v2820 = vpack.c.b16 %v2105, %v2104
    %v2821 = vpack.c.b16 %v2107, %v2106
    %v2822 = vpack.c.b16 %v2109, %v2108
    %v2823 = vpack.c.b16 %v2111, %v2110
    %v2824 = vpack.c.b16 %v2113, %v2112
    %v2825 = vpack.c.b16 %v2115, %v2114
    %v2826 = vpack.c.b16 %v2117, %v2116
    %v2827 = vpack.c.b16 %v2119, %v2118
    %v2828 = vpack.c.b16 %v2121, %v2120
    %v2829 = vpack.c.b16 %v2123, %v2122
    %v2830 = vpack.c.b16 %v2125, %v2124
    %v2831 = vpack.c.b16 %v2127, %v2126
    %v2832 = vpack.c.b16 %v2129, %v2128
    %v2833 = vpack.c.b16 %v2131, %v2130
    %v2834 = vpack.c.b16 %v2133, %v2132
    %v2835 = vpack.c.b16 %v2135, %v2134
    %v2836 = vpack.c.b16 %v2137, %v2136
    %v2837 = vpack.c.b16 %v2139, %v2138
    %v2838 = vpack.c.b16 %v2141, %v2140
    %v2839 = vpack.c.b16 %v2143, %v2142
    %v2840 = vpack.c.b16 %v2145, %v2144
    %v2841 = vpack.c.b16 %v2147, %v2146
    %v2842 = vpack.c.b16 %v2149, %v2148
    %v2843 = vpack.c.b16 %v2151, %v2150
    %v2844 = vpack.c.b16 %v2153, %v2152
    %v2845 = vpack.c.b16 %v2155, %v2154
    %v2846 = vpack.c.b16 %v2157, %v2156
    %v2847 = vpack.c.b16 %v2159, %v2158
    %v2848 = vpack.c.b16 %v2161, %v2160
    %v2849 = vpack.c.b16 %v2163, %v2162
    %v2850 = vpack.c.b16 %v2165, %v2164
    %v2851 = vpack.c.b16 %v2167, %v2166
    %v2852 = vpack.c.b16 %v2169, %v2168
    %v2853 = vpack.c.b16 %v2171, %v2170
    %v2854 = vpack.c.b16 %v2173, %v2172
    %v2855 = vpack.c.b16 %v2175, %v2174
    %v2856 = vpack.c.b16 %v2177, %v2176
    %v2857 = vpack.c.b16 %v2179, %v2178
    %v2858 = vpack.c.b16 %v2181, %v2180
    %v2859 = vpack.c.b16 %v2183, %v2182
    %v2860 = vpack.c.b16 %v2185, %v2184
    %v2861 = vpack.c.b16 %v2187, %v2186
    %v2862 = vpack.c.b16 %v2189, %v2188
    %v2863 = vpack.c.b16 %v2191, %v2190
    %v2864 = vpack.c.b16 %v2193, %v2192
    %v2865 = vpack.c.b16 %v2195, %v2194
    %v2866 = vpack.c.b16 %v2197, %v2196
    %v2867 = vpack.c.b16 %v2199, %v2198
    %v2868 = vpack.c.b16 %v2201, %v2200
    %v2869 = vpack.c.b16 %v2203, %v2202
    %v2870 = vpack.c.b16 %v2205, %v2204
    %v2871 = vpack.c.b16 %v2207, %v2206
    %v2872 = vpack.c.b16 %v2209, %v2208
    %v2873 = vpack.c.b16 %v2211, %v2210
    %v2874 = vpack.c.b16 %v2213, %v2212
    %v2875 = vpack.c.b16 %v2215, %v2214
    %v2876 = vpack.c.b16 %v2217, %v2216
    %v2877 = vpack.c.b16 %v2219, %v2218
    %v2878 = vpack.c.b16 %v2221, %v2220
    %v2879 = vpack.c.b16 %v2223, %v2222
    %v2880 = vpack.c.b16 %v2225, %v2224
    %v2881 = vpack.c.b16 %v2227, %v2226
    %v2882 = vpack.c.b16 %v2229, %v2228
    %v2883 = vpack.c.b16 %v2231, %v2230
    %v2884 = vpack.c.b16 %v2233, %v2232
    %v2885 = vpack.c.b16 %v2235, %v2234
    %v2886 = vpack.c.b16 %v2237, %v2236
    %v2887 = vpack.c.b16 %v2239, %v2238
    %v2888 = vpack.c.b16 %v2241, %v2240
    %v2889 = vpack.c.b16 %v2243, %v2242
    %v2890 = vpack.c.b16 %v2245, %v2244
    %v2891 = vpack.c.b16 %v2247, %v2246
    %v2892 = vpack.c.b16 %v2249, %v2248
    %v2893 = vpack.c.b16 %v2251, %v2250
    %v2894 = vpack.c.b16 %v2253, %v2252
    %v2895 = vpack.c.b16 %v2255, %v2254
    %v2896 = vpack.c.b16 %v2257, %v2256
    %v2897 = vpack.c.b16 %v2259, %v2258
    %v2898 = vpack.c.b16 %v2261, %v2260
    %v2899 = vpack.c.b16 %v2263, %v2262
    %v2900 = vpack.c.b16 %v2265, %v2264
    %v2901 = vpack.c.b16 %v2267, %v2266
    %v2902 = vpack.c.b16 %v2269, %v2268
    %v2903 = vpack.c.b16 %v2271, %v2270
    %v2904 = vpack.c.b16 %v2273, %v2272
    %v2905 = vpack.c.b16 %v2275, %v2274
    %v2906 = vpack.c.b16 %v2277, %v2276
    %v2907 = vpack.c.b16 %v2279, %v2278
    %v2908 = vpack.c.b16 %v2281, %v2280
    %v2909 = vpack.c.b16 %v2283, %v2282
    %v2910 = vpack.c.b16 %v2285, %v2284
    %v2911 = vpack.c.b16 %v2287, %v2286
    %v2912 = vpack.c.b16 %v2289, %v2288
    %v2913 = vpack.c.b16 %v2291, %v2290
    %v2914 = vpack.c.b16 %v2293, %v2292
    %v2915 = vpack.c.b16 %v2295, %v2294
    %v2916 = vpack.c.b16 %v2297, %v2296
    %v2917 = vpack.c.b16 %v2299, %v2298
    %v2918 = vpack.c.b16 %v2301, %v2300
    %v2919 = vpack.c.b16 %v2303, %v2302
    %v2920 = vpack.c.b16 %v2305, %v2304
    %v2921 = vpack.c.b16 %v2307, %v2306
    %v2922 = vpack.c.b16 %v2309, %v2308
    %v2923 = vpack.c.b16 %v2311, %v2310
    %v2924 = vpack.c.b16 %v2313, %v2312
    %v2925 = vpack.c.b16 %v2315, %v2314
    %v2926 = vpack.c.b16 %v2317, %v2316
    %v2927 = vpack.c.b16 %v2319, %v2318
    %v2928 = vpack.c.b16 %v2321, %v2320
    %v2929 = vpack.c.b16 %v2323, %v2322
    %v2930 = vpack.c.b16 %v2325, %v2324
    %v2931 = vpack.c.b16 %v2327, %v2326
    %v2932 = vpack.c.b16 %v2329, %v2328
    %v2933 = vpack.c.b16 %v2331, %v2330
    %v2934 = vpack.c.b16 %v2333, %v2332
    %v2935 = vpack.c.b16 %v2335, %v2334
    %v2936 = vpack.c.b16 %v2337, %v2336
    %v2937 = vpack.c.b16 %v2339, %v2338
    %v2938 = vpack.c.b16 %v2341, %v2340
    %v2939 = vpack.c.b16 %v2343, %v2342
    %v2940 = vpack.c.b16 %v2345, %v2344
    %v2941 = vpack.c.b16 %v2347, %v2346
    %v2942 = vpack.c.b16 %v2349, %v2348
    %v2943 = vpack.c.b16 %v2351, %v2350
    %v2944 = vpack.c.b16 %v2353, %v2352
    %v2945 = vpack.c.b16 %v2355, %v2354
    %v2946 = vpack.c.b16 %v2357, %v2356
    %v2947 = vpack.c.b16 %v2359, %v2358
    %v2948 = vpack.c.b16 %v2361, %v2360
    %v2949 = vpack.c.b16 %v2363, %v2362
    %v2950 = vpack.c.b16 %v2365, %v2364
    %v2951 = vpack.c.b16 %v2367, %v2366
    %v2952 = vpack.c.b16 %v2369, %v2368
    %v2953 = vpack.c.b16 %v2371, %v2370
    %v2954 = vpack.c.b16 %v2373, %v2372
    %v2955 = vpack.c.b16 %v2375, %v2374
    %v2956 = vpack.c.b16 %v2377, %v2376
    %v2957 = vpack.c.b16 %v2379, %v2378
    %v2958 = vpack.c.b16 %v2381, %v2380
    %v2959 = vpack.c.b16 %v2383, %v2382
    %v2960 = vpack.c.b16 %v2385, %v2384
    %v2961 = vpack.c.b16 %v2387, %v2386
    %v2962 = vpack.c.b16 %v2389, %v2388
    %v2963 = vpack.c.b16 %v2391, %v2390
    %v2964 = vpack.c.b16 %v2393, %v2392
    %v2965 = vpack.c.b16 %v2395, %v2394
    %v2966 = vpack.c.b16 %v2397, %v2396
    %v2967 = vpack.c.b16 %v2399, %v2398
    %v2968 = vpack.c.b16 %v2401, %v2400
    %v2969 = vpack.c.b16 %v2403, %v2402
    %v2970 = vpack.c.b16 %v2405, %v2404
    %v2971 = vpack.c.b16 %v2407, %v2406
    %v2972 = vpack.c.b16 %v2409, %v2408
    %v2973 = vpack.c.b16 %v2411, %v2410
    %v2974 = vpack.c.b16 %v2413, %v2412
    %v2975 = vpack.c.b16 %v2415, %v2414
    %v2976 = vpack.c.b16 %v2417, %v2416
    %v2977 = vpack.c.b16 %v2419, %v2418
    %v2978 = vpack.c.b16 %v2421, %v2420
    %v2979 = vpack.c.b16 %v2423, %v2422
    %v2980 = vpack.c.b16 %v2425, %v2424
    %v2981 = vpack.c.b16 %v2427, %v2426
    %v2982 = vpack.c.b16 %v2429, %v2428
    %v2983 = vpack.c.b16 %v2431, %v2430
    %v2984 = vpack.c.b16 %v2433, %v2432
    %v2985 = vpack.c.b16 %v2435, %v2434
    %v2986 = vpack.c.b16 %v2437, %v2436
    %v2987 = vpack.c.b16 %v2439, %v2438
    %v2988 = vpack.c.b16 %v2441, %v2440
    %v2989 = vpack.c.b16 %v2443, %v2442
    %v2990 = vpack.c.b16 %v2445, %v2444
    %v2991 = vpack.c.b16 %v2447, %v2446
    %v2992 = vpack.c.b16 %v2449, %v2448
    %v2993 = vpack.c.b16 %v2451, %v2450
    %v2994 = vpack.c.b16 %v2453, %v2452
    %v2995 = vpack.c.b16 %v2455, %v2454
    %v2996 = vpack.c.b16 %v2457, %v2456
    %v2997 = vpack.c.b16 %v2459, %v2458
    %v2998 = vpack.c.b16 %v2461, %v2460
    %v2999 = vpack.c.b16 %v2463, %v2462
    %v3000 = vpack.c.b16 %v2465, %v2464
    %v3001 = vpack.c.b16 %v2467, %v2466
    %v3002 = vpack.c.b16 %v2469, %v2468
    %v3003 = vpack.c.b16 %v2471, %v2470
    %v3004 = vpack.c.b16 %v2473, %v2472
    %v3005 = vpack.c.b16 %v2475, %v2474
    %v3006 = vpack.c.b16 %v2477, %v2476
    %v3007 = vpack.c.b16 %v2479, %v2478
    %v3008 = vpack.c.b16 %v2481, %v2480
    %v3009 = vpack.c.b16 %v2483, %v2482
    %v3010 = vpack.c.b16 %v2485, %v2484
    %v3011 = vpack.c.b16 %v2487, %v2486
    %v3012 = vpack.c.b16 %v2489, %v2488
    %v3013 = vpack.c.b16 %v2491, %v2490
    %v3014 = vpack.c.b16 %v2493, %v2492
    %v3015 = vpack.c.b16 %v2495, %v2494
    %v3016 = vpack.c.b16 %v2497, %v2496
    %v3017 = vpack.c.b16 %v2499, %v2498
    %v3018 = vpack.c.b16 %v2501, %v2500
    %v3019 = vpack.c.b16 %v2503, %v2502
    %v3020 = vpack.c.b16 %v2505, %v2504
    %v3021 = vpack.c.b16 %v2507, %v2506
    %v3022 = vpack.c.b16 %v2509, %v2508
    %v3023 = vpack.c.b16 %v2511, %v2510
    %v3024 = vpack.c.b16 %v2513, %v2512
    %v3025 = vpack.c.b16 %v2515, %v2514
    %v3026 = vpack.c.b16 %v2517, %v2516
    %v3027 = vpack.c.b16 %v2519, %v2518
    %v3028 = vpack.c.b16 %v2521, %v2520
    %v3029 = vpack.c.b16 %v2523, %v2522
    %v3030 = vpack.c.b16 %v2525, %v2524
    %v3031 = vpack.c.b16 %v2527, %v2526
    %v3032 = vpack.c.b16 %v2529, %v2528
    %v3033 = vpack.c.b16 %v2531, %v2530
    %v3034 = vpack.c.b16 %v2533, %v2532
    %v3035 = vpack.c.b16 %v2535, %v2534
    %v3036 = vpack.c.b16 %v2537, %v2536
    %v3037 = vpack.c.b16 %v2539, %v2538
    %v3038 = vpack.c.b16 %v2541, %v2540
    %v3039 = vpack.c.b16 %v2543, %v2542
    %v3040 = vpack.c.b16 %v2545, %v2544
    %v3041 = vpack.c.b16 %v2547, %v2546
    %v3042 = vpack.c.b16 %v2549, %v2548
    %v3043 = vpack.c.b16 %v2551, %v2550
    %v3044 = vpack.c.b16 %v2553, %v2552
    %v3045 = vpack.c.b16 %v2555, %v2554
    %v3046 = vpack.c.b16 %v2557, %v2556
    %v3047 = vpack.c.b16 %v2559, %v2558
    %v3048 = vpack.c.b16 %v2561, %v2560
    %v3049 = vpack.c.b16 %v2563, %v2562
    %v3050 = vpack.c.b16 %v2565, %v2564
    %v3051 = vpack.c.b16 %v2567, %v2566
    %v3052 = vpack.c.b16 %v2569, %v2568
    %v3053 = vpack.c.b16 %v2571, %v2570
    %v3054 = vpack.c.b16 %v2573, %v2572
    %v3055 = vpack.c.b16 %v2575, %v2574
    %v3056 = vpack.c.b16 %v2577, %v2576
    %v3057 = vpack.c.b16 %v2579, %v2578
    %v3058 = vpack.c.b16 %v2581, %v2580
    %v3059 = vpack.c.b16 %v2583, %v2582
    %v3060 = vpack.c.b16 %v2585, %v2584
    %v3061 = vpack.c.b16 %v2587, %v2586
    %v3062 = vpack.c.b16 %v2589, %v2588
    %v3063 = vpack.c.b16 %v2591, %v2590
    %v3064 = vpack.c.b16 %v2593, %v2592
    %v3065 = vpack.c.b16 %v2595, %v2594
    %v3066 = vpack.c.b16 %v2597, %v2596
    %v3067 = vpack.c.b16 %v2599, %v2598
    %v3068 = vpack.c.b16 %v2601, %v2600
    %v3069 = vpack.c.b16 %v2603, %v2602
    %v3070 = vpack.c.b16 %v2605, %v2604
    %v3071 = vpack.c.b16 %v2607, %v2606
    %v3072 = vpack.c.b16 %v2609, %v2608
    %v3073 = vpack.c.b16 %v2611, %v2610
    %v3074 = vpack.c.b16 %v2613, %v2612
    %v3075 = vpack.c.b16 %v2615, %v2614
    %v3076 = vpack.c.b16 %v2617, %v2616
    %v3077 = vpack.c.b16 %v2619, %v2618
    %v3078 = vpack.c.b16 %v2621, %v2620
    %v3079 = vpack.c.b16 %v2623, %v2622
    %v3080 = vpack.c.b16 %v2625, %v2624
    %v3081 = vpack.c.b16 %v2627, %v2626
    %v3082 = vpack.c.b16 %v2629, %v2628
    %v3083 = vpack.c.b16 %v2631, %v2630
    %v3084 = vpack.c.b16 %v2633, %v2632
    %v3085 = vpack.c.b16 %v2635, %v2634
    %v3086 = vpack.c.b16 %v2637, %v2636
    %v3087 = vpack.c.b16 %v2639, %v2638
    %v3088 = vpack.c.b16 %v2641, %v2640
    %v3089 = vpack.c.b16 %v2643, %v2642
    %v3090 = vpack.c.b16 %v2645, %v2644
    %v3091 = vpack.c.b16 %v2647, %v2646
    %v3092 = vpack.c.b16 %v2649, %v2648
    %v3093 = vpack.c.b16 %v2651, %v2650
    %v3094 = vpack.c.b16 %v2653, %v2652
    %v3095 = vpack.c.b16 %v2655, %v2654
    %v3096 = vpack.c.b16 %v2657, %v2656
    %v3097 = vpack.c.b16 %v2659, %v2658
    %v3098 = vpack.c.b16 %v2661, %v2660
    %v3099 = vpack.c.b16 %v2663, %v2662
    %v3100 = vpack.c.b16 %v2665, %v2664
    %v3101 = vpack.c.b16 %v2667, %v2666
    %v3102 = vpack.c.b16 %v2669, %v2668
    %v3103 = vpack.c.b16 %v2671, %v2670
    %v3104 = vpack.c.b16 %v2673, %v2672
    %v3105 = vpack.c.b16 %v2675, %v2674
    %v3106 = vpack.c.b16 %v2677, %v2676
    %v3107 = vpack.c.b16 %v2679, %v2678
    %v3108 = vpack.c.b16 %v2681, %v2680
    %v3109 = vpack.c.b16 %v2683, %v2682
    %v3110 = vpack.c.b16 %v2685, %v2684
    %v3111 = vpack.c.b16 %v2687, %v2686
    %v3112 = vpack.c.b16 %v2689, %v2688
    %v3113 = vpack.c.b16 %v2691, %v2690
    %v3114 = vpack.c.b16 %v2693, %v2692
    %v3115 = vpack.c.b16 %v2695, %v2694
    %v3116 = vpack.c.b16 %v2697, %v2696
    %v3117 = vpack.c.b16 %v2699, %v2698
    %v3118 = vpack.c.b16 %v2701, %v2700
    %v3119 = vpack.c.b16 %v2703, %v2702
    %v3120 = vpack.c.b16 %v2705, %v2704
    %v3121 = vpack.c.b16 %v2707, %v2706
    %v3122 = vpack.c.b16 %v2709, %v2708
    %v3123 = vpack.c.b16 %v2711, %v2710
    %v3124 = vpack.c.b16 %v2713, %v2712
    %v3125 = vpack.c.b16 %v2715, %v2714
    %v3126 = vpack.c.b16 %v2717, %v2716
    %v3127 = vpack.c.b16 %v2719, %v2718
    %v3128 = vpack.c.b16 %v2721, %v2720
    %v3129 = vpack.c.b16 %v2723, %v2722
    %v3130 = vpack.c.b16 %v2725, %v2724
    %v3131 = vpack.c.b16 %v2727, %v2726
    %v3132 = vpack.c.b16 %v2729, %v2728
    %v3133 = vpack.c.b16 %v2731, %v2730
    %v3134 = vpack.c.b16 %v2733, %v2732
    %v3135 = vpack.c.b16 %v2735, %v2734
    %v3136 = vpack.c.b16 %v2737, %v2736
    %v3137 = vpack.c.b16 %v2739, %v2738
    %v3138 = vpack.c.b16 %v2741, %v2740
    %v3139 = vpack.c.b16 %v2743, %v2742
    %v3140 = vpack.c.b16 %v2745, %v2744
    %v3141 = vpack.c.b16 %v2747, %v2746
    %v3142 = vpack.c.b16 %v2749, %v2748
    %v3143 = vpack.c.b16 %v2751, %v2750
    %3536 = vmatprep.subr.bf16.mxu0 0
    %3537 = vmatpush1.bf16.msra.mxu0 %v2759
    %3538 = vmatprep.subr.bf16.mxu0 0
    %3539 = vmatpush1.bf16.msra.mxu0 %v2758
    %3540 = vmatprep.subr.bf16.mxu0 0
    %3541 = vmatpush1.bf16.msra.mxu0 %v2757
    %3542 = vmatprep.subr.bf16.mxu0 0
    %3543 = vmatpush1.bf16.msra.mxu0 %v2756
    %3544 = vmatprep.subr.bf16.mxu0 0
    %3545 = vmatpush1.bf16.msra.mxu0 %v2755
    %3546 = vmatprep.subr.bf16.mxu0 0
    %3547 = vmatpush1.bf16.msra.mxu0 %v2754
    %3548 = vmatprep.subr.bf16.mxu0 0
    %3549 = vmatpush1.bf16.msra.mxu0 %v2753
    %3550 = vmatprep.subr.bf16.mxu0 0
    %3551 = vmatpush1.bf16.msra.mxu0 %v2752
    %3552 = vmatprep.subr.bf16.mxu0 0
    %3553 = vmatpush2.bf16.msra.mxu0 %v2767
    %3554 = vmatprep.subr.bf16.mxu0 0
    %3555 = vmatpush2.bf16.msra.mxu0 %v2766
    %3556 = vmatprep.subr.bf16.mxu0 0
    %3557 = vmatpush2.bf16.msra.mxu0 %v2765
    %3558 = vmatprep.subr.bf16.mxu0 0
    %3559 = vmatpush2.bf16.msra.mxu0 %v2764
    %3560 = vmatprep.subr.bf16.mxu0 0
    %3561 = vmatpush2.bf16.msra.mxu0 %v2763
    %3562 = vmatprep.subr.bf16.mxu0 0
    %3563 = vmatpush2.bf16.msra.mxu0 %v2762
    %3564 = vmatprep.subr.bf16.mxu0 0
    %3565 = vmatpush2.bf16.msra.mxu0 %v2761
    %3566 = vmatprep.subr.bf16.mxu0 0
    %3567 = vmatpush2.bf16.msra.mxu0 %v2760
    %3568 = vmatprep.mubr.bf16.mxu0 %v864
    %3569 = vmatmul.mubr.bf16.gmra.mxu0 %v850
    %v3570 = vpop.f32.mrf.mxu0
    %v3571 = vadd.f32 %v818, %v3570
    %v3572 = vpop.f32.mrf.mxu0
    %v3573 = vpop.f32.mrf.mxu0
    %v3574 = vpop.f32.mrf.mxu0
    %3575 = vdwg.mxu0
    %3576 = vmatprep.subr.bf16.mxu0 0
    %3577 = vmatpush1.bf16.msra.mxu0 %v2775
    %3578 = vmatprep.subr.bf16.mxu0 0
    %3579 = vmatpush1.bf16.msra.mxu0 %v2774
    %3580 = vmatprep.subr.bf16.mxu0 0
    %3581 = vmatpush1.bf16.msra.mxu0 %v2773
    %3582 = vmatprep.subr.bf16.mxu0 0
    %3583 = vmatpush1.bf16.msra.mxu0 %v2772
    %3584 = vmatprep.subr.bf16.mxu0 0
    %3585 = vmatpush1.bf16.msra.mxu0 %v2771
    %3586 = vmatprep.subr.bf16.mxu0 0
    %3587 = vmatpush1.bf16.msra.mxu0 %v2770
    %3588 = vmatprep.subr.bf16.mxu0 0
    %3589 = vmatpush1.bf16.msra.mxu0 %v2769
    %3590 = vmatprep.subr.bf16.mxu0 0
    %3591 = vmatpush1.bf16.msra.mxu0 %v2768
    %3592 = vmatprep.subr.bf16.mxu0 0
    %3593 = vmatpush2.bf16.msra.mxu0 %v2783
    %3594 = vmatprep.subr.bf16.mxu0 0
    %3595 = vmatpush2.bf16.msra.mxu0 %v2782
    %3596 = vmatprep.subr.bf16.mxu0 0
    %3597 = vmatpush2.bf16.msra.mxu0 %v2781
    %3598 = vmatprep.subr.bf16.mxu0 0
    %3599 = vmatpush2.bf16.msra.mxu0 %v2780
    %3600 = vmatprep.subr.bf16.mxu0 0
    %3601 = vmatpush2.bf16.msra.mxu0 %v2779
    %3602 = vmatprep.subr.bf16.mxu0 0
    %3603 = vmatpush2.bf16.msra.mxu0 %v2778
    %3604 = vmatprep.subr.bf16.mxu0 0
    %3605 = vmatpush2.bf16.msra.mxu0 %v2777
    %3606 = vmatprep.subr.bf16.mxu0 0
    %3607 = vmatpush2.bf16.msra.mxu0 %v2776
    %3608 = vmatprep.mubr.bf16.mxu0 %v874
    %3609 = vmatmul.mubr.bf16.gmra.mxu0 %v872
    %v3610 = vpop.f32.mrf.mxu0
    %v3611 = vadd.f32 %v3571, %v3610
    %v3612 = vpop.f32.mrf.mxu0
    %v3613 = vpop.f32.mrf.mxu0
    %v3614 = vpop.f32.mrf.mxu0
    %3615 = vdwg.mxu0
    %3616 = vmatprep.subr.bf16.mxu0 0
    %3617 = vmatpush1.bf16.msra.mxu0 %v2791
    %3618 = vmatprep.subr.bf16.mxu0 0
    %3619 = vmatpush1.bf16.msra.mxu0 %v2790
    %3620 = vmatprep.subr.bf16.mxu0 0
    %3621 = vmatpush1.bf16.msra.mxu0 %v2789
    %3622 = vmatprep.subr.bf16.mxu0 0
    %3623 = vmatpush1.bf16.msra.mxu0 %v2788
    %3624 = vmatprep.subr.bf16.mxu0 0
    %3625 = vmatpush1.bf16.msra.mxu0 %v2787
    %3626 = vmatprep.subr.bf16.mxu0 0
    %3627 = vmatpush1.bf16.msra.mxu0 %v2786
    %3628 = vmatprep.subr.bf16.mxu0 0
    %3629 = vmatpush1.bf16.msra.mxu0 %v2785
    %3630 = vmatprep.subr.bf16.mxu0 0
    %3631 = vmatpush1.bf16.msra.mxu0 %v2784
    %3632 = vmatprep.subr.bf16.mxu0 0
    %3633 = vmatpush2.bf16.msra.mxu0 %v2799
    %3634 = vmatprep.subr.bf16.mxu0 0
    %3635 = vmatpush2.bf16.msra.mxu0 %v2798
    %3636 = vmatprep.subr.bf16.mxu0 0
    %3637 = vmatpush2.bf16.msra.mxu0 %v2797
    %3638 = vmatprep.subr.bf16.mxu0 0
    %3639 = vmatpush2.bf16.msra.mxu0 %v2796
    %3640 = vmatprep.subr.bf16.mxu0 0
    %3641 = vmatpush2.bf16.msra.mxu0 %v2795
    %3642 = vmatprep.subr.bf16.mxu0 0
    %3643 = vmatpush2.bf16.msra.mxu0 %v2794
    %3644 = vmatprep.subr.bf16.mxu0 0
    %3645 = vmatpush2.bf16.msra.mxu0 %v2793
    %3646 = vmatprep.subr.bf16.mxu0 0
    %3647 = vmatpush2.bf16.msra.mxu0 %v2792
    %3648 = vmatprep.mubr.bf16.mxu0 %v871
    %3649 = vmatmul.mubr.bf16.gmra.mxu0 %v857
    %v3650 = vpop.f32.mrf.mxu0
    %v3651 = vadd.f32 %v3611, %v3650
    %v3652 = vpop.f32.mrf.mxu0
    %v3653 = vpop.f32.mrf.mxu0
    %v3654 = vpop.f32.mrf.mxu0
    %3655 = vdwg.mxu0
    %3656 = vmatprep.subr.bf16.mxu0 0
    %3657 = vmatpush1.bf16.msra.mxu0 %v2807
    %3658 = vmatprep.subr.bf16.mxu0 0
    %3659 = vmatpush1.bf16.msra.mxu0 %v2806
    %3660 = vmatprep.subr.bf16.mxu0 0
    %3661 = vmatpush1.bf16.msra.mxu0 %v2805
    %3662 = vmatprep.subr.bf16.mxu0 0
    %3663 = vmatpush1.bf16.msra.mxu0 %v2804
    %3664 = vmatprep.subr.bf16.mxu0 0
    %3665 = vmatpush1.bf16.msra.mxu0 %v2803
    %3666 = vmatprep.subr.bf16.mxu0 0
    %3667 = vmatpush1.bf16.msra.mxu0 %v2802
    %3668 = vmatprep.subr.bf16.mxu0 0
    %3669 = vmatpush1.bf16.msra.mxu0 %v2801
    %3670 = vmatprep.subr.bf16.mxu0 0
    %3671 = vmatpush1.bf16.msra.mxu0 %v2800
    %3672 = vmatprep.subr.bf16.mxu0 0
    %3673 = vmatpush2.bf16.msra.mxu0 %v2815
    %3674 = vmatprep.subr.bf16.mxu0 0
    %3675 = vmatpush2.bf16.msra.mxu0 %v2814
    %3676 = vmatprep.subr.bf16.mxu0 0
    %3677 = vmatpush2.bf16.msra.mxu0 %v2813
    %3678 = vmatprep.subr.bf16.mxu0 0
    %3679 = vmatpush2.bf16.msra.mxu0 %v2812
    %3680 = vmatprep.subr.bf16.mxu0 0
    %3681 = vmatpush2.bf16.msra.mxu0 %v2811
    %3682 = vmatprep.subr.bf16.mxu0 0
    %3683 = vmatpush2.bf16.msra.mxu0 %v2810
    %3684 = vmatprep.subr.bf16.mxu0 0
    %3685 = vmatpush2.bf16.msra.mxu0 %v2809
    %3686 = vmatprep.subr.bf16.mxu0 0
    %3687 = vmatpush2.bf16.msra.mxu0 %v2808
    %3688 = vmatprep.mubr.bf16.mxu0 %v875
    %3689 = vmatmul.mubr.bf16.gmra.mxu0 %v873
    %v3690 = vpop.f32.mrf.mxu0
    %v3691 = vadd.f32 %v3651, %v3690
    %v3692 = vpop.f32.mrf.mxu0
    %v3693 = vpop.f32.mrf.mxu0
    %v3694 = vpop.f32.mrf.mxu0
    %3695 = vdwg.mxu0
    %3696 = vmatprep.subr.bf16.mxu0 0
    %3697 = vmatpush1.bf16.msra.mxu0 %v2823
    %3698 = vmatprep.subr.bf16.mxu0 0
    %3699 = vmatpush1.bf16.msra.mxu0 %v2822
    %3700 = vmatprep.subr.bf16.mxu0 0
    %3701 = vmatpush1.bf16.msra.mxu0 %v2821
    %3702 = vmatprep.subr.bf16.mxu0 0
    %3703 = vmatpush1.bf16.msra.mxu0 %v2820
    %3704 = vmatprep.subr.bf16.mxu0 0
    %3705 = vmatpush1.bf16.msra.mxu0 %v2819
    %3706 = vmatprep.subr.bf16.mxu0 0
    %3707 = vmatpush1.bf16.msra.mxu0 %v2818
    %3708 = vmatprep.subr.bf16.mxu0 0
    %3709 = vmatpush1.bf16.msra.mxu0 %v2817
    %3710 = vmatprep.subr.bf16.mxu0 0
    %3711 = vmatpush1.bf16.msra.mxu0 %v2816
    %3712 = vmatprep.subr.bf16.mxu0 0
    %3713 = vmatpush2.bf16.msra.mxu0 %v2831
    %3714 = vmatprep.subr.bf16.mxu0 0
    %3715 = vmatpush2.bf16.msra.mxu0 %v2830
    %3716 = vmatprep.subr.bf16.mxu0 0
    %3717 = vmatpush2.bf16.msra.mxu0 %v2829
    %3718 = vmatprep.subr.bf16.mxu0 0
    %3719 = vmatpush2.bf16.msra.mxu0 %v2828
    %3720 = vmatprep.subr.bf16.mxu0 0
    %3721 = vmatpush2.bf16.msra.mxu0 %v2827
    %3722 = vmatprep.subr.bf16.mxu0 0
    %3723 = vmatpush2.bf16.msra.mxu0 %v2826
    %3724 = vmatprep.subr.bf16.mxu0 0
    %3725 = vmatpush2.bf16.msra.mxu0 %v2825
    %3726 = vmatprep.subr.bf16.mxu0 0
    %3727 = vmatpush2.bf16.msra.mxu0 %v2824
    %3728 = vmatprep.mubr.bf16.mxu0 %v913
    %3729 = vmatmul.mubr.bf16.gmra.mxu0 %v899
    %v3730 = vpop.f32.mrf.mxu0
    %v3731 = vadd.f32 %v3691, %v3730
    %v3732 = vpop.f32.mrf.mxu0
    %v3733 = vpop.f32.mrf.mxu0
    %v3734 = vpop.f32.mrf.mxu0
    %3735 = vdwg.mxu0
    %3736 = vmatprep.subr.bf16.mxu0 0
    %3737 = vmatpush1.bf16.msra.mxu0 %v2839
    %3738 = vmatprep.subr.bf16.mxu0 0
    %3739 = vmatpush1.bf16.msra.mxu0 %v2838
    %3740 = vmatprep.subr.bf16.mxu0 0
    %3741 = vmatpush1.bf16.msra.mxu0 %v2837
    %3742 = vmatprep.subr.bf16.mxu0 0
    %3743 = vmatpush1.bf16.msra.mxu0 %v2836
    %3744 = vmatprep.subr.bf16.mxu0 0
    %3745 = vmatpush1.bf16.msra.mxu0 %v2835
    %3746 = vmatprep.subr.bf16.mxu0 0
    %3747 = vmatpush1.bf16.msra.mxu0 %v2834
    %3748 = vmatprep.subr.bf16.mxu0 0
    %3749 = vmatpush1.bf16.msra.mxu0 %v2833
    %3750 = vmatprep.subr.bf16.mxu0 0
    %3751 = vmatpush1.bf16.msra.mxu0 %v2832
    %3752 = vmatprep.subr.bf16.mxu0 0
    %3753 = vmatpush2.bf16.msra.mxu0 %v2847
    %3754 = vmatprep.subr.bf16.mxu0 0
    %3755 = vmatpush2.bf16.msra.mxu0 %v2846
    %3756 = vmatprep.subr.bf16.mxu0 0
    %3757 = vmatpush2.bf16.msra.mxu0 %v2845
    %3758 = vmatprep.subr.bf16.mxu0 0
    %3759 = vmatpush2.bf16.msra.mxu0 %v2844
    %3760 = vmatprep.subr.bf16.mxu0 0
    %3761 = vmatpush2.bf16.msra.mxu0 %v2843
    %3762 = vmatprep.subr.bf16.mxu0 0
    %3763 = vmatpush2.bf16.msra.mxu0 %v2842
    %3764 = vmatprep.subr.bf16.mxu0 0
    %3765 = vmatpush2.bf16.msra.mxu0 %v2841
    %3766 = vmatprep.subr.bf16.mxu0 0
    %3767 = vmatpush2.bf16.msra.mxu0 %v2840
    %3768 = vmatprep.mubr.bf16.mxu0 %v923
    %3769 = vmatmul.mubr.bf16.gmra.mxu0 %v921
    %v3770 = vpop.f32.mrf.mxu0
    %v3771 = vadd.f32 %v3731, %v3770
    %v3772 = vpop.f32.mrf.mxu0
    %v3773 = vpop.f32.mrf.mxu0
    %v3774 = vpop.f32.mrf.mxu0
    %3775 = vdwg.mxu0
    %3776 = vmatprep.subr.bf16.mxu0 0
    %3777 = vmatpush1.bf16.msra.mxu0 %v2855
    %3778 = vmatprep.subr.bf16.mxu0 0
    %3779 = vmatpush1.bf16.msra.mxu0 %v2854
    %3780 = vmatprep.subr.bf16.mxu0 0
    %3781 = vmatpush1.bf16.msra.mxu0 %v2853
    %3782 = vmatprep.subr.bf16.mxu0 0
    %3783 = vmatpush1.bf16.msra.mxu0 %v2852
    %3784 = vmatprep.subr.bf16.mxu0 0
    %3785 = vmatpush1.bf16.msra.mxu0 %v2851
    %3786 = vmatprep.subr.bf16.mxu0 0
    %3787 = vmatpush1.bf16.msra.mxu0 %v2850
    %3788 = vmatprep.subr.bf16.mxu0 0
    %3789 = vmatpush1.bf16.msra.mxu0 %v2849
    %3790 = vmatprep.subr.bf16.mxu0 0
    %3791 = vmatpush1.bf16.msra.mxu0 %v2848
    %3792 = vmatprep.subr.bf16.mxu0 0
    %3793 = vmatpush2.bf16.msra.mxu0 %v2863
    %3794 = vmatprep.subr.bf16.mxu0 0
    %3795 = vmatpush2.bf16.msra.mxu0 %v2862
    %3796 = vmatprep.subr.bf16.mxu0 0
    %3797 = vmatpush2.bf16.msra.mxu0 %v2861
    %3798 = vmatprep.subr.bf16.mxu0 0
    %3799 = vmatpush2.bf16.msra.mxu0 %v2860
    %3800 = vmatprep.subr.bf16.mxu0 0
    %3801 = vmatpush2.bf16.msra.mxu0 %v2859
    %3802 = vmatprep.subr.bf16.mxu0 0
    %3803 = vmatpush2.bf16.msra.mxu0 %v2858
    %3804 = vmatprep.subr.bf16.mxu0 0
    %3805 = vmatpush2.bf16.msra.mxu0 %v2857
    %3806 = vmatprep.subr.bf16.mxu0 0
    %3807 = vmatpush2.bf16.msra.mxu0 %v2856
    %3808 = vmatprep.mubr.bf16.mxu0 %v920
    %3809 = vmatmul.mubr.bf16.gmra.mxu0 %v906
    %v3810 = vpop.f32.mrf.mxu0
    %v3811 = vadd.f32 %v3771, %v3810
    %v3812 = vpop.f32.mrf.mxu0
    %v3813 = vpop.f32.mrf.mxu0
    %v3814 = vpop.f32.mrf.mxu0
    %3815 = vdwg.mxu0
    %3816 = vmatprep.subr.bf16.mxu0 0
    %3817 = vmatpush1.bf16.msra.mxu0 %v2871
    %3818 = vmatprep.subr.bf16.mxu0 0
    %3819 = vmatpush1.bf16.msra.mxu0 %v2870
    %3820 = vmatprep.subr.bf16.mxu0 0
    %3821 = vmatpush1.bf16.msra.mxu0 %v2869
    %3822 = vmatprep.subr.bf16.mxu0 0
    %3823 = vmatpush1.bf16.msra.mxu0 %v2868
    %3824 = vmatprep.subr.bf16.mxu0 0
    %3825 = vmatpush1.bf16.msra.mxu0 %v2867
    %3826 = vmatprep.subr.bf16.mxu0 0
    %3827 = vmatpush1.bf16.msra.mxu0 %v2866
    %3828 = vmatprep.subr.bf16.mxu0 0
    %3829 = vmatpush1.bf16.msra.mxu0 %v2865
    %3830 = vmatprep.subr.bf16.mxu0 0
    %3831 = vmatpush1.bf16.msra.mxu0 %v2864
    %3832 = vmatprep.subr.bf16.mxu0 0
    %3833 = vmatpush2.bf16.msra.mxu0 %v2879
    %3834 = vmatprep.subr.bf16.mxu0 0
    %3835 = vmatpush2.bf16.msra.mxu0 %v2878
    %3836 = vmatprep.subr.bf16.mxu0 0
    %3837 = vmatpush2.bf16.msra.mxu0 %v2877
    %3838 = vmatprep.subr.bf16.mxu0 0
    %3839 = vmatpush2.bf16.msra.mxu0 %v2876
    %3840 = vmatprep.subr.bf16.mxu0 0
    %3841 = vmatpush2.bf16.msra.mxu0 %v2875
    %3842 = vmatprep.subr.bf16.mxu0 0
    %3843 = vmatpush2.bf16.msra.mxu0 %v2874
    %3844 = vmatprep.subr.bf16.mxu0 0
    %3845 = vmatpush2.bf16.msra.mxu0 %v2873
    %3846 = vmatprep.subr.bf16.mxu0 0
    %3847 = vmatpush2.bf16.msra.mxu0 %v2872
    %3848 = vmatprep.mubr.bf16.mxu0 %v924
    %3849 = vmatmul.mubr.bf16.gmra.mxu0 %v922
    %v3850 = vpop.f32.mrf.mxu0
    %v3851 = vadd.f32 %v3811, %v3850
    %v3852 = vpop.f32.mrf.mxu0
    %v3853 = vpop.f32.mrf.mxu0
    %v3854 = vpop.f32.mrf.mxu0
    %3855 = vdwg.mxu0
    %3856 = vmatprep.subr.bf16.mxu0 0
    %3857 = vmatpush1.bf16.msra.mxu0 %v2887
    %3858 = vmatprep.subr.bf16.mxu0 0
    %3859 = vmatpush1.bf16.msra.mxu0 %v2886
    %3860 = vmatprep.subr.bf16.mxu0 0
    %3861 = vmatpush1.bf16.msra.mxu0 %v2885
    %3862 = vmatprep.subr.bf16.mxu0 0
    %3863 = vmatpush1.bf16.msra.mxu0 %v2884
    %3864 = vmatprep.subr.bf16.mxu0 0
    %3865 = vmatpush1.bf16.msra.mxu0 %v2883
    %3866 = vmatprep.subr.bf16.mxu0 0
    %3867 = vmatpush1.bf16.msra.mxu0 %v2882
    %3868 = vmatprep.subr.bf16.mxu0 0
    %3869 = vmatpush1.bf16.msra.mxu0 %v2881
    %3870 = vmatprep.subr.bf16.mxu0 0
    %3871 = vmatpush1.bf16.msra.mxu0 %v2880
    %3872 = vmatprep.subr.bf16.mxu0 0
    %3873 = vmatpush2.bf16.msra.mxu0 %v2895
    %3874 = vmatprep.subr.bf16.mxu0 0
    %3875 = vmatpush2.bf16.msra.mxu0 %v2894
    %3876 = vmatprep.subr.bf16.mxu0 0
    %3877 = vmatpush2.bf16.msra.mxu0 %v2893
    %3878 = vmatprep.subr.bf16.mxu0 0
    %3879 = vmatpush2.bf16.msra.mxu0 %v2892
    %3880 = vmatprep.subr.bf16.mxu0 0
    %3881 = vmatpush2.bf16.msra.mxu0 %v2891
    %3882 = vmatprep.subr.bf16.mxu0 0
    %3883 = vmatpush2.bf16.msra.mxu0 %v2890
    %3884 = vmatprep.subr.bf16.mxu0 0
    %3885 = vmatpush2.bf16.msra.mxu0 %v2889
    %3886 = vmatprep.subr.bf16.mxu0 0
    %3887 = vmatpush2.bf16.msra.mxu0 %v2888
    %3888 = vmatprep.mubr.bf16.mxu0 %v962
    %3889 = vmatmul.mubr.bf16.gmra.mxu0 %v948
    %v3890 = vpop.f32.mrf.mxu0
    %v3891 = vadd.f32 %v3851, %v3890
    %v3892 = vpop.f32.mrf.mxu0
    %v3893 = vpop.f32.mrf.mxu0
    %v3894 = vpop.f32.mrf.mxu0
    %3895 = vdwg.mxu0
    %3896 = vmatprep.subr.bf16.mxu0 0
    %3897 = vmatpush1.bf16.msra.mxu0 %v2903
    %3898 = vmatprep.subr.bf16.mxu0 0
    %3899 = vmatpush1.bf16.msra.mxu0 %v2902
    %3900 = vmatprep.subr.bf16.mxu0 0
    %3901 = vmatpush1.bf16.msra.mxu0 %v2901
    %3902 = vmatprep.subr.bf16.mxu0 0
    %3903 = vmatpush1.bf16.msra.mxu0 %v2900
    %3904 = vmatprep.subr.bf16.mxu0 0
    %3905 = vmatpush1.bf16.msra.mxu0 %v2899
    %3906 = vmatprep.subr.bf16.mxu0 0
    %3907 = vmatpush1.bf16.msra.mxu0 %v2898
    %3908 = vmatprep.subr.bf16.mxu0 0
    %3909 = vmatpush1.bf16.msra.mxu0 %v2897
    %3910 = vmatprep.subr.bf16.mxu0 0
    %3911 = vmatpush1.bf16.msra.mxu0 %v2896
    %3912 = vmatprep.subr.bf16.mxu0 0
    %3913 = vmatpush2.bf16.msra.mxu0 %v2911
    %3914 = vmatprep.subr.bf16.mxu0 0
    %3915 = vmatpush2.bf16.msra.mxu0 %v2910
    %3916 = vmatprep.subr.bf16.mxu0 0
    %3917 = vmatpush2.bf16.msra.mxu0 %v2909
    %3918 = vmatprep.subr.bf16.mxu0 0
    %3919 = vmatpush2.bf16.msra.mxu0 %v2908
    %3920 = vmatprep.subr.bf16.mxu0 0
    %3921 = vmatpush2.bf16.msra.mxu0 %v2907
    %3922 = vmatprep.subr.bf16.mxu0 0
    %3923 = vmatpush2.bf16.msra.mxu0 %v2906
    %3924 = vmatprep.subr.bf16.mxu0 0
    %3925 = vmatpush2.bf16.msra.mxu0 %v2905
    %3926 = vmatprep.subr.bf16.mxu0 0
    %3927 = vmatpush2.bf16.msra.mxu0 %v2904
    %3928 = vmatprep.mubr.bf16.mxu0 %v972
    %3929 = vmatmul.mubr.bf16.gmra.mxu0 %v970
    %v3930 = vpop.f32.mrf.mxu0
    %v3931 = vadd.f32 %v3891, %v3930
    %v3932 = vpop.f32.mrf.mxu0
    %v3933 = vpop.f32.mrf.mxu0
    %v3934 = vpop.f32.mrf.mxu0
    %3935 = vdwg.mxu0
    %3936 = vmatprep.subr.bf16.mxu0 0
    %3937 = vmatpush1.bf16.msra.mxu0 %v2919
    %3938 = vmatprep.subr.bf16.mxu0 0
    %3939 = vmatpush1.bf16.msra.mxu0 %v2918
    %3940 = vmatprep.subr.bf16.mxu0 0
    %3941 = vmatpush1.bf16.msra.mxu0 %v2917
    %3942 = vmatprep.subr.bf16.mxu0 0
    %3943 = vmatpush1.bf16.msra.mxu0 %v2916
    %3944 = vmatprep.subr.bf16.mxu0 0
    %3945 = vmatpush1.bf16.msra.mxu0 %v2915
    %3946 = vmatprep.subr.bf16.mxu0 0
    %3947 = vmatpush1.bf16.msra.mxu0 %v2914
    %3948 = vmatprep.subr.bf16.mxu0 0
    %3949 = vmatpush1.bf16.msra.mxu0 %v2913
    %3950 = vmatprep.subr.bf16.mxu0 0
    %3951 = vmatpush1.bf16.msra.mxu0 %v2912
    %3952 = vmatprep.subr.bf16.mxu0 0
    %3953 = vmatpush2.bf16.msra.mxu0 %v2927
    %3954 = vmatprep.subr.bf16.mxu0 0
    %3955 = vmatpush2.bf16.msra.mxu0 %v2926
    %3956 = vmatprep.subr.bf16.mxu0 0
    %3957 = vmatpush2.bf16.msra.mxu0 %v2925
    %3958 = vmatprep.subr.bf16.mxu0 0
    %3959 = vmatpush2.bf16.msra.mxu0 %v2924
    %3960 = vmatprep.subr.bf16.mxu0 0
    %3961 = vmatpush2.bf16.msra.mxu0 %v2923
    %3962 = vmatprep.subr.bf16.mxu0 0
    %3963 = vmatpush2.bf16.msra.mxu0 %v2922
    %3964 = vmatprep.subr.bf16.mxu0 0
    %3965 = vmatpush2.bf16.msra.mxu0 %v2921
    %3966 = vmatprep.subr.bf16.mxu0 0
    %3967 = vmatpush2.bf16.msra.mxu0 %v2920
    %3968 = vmatprep.mubr.bf16.mxu0 %v969
    %3969 = vmatmul.mubr.bf16.gmra.mxu0 %v955
    %v3970 = vpop.f32.mrf.mxu0
    %v3971 = vadd.f32 %v3931, %v3970
    %v3972 = vpop.f32.mrf.mxu0
    %v3973 = vpop.f32.mrf.mxu0
    %v3974 = vpop.f32.mrf.mxu0
    %3975 = vdwg.mxu0
    %3976 = vmatprep.subr.bf16.mxu0 0
    %3977 = vmatpush1.bf16.msra.mxu0 %v2935
    %3978 = vmatprep.subr.bf16.mxu0 0
    %3979 = vmatpush1.bf16.msra.mxu0 %v2934
    %3980 = vmatprep.subr.bf16.mxu0 0
    %3981 = vmatpush1.bf16.msra.mxu0 %v2933
    %3982 = vmatprep.subr.bf16.mxu0 0
    %3983 = vmatpush1.bf16.msra.mxu0 %v2932
    %3984 = vmatprep.subr.bf16.mxu0 0
    %3985 = vmatpush1.bf16.msra.mxu0 %v2931
    %3986 = vmatprep.subr.bf16.mxu0 0
    %3987 = vmatpush1.bf16.msra.mxu0 %v2930
    %3988 = vmatprep.subr.bf16.mxu0 0
    %3989 = vmatpush1.bf16.msra.mxu0 %v2929
    %3990 = vmatprep.subr.bf16.mxu0 0
    %3991 = vmatpush1.bf16.msra.mxu0 %v2928
    %3992 = vmatprep.subr.bf16.mxu0 0
    %3993 = vmatpush2.bf16.msra.mxu0 %v2943
    %3994 = vmatprep.subr.bf16.mxu0 0
    %3995 = vmatpush2.bf16.msra.mxu0 %v2942
    %3996 = vmatprep.subr.bf16.mxu0 0
    %3997 = vmatpush2.bf16.msra.mxu0 %v2941
    %3998 = vmatprep.subr.bf16.mxu0 0
    %3999 = vmatpush2.bf16.msra.mxu0 %v2940
    %4000 = vmatprep.subr.bf16.mxu0 0
    %4001 = vmatpush2.bf16.msra.mxu0 %v2939
    %4002 = vmatprep.subr.bf16.mxu0 0
    %4003 = vmatpush2.bf16.msra.mxu0 %v2938
    %4004 = vmatprep.subr.bf16.mxu0 0
    %4005 = vmatpush2.bf16.msra.mxu0 %v2937
    %4006 = vmatprep.subr.bf16.mxu0 0
    %4007 = vmatpush2.bf16.msra.mxu0 %v2936
    %4008 = vmatprep.mubr.bf16.mxu0 %v973
    %4009 = vmatmul.mubr.bf16.gmra.mxu0 %v971
    %v4010 = vpop.f32.mrf.mxu0
    %v4011 = vadd.f32 %v3971, %v4010
    %v4012 = vpop.f32.mrf.mxu0
    %v4013 = vpop.f32.mrf.mxu0
    %v4014 = vpop.f32.mrf.mxu0
    %4015 = vdwg.mxu0
    %4016 = vmatprep.subr.bf16.mxu0 0
    %4017 = vmatpush1.bf16.msra.mxu0 %v2951
    %4018 = vmatprep.subr.bf16.mxu0 0
    %4019 = vmatpush1.bf16.msra.mxu0 %v2950
    %4020 = vmatprep.subr.bf16.mxu0 0
    %4021 = vmatpush1.bf16.msra.mxu0 %v2949
    %4022 = vmatprep.subr.bf16.mxu0 0
    %4023 = vmatpush1.bf16.msra.mxu0 %v2948
    %4024 = vmatprep.subr.bf16.mxu0 0
    %4025 = vmatpush1.bf16.msra.mxu0 %v2947
    %4026 = vmatprep.subr.bf16.mxu0 0
    %4027 = vmatpush1.bf16.msra.mxu0 %v2946
    %4028 = vmatprep.subr.bf16.mxu0 0
    %4029 = vmatpush1.bf16.msra.mxu0 %v2945
    %4030 = vmatprep.subr.bf16.mxu0 0
    %4031 = vmatpush1.bf16.msra.mxu0 %v2944
    %4032 = vmatprep.subr.bf16.mxu0 0
    %4033 = vmatpush2.bf16.msra.mxu0 %v2959
    %4034 = vmatprep.subr.bf16.mxu0 0
    %4035 = vmatpush2.bf16.msra.mxu0 %v2958
    %4036 = vmatprep.subr.bf16.mxu0 0
    %4037 = vmatpush2.bf16.msra.mxu0 %v2957
    %4038 = vmatprep.subr.bf16.mxu0 0
    %4039 = vmatpush2.bf16.msra.mxu0 %v2956
    %4040 = vmatprep.subr.bf16.mxu0 0
    %4041 = vmatpush2.bf16.msra.mxu0 %v2955
    %4042 = vmatprep.subr.bf16.mxu0 0
    %4043 = vmatpush2.bf16.msra.mxu0 %v2954
    %4044 = vmatprep.subr.bf16.mxu0 0
    %4045 = vmatpush2.bf16.msra.mxu0 %v2953
    %4046 = vmatprep.subr.bf16.mxu0 0
    %4047 = vmatpush2.bf16.msra.mxu0 %v2952
    %4048 = vmatprep.mubr.bf16.mxu0 %v1011
    %4049 = vmatmul.mubr.bf16.gmra.mxu0 %v997
    %v4050 = vpop.f32.mrf.mxu0
    %v4051 = vadd.f32 %v4011, %v4050
    %v4052 = vpop.f32.mrf.mxu0
    %v4053 = vpop.f32.mrf.mxu0
    %v4054 = vpop.f32.mrf.mxu0
    %4055 = vdwg.mxu0
    %4056 = vmatprep.subr.bf16.mxu0 0
    %4057 = vmatpush1.bf16.msra.mxu0 %v2967
    %4058 = vmatprep.subr.bf16.mxu0 0
    %4059 = vmatpush1.bf16.msra.mxu0 %v2966
    %4060 = vmatprep.subr.bf16.mxu0 0
    %4061 = vmatpush1.bf16.msra.mxu0 %v2965
    %4062 = vmatprep.subr.bf16.mxu0 0
    %4063 = vmatpush1.bf16.msra.mxu0 %v2964
    %4064 = vmatprep.subr.bf16.mxu0 0
    %4065 = vmatpush1.bf16.msra.mxu0 %v2963
    %4066 = vmatprep.subr.bf16.mxu0 0
    %4067 = vmatpush1.bf16.msra.mxu0 %v2962
    %4068 = vmatprep.subr.bf16.mxu0 0
    %4069 = vmatpush1.bf16.msra.mxu0 %v2961
    %4070 = vmatprep.subr.bf16.mxu0 0
    %4071 = vmatpush1.bf16.msra.mxu0 %v2960
    %4072 = vmatprep.subr.bf16.mxu0 0
    %4073 = vmatpush2.bf16.msra.mxu0 %v2975
    %4074 = vmatprep.subr.bf16.mxu0 0
    %4075 = vmatpush2.bf16.msra.mxu0 %v2974
    %4076 = vmatprep.subr.bf16.mxu0 0
    %4077 = vmatpush2.bf16.msra.mxu0 %v2973
    %4078 = vmatprep.subr.bf16.mxu0 0
    %4079 = vmatpush2.bf16.msra.mxu0 %v2972
    %4080 = vmatprep.subr.bf16.mxu0 0
    %4081 = vmatpush2.bf16.msra.mxu0 %v2971
    %4082 = vmatprep.subr.bf16.mxu0 0
    %4083 = vmatpush2.bf16.msra.mxu0 %v2970
    %4084 = vmatprep.subr.bf16.mxu0 0
    %4085 = vmatpush2.bf16.msra.mxu0 %v2969
    %4086 = vmatprep.subr.bf16.mxu0 0
    %4087 = vmatpush2.bf16.msra.mxu0 %v2968
    %4088 = vmatprep.mubr.bf16.mxu0 %v1021
    %4089 = vmatmul.mubr.bf16.gmra.mxu0 %v1019
    %v4090 = vpop.f32.mrf.mxu0
    %v4091 = vadd.f32 %v4051, %v4090
    %v4092 = vpop.f32.mrf.mxu0
    %v4093 = vpop.f32.mrf.mxu0
    %v4094 = vpop.f32.mrf.mxu0
    %4095 = vdwg.mxu0
    %4096 = vmatprep.subr.bf16.mxu0 0
    %4097 = vmatpush1.bf16.msra.mxu0 %v2983
    %4098 = vmatprep.subr.bf16.mxu0 0
    %4099 = vmatpush1.bf16.msra.mxu0 %v2982
    %4100 = vmatprep.subr.bf16.mxu0 0
    %4101 = vmatpush1.bf16.msra.mxu0 %v2981
    %4102 = vmatprep.subr.bf16.mxu0 0
    %4103 = vmatpush1.bf16.msra.mxu0 %v2980
    %4104 = vmatprep.subr.bf16.mxu0 0
    %4105 = vmatpush1.bf16.msra.mxu0 %v2979
    %4106 = vmatprep.subr.bf16.mxu0 0
    %4107 = vmatpush1.bf16.msra.mxu0 %v2978
    %4108 = vmatprep.subr.bf16.mxu0 0
    %4109 = vmatpush1.bf16.msra.mxu0 %v2977
    %4110 = vmatprep.subr.bf16.mxu0 0
    %4111 = vmatpush1.bf16.msra.mxu0 %v2976
    %4112 = vmatprep.subr.bf16.mxu0 0
    %4113 = vmatpush2.bf16.msra.mxu0 %v2991
    %4114 = vmatprep.subr.bf16.mxu0 0
    %4115 = vmatpush2.bf16.msra.mxu0 %v2990
    %4116 = vmatprep.subr.bf16.mxu0 0
    %4117 = vmatpush2.bf16.msra.mxu0 %v2989
    %4118 = vmatprep.subr.bf16.mxu0 0
    %4119 = vmatpush2.bf16.msra.mxu0 %v2988
    %4120 = vmatprep.subr.bf16.mxu0 0
    %4121 = vmatpush2.bf16.msra.mxu0 %v2987
    %4122 = vmatprep.subr.bf16.mxu0 0
    %4123 = vmatpush2.bf16.msra.mxu0 %v2986
    %4124 = vmatprep.subr.bf16.mxu0 0
    %4125 = vmatpush2.bf16.msra.mxu0 %v2985
    %4126 = vmatprep.subr.bf16.mxu0 0
    %4127 = vmatpush2.bf16.msra.mxu0 %v2984
    %4128 = vmatprep.mubr.bf16.mxu0 %v1018
    %4129 = vmatmul.mubr.bf16.gmra.mxu0 %v1004
    %v4130 = vpop.f32.mrf.mxu0
    %v4131 = vadd.f32 %v4091, %v4130
    %v4132 = vpop.f32.mrf.mxu0
    %v4133 = vpop.f32.mrf.mxu0
    %v4134 = vpop.f32.mrf.mxu0
    %4135 = vdwg.mxu0
    %4136 = vmatprep.subr.bf16.mxu0 0
    %4137 = vmatpush1.bf16.msra.mxu0 %v2999
    %4138 = vmatprep.subr.bf16.mxu0 0
    %4139 = vmatpush1.bf16.msra.mxu0 %v2998
    %4140 = vmatprep.subr.bf16.mxu0 0
    %4141 = vmatpush1.bf16.msra.mxu0 %v2997
    %4142 = vmatprep.subr.bf16.mxu0 0
    %4143 = vmatpush1.bf16.msra.mxu0 %v2996
    %4144 = vmatprep.subr.bf16.mxu0 0
    %4145 = vmatpush1.bf16.msra.mxu0 %v2995
    %4146 = vmatprep.subr.bf16.mxu0 0
    %4147 = vmatpush1.bf16.msra.mxu0 %v2994
    %4148 = vmatprep.subr.bf16.mxu0 0
    %4149 = vmatpush1.bf16.msra.mxu0 %v2993
    %4150 = vmatprep.subr.bf16.mxu0 0
    %4151 = vmatpush1.bf16.msra.mxu0 %v2992
    %4152 = vmatprep.subr.bf16.mxu0 0
    %4153 = vmatpush2.bf16.msra.mxu0 %v3007
    %4154 = vmatprep.subr.bf16.mxu0 0
    %4155 = vmatpush2.bf16.msra.mxu0 %v3006
    %4156 = vmatprep.subr.bf16.mxu0 0
    %4157 = vmatpush2.bf16.msra.mxu0 %v3005
    %4158 = vmatprep.subr.bf16.mxu0 0
    %4159 = vmatpush2.bf16.msra.mxu0 %v3004
    %4160 = vmatprep.subr.bf16.mxu0 0
    %4161 = vmatpush2.bf16.msra.mxu0 %v3003
    %4162 = vmatprep.subr.bf16.mxu0 0
    %4163 = vmatpush2.bf16.msra.mxu0 %v3002
    %4164 = vmatprep.subr.bf16.mxu0 0
    %4165 = vmatpush2.bf16.msra.mxu0 %v3001
    %4166 = vmatprep.subr.bf16.mxu0 0
    %4167 = vmatpush2.bf16.msra.mxu0 %v3000
    %4168 = vmatprep.mubr.bf16.mxu0 %v1022
    %4169 = vmatmul.mubr.bf16.gmra.mxu0 %v1020
    %v4170 = vpop.f32.mrf.mxu0
    %v4171 = vadd.f32 %v4131, %v4170
    %v4172 = vpop.f32.mrf.mxu0
    %v4173 = vpop.f32.mrf.mxu0
    %v4174 = vpop.f32.mrf.mxu0
    %4175 = vdwg.mxu0
    %4176 = vmatprep.subr.bf16.mxu0 0
    %4177 = vmatpush1.bf16.msra.mxu0 %v3015
    %4178 = vmatprep.subr.bf16.mxu0 0
    %4179 = vmatpush1.bf16.msra.mxu0 %v3014
    %4180 = vmatprep.subr.bf16.mxu0 0
    %4181 = vmatpush1.bf16.msra.mxu0 %v3013
    %4182 = vmatprep.subr.bf16.mxu0 0
    %4183 = vmatpush1.bf16.msra.mxu0 %v3012
    %4184 = vmatprep.subr.bf16.mxu0 0
    %4185 = vmatpush1.bf16.msra.mxu0 %v3011
    %4186 = vmatprep.subr.bf16.mxu0 0
    %4187 = vmatpush1.bf16.msra.mxu0 %v3010
    %4188 = vmatprep.subr.bf16.mxu0 0
    %4189 = vmatpush1.bf16.msra.mxu0 %v3009
    %4190 = vmatprep.subr.bf16.mxu0 0
    %4191 = vmatpush1.bf16.msra.mxu0 %v3008
    %4192 = vmatprep.subr.bf16.mxu0 0
    %4193 = vmatpush2.bf16.msra.mxu0 %v3023
    %4194 = vmatprep.subr.bf16.mxu0 0
    %4195 = vmatpush2.bf16.msra.mxu0 %v3022
    %4196 = vmatprep.subr.bf16.mxu0 0
    %4197 = vmatpush2.bf16.msra.mxu0 %v3021
    %4198 = vmatprep.subr.bf16.mxu0 0
    %4199 = vmatpush2.bf16.msra.mxu0 %v3020
    %4200 = vmatprep.subr.bf16.mxu0 0
    %4201 = vmatpush2.bf16.msra.mxu0 %v3019
    %4202 = vmatprep.subr.bf16.mxu0 0
    %4203 = vmatpush2.bf16.msra.mxu0 %v3018
    %4204 = vmatprep.subr.bf16.mxu0 0
    %4205 = vmatpush2.bf16.msra.mxu0 %v3017
    %4206 = vmatprep.subr.bf16.mxu0 0
    %4207 = vmatpush2.bf16.msra.mxu0 %v3016
    %4208 = vmatprep.mubr.bf16.mxu0 %v1060
    %4209 = vmatmul.mubr.bf16.gmra.mxu0 %v1046
    %v4210 = vpop.f32.mrf.mxu0
    %v4211 = vadd.f32 %v4171, %v4210
    %v4212 = vpop.f32.mrf.mxu0
    %v4213 = vpop.f32.mrf.mxu0
    %v4214 = vpop.f32.mrf.mxu0
    %4215 = vdwg.mxu0
    %4216 = vmatprep.subr.bf16.mxu0 0
    %4217 = vmatpush1.bf16.msra.mxu0 %v3031
    %4218 = vmatprep.subr.bf16.mxu0 0
    %4219 = vmatpush1.bf16.msra.mxu0 %v3030
    %4220 = vmatprep.subr.bf16.mxu0 0
    %4221 = vmatpush1.bf16.msra.mxu0 %v3029
    %4222 = vmatprep.subr.bf16.mxu0 0
    %4223 = vmatpush1.bf16.msra.mxu0 %v3028
    %4224 = vmatprep.subr.bf16.mxu0 0
    %4225 = vmatpush1.bf16.msra.mxu0 %v3027
    %4226 = vmatprep.subr.bf16.mxu0 0
    %4227 = vmatpush1.bf16.msra.mxu0 %v3026
    %4228 = vmatprep.subr.bf16.mxu0 0
    %4229 = vmatpush1.bf16.msra.mxu0 %v3025
    %4230 = vmatprep.subr.bf16.mxu0 0
    %4231 = vmatpush1.bf16.msra.mxu0 %v3024
    %4232 = vmatprep.subr.bf16.mxu0 0
    %4233 = vmatpush2.bf16.msra.mxu0 %v3039
    %4234 = vmatprep.subr.bf16.mxu0 0
    %4235 = vmatpush2.bf16.msra.mxu0 %v3038
    %4236 = vmatprep.subr.bf16.mxu0 0
    %4237 = vmatpush2.bf16.msra.mxu0 %v3037
    %4238 = vmatprep.subr.bf16.mxu0 0
    %4239 = vmatpush2.bf16.msra.mxu0 %v3036
    %4240 = vmatprep.subr.bf16.mxu0 0
    %4241 = vmatpush2.bf16.msra.mxu0 %v3035
    %4242 = vmatprep.subr.bf16.mxu0 0
    %4243 = vmatpush2.bf16.msra.mxu0 %v3034
    %4244 = vmatprep.subr.bf16.mxu0 0
    %4245 = vmatpush2.bf16.msra.mxu0 %v3033
    %4246 = vmatprep.subr.bf16.mxu0 0
    %4247 = vmatpush2.bf16.msra.mxu0 %v3032
    %4248 = vmatprep.mubr.bf16.mxu0 %v1070
    %4249 = vmatmul.mubr.bf16.gmra.mxu0 %v1068
    %v4250 = vpop.f32.mrf.mxu0
    %v4251 = vadd.f32 %v4211, %v4250
    %v4252 = vpop.f32.mrf.mxu0
    %v4253 = vpop.f32.mrf.mxu0
    %v4254 = vpop.f32.mrf.mxu0
    %4255 = vdwg.mxu0
    %4256 = vmatprep.subr.bf16.mxu0 0
    %4257 = vmatpush1.bf16.msra.mxu0 %v3047
    %4258 = vmatprep.subr.bf16.mxu0 0
    %4259 = vmatpush1.bf16.msra.mxu0 %v3046
    %4260 = vmatprep.subr.bf16.mxu0 0
    %4261 = vmatpush1.bf16.msra.mxu0 %v3045
    %4262 = vmatprep.subr.bf16.mxu0 0
    %4263 = vmatpush1.bf16.msra.mxu0 %v3044
    %4264 = vmatprep.subr.bf16.mxu0 0
    %4265 = vmatpush1.bf16.msra.mxu0 %v3043
    %4266 = vmatprep.subr.bf16.mxu0 0
    %4267 = vmatpush1.bf16.msra.mxu0 %v3042
    %4268 = vmatprep.subr.bf16.mxu0 0
    %4269 = vmatpush1.bf16.msra.mxu0 %v3041
    %4270 = vmatprep.subr.bf16.mxu0 0
    %4271 = vmatpush1.bf16.msra.mxu0 %v3040
    %4272 = vmatprep.subr.bf16.mxu0 0
    %4273 = vmatpush2.bf16.msra.mxu0 %v3055
    %4274 = vmatprep.subr.bf16.mxu0 0
    %4275 = vmatpush2.bf16.msra.mxu0 %v3054
    %4276 = vmatprep.subr.bf16.mxu0 0
    %4277 = vmatpush2.bf16.msra.mxu0 %v3053
    %4278 = vmatprep.subr.bf16.mxu0 0
    %4279 = vmatpush2.bf16.msra.mxu0 %v3052
    %4280 = vmatprep.subr.bf16.mxu0 0
    %4281 = vmatpush2.bf16.msra.mxu0 %v3051
    %4282 = vmatprep.subr.bf16.mxu0 0
    %4283 = vmatpush2.bf16.msra.mxu0 %v3050
    %4284 = vmatprep.subr.bf16.mxu0 0
    %4285 = vmatpush2.bf16.msra.mxu0 %v3049
    %4286 = vmatprep.subr.bf16.mxu0 0
    %4287 = vmatpush2.bf16.msra.mxu0 %v3048
    %4288 = vmatprep.mubr.bf16.mxu0 %v1067
    %4289 = vmatmul.mubr.bf16.gmra.mxu0 %v1053
    %v4290 = vpop.f32.mrf.mxu0
    %v4291 = vadd.f32 %v4251, %v4290
    %v4292 = vpop.f32.mrf.mxu0
    %v4293 = vpop.f32.mrf.mxu0
    %v4294 = vpop.f32.mrf.mxu0
    %4295 = vdwg.mxu0
    %4296 = vmatprep.subr.bf16.mxu0 0
    %4297 = vmatpush1.bf16.msra.mxu0 %v3063
    %4298 = vmatprep.subr.bf16.mxu0 0
    %4299 = vmatpush1.bf16.msra.mxu0 %v3062
    %4300 = vmatprep.subr.bf16.mxu0 0
    %4301 = vmatpush1.bf16.msra.mxu0 %v3061
    %4302 = vmatprep.subr.bf16.mxu0 0
    %4303 = vmatpush1.bf16.msra.mxu0 %v3060
    %4304 = vmatprep.subr.bf16.mxu0 0
    %4305 = vmatpush1.bf16.msra.mxu0 %v3059
    %4306 = vmatprep.subr.bf16.mxu0 0
    %4307 = vmatpush1.bf16.msra.mxu0 %v3058
    %4308 = vmatprep.subr.bf16.mxu0 0
    %4309 = vmatpush1.bf16.msra.mxu0 %v3057
    %4310 = vmatprep.subr.bf16.mxu0 0
    %4311 = vmatpush1.bf16.msra.mxu0 %v3056
    %4312 = vmatprep.subr.bf16.mxu0 0
    %4313 = vmatpush2.bf16.msra.mxu0 %v3071
    %4314 = vmatprep.subr.bf16.mxu0 0
    %4315 = vmatpush2.bf16.msra.mxu0 %v3070
    %4316 = vmatprep.subr.bf16.mxu0 0
    %4317 = vmatpush2.bf16.msra.mxu0 %v3069
    %4318 = vmatprep.subr.bf16.mxu0 0
    %4319 = vmatpush2.bf16.msra.mxu0 %v3068
    %4320 = vmatprep.subr.bf16.mxu0 0
    %4321 = vmatpush2.bf16.msra.mxu0 %v3067
    %4322 = vmatprep.subr.bf16.mxu0 0
    %4323 = vmatpush2.bf16.msra.mxu0 %v3066
    %4324 = vmatprep.subr.bf16.mxu0 0
    %4325 = vmatpush2.bf16.msra.mxu0 %v3065
    %4326 = vmatprep.subr.bf16.mxu0 0
    %4327 = vmatpush2.bf16.msra.mxu0 %v3064
    %4328 = vmatprep.mubr.bf16.mxu0 %v1071
    %4329 = vmatmul.mubr.bf16.gmra.mxu0 %v1069
    %v4330 = vpop.f32.mrf.mxu0
    %v4331 = vadd.f32 %v4291, %v4330
    %v4332 = vpop.f32.mrf.mxu0
    %v4333 = vpop.f32.mrf.mxu0
    %v4334 = vpop.f32.mrf.mxu0
    %4335 = vdwg.mxu0
    %4336 = vmatprep.subr.bf16.mxu0 0
    %4337 = vmatpush1.bf16.msra.mxu0 %v3079
    %4338 = vmatprep.subr.bf16.mxu0 0
    %4339 = vmatpush1.bf16.msra.mxu0 %v3078
    %4340 = vmatprep.subr.bf16.mxu0 0
    %4341 = vmatpush1.bf16.msra.mxu0 %v3077
    %4342 = vmatprep.subr.bf16.mxu0 0
    %4343 = vmatpush1.bf16.msra.mxu0 %v3076
    %4344 = vmatprep.subr.bf16.mxu0 0
    %4345 = vmatpush1.bf16.msra.mxu0 %v3075
    %4346 = vmatprep.subr.bf16.mxu0 0
    %4347 = vmatpush1.bf16.msra.mxu0 %v3074
    %4348 = vmatprep.subr.bf16.mxu0 0
    %4349 = vmatpush1.bf16.msra.mxu0 %v3073
    %4350 = vmatprep.subr.bf16.mxu0 0
    %4351 = vmatpush1.bf16.msra.mxu0 %v3072
    %4352 = vmatprep.subr.bf16.mxu0 0
    %4353 = vmatpush2.bf16.msra.mxu0 %v3087
    %4354 = vmatprep.subr.bf16.mxu0 0
    %4355 = vmatpush2.bf16.msra.mxu0 %v3086
    %4356 = vmatprep.subr.bf16.mxu0 0
    %4357 = vmatpush2.bf16.msra.mxu0 %v3085
    %4358 = vmatprep.subr.bf16.mxu0 0
    %4359 = vmatpush2.bf16.msra.mxu0 %v3084
    %4360 = vmatprep.subr.bf16.mxu0 0
    %4361 = vmatpush2.bf16.msra.mxu0 %v3083
    %4362 = vmatprep.subr.bf16.mxu0 0
    %4363 = vmatpush2.bf16.msra.mxu0 %v3082
    %4364 = vmatprep.subr.bf16.mxu0 0
    %4365 = vmatpush2.bf16.msra.mxu0 %v3081
    %4366 = vmatprep.subr.bf16.mxu0 0
    %4367 = vmatpush2.bf16.msra.mxu0 %v3080
    %4368 = vmatprep.mubr.bf16.mxu0 %v1109
    %4369 = vmatmul.mubr.bf16.gmra.mxu0 %v1095
    %v4370 = vpop.f32.mrf.mxu0
    %v4371 = vadd.f32 %v4331, %v4370
    %v4372 = vpop.f32.mrf.mxu0
    %v4373 = vpop.f32.mrf.mxu0
    %v4374 = vpop.f32.mrf.mxu0
    %4375 = vdwg.mxu0
    %4376 = vmatprep.subr.bf16.mxu0 0
    %4377 = vmatpush1.bf16.msra.mxu0 %v3095
    %4378 = vmatprep.subr.bf16.mxu0 0
    %4379 = vmatpush1.bf16.msra.mxu0 %v3094
    %4380 = vmatprep.subr.bf16.mxu0 0
    %4381 = vmatpush1.bf16.msra.mxu0 %v3093
    %4382 = vmatprep.subr.bf16.mxu0 0
    %4383 = vmatpush1.bf16.msra.mxu0 %v3092
    %4384 = vmatprep.subr.bf16.mxu0 0
    %4385 = vmatpush1.bf16.msra.mxu0 %v3091
    %4386 = vmatprep.subr.bf16.mxu0 0
    %4387 = vmatpush1.bf16.msra.mxu0 %v3090
    %4388 = vmatprep.subr.bf16.mxu0 0
    %4389 = vmatpush1.bf16.msra.mxu0 %v3089
    %4390 = vmatprep.subr.bf16.mxu0 0
    %4391 = vmatpush1.bf16.msra.mxu0 %v3088
    %4392 = vmatprep.subr.bf16.mxu0 0
    %4393 = vmatpush2.bf16.msra.mxu0 %v3103
    %4394 = vmatprep.subr.bf16.mxu0 0
    %4395 = vmatpush2.bf16.msra.mxu0 %v3102
    %4396 = vmatprep.subr.bf16.mxu0 0
    %4397 = vmatpush2.bf16.msra.mxu0 %v3101
    %4398 = vmatprep.subr.bf16.mxu0 0
    %4399 = vmatpush2.bf16.msra.mxu0 %v3100
    %4400 = vmatprep.subr.bf16.mxu0 0
    %4401 = vmatpush2.bf16.msra.mxu0 %v3099
    %4402 = vmatprep.subr.bf16.mxu0 0
    %4403 = vmatpush2.bf16.msra.mxu0 %v3098
    %4404 = vmatprep.subr.bf16.mxu0 0
    %4405 = vmatpush2.bf16.msra.mxu0 %v3097
    %4406 = vmatprep.subr.bf16.mxu0 0
    %4407 = vmatpush2.bf16.msra.mxu0 %v3096
    %4408 = vmatprep.mubr.bf16.mxu0 %v1119
    %4409 = vmatmul.mubr.bf16.gmra.mxu0 %v1117
    %v4410 = vpop.f32.mrf.mxu0
    %v4411 = vadd.f32 %v4371, %v4410
    %v4412 = vpop.f32.mrf.mxu0
    %v4413 = vpop.f32.mrf.mxu0
    %v4414 = vpop.f32.mrf.mxu0
    %4415 = vdwg.mxu0
    %4416 = vmatprep.subr.bf16.mxu0 0
    %4417 = vmatpush1.bf16.msra.mxu0 %v3111
    %4418 = vmatprep.subr.bf16.mxu0 0
    %4419 = vmatpush1.bf16.msra.mxu0 %v3110
    %4420 = vmatprep.subr.bf16.mxu0 0
    %4421 = vmatpush1.bf16.msra.mxu0 %v3109
    %4422 = vmatprep.subr.bf16.mxu0 0
    %4423 = vmatpush1.bf16.msra.mxu0 %v3108
    %4424 = vmatprep.subr.bf16.mxu0 0
    %4425 = vmatpush1.bf16.msra.mxu0 %v3107
    %4426 = vmatprep.subr.bf16.mxu0 0
    %4427 = vmatpush1.bf16.msra.mxu0 %v3106
    %4428 = vmatprep.subr.bf16.mxu0 0
    %4429 = vmatpush1.bf16.msra.mxu0 %v3105
    %4430 = vmatprep.subr.bf16.mxu0 0
    %4431 = vmatpush1.bf16.msra.mxu0 %v3104
    %4432 = vmatprep.subr.bf16.mxu0 0
    %4433 = vmatpush2.bf16.msra.mxu0 %v3119
    %4434 = vmatprep.subr.bf16.mxu0 0
    %4435 = vmatpush2.bf16.msra.mxu0 %v3118
    %4436 = vmatprep.subr.bf16.mxu0 0
    %4437 = vmatpush2.bf16.msra.mxu0 %v3117
    %4438 = vmatprep.subr.bf16.mxu0 0
    %4439 = vmatpush2.bf16.msra.mxu0 %v3116
    %4440 = vmatprep.subr.bf16.mxu0 0
    %4441 = vmatpush2.bf16.msra.mxu0 %v3115
    %4442 = vmatprep.subr.bf16.mxu0 0
    %4443 = vmatpush2.bf16.msra.mxu0 %v3114
    %4444 = vmatprep.subr.bf16.mxu0 0
    %4445 = vmatpush2.bf16.msra.mxu0 %v3113
    %4446 = vmatprep.subr.bf16.mxu0 0
    %4447 = vmatpush2.bf16.msra.mxu0 %v3112
    %4448 = vmatprep.mubr.bf16.mxu0 %v1116
    %4449 = vmatmul.mubr.bf16.gmra.mxu0 %v1102
    %v4450 = vpop.f32.mrf.mxu0
    %v4451 = vadd.f32 %v4411, %v4450
    %v4452 = vpop.f32.mrf.mxu0
    %v4453 = vpop.f32.mrf.mxu0
    %v4454 = vpop.f32.mrf.mxu0
    %4455 = vdwg.mxu0
    %4456 = vmatprep.subr.bf16.mxu0 0
    %4457 = vmatpush1.bf16.msra.mxu0 %v3127
    %4458 = vmatprep.subr.bf16.mxu0 0
    %4459 = vmatpush1.bf16.msra.mxu0 %v3126
    %4460 = vmatprep.subr.bf16.mxu0 0
    %4461 = vmatpush1.bf16.msra.mxu0 %v3125
    %4462 = vmatprep.subr.bf16.mxu0 0
    %4463 = vmatpush1.bf16.msra.mxu0 %v3124
    %4464 = vmatprep.subr.bf16.mxu0 0
    %4465 = vmatpush1.bf16.msra.mxu0 %v3123
    %4466 = vmatprep.subr.bf16.mxu0 0
    %4467 = vmatpush1.bf16.msra.mxu0 %v3122
    %4468 = vmatprep.subr.bf16.mxu0 0
    %4469 = vmatpush1.bf16.msra.mxu0 %v3121
    %4470 = vmatprep.subr.bf16.mxu0 0
    %4471 = vmatpush1.bf16.msra.mxu0 %v3120
    %4472 = vmatprep.subr.bf16.mxu0 0
    %4473 = vmatpush2.bf16.msra.mxu0 %v3135
    %4474 = vmatprep.subr.bf16.mxu0 0
    %4475 = vmatpush2.bf16.msra.mxu0 %v3134
    %4476 = vmatprep.subr.bf16.mxu0 0
    %4477 = vmatpush2.bf16.msra.mxu0 %v3133
    %4478 = vmatprep.subr.bf16.mxu0 0
    %4479 = vmatpush2.bf16.msra.mxu0 %v3132
    %4480 = vmatprep.subr.bf16.mxu0 0
    %4481 = vmatpush2.bf16.msra.mxu0 %v3131
    %4482 = vmatprep.subr.bf16.mxu0 0
    %4483 = vmatpush2.bf16.msra.mxu0 %v3130
    %4484 = vmatprep.subr.bf16.mxu0 0
    %4485 = vmatpush2.bf16.msra.mxu0 %v3129
    %4486 = vmatprep.subr.bf16.mxu0 0
    %4487 = vmatpush2.bf16.msra.mxu0 %v3128
    %4488 = vmatprep.mubr.bf16.mxu0 %v1120
    %4489 = vmatmul.mubr.bf16.gmra.mxu0 %v1118
    %v4490 = vpop.f32.mrf.mxu0
    %v4491 = vadd.f32 %v4451, %v4490
    %v4492 = vpop.f32.mrf.mxu0
    %v4493 = vpop.f32.mrf.mxu0
    %v4494 = vpop.f32.mrf.mxu0
    %4495 = vdwg.mxu0
    %4496 = vmatprep.subr.bf16.mxu0 0
    %4497 = vmatpush1.bf16.msra.mxu0 %v3143
    %4498 = vmatprep.subr.bf16.mxu0 0
    %4499 = vmatpush1.bf16.msra.mxu0 %v3142
    %4500 = vmatprep.subr.bf16.mxu0 0
    %4501 = vmatpush1.bf16.msra.mxu0 %v3141
    %4502 = vmatprep.subr.bf16.mxu0 0
    %4503 = vmatpush1.bf16.msra.mxu0 %v3140
    %4504 = vmatprep.subr.bf16.mxu0 0
    %4505 = vmatpush1.bf16.msra.mxu0 %v3139
    %4506 = vmatprep.subr.bf16.mxu0 0
    %4507 = vmatpush1.bf16.msra.mxu0 %v3138
    %4508 = vmatprep.subr.bf16.mxu0 0
    %4509 = vmatpush1.bf16.msra.mxu0 %v3137
    %4510 = vmatprep.subr.bf16.mxu0 0
    %4511 = vmatpush1.bf16.msra.mxu0 %v3136
    %4512 = vmatprep.subr.bf16.mxu0 0
    %4513 = vmatpush2.bf16.msra.mxu0 0
    %4514 = vmatprep.subr.bf16.mxu0 0
    %4515 = vmatpush2.bf16.msra.mxu0 0
    %4516 = vmatprep.subr.bf16.mxu0 0
    %4517 = vmatpush2.bf16.msra.mxu0 0
    %4518 = vmatprep.subr.bf16.mxu0 0
    %4519 = vmatpush2.bf16.msra.mxu0 0
    %4520 = vmatprep.subr.bf16.mxu0 0
    %4521 = vmatpush2.bf16.msra.mxu0 0
    %4522 = vmatprep.subr.bf16.mxu0 0
    %4523 = vmatpush2.bf16.msra.mxu0 0
    %4524 = vmatprep.subr.bf16.mxu0 0
    %4525 = vmatpush2.bf16.msra.mxu0 0
    %4526 = vmatprep.subr.bf16.mxu0 0
    %4527 = vmatpush2.bf16.msra.mxu0 0
    %4528 = vmatprep.mubr.bf16.mxu0 0
    %4529 = vmatmul.mubr.bf16.gmra.mxu0 %v1134
    %v4530 = vpop.f32.mrf.mxu0
    %v4531 = vadd.f32 %v4491, %v4530
    %v4532 = vpop.f32.mrf.mxu0
    %v4533 = vpop.f32.mrf.mxu0
    %v4534 = vpop.f32.mrf.mxu0
    %4535 = vdwg.mxu0
    %v4536 = vmax.f32 %v4531, 0.0
    %v4537 = vld [vmem:[%s3] sm:$0xff]
    %v4538 = vld [vmem:[%s3 + $0x8] sm:$0xff]
    %v4539 = vld [vmem:[%s3 + $0x10] sm:$0xff]
    %v4540 = vld [vmem:[%s3 + $0x18] sm:$0xff]
    %v4541 = vld [vmem:[%s3 + $0x20] sm:$0xff]
    %v4542 = vld [vmem:[%s3 + $0x28] sm:$0xff]
    %v4543 = vld [vmem:[%s3 + $0x30] sm:$0xff]
    %v4544 = vld [vmem:[%s3 + $0x38] sm:$0xff]
    %v4545 = vld [vmem:[%s3 + $0x40] sm:$0xff]
    %v4546 = vld [vmem:[%s3 + $0x48] sm:$0xff]
    %v4547 = vld [vmem:[%s3 + $0x50] sm:$0xff]
    %v4548 = vld [vmem:[%s3 + $0x58] sm:$0xff]
    %v4549 = vld [vmem:[%s3 + $0x60] sm:$0xff]
    %v4550 = vld [vmem:[%s3 + $0x68] sm:$0xff]
    %v4551 = vld [vmem:[%s3 + $0x70] sm:$0xff]
    %v4552 = vld [vmem:[%s3 + $0x78] sm:$0xff]
    %v4553 = vld [vmem:[%s4] sm:$0x1]
    %v4555 = vlaneseq
    %v4556 = vshrl.u32 %v4555, 7
    %v4557 = vsub.s32 0, %v4556
    %v4558 = vrot.slane %v4553, %v4557
    %4560 = vmatprep.subr.mxu0 0.0
    %4561 = vmatpush1.msra.mxu0 %v4552
    %4562 = vmatprep.subr.mxu0 0.0
    %4563 = vmatpush1.msra.mxu0 %v4551
    %4564 = vmatprep.subr.mxu0 0.0
    %4565 = vmatpush1.msra.mxu0 %v4550
    %4566 = vmatprep.subr.mxu0 0.0
    %4567 = vmatpush1.msra.mxu0 %v4549
    %4568 = vmatprep.subr.mxu0 0.0
    %4569 = vmatpush1.msra.mxu0 %v4548
    %4570 = vmatprep.subr.mxu0 0.0
    %4571 = vmatpush1.msra.mxu0 %v4547
    %4572 = vmatprep.subr.mxu0 0.0
    %4573 = vmatpush1.msra.mxu0 %v4546
    %4574 = vmatprep.subr.mxu0 0.0
    %4575 = vmatpush1.msra.mxu0 %v4545
    %4576 = vmatprep.subr.mxu0 0.0
    %4577 = vmatpush1.msra.mxu0 %v4544
    %4578 = vmatprep.subr.mxu0 0.0
    %4579 = vmatpush1.msra.mxu0 %v4543
    %4580 = vmatprep.subr.mxu0 0.0
    %4581 = vmatpush1.msra.mxu0 %v4542
    %4582 = vmatprep.subr.mxu0 0.0
    %4583 = vmatpush1.msra.mxu0 %v4541
    %4584 = vmatprep.subr.mxu0 0.0
    %4585 = vmatpush1.msra.mxu0 %v4540
    %4586 = vmatprep.subr.mxu0 0.0
    %4587 = vmatpush1.msra.mxu0 %v4539
    %4588 = vmatprep.subr.mxu0 0.0
    %4589 = vmatpush1.msra.mxu0 %v4538
    %4590 = vmatprep.subr.mxu0 0.0
    %4591 = vmatpush1.msra.mxu0 %v4537
    %4592 = vmatprep.subr.mxu0 0.0
    %4593 = vmatpush2.msra.mxu0 0.0
    %4594 = vmatprep.subr.mxu0 0.0
    %4595 = vmatpush2.msra.mxu0 0.0
    %4596 = vmatprep.subr.mxu0 0.0
    %4597 = vmatpush2.msra.mxu0 0.0
    %4598 = vmatprep.subr.mxu0 0.0
    %4599 = vmatpush2.msra.mxu0 0.0
    %4600 = vmatprep.subr.mxu0 0.0
    %4601 = vmatpush2.msra.mxu0 0.0
    %4602 = vmatprep.subr.mxu0 0.0
    %4603 = vmatpush2.msra.mxu0 0.0
    %4604 = vmatprep.subr.mxu0 0.0
    %4605 = vmatpush2.msra.mxu0 0.0
    %4606 = vmatprep.subr.mxu0 0.0
    %4607 = vmatpush2.msra.mxu0 0.0
    %4608 = vmatprep.subr.mxu0 0.0
    %4609 = vmatpush2.msra.mxu0 0.0
    %4610 = vmatprep.subr.mxu0 0.0
    %4611 = vmatpush2.msra.mxu0 0.0
    %4612 = vmatprep.subr.mxu0 0.0
    %4613 = vmatpush2.msra.mxu0 0.0
    %4614 = vmatprep.subr.mxu0 0.0
    %4615 = vmatpush2.msra.mxu0 0.0
    %4616 = vmatprep.subr.mxu0 0.0
    %4617 = vmatpush2.msra.mxu0 0.0
    %4618 = vmatprep.subr.mxu0 0.0
    %4619 = vmatpush2.msra.mxu0 0.0
    %4620 = vmatprep.subr.mxu0 0.0
    %4621 = vmatpush2.msra.mxu0 0.0
    %4622 = vmatprep.subr.mxu0 0.0
    %4623 = vmatpush2.msra.mxu0 0.0
    %4624 = vmatprep.mubr.f32.mxu0 0.0
    %4625 = vmatmul.mubr.f32.gmra.mxu0 %v4536
    %v4626 = vpop.f32.mrf.mxu0
    %v4627 = vadd.f32 %v4558, %v4626
    %v4628 = vpop.f32.mrf.mxu0
    %4629 = vdwg.mxu0
    %vm4630 = vcmask 74752
    %v4631 = vsel %vm4630, %v4627, -inf
    %4632 = vmax.xlane.f32.xlu0 %v4631
    %v4633 = vpop.xlane.xlu0 %4632
    %v4634 = vsub.f32 %v4627, %v4633
    %v4635 = vmul.f32 %v4634, 1.442695
    %v4636 = vpow.pop %v4635
    %v4637 = vsel %vm4630, %v4636, 0.0
    %4638 = vadd.xlane.f32.xlu0 %v4637
    %v4639 = vpop.xlane.xlu0 %4638
    %v4640 = vlog2.pop %v4639
    %v4641 = vmul.f32 %v4640, 0.6931472
    %v4642 = vsub.f32 %v4634, %v4641
    %4643 = vst.msk [vmem:[#allocation2] sm:$0x3] %vm4630, %v4642
    // Predicated region
    $region22: #{simple_cnn_forward.5} parent=1 // pred_check
      _
    $region23: #{simple_cnn_forward.5} parent=1 // pred_check_branch
      %4645 = sbr.rel (0) target = $region25
    $region24: #{simple_cnn_forward.5} parent=1 // pred_region
      %s4647 = ssub.s32 32, 32
      %4648 = vsyncadd [#allocation3], %s4647
      %s4650 = sshll.u32 [#allocation2], 4
      %s4651 = int_to_ptr.vmem [resolvable:$true] %s4650
      %4653 = dma.vmem_to_hbm [thread:$0]  %s4651, 32, %s5, [#allocation3]
    $region25: #{simple_cnn_forward.5} parent=1 // pred_fallthru
      _
    // Predicated region
    $region26: #{simple_cnn_forward.5} parent=1 // pred_check
      _
    $region27: #{simple_cnn_forward.5} parent=1 // pred_check_branch
      %4655 = sbr.rel (0) target = $region29
    $region28: #{simple_cnn_forward.5} parent=1 // pred_region
      %4656 = dma.done [#allocation3], 32
    $region29: #{simple_cnn_forward.5} parent=1 // pred_fallthru
      _
    %4657 = vsyncpa [#allocation3], 1

</llo_original>
